<compile_context>
chip_gen: v7x
topology: tpu7x:2x2x1
jax: 0.10.0
libtpu: 0.0.40
codegen_flags: <defaults>
</compile_context>

<pallas_src>
import numpy as np
import jax
import jax.numpy as jnp
from jax import lax
from jax.experimental import pallas as pl
from jax.experimental.pallas import tpu as pltpu

_VMEM_LIMIT = 48 * 1024 * 1024     # explicit scoped-VMEM budget (< v7x 64 MiB)


# ----------------------------------------------------------------------------
# planning helpers
# ----------------------------------------------------------------------------
def _vmem_per_image(h, w, c_in, c_out, itemsize):
    """Rough per-image VMEM footprint of one conv step (input block, f32
    window, f32 + compute-dtype im2col, f32 accumulator)."""
    return h * w * (c_in * (10 * itemsize + 40) + (4 + itemsize) * c_out)


def _batch_fold(batch, per_image_bytes, cap=4 << 20):
    """Largest divisor nb of `batch` whose per-step footprint fits `cap`."""
    nb = 1
    for d in range(1, batch + 1):
        if batch % d == 0 and d * per_image_bytes <= cap:
            nb = d
    return nb


def _row_tile(h, w, lane_align, cap_rows=1024):
    """Output rows per grid step: largest divisor th of h with th*w <= cap_rows,
    preferring tiles whose flattened row count is `lane_align`-aligned."""
    if h * w <= cap_rows:
        return h
    best_unaligned = None
    for th in range(h, 0, -1):
        if h % th or th * w > cap_rows:
            continue
        if (th * w) % lane_align == 0:
            return th
        if best_unaligned is None:
            best_unaligned = th
    # TODO(synk): pad tail tiles instead of giving up on alignment when h has
    # no aligned divisor (only matters at large, odd resolutions).
    return best_unaligned if best_unaligned is not None else h


# ----------------------------------------------------------------------------
# in-kernel building blocks (operate on f32 VMEM values)
# ----------------------------------------------------------------------------
def _pad1_hw(x3):
    """(h, w, c) -> (h+2, w+2, c) with a zero 1-px halo, built in VMEM."""
    h, w, c = x3.shape
    zr = jnp.zeros((1, w, c), x3.dtype)
    x3 = jnp.concatenate([zr, x3, zr], axis=0)        # cheap major-axis concat
    zc = jnp.zeros((h + 2, 1, c), x3.dtype)
    return jnp.concatenate([zc, x3, zc], axis=1)


def _im2col_3x3(xp, th, w):
    """(th+2, w+2, c) padded window -> (th*w, 9*c) folded im2col tile."""
    c = xp.shape[-1]
    taps = [xp[dy:dy + th, dx:dx + w, :] for dy in range(3) for dx in range(3)]
    cols = jnp.concatenate(taps, axis=-1)             # (th, w, 9c) lane concat
    return cols.reshape(th * w, 9 * c)                # collapse majors (w%8==0)


# ----------------------------------------------------------------------------
# generic 3x3 "same" conv (pad built in VMEM), batch-folded, optionally
# phase-fused (Cout axis carries the 4 sub-pixel phases).
# ----------------------------------------------------------------------------
def _make_conv3x3_kernel(nb, h, w, c, th, t_tiles, layout, relu_in,
                         compute_dtype):
    m = th * w
    f32 = jnp.float32

    def kernel(x_ref, w_ref, b_ref, o_ref):
        # x_ref: (nb, h, w, c) unpadded images.
        # w_ref: (9c, Co) "pc" / (Co, 9c) "cp";  b_ref: (1, Co) / (Co, 1) f32.
        # o_ref: (nb, m, Co) "pc" / (nb, Co, m) "cp".
        if t_tiles > 1:
            base = pl.program_id(1) * th
        xcols = []
        for bi in range(nb):
            if t_tiles == 1:
                win = _pad1_hw(x_ref[bi].astype(f32))             # (h+2,w+2,c)
            else:
                mid = x_ref[bi, pl.ds(base, th)].astype(f32)      # (th, w, c)
                top = x_ref[bi, jnp.maximum(base - 1, 0)].astype(f32)
                bot = x_ref[bi, jnp.minimum(base + th, h - 1)].astype(f32)
                top = jnp.where(base == 0, jnp.zeros_like(top), top)
                bot = jnp.where(base + th == h, jnp.zeros_like(bot), bot)
                rows = jnp.concatenate([top[None], mid, bot[None]], axis=0)
                zc = jnp.zeros((th + 2, 1, c), f32)
                win = jnp.concatenate([zc, rows, zc], axis=1)
            if relu_in:
                win = jnp.maximum(win, 0.0)                       # 1 ReLU/block
            xcols.append(_im2col_3x3(win, th, w))
        xcol = xcols[0] if nb == 1 else jnp.concatenate(xcols, axis=0)
        xcol = xcol.astype(compute_dtype)                         # MXU boundary
        bias = b_ref[...].astype(f32)

        if layout == "pc":                                        # (nb*m, Co)
            acc = jnp.dot(xcol, w_ref[...], preferred_element_type=f32) + bias
            for bi in range(nb):
                o_ref[bi] = acc[bi * m:(bi + 1) * m].astype(o_ref.dtype)
        else:                                                     # "cp": (Co, nb*m)
            acc = lax.dot_general(w_ref[...], xcol,
                                  dimension_numbers=(((1,), (1,)), ((), ())),
                                  preferred_element_type=f32) + bias
            for bi in range(nb):
                o_ref[bi] = acc[:, bi * m:(bi + 1) * m].astype(o_ref.dtype)

    return kernel


def conv3x3_pallas(x, wf, bf, *, layout, relu_in, compute_dtype, out_dtype):
    """3x3 pad-1 conv on NHWC input (halo built in VMEM, no wrapper pad).

    x  : (B, H, W, Cin)
    wf : (9*Cin, Co) for layout="pc"  /  (Co, 9*Cin) for layout="cp"
    bf : (1, Co) f32                  /  (Co, 1) f32
    Returns (B, H*W, Co) ("pc") or (B, Co, H*W) ("cp").
    """
    b, h, w, c = x.shape
    co = wf.shape[1] if layout == "pc" else wf.shape[0]
    p = h * w

    nb = _batch_fold(b, _vmem_per_image(h, w, c, co, x.dtype.itemsize))
    g = b // nb
    th = _row_tile(h, w, lane_align=(128 if layout == "cp" else 8))
    t = h // th
    m = th * w

    kernel = _make_conv3x3_kernel(nb, h, w, c, th, t, layout, relu_in,
                                  compute_dtype)
    if layout == "pc":
        out_shape = jax.ShapeDtypeStruct((b, p, co), out_dtype)
        out_spec = pl.BlockSpec((nb, m, co), lambda gi, ti: (gi, ti, 0))
    else:
        out_shape = jax.ShapeDtypeStruct((b, co, p), out_dtype)
        out_spec = pl.BlockSpec((nb, co, m), lambda gi, ti: (gi, 0, ti))

    # TODO(synk): at very large resolutions feed halo'd row windows instead of
    # whole images (the full-image input block is the VMEM hog on v7x).
    return pl.pallas_call(
        kernel,
        out_shape=out_shape,
        grid=(g, t),
        in_specs=[
            pl.BlockSpec((nb, h, w, c), lambda gi, ti: (gi, 0, 0, 0)),
            pl.BlockSpec(wf.shape, lambda gi, ti: (0, 0)),
            pl.BlockSpec(bf.shape, lambda gi, ti: (0, 0)),
        ],
        out_specs=out_spec,
        compiler_params=pltpu.CompilerParams(
            dimension_semantics=("parallel", "parallel"),
            vmem_limit_bytes=_VMEM_LIMIT),
    )(x, wf, bf)


# ----------------------------------------------------------------------------
# Fused low-resolution head: [ResBlock]*n + ReLU + ConvTranspose 3x3/s1/p1.
# ----------------------------------------------------------------------------
def _make_head_kernel(nb, h, w, c, n_res, compute_dtype):
    m = h * w
    f32 = jnp.float32

    def kernel(x_ref, rw1_ref, rb1_ref, rw2_ref, rb2_ref, cw_ref, cb_ref,
               o_ref):
        # Residual stream stays in f32 VMEM across all layers of the head.
        hs = [x_ref[bi].astype(f32) for bi in range(nb)]          # (h, w, c)

        def folded_xcol():
            cols = [_im2col_3x3(_pad1_hw(jnp.maximum(hs[bi], 0.0)), h, w)
                    for bi in range(nb)]
            return cols[0] if nb == 1 else jnp.concatenate(cols, axis=0)

        for r in range(n_res):                                    # ResBlocks
            xcol = folded_xcol().astype(compute_dtype)            # (nb*m, 9c)
            t1 = jnp.dot(xcol, rw1_ref[r], preferred_element_type=f32)
            t1 = jnp.maximum(t1 + rb1_ref[r].astype(f32), 0.0)    # (nb*m, R)
            t2 = jnp.dot(t1.astype(compute_dtype), rw2_ref[r],
                         preferred_element_type=f32)
            t2 = t2 + rb2_ref[r].astype(f32)                      # (nb*m, c)
            for bi in range(nb):
                hs[bi] = hs[bi] + t2[bi * m:(bi + 1) * m].reshape(h, w, c)

        # decoder-level ReLU + ConvTranspose 3x3 / stride 1 / pad 1
        xcol = folded_xcol().astype(compute_dtype)
        out = jnp.dot(xcol, cw_ref[...], preferred_element_type=f32)
        out = out + cb_ref[...].astype(f32)                       # (nb*m, c)
        for bi in range(nb):
            o_ref[bi] = out[bi * m:(bi + 1) * m].astype(o_ref.dtype)

    return kernel


def head_pallas(x, rw1, rb1, rw2, rb2, cw, cb, *, compute_dtype, out_dtype):
    b, h, w, c = x.shape
    n_res = rw1.shape[0]
    m = h * w
    nb = _batch_fold(b, _vmem_per_image(h, w, c, c, x.dtype.itemsize))
    g = b // nb
    kernel = _make_head_kernel(nb, h, w, c, n_res, compute_dtype)
    out = pl.pallas_call(
        kernel,
        out_shape=jax.ShapeDtypeStruct((b, m, c), out_dtype),
        grid=(g,),
        in_specs=[
            pl.BlockSpec((nb, h, w, c), lambda gi: (gi, 0, 0, 0)),
            pl.BlockSpec(rw1.shape, lambda gi: (0, 0, 0)),
            pl.BlockSpec(rb1.shape, lambda gi: (0, 0, 0)),
            pl.BlockSpec(rw2.shape, lambda gi: (0, 0, 0)),
            pl.BlockSpec(rb2.shape, lambda gi: (0, 0, 0)),
            pl.BlockSpec(cw.shape, lambda gi: (0, 0)),
            pl.BlockSpec(cb.shape, lambda gi: (0, 0)),
        ],
        out_specs=pl.BlockSpec((nb, m, c), lambda gi: (gi, 0, 0)),
        compiler_params=pltpu.CompilerParams(
            dimension_semantics=("parallel",),
            vmem_limit_bytes=_VMEM_LIMIT),
    )(x, rw1, rb1, rw2, rb2, cw, cb)
    return out.reshape(b, h, w, c)


# ----------------------------------------------------------------------------
# Glue: phase decomposition of 4x4/stride-2/pad-1 ConvTranspose, params,
# decoder forward, independent reference.
# ----------------------------------------------------------------------------
def _phase_kernel_hwio(wt, py, px):
    """Phase (py, px) of a 4x4/s2/p1 ConvTranspose2d as a 3x3 valid-conv
    kernel (HWIO) over the pad-1 (un-upsampled) input.  Only a 2x2 block of
    the 3x3 kernel is non-zero (zero-embedded so all 4 phases share one
    im2col and can be fused along the Cout axis).
    # TODO(synk): exact 2x2 phase sub-kernels would cut MXU MACs 2.25x, but
    # they cannot share a single fused xcol; revisit if MXU-bound."""
    cin, cout = wt.shape[0], wt.shape[1]
    row_taps = [(0, 3), (1, 1)] if py == 0 else [(1, 2), (2, 0)]
    col_taps = [(0, 3), (1, 1)] if px == 0 else [(1, 2), (2, 0)]
    k3 = jnp.zeros((3, 3, cin, cout), wt.dtype)
    for dy, a in row_taps:
        for dx, b in col_taps:
            k3 = k3.at[dy, dx].set(wt[:, :, a, b])                # (Cin, Cout)
    return k3


def init_decoder_params(key, hid, out_ch, n_res_block, n_res_ch, scale_factor):
    keys = iter(jax.random.split(key, 128))

    def init(shape, scale=0.05):
        return scale * jax.random.normal(next(keys), shape, jnp.float32)

    params = {"res": [], "ups": []}
    for _ in range(n_res_block):
        params["res"].append({
            "w1": init((n_res_ch, hid, 3, 3)),   # Conv2d OIHW
            "b1": init((n_res_ch,)),
            "w2": init((hid, n_res_ch, 1, 1)),
            "b2": init((hid,)),
        })
    # ConvTranspose2d weights are IOHW (Cin, Cout, kh, kw)
    params["ups"].append({"w": init((hid, hid, 3, 3)), "b": init((hid,))})
    hc = hid
    for _ in range(scale_factor):
        params["ups"].append({"w": init((hc, hc // 2, 4, 4)),
                              "b": init((hc // 2,))})
        hc //= 2
    params["ups"].append({"w": init((hc, out_ch, 4, 4)), "b": init((out_ch,))})
    return params


def decoder_forward_pallas(x_nchw, params, *, compute_dtype=jnp.bfloat16):
    f32 = jnp.float32
    cd = compute_dtype
    h = jnp.transpose(x_nchw, (0, 2, 3, 1)).astype(cd)            # NHWC
    b, hh, ww, c = h.shape

    # ---- fused head: ResBlocks + ReLU + ConvTranspose 3x3/s1/p1 ------------
    up0 = params["ups"][0]
    w0 = jnp.transpose(up0["w"][:, :, ::-1, ::-1], (2, 3, 0, 1))  # flip->HWIO
    w0 = w0.reshape(9 * c, c)
    b0 = up0["b"].reshape(1, c).astype(f32)
    res = params["res"]
    if res:
        rr = res[0]["w1"].shape[0]
        rw1 = jnp.stack([jnp.transpose(rp["w1"], (2, 3, 1, 0)).reshape(9 * c, rr)
                         for rp in res]).astype(cd)
        rb1 = jnp.stack([rp["b1"].reshape(1, rr) for rp in res]).astype(f32)
        rw2 = jnp.stack([jnp.transpose(rp["w2"], (2, 3, 1, 0)).reshape(rr, c)
                         for rp in res]).astype(cd)
        rb2 = jnp.stack([rp["b2"].reshape(1, c) for rp in res]).astype(f32)
        h = head_pallas(h, rw1, rb1, rw2, rb2, w0.astype(cd), b0,
                        compute_dtype=cd, out_dtype=cd)
    else:
        h = conv3x3_pallas(h, w0.astype(cd), b0, layout="pc", relu_in=True,
                           compute_dtype=cd,
                           out_dtype=cd).reshape(b, hh, ww, c)

    # ---- stride-2 ConvTranspose 4x4/p1 layers: phase-FUSED ------------------
    n_ups = len(params["ups"])
    for li in range(1, n_ups):
        up = params["ups"][li]
        is_last = li == n_ups - 1
        wt = up["w"]                                  # (Cin, Cout, 4, 4) IOHW
        cin, cout = wt.shape[0], wt.shape[1]
        b, hh, ww, _ = h.shape
        ks = jnp.stack([_phase_kernel_hwio(wt, py, px).reshape(9 * cin, cout)
                        for py in (0, 1) for px in (0, 1)])       # (4,9Cin,Cout)
        if is_last:
            # lane-dense trans-B layout; rows ordered (cout, py, px) -> NCHW
            wf = jnp.transpose(ks, (2, 0, 1)).reshape(4 * cout, 9 * cin)
            bf = jnp.repeat(up["b"], 4).reshape(4 * cout, 1).astype(f32)
            out = conv3x3_pallas(h, wf.astype(cd), bf, layout="cp",
                                 relu_in=True, compute_dtype=cd, out_dtype=f32)
            out = out.reshape(b, cout, 2, 2, hh, ww)              # b,co,py,px,y,x
            out = jnp.transpose(out, (0, 1, 4, 2, 5, 3))          # b,co,y,py,x,px
            return out.reshape(b, cout, 2 * hh, 2 * ww)           # NCHW
        # columns ordered (py, px, cout): one depth-to-space transpose after
        wf = jnp.transpose(ks, (1, 0, 2)).reshape(9 * cin, 4 * cout)
        bf = jnp.tile(up["b"], 4).reshape(1, 4 * cout).astype(f32)
        out = conv3x3_pallas(h, wf.astype(cd), bf, layout="pc",
                             relu_in=True, compute_dtype=cd, out_dtype=cd)
        out = out.reshape(b, hh, ww, 2, 2, cout)                  # b,y,x,py,px,co
        out = jnp.transpose(out, (0, 1, 3, 2, 4, 5))              # b,y,py,x,px,co
        h = out.reshape(b, 2 * hh, 2 * ww, cout)

    return jnp.transpose(h, (0, 3, 1, 2)).astype(f32)             # defensive


# Independent pure-lax reference (does NOT reuse any of the Pallas glue).
def decoder_reference(x_nchw, params):
    f32 = jnp.float32
    dn = ("NHWC", "HWIO", "NHWC")
    hp = lax.Precision.HIGHEST
    h = jnp.transpose(x_nchw, (0, 2, 3, 1)).astype(f32)
    for rp in params["res"]:
        w1 = jnp.transpose(rp["w1"], (2, 3, 1, 0)).astype(f32)
        w2 = jnp.transpose(rp["w2"], (2, 3, 1, 0)).astype(f32)
        t = lax.conv_general_dilated(jax.nn.relu(h), w1, (1, 1),
                                     [(1, 1), (1, 1)], dimension_numbers=dn,
                                     precision=hp) + rp["b1"]
        t = lax.conv_general_dilated(jax.nn.relu(t), w2, (1, 1),
                                     [(0, 0), (0, 0)], dimension_numbers=dn,
                                     precision=hp) + rp["b2"]
        h = h + t
    for up in params["ups"]:
        wt = up["w"].astype(f32)                     # (Cin, Cout, k, k)
        k = wt.shape[2]
        s = 1 if k == 3 else 2
        p = 1
        w = jnp.transpose(wt[:, :, ::-1, ::-1], (2, 3, 0, 1))
        h = lax.conv_general_dilated(
            jax.nn.relu(h), w, (1, 1), [(k - 1 - p, k - 1 - p)] * 2,
            lhs_dilation=(s, s), dimension_numbers=dn, precision=hp) + up["b"]
    return jnp.transpose(h, (0, 3, 1, 2))


@jax.jit
def _decoder_bf16(x, params):
    return decoder_forward_pallas(x, params, compute_dtype=jnp.bfloat16)


@jax.jit
def _decoder_f32(x, params):
    return decoder_forward_pallas(x, params, compute_dtype=jnp.float32)


@jax.jit
def _decoder_ref(x, params):
    return decoder_reference(x, params)


if __name__ == "__main__":
    B, hid_channel, out_channel = 2, 32, 3
    n_res_block, n_res_channel, scale_factor = 2, 8, 1
    H = W = 8

    key = jax.random.PRNGKey(0)
    kx, kp = jax.random.split(key)
    x = jax.random.normal(kx, (B, hid_channel, H, W), jnp.float32)
    params = init_decoder_params(kp, hid_channel, out_channel,
                                 n_res_block, n_res_channel, scale_factor)

    y_bf16 = jax.block_until_ready(_decoder_bf16(x, params))
    y_f32 = jax.block_until_ready(_decoder_f32(x, params))
    y_ref = jax.block_until_ready(_decoder_ref(x, params))

    up = 2 ** (scale_factor + 1)
    assert y_bf16.shape == (B, out_channel, H * up, W * up), y_bf16.shape
    assert y_bf16.dtype == jnp.float32

    # f32 kernel path vs independent lax reference (gating test)
    np.testing.assert_allclose(np.asarray(y_f32), np.asarray(y_ref),
                               rtol=1e-2, atol=1e-3)
    # bf16 (production) path vs reference (loose, bf16 rounding)
    np.testing.assert_allclose(np.asarray(y_bf16), np.asarray(y_ref),
                               rtol=1e-1, atol=5e-2)

    print("KERNEL_OK")
</pallas_src>

<mosaic_0001>
module attributes {stable_mosaic.version = 11 : i64} {
  func.func @kernel(%arg0: i32, %arg1: memref<2x8x8x32xbf16, #tpu.memory_space<vmem>>, %arg2: memref<2x288x8xbf16, #tpu.memory_space<vmem>>, %arg3: memref<2x1x8xf32, #tpu.memory_space<vmem>>, %arg4: memref<2x8x32xbf16, #tpu.memory_space<vmem>>, %arg5: memref<2x1x32xf32, #tpu.memory_space<vmem>>, %arg6: memref<288x32xbf16, #tpu.memory_space<vmem>>, %arg7: memref<1x32xf32, #tpu.memory_space<vmem>>, %arg8: memref<2x64x32xbf16, #tpu.memory_space<vmem>>) attributes {dimension_semantics = [#tpu.dimension_semantics<parallel>], iteration_bounds = array<i64: 1>, scalar_prefetch = 0 : i64, scratch_operands = 0 : i64, tpu.core_type = #tpu.core_type<tc>, window_params = [{transform_indices = @transform_0, window_bounds = array<i64: 2, 8, 8, 32>}, {pipeline_mode = #tpu.pipeline_mode<synchronous>, transform_indices = @transform_1, window_bounds = array<i64: 2, 288, 8>}, {pipeline_mode = #tpu.pipeline_mode<synchronous>, transform_indices = @transform_2, window_bounds = array<i64: 2, 1, 8>}, {pipeline_mode = #tpu.pipeline_mode<synchronous>, transform_indices = @transform_3, window_bounds = array<i64: 2, 8, 32>}, {pipeline_mode = #tpu.pipeline_mode<synchronous>, transform_indices = @transform_4, window_bounds = array<i64: 2, 1, 32>}, {pipeline_mode = #tpu.pipeline_mode<synchronous>, transform_indices = @transform_5, window_bounds = array<i64: 288, 32>}, {pipeline_mode = #tpu.pipeline_mode<synchronous>, transform_indices = @transform_6, window_bounds = array<i64: 1, 32>}, {transform_indices = @transform_7, window_bounds = array<i64: 2, 64, 32>}]} {
    %c0 = arith.constant 0 : index
    %c0_0 = arith.constant 0 : index
    %c0_1 = arith.constant 0 : index
    %c0_2 = arith.constant 0 : index
    %0 = vector.load %arg1[%c0, %c0_0, %c0_1, %c0_2] : memref<2x8x8x32xbf16, #tpu.memory_space<vmem>>, vector<1x8x8x32xbf16>
    %1 = vector.shape_cast %0 : vector<1x8x8x32xbf16> to vector<8x8x32xbf16>
    %2 = arith.extf %1 : vector<8x8x32xbf16> to vector<8x8x32xf32>
    %c1 = arith.constant 1 : index
    %c0_3 = arith.constant 0 : index
    %c0_4 = arith.constant 0 : index
    %c0_5 = arith.constant 0 : index
    %3 = vector.load %arg1[%c1, %c0_3, %c0_4, %c0_5] : memref<2x8x8x32xbf16, #tpu.memory_space<vmem>>, vector<1x8x8x32xbf16>
    %4 = vector.shape_cast %3 : vector<1x8x8x32xbf16> to vector<8x8x32xbf16>
    %5 = arith.extf %4 : vector<8x8x32xbf16> to vector<8x8x32xf32>
    %cst = arith.constant 0.000000e+00 : f32
    %6 = vector.broadcast %cst : f32 to vector<8x8x32xf32>
    %7 = arith.maximumf %2, %6 : vector<8x8x32xf32>
    %cst_6 = arith.constant 0.000000e+00 : f32
    %8 = vector.broadcast %cst_6 : f32 to vector<1x8x32xf32>
    %9 = tpu.concatenate %8, %7, %8 in 0 : vector<1x8x32xf32>, vector<8x8x32xf32>, vector<1x8x32xf32> -> vector<10x8x32xf32>
    %cst_7 = arith.constant 0.000000e+00 : f32
    %10 = vector.broadcast %cst_7 : f32 to vector<10x1x32xf32>
    %11 = tpu.concatenate %10, %9, %10 in 1 : vector<10x1x32xf32>, vector<10x8x32xf32>, vector<10x1x32xf32> -> vector<10x10x32xf32>
    %12 = vector.extract_strided_slice %11 {offsets = [0, 0, 0], sizes = [8, 8, 32], strides = [1, 1, 1]} : vector<10x10x32xf32> to vector<8x8x32xf32>
    %13 = vector.extract_strided_slice %11 {offsets = [0, 1, 0], sizes = [8, 8, 32], strides = [1, 1, 1]} : vector<10x10x32xf32> to vector<8x8x32xf32>
    %14 = vector.extract_strided_slice %11 {offsets = [0, 2, 0], sizes = [8, 8, 32], strides = [1, 1, 1]} : vector<10x10x32xf32> to vector<8x8x32xf32>
    %15 = vector.extract_strided_slice %11 {offsets = [1, 0, 0], sizes = [8, 8, 32], strides = [1, 1, 1]} : vector<10x10x32xf32> to vector<8x8x32xf32>
    %16 = vector.extract_strided_slice %11 {offsets = [1, 1, 0], sizes = [8, 8, 32], strides = [1, 1, 1]} : vector<10x10x32xf32> to vector<8x8x32xf32>
    %17 = vector.extract_strided_slice %11 {offsets = [1, 2, 0], sizes = [8, 8, 32], strides = [1, 1, 1]} : vector<10x10x32xf32> to vector<8x8x32xf32>
    %18 = vector.extract_strided_slice %11 {offsets = [2, 0, 0], sizes = [8, 8, 32], strides = [1, 1, 1]} : vector<10x10x32xf32> to vector<8x8x32xf32>
    %19 = vector.extract_strided_slice %11 {offsets = [2, 1, 0], sizes = [8, 8, 32], strides = [1, 1, 1]} : vector<10x10x32xf32> to vector<8x8x32xf32>
    %20 = vector.extract_strided_slice %11 {offsets = [2, 2, 0], sizes = [8, 8, 32], strides = [1, 1, 1]} : vector<10x10x32xf32> to vector<8x8x32xf32>
    %21 = tpu.concatenate %12, %13, %14, %15, %16, %17, %18, %19, %20 in 2 : vector<8x8x32xf32>, vector<8x8x32xf32>, vector<8x8x32xf32>, vector<8x8x32xf32>, vector<8x8x32xf32>, vector<8x8x32xf32>, vector<8x8x32xf32>, vector<8x8x32xf32>, vector<8x8x32xf32> -> vector<8x8x288xf32>
    %22 = vector.shape_cast %21 : vector<8x8x288xf32> to vector<64x288xf32>
    %cst_8 = arith.constant 0.000000e+00 : f32
    %23 = vector.broadcast %cst_8 : f32 to vector<8x8x32xf32>
    %24 = arith.maximumf %5, %23 : vector<8x8x32xf32>
    %cst_9 = arith.constant 0.000000e+00 : f32
    %25 = vector.broadcast %cst_9 : f32 to vector<1x8x32xf32>
    %26 = tpu.concatenate %25, %24, %25 in 0 : vector<1x8x32xf32>, vector<8x8x32xf32>, vector<1x8x32xf32> -> vector<10x8x32xf32>
    %cst_10 = arith.constant 0.000000e+00 : f32
    %27 = vector.broadcast %cst_10 : f32 to vector<10x1x32xf32>
    %28 = tpu.concatenate %27, %26, %27 in 1 : vector<10x1x32xf32>, vector<10x8x32xf32>, vector<10x1x32xf32> -> vector<10x10x32xf32>
    %29 = vector.extract_strided_slice %28 {offsets = [0, 0, 0], sizes = [8, 8, 32], strides = [1, 1, 1]} : vector<10x10x32xf32> to vector<8x8x32xf32>
    %30 = vector.extract_strided_slice %28 {offsets = [0, 1, 0], sizes = [8, 8, 32], strides = [1, 1, 1]} : vector<10x10x32xf32> to vector<8x8x32xf32>
    %31 = vector.extract_strided_slice %28 {offsets = [0, 2, 0], sizes = [8, 8, 32], strides = [1, 1, 1]} : vector<10x10x32xf32> to vector<8x8x32xf32>
    %32 = vector.extract_strided_slice %28 {offsets = [1, 0, 0], sizes = [8, 8, 32], strides = [1, 1, 1]} : vector<10x10x32xf32> to vector<8x8x32xf32>
    %33 = vector.extract_strided_slice %28 {offsets = [1, 1, 0], sizes = [8, 8, 32], strides = [1, 1, 1]} : vector<10x10x32xf32> to vector<8x8x32xf32>
    %34 = vector.extract_strided_slice %28 {offsets = [1, 2, 0], sizes = [8, 8, 32], strides = [1, 1, 1]} : vector<10x10x32xf32> to vector<8x8x32xf32>
    %35 = vector.extract_strided_slice %28 {offsets = [2, 0, 0], sizes = [8, 8, 32], strides = [1, 1, 1]} : vector<10x10x32xf32> to vector<8x8x32xf32>
    %36 = vector.extract_strided_slice %28 {offsets = [2, 1, 0], sizes = [8, 8, 32], strides = [1, 1, 1]} : vector<10x10x32xf32> to vector<8x8x32xf32>
    %37 = vector.extract_strided_slice %28 {offsets = [2, 2, 0], sizes = [8, 8, 32], strides = [1, 1, 1]} : vector<10x10x32xf32> to vector<8x8x32xf32>
    %38 = tpu.concatenate %29, %30, %31, %32, %33, %34, %35, %36, %37 in 2 : vector<8x8x32xf32>, vector<8x8x32xf32>, vector<8x8x32xf32>, vector<8x8x32xf32>, vector<8x8x32xf32>, vector<8x8x32xf32>, vector<8x8x32xf32>, vector<8x8x32xf32>, vector<8x8x32xf32> -> vector<8x8x288xf32>
    %39 = vector.shape_cast %38 : vector<8x8x288xf32> to vector<64x288xf32>
    %40 = tpu.concatenate %22, %39 in 0 : vector<64x288xf32>, vector<64x288xf32> -> vector<128x288xf32>
    %41 = arith.truncf %40 : vector<128x288xf32> to vector<128x288xbf16>
    %c0_11 = arith.constant 0 : index
    %c0_12 = arith.constant 0 : index
    %c0_13 = arith.constant 0 : index
    %42 = vector.load %arg2[%c0_11, %c0_12, %c0_13] : memref<2x288x8xbf16, #tpu.memory_space<vmem>>, vector<1x288x8xbf16>
    %43 = vector.shape_cast %42 : vector<1x288x8xbf16> to vector<288x8xbf16>
    %cst_14 = arith.constant dense<0.000000e+00> : vector<128x8xf32>
    %44 = tpu.matmul %41, %43, %cst_14 {dimension_numbers = #tpu.dot_dimension_numbers<[1], [0], [0], [1], [0, 0, 1, 1], [], []>} : vector<128x288xbf16>, vector<288x8xbf16>, vector<128x8xf32> -> vector<128x8xf32>
    %c0_15 = arith.constant 0 : index
    %c0_16 = arith.constant 0 : index
    %c0_17 = arith.constant 0 : index
    %45 = vector.load %arg3[%c0_15, %c0_16, %c0_17] : memref<2x1x8xf32, #tpu.memory_space<vmem>>, vector<1x1x8xf32>
    %46 = vector.shape_cast %45 : vector<1x1x8xf32> to vector<1x8xf32>
    %47 = vector.broadcast %46 : vector<1x8xf32> to vector<128x8xf32>
    %48 = arith.addf %44, %47 : vector<128x8xf32>
    %cst_18 = arith.constant 0.000000e+00 : f32
    %49 = vector.broadcast %cst_18 : f32 to vector<128x8xf32>
    %50 = arith.maximumf %48, %49 : vector<128x8xf32>
    %51 = arith.truncf %50 : vector<128x8xf32> to vector<128x8xbf16>
    %c0_19 = arith.constant 0 : index
    %c0_20 = arith.constant 0 : index
    %c0_21 = arith.constant 0 : index
    %52 = vector.load %arg4[%c0_19, %c0_20, %c0_21] : memref<2x8x32xbf16, #tpu.memory_space<vmem>>, vector<1x8x32xbf16>
    %53 = vector.shape_cast %52 : vector<1x8x32xbf16> to vector<8x32xbf16>
    %cst_22 = arith.constant dense<0.000000e+00> : vector<128x32xf32>
    %54 = tpu.matmul %51, %53, %cst_22 {dimension_numbers = #tpu.dot_dimension_numbers<[1], [0], [0], [1], [0, 0, 1, 1], [], []>} : vector<128x8xbf16>, vector<8x32xbf16>, vector<128x32xf32> -> vector<128x32xf32>
    %c0_23 = arith.constant 0 : index
    %c0_24 = arith.constant 0 : index
    %c0_25 = arith.constant 0 : index
    %55 = vector.load %arg5[%c0_23, %c0_24, %c0_25] : memref<2x1x32xf32, #tpu.memory_space<vmem>>, vector<1x1x32xf32>
    %56 = vector.shape_cast %55 : vector<1x1x32xf32> to vector<1x32xf32>
    %57 = vector.broadcast %56 : vector<1x32xf32> to vector<128x32xf32>
    %58 = arith.addf %54, %57 : vector<128x32xf32>
    %59 = vector.extract_strided_slice %58 {offsets = [0, 0], sizes = [64, 32], strides = [1, 1]} : vector<128x32xf32> to vector<64x32xf32>
    %60 = vector.shape_cast %59 : vector<64x32xf32> to vector<8x8x32xf32>
    %61 = arith.addf %2, %60 : vector<8x8x32xf32>
    %62 = vector.extract_strided_slice %58 {offsets = [64, 0], sizes = [64, 32], strides = [1, 1]} : vector<128x32xf32> to vector<64x32xf32>
    %63 = vector.shape_cast %62 : vector<64x32xf32> to vector<8x8x32xf32>
    %64 = arith.addf %5, %63 : vector<8x8x32xf32>
    %cst_26 = arith.constant 0.000000e+00 : f32
    %65 = vector.broadcast %cst_26 : f32 to vector<8x8x32xf32>
    %66 = arith.maximumf %61, %65 : vector<8x8x32xf32>
    %cst_27 = arith.constant 0.000000e+00 : f32
    %67 = vector.broadcast %cst_27 : f32 to vector<1x8x32xf32>
    %68 = tpu.concatenate %67, %66, %67 in 0 : vector<1x8x32xf32>, vector<8x8x32xf32>, vector<1x8x32xf32> -> vector<10x8x32xf32>
    %cst_28 = arith.constant 0.000000e+00 : f32
    %69 = vector.broadcast %cst_28 : f32 to vector<10x1x32xf32>
    %70 = tpu.concatenate %69, %68, %69 in 1 : vector<10x1x32xf32>, vector<10x8x32xf32>, vector<10x1x32xf32> -> vector<10x10x32xf32>
    %71 = vector.extract_strided_slice %70 {offsets = [0, 0, 0], sizes = [8, 8, 32], strides = [1, 1, 1]} : vector<10x10x32xf32> to vector<8x8x32xf32>
    %72 = vector.extract_strided_slice %70 {offsets = [0, 1, 0], sizes = [8, 8, 32], strides = [1, 1, 1]} : vector<10x10x32xf32> to vector<8x8x32xf32>
    %73 = vector.extract_strided_slice %70 {offsets = [0, 2, 0], sizes = [8, 8, 32], strides = [1, 1, 1]} : vector<10x10x32xf32> to vector<8x8x32xf32>
    %74 = vector.extract_strided_slice %70 {offsets = [1, 0, 0], sizes = [8, 8, 32], strides = [1, 1, 1]} : vector<10x10x32xf32> to vector<8x8x32xf32>
    %75 = vector.extract_strided_slice %70 {offsets = [1, 1, 0], sizes = [8, 8, 32], strides = [1, 1, 1]} : vector<10x10x32xf32> to vector<8x8x32xf32>
    %76 = vector.extract_strided_slice %70 {offsets = [1, 2, 0], sizes = [8, 8, 32], strides = [1, 1, 1]} : vector<10x10x32xf32> to vector<8x8x32xf32>
    %77 = vector.extract_strided_slice %70 {offsets = [2, 0, 0], sizes = [8, 8, 32], strides = [1, 1, 1]} : vector<10x10x32xf32> to vector<8x8x32xf32>
    %78 = vector.extract_strided_slice %70 {offsets = [2, 1, 0], sizes = [8, 8, 32], strides = [1, 1, 1]} : vector<10x10x32xf32> to vector<8x8x32xf32>
    %79 = vector.extract_strided_slice %70 {offsets = [2, 2, 0], sizes = [8, 8, 32], strides = [1, 1, 1]} : vector<10x10x32xf32> to vector<8x8x32xf32>
    %80 = tpu.concatenate %71, %72, %73, %74, %75, %76, %77, %78, %79 in 2 : vector<8x8x32xf32>, vector<8x8x32xf32>, vector<8x8x32xf32>, vector<8x8x32xf32>, vector<8x8x32xf32>, vector<8x8x32xf32>, vector<8x8x32xf32>, vector<8x8x32xf32>, vector<8x8x32xf32> -> vector<8x8x288xf32>
    %81 = vector.shape_cast %80 : vector<8x8x288xf32> to vector<64x288xf32>
    %cst_29 = arith.constant 0.000000e+00 : f32
    %82 = vector.broadcast %cst_29 : f32 to vector<8x8x32xf32>
    %83 = arith.maximumf %64, %82 : vector<8x8x32xf32>
    %cst_30 = arith.constant 0.000000e+00 : f32
    %84 = vector.broadcast %cst_30 : f32 to vector<1x8x32xf32>
    %85 = tpu.concatenate %84, %83, %84 in 0 : vector<1x8x32xf32>, vector<8x8x32xf32>, vector<1x8x32xf32> -> vector<10x8x32xf32>
    %cst_31 = arith.constant 0.000000e+00 : f32
    %86 = vector.broadcast %cst_31 : f32 to vector<10x1x32xf32>
    %87 = tpu.concatenate %86, %85, %86 in 1 : vector<10x1x32xf32>, vector<10x8x32xf32>, vector<10x1x32xf32> -> vector<10x10x32xf32>
    %88 = vector.extract_strided_slice %87 {offsets = [0, 0, 0], sizes = [8, 8, 32], strides = [1, 1, 1]} : vector<10x10x32xf32> to vector<8x8x32xf32>
    %89 = vector.extract_strided_slice %87 {offsets = [0, 1, 0], sizes = [8, 8, 32], strides = [1, 1, 1]} : vector<10x10x32xf32> to vector<8x8x32xf32>
    %90 = vector.extract_strided_slice %87 {offsets = [0, 2, 0], sizes = [8, 8, 32], strides = [1, 1, 1]} : vector<10x10x32xf32> to vector<8x8x32xf32>
    %91 = vector.extract_strided_slice %87 {offsets = [1, 0, 0], sizes = [8, 8, 32], strides = [1, 1, 1]} : vector<10x10x32xf32> to vector<8x8x32xf32>
    %92 = vector.extract_strided_slice %87 {offsets = [1, 1, 0], sizes = [8, 8, 32], strides = [1, 1, 1]} : vector<10x10x32xf32> to vector<8x8x32xf32>
    %93 = vector.extract_strided_slice %87 {offsets = [1, 2, 0], sizes = [8, 8, 32], strides = [1, 1, 1]} : vector<10x10x32xf32> to vector<8x8x32xf32>
    %94 = vector.extract_strided_slice %87 {offsets = [2, 0, 0], sizes = [8, 8, 32], strides = [1, 1, 1]} : vector<10x10x32xf32> to vector<8x8x32xf32>
    %95 = vector.extract_strided_slice %87 {offsets = [2, 1, 0], sizes = [8, 8, 32], strides = [1, 1, 1]} : vector<10x10x32xf32> to vector<8x8x32xf32>
    %96 = vector.extract_strided_slice %87 {offsets = [2, 2, 0], sizes = [8, 8, 32], strides = [1, 1, 1]} : vector<10x10x32xf32> to vector<8x8x32xf32>
    %97 = tpu.concatenate %88, %89, %90, %91, %92, %93, %94, %95, %96 in 2 : vector<8x8x32xf32>, vector<8x8x32xf32>, vector<8x8x32xf32>, vector<8x8x32xf32>, vector<8x8x32xf32>, vector<8x8x32xf32>, vector<8x8x32xf32>, vector<8x8x32xf32>, vector<8x8x32xf32> -> vector<8x8x288xf32>
    %98 = vector.shape_cast %97 : vector<8x8x288xf32> to vector<64x288xf32>
    %99 = tpu.concatenate %81, %98 in 0 : vector<64x288xf32>, vector<64x288xf32> -> vector<128x288xf32>
    %100 = arith.truncf %99 : vector<128x288xf32> to vector<128x288xbf16>
    %c1_32 = arith.constant 1 : index
    %c0_33 = arith.constant 0 : index
    %c0_34 = arith.constant 0 : index
    %101 = vector.load %arg2[%c1_32, %c0_33, %c0_34] : memref<2x288x8xbf16, #tpu.memory_space<vmem>>, vector<1x288x8xbf16>
    %102 = vector.shape_cast %101 : vector<1x288x8xbf16> to vector<288x8xbf16>
    %cst_35 = arith.constant dense<0.000000e+00> : vector<128x8xf32>
    %103 = tpu.matmul %100, %102, %cst_35 {dimension_numbers = #tpu.dot_dimension_numbers<[1], [0], [0], [1], [0, 0, 1, 1], [], []>} : vector<128x288xbf16>, vector<288x8xbf16>, vector<128x8xf32> -> vector<128x8xf32>
    %c1_36 = arith.constant 1 : index
    %c0_37 = arith.constant 0 : index
    %c0_38 = arith.constant 0 : index
    %104 = vector.load %arg3[%c1_36, %c0_37, %c0_38] : memref<2x1x8xf32, #tpu.memory_space<vmem>>, vector<1x1x8xf32>
    %105 = vector.shape_cast %104 : vector<1x1x8xf32> to vector<1x8xf32>
    %106 = vector.broadcast %105 : vector<1x8xf32> to vector<128x8xf32>
    %107 = arith.addf %103, %106 : vector<128x8xf32>
    %cst_39 = arith.constant 0.000000e+00 : f32
    %108 = vector.broadcast %cst_39 : f32 to vector<128x8xf32>
    %109 = arith.maximumf %107, %108 : vector<128x8xf32>
    %110 = arith.truncf %109 : vector<128x8xf32> to vector<128x8xbf16>
    %c1_40 = arith.constant 1 : index
    %c0_41 = arith.constant 0 : index
    %c0_42 = arith.constant 0 : index
    %111 = vector.load %arg4[%c1_40, %c0_41, %c0_42] : memref<2x8x32xbf16, #tpu.memory_space<vmem>>, vector<1x8x32xbf16>
    %112 = vector.shape_cast %111 : vector<1x8x32xbf16> to vector<8x32xbf16>
    %cst_43 = arith.constant dense<0.000000e+00> : vector<128x32xf32>
    %113 = tpu.matmul %110, %112, %cst_43 {dimension_numbers = #tpu.dot_dimension_numbers<[1], [0], [0], [1], [0, 0, 1, 1], [], []>} : vector<128x8xbf16>, vector<8x32xbf16>, vector<128x32xf32> -> vector<128x32xf32>
    %c1_44 = arith.constant 1 : index
    %c0_45 = arith.constant 0 : index
    %c0_46 = arith.constant 0 : index
    %114 = vector.load %arg5[%c1_44, %c0_45, %c0_46] : memref<2x1x32xf32, #tpu.memory_space<vmem>>, vector<1x1x32xf32>
    %115 = vector.shape_cast %114 : vector<1x1x32xf32> to vector<1x32xf32>
    %116 = vector.broadcast %115 : vector<1x32xf32> to vector<128x32xf32>
    %117 = arith.addf %113, %116 : vector<128x32xf32>
    %118 = vector.extract_strided_slice %117 {offsets = [0, 0], sizes = [64, 32], strides = [1, 1]} : vector<128x32xf32> to vector<64x32xf32>
    %119 = vector.shape_cast %118 : vector<64x32xf32> to vector<8x8x32xf32>
    %120 = arith.addf %61, %119 : vector<8x8x32xf32>
    %121 = vector.extract_strided_slice %117 {offsets = [64, 0], sizes = [64, 32], strides = [1, 1]} : vector<128x32xf32> to vector<64x32xf32>
    %122 = vector.shape_cast %121 : vector<64x32xf32> to vector<8x8x32xf32>
    %123 = arith.addf %64, %122 : vector<8x8x32xf32>
    %cst_47 = arith.constant 0.000000e+00 : f32
    %124 = vector.broadcast %cst_47 : f32 to vector<8x8x32xf32>
    %125 = arith.maximumf %120, %124 : vector<8x8x32xf32>
    %cst_48 = arith.constant 0.000000e+00 : f32
    %126 = vector.broadcast %cst_48 : f32 to vector<1x8x32xf32>
    %127 = tpu.concatenate %126, %125, %126 in 0 : vector<1x8x32xf32>, vector<8x8x32xf32>, vector<1x8x32xf32> -> vector<10x8x32xf32>
    %cst_49 = arith.constant 0.000000e+00 : f32
    %128 = vector.broadcast %cst_49 : f32 to vector<10x1x32xf32>
    %129 = tpu.concatenate %128, %127, %128 in 1 : vector<10x1x32xf32>, vector<10x8x32xf32>, vector<10x1x32xf32> -> vector<10x10x32xf32>
    %130 = vector.extract_strided_slice %129 {offsets = [0, 0, 0], sizes = [8, 8, 32], strides = [1, 1, 1]} : vector<10x10x32xf32> to vector<8x8x32xf32>
    %131 = vector.extract_strided_slice %129 {offsets = [0, 1, 0], sizes = [8, 8, 32], strides = [1, 1, 1]} : vector<10x10x32xf32> to vector<8x8x32xf32>
    %132 = vector.extract_strided_slice %129 {offsets = [0, 2, 0], sizes = [8, 8, 32], strides = [1, 1, 1]} : vector<10x10x32xf32> to vector<8x8x32xf32>
    %133 = vector.extract_strided_slice %129 {offsets = [1, 0, 0], sizes = [8, 8, 32], strides = [1, 1, 1]} : vector<10x10x32xf32> to vector<8x8x32xf32>
    %134 = vector.extract_strided_slice %129 {offsets = [1, 1, 0], sizes = [8, 8, 32], strides = [1, 1, 1]} : vector<10x10x32xf32> to vector<8x8x32xf32>
    %135 = vector.extract_strided_slice %129 {offsets = [1, 2, 0], sizes = [8, 8, 32], strides = [1, 1, 1]} : vector<10x10x32xf32> to vector<8x8x32xf32>
    %136 = vector.extract_strided_slice %129 {offsets = [2, 0, 0], sizes = [8, 8, 32], strides = [1, 1, 1]} : vector<10x10x32xf32> to vector<8x8x32xf32>
    %137 = vector.extract_strided_slice %129 {offsets = [2, 1, 0], sizes = [8, 8, 32], strides = [1, 1, 1]} : vector<10x10x32xf32> to vector<8x8x32xf32>
    %138 = vector.extract_strided_slice %129 {offsets = [2, 2, 0], sizes = [8, 8, 32], strides = [1, 1, 1]} : vector<10x10x32xf32> to vector<8x8x32xf32>
    %139 = tpu.concatenate %130, %131, %132, %133, %134, %135, %136, %137, %138 in 2 : vector<8x8x32xf32>, vector<8x8x32xf32>, vector<8x8x32xf32>, vector<8x8x32xf32>, vector<8x8x32xf32>, vector<8x8x32xf32>, vector<8x8x32xf32>, vector<8x8x32xf32>, vector<8x8x32xf32> -> vector<8x8x288xf32>
    %140 = vector.shape_cast %139 : vector<8x8x288xf32> to vector<64x288xf32>
    %cst_50 = arith.constant 0.000000e+00 : f32
    %141 = vector.broadcast %cst_50 : f32 to vector<8x8x32xf32>
    %142 = arith.maximumf %123, %141 : vector<8x8x32xf32>
    %cst_51 = arith.constant 0.000000e+00 : f32
    %143 = vector.broadcast %cst_51 : f32 to vector<1x8x32xf32>
    %144 = tpu.concatenate %143, %142, %143 in 0 : vector<1x8x32xf32>, vector<8x8x32xf32>, vector<1x8x32xf32> -> vector<10x8x32xf32>
    %cst_52 = arith.constant 0.000000e+00 : f32
    %145 = vector.broadcast %cst_52 : f32 to vector<10x1x32xf32>
    %146 = tpu.concatenate %145, %144, %145 in 1 : vector<10x1x32xf32>, vector<10x8x32xf32>, vector<10x1x32xf32> -> vector<10x10x32xf32>
    %147 = vector.extract_strided_slice %146 {offsets = [0, 0, 0], sizes = [8, 8, 32], strides = [1, 1, 1]} : vector<10x10x32xf32> to vector<8x8x32xf32>
    %148 = vector.extract_strided_slice %146 {offsets = [0, 1, 0], sizes = [8, 8, 32], strides = [1, 1, 1]} : vector<10x10x32xf32> to vector<8x8x32xf32>
    %149 = vector.extract_strided_slice %146 {offsets = [0, 2, 0], sizes = [8, 8, 32], strides = [1, 1, 1]} : vector<10x10x32xf32> to vector<8x8x32xf32>
    %150 = vector.extract_strided_slice %146 {offsets = [1, 0, 0], sizes = [8, 8, 32], strides = [1, 1, 1]} : vector<10x10x32xf32> to vector<8x8x32xf32>
    %151 = vector.extract_strided_slice %146 {offsets = [1, 1, 0], sizes = [8, 8, 32], strides = [1, 1, 1]} : vector<10x10x32xf32> to vector<8x8x32xf32>
    %152 = vector.extract_strided_slice %146 {offsets = [1, 2, 0], sizes = [8, 8, 32], strides = [1, 1, 1]} : vector<10x10x32xf32> to vector<8x8x32xf32>
    %153 = vector.extract_strided_slice %146 {offsets = [2, 0, 0], sizes = [8, 8, 32], strides = [1, 1, 1]} : vector<10x10x32xf32> to vector<8x8x32xf32>
    %154 = vector.extract_strided_slice %146 {offsets = [2, 1, 0], sizes = [8, 8, 32], strides = [1, 1, 1]} : vector<10x10x32xf32> to vector<8x8x32xf32>
    %155 = vector.extract_strided_slice %146 {offsets = [2, 2, 0], sizes = [8, 8, 32], strides = [1, 1, 1]} : vector<10x10x32xf32> to vector<8x8x32xf32>
    %156 = tpu.concatenate %147, %148, %149, %150, %151, %152, %153, %154, %155 in 2 : vector<8x8x32xf32>, vector<8x8x32xf32>, vector<8x8x32xf32>, vector<8x8x32xf32>, vector<8x8x32xf32>, vector<8x8x32xf32>, vector<8x8x32xf32>, vector<8x8x32xf32>, vector<8x8x32xf32> -> vector<8x8x288xf32>
    %157 = vector.shape_cast %156 : vector<8x8x288xf32> to vector<64x288xf32>
    %158 = tpu.concatenate %140, %157 in 0 : vector<64x288xf32>, vector<64x288xf32> -> vector<128x288xf32>
    %159 = arith.truncf %158 : vector<128x288xf32> to vector<128x288xbf16>
    %c0_53 = arith.constant 0 : index
    %c0_54 = arith.constant 0 : index
    %160 = vector.load %arg6[%c0_53, %c0_54] : memref<288x32xbf16, #tpu.memory_space<vmem>>, vector<288x32xbf16>
    %cst_55 = arith.constant dense<0.000000e+00> : vector<128x32xf32>
    %161 = tpu.matmul %159, %160, %cst_55 {dimension_numbers = #tpu.dot_dimension_numbers<[1], [0], [0], [1], [0, 0, 1, 1], [], []>} : vector<128x288xbf16>, vector<288x32xbf16>, vector<128x32xf32> -> vector<128x32xf32>
    %c0_56 = arith.constant 0 : index
    %c0_57 = arith.constant 0 : index
    %162 = vector.load %arg7[%c0_56, %c0_57] : memref<1x32xf32, #tpu.memory_space<vmem>>, vector<1x32xf32>
    %163 = vector.broadcast %162 : vector<1x32xf32> to vector<128x32xf32>
    %164 = arith.addf %161, %163 : vector<128x32xf32>
    %165 = vector.extract_strided_slice %164 {offsets = [0, 0], sizes = [64, 32], strides = [1, 1]} : vector<128x32xf32> to vector<64x32xf32>
    %166 = arith.truncf %165 : vector<64x32xf32> to vector<64x32xbf16>
    %c0_58 = arith.constant 0 : index
    %c0_59 = arith.constant 0 : index
    %c0_60 = arith.constant 0 : index
    %167 = vector.load %arg8[%c0_58, %c0_59, %c0_60] : memref<2x64x32xbf16, #tpu.memory_space<vmem>>, vector<1x64x32xbf16>
    %168 = vector.shape_cast %167 : vector<1x64x32xbf16> to vector<64x32xbf16>
    %169 = vector.shape_cast %166 : vector<64x32xbf16> to vector<1x64x32xbf16>
    tpu.vector_store %arg8[%c0_58, %c0_59, %c0_60], %169 {strides = array<i32>} : memref<2x64x32xbf16, #tpu.memory_space<vmem>>, vector<1x64x32xbf16>,
    %170 = vector.extract_strided_slice %164 {offsets = [64, 0], sizes = [64, 32], strides = [1, 1]} : vector<128x32xf32> to vector<64x32xf32>
    %171 = arith.truncf %170 : vector<64x32xf32> to vector<64x32xbf16>
    %c1_61 = arith.constant 1 : index
    %c0_62 = arith.constant 0 : index
    %c0_63 = arith.constant 0 : index
    %172 = vector.load %arg8[%c1_61, %c0_62, %c0_63] : memref<2x64x32xbf16, #tpu.memory_space<vmem>>, vector<1x64x32xbf16>
    %173 = vector.shape_cast %172 : vector<1x64x32xbf16> to vector<64x32xbf16>
    %174 = vector.shape_cast %171 : vector<64x32xbf16> to vector<1x64x32xbf16>
    tpu.vector_store %arg8[%c1_61, %c0_62, %c0_63], %174 {strides = array<i32>} : memref<2x64x32xbf16, #tpu.memory_space<vmem>>, vector<1x64x32xbf16>,
    return
  }
  func.func @transform_0(%arg0: i32) -> (i32, i32, i32, i32) {
    %c0_i32 = arith.constant 0 : i32
    %c0_i32_0 = arith.constant 0 : i32
    %c0_i32_1 = arith.constant 0 : i32
    %c0_i32_2 = arith.constant 0 : i32
    return %arg0, %c0_i32, %c0_i32_0, %c0_i32_1 : i32, i32, i32, i32
  }
  func.func @transform_1(%arg0: i32) -> (i32, i32, i32) {
    %c0_i32 = arith.constant 0 : i32
    %c0_i32_0 = arith.constant 0 : i32
    %c0_i32_1 = arith.constant 0 : i32
    %c0_i32_2 = arith.constant 0 : i32
    return %c0_i32, %c0_i32_0, %c0_i32_1 : i32, i32, i32
  }
  func.func @transform_2(%arg0: i32) -> (i32, i32, i32) {
    %c0_i32 = arith.constant 0 : i32
    %c0_i32_0 = arith.constant 0 : i32
    %c0_i32_1 = arith.constant 0 : i32
    %c0_i32_2 = arith.constant 0 : i32
    return %c0_i32, %c0_i32_0, %c0_i32_1 : i32, i32, i32
  }
  func.func @transform_3(%arg0: i32) -> (i32, i32, i32) {
    %c0_i32 = arith.constant 0 : i32
    %c0_i32_0 = arith.constant 0 : i32
    %c0_i32_1 = arith.constant 0 : i32
    %c0_i32_2 = arith.constant 0 : i32
    return %c0_i32, %c0_i32_0, %c0_i32_1 : i32, i32, i32
  }
  func.func @transform_4(%arg0: i32) -> (i32, i32, i32) {
    %c0_i32 = arith.constant 0 : i32
    %c0_i32_0 = arith.constant 0 : i32
    %c0_i32_1 = arith.constant 0 : i32
    %c0_i32_2 = arith.constant 0 : i32
    return %c0_i32, %c0_i32_0, %c0_i32_1 : i32, i32, i32
  }
  func.func @transform_5(%arg0: i32) -> (i32, i32) {
    %c0_i32 = arith.constant 0 : i32
    %c0_i32_0 = arith.constant 0 : i32
    %c0_i32_1 = arith.constant 0 : i32
    return %c0_i32, %c0_i32_0 : i32, i32
  }
  func.func @transform_6(%arg0: i32) -> (i32, i32) {
    %c0_i32 = arith.constant 0 : i32
    %c0_i32_0 = arith.constant 0 : i32
    %c0_i32_1 = arith.constant 0 : i32
    return %c0_i32, %c0_i32_0 : i32, i32
  }
  func.func @transform_7(%arg0: i32) -> (i32, i32, i32) {
    %c0_i32 = arith.constant 0 : i32
    %c0_i32_0 = arith.constant 0 : i32
    %c0_i32_1 = arith.constant 0 : i32
    return %arg0, %c0_i32, %c0_i32_0 : i32, i32, i32
  }
}

module attributes {stable_mosaic.version = 11 : i64} {
  func.func @kernel(%arg0: i32, %arg1: i32, %arg2: memref<2x8x8x32xbf16, #tpu.memory_space<vmem>>, %arg3: memref<288x64xbf16, #tpu.memory_space<vmem>>, %arg4: memref<1x64xf32, #tpu.memory_space<vmem>>, %arg5: memref<2x64x64xbf16, #tpu.memory_space<vmem>>) attributes {dimension_semantics = [#tpu.dimension_semantics<parallel>, #tpu.dimension_semantics<parallel>], iteration_bounds = array<i64: 1, 1>, scalar_prefetch = 0 : i64, scratch_operands = 0 : i64, tpu.core_type = #tpu.core_type<tc>, window_params = [{transform_indices = @transform_0, window_bounds = array<i64: 2, 8, 8, 32>}, {pipeline_mode = #tpu.pipeline_mode<synchronous>, transform_indices = @transform_1, window_bounds = array<i64: 288, 64>}, {pipeline_mode = #tpu.pipeline_mode<synchronous>, transform_indices = @transform_2, window_bounds = array<i64: 1, 64>}, {transform_indices = @transform_3, window_bounds = array<i64: 2, 64, 64>}]} {
    %c0 = arith.constant 0 : index
    %c0_0 = arith.constant 0 : index
    %c0_1 = arith.constant 0 : index
    %c0_2 = arith.constant 0 : index
    %0 = vector.load %arg2[%c0, %c0_0, %c0_1, %c0_2] : memref<2x8x8x32xbf16, #tpu.memory_space<vmem>>, vector<1x8x8x32xbf16>
    %1 = vector.shape_cast %0 : vector<1x8x8x32xbf16> to vector<8x8x32xbf16>
    %2 = arith.extf %1 : vector<8x8x32xbf16> to vector<8x8x32xf32>
    %cst = arith.constant 0.000000e+00 : f32
    %3 = vector.broadcast %cst : f32 to vector<1x8x32xf32>
    %4 = tpu.concatenate %3, %2, %3 in 0 : vector<1x8x32xf32>, vector<8x8x32xf32>, vector<1x8x32xf32> -> vector<10x8x32xf32>
    %cst_3 = arith.constant 0.000000e+00 : f32
    %5 = vector.broadcast %cst_3 : f32 to vector<10x1x32xf32>
    %6 = tpu.concatenate %5, %4, %5 in 1 : vector<10x1x32xf32>, vector<10x8x32xf32>, vector<10x1x32xf32> -> vector<10x10x32xf32>
    %cst_4 = arith.constant 0.000000e+00 : f32
    %7 = vector.broadcast %cst_4 : f32 to vector<10x10x32xf32>
    %8 = arith.maximumf %6, %7 : vector<10x10x32xf32>
    %9 = vector.extract_strided_slice %8 {offsets = [0, 0, 0], sizes = [8, 8, 32], strides = [1, 1, 1]} : vector<10x10x32xf32> to vector<8x8x32xf32>
    %10 = vector.extract_strided_slice %8 {offsets = [0, 1, 0], sizes = [8, 8, 32], strides = [1, 1, 1]} : vector<10x10x32xf32> to vector<8x8x32xf32>
    %11 = vector.extract_strided_slice %8 {offsets = [0, 2, 0], sizes = [8, 8, 32], strides = [1, 1, 1]} : vector<10x10x32xf32> to vector<8x8x32xf32>
    %12 = vector.extract_strided_slice %8 {offsets = [1, 0, 0], sizes = [8, 8, 32], strides = [1, 1, 1]} : vector<10x10x32xf32> to vector<8x8x32xf32>
    %13 = vector.extract_strided_slice %8 {offsets = [1, 1, 0], sizes = [8, 8, 32], strides = [1, 1, 1]} : vector<10x10x32xf32> to vector<8x8x32xf32>
    %14 = vector.extract_strided_slice %8 {offsets = [1, 2, 0], sizes = [8, 8, 32], strides = [1, 1, 1]} : vector<10x10x32xf32> to vector<8x8x32xf32>
    %15 = vector.extract_strided_slice %8 {offsets = [2, 0, 0], sizes = [8, 8, 32], strides = [1, 1, 1]} : vector<10x10x32xf32> to vector<8x8x32xf32>
    %16 = vector.extract_strided_slice %8 {offsets = [2, 1, 0], sizes = [8, 8, 32], strides = [1, 1, 1]} : vector<10x10x32xf32> to vector<8x8x32xf32>
    %17 = vector.extract_strided_slice %8 {offsets = [2, 2, 0], sizes = [8, 8, 32], strides = [1, 1, 1]} : vector<10x10x32xf32> to vector<8x8x32xf32>
    %18 = tpu.concatenate %9, %10, %11, %12, %13, %14, %15, %16, %17 in 2 : vector<8x8x32xf32>, vector<8x8x32xf32>, vector<8x8x32xf32>, vector<8x8x32xf32>, vector<8x8x32xf32>, vector<8x8x32xf32>, vector<8x8x32xf32>, vector<8x8x32xf32>, vector<8x8x32xf32> -> vector<8x8x288xf32>
    %19 = vector.shape_cast %18 : vector<8x8x288xf32> to vector<64x288xf32>
    %c1 = arith.constant 1 : index
    %c0_5 = arith.constant 0 : index
    %c0_6 = arith.constant 0 : index
    %c0_7 = arith.constant 0 : index
    %20 = vector.load %arg2[%c1, %c0_5, %c0_6, %c0_7] : memref<2x8x8x32xbf16, #tpu.memory_space<vmem>>, vector<1x8x8x32xbf16>
    %21 = vector.shape_cast %20 : vector<1x8x8x32xbf16> to vector<8x8x32xbf16>
    %22 = arith.extf %21 : vector<8x8x32xbf16> to vector<8x8x32xf32>
    %cst_8 = arith.constant 0.000000e+00 : f32
    %23 = vector.broadcast %cst_8 : f32 to vector<1x8x32xf32>
    %24 = tpu.concatenate %23, %22, %23 in 0 : vector<1x8x32xf32>, vector<8x8x32xf32>, vector<1x8x32xf32> -> vector<10x8x32xf32>
    %cst_9 = arith.constant 0.000000e+00 : f32
    %25 = vector.broadcast %cst_9 : f32 to vector<10x1x32xf32>
    %26 = tpu.concatenate %25, %24, %25 in 1 : vector<10x1x32xf32>, vector<10x8x32xf32>, vector<10x1x32xf32> -> vector<10x10x32xf32>
    %cst_10 = arith.constant 0.000000e+00 : f32
    %27 = vector.broadcast %cst_10 : f32 to vector<10x10x32xf32>
    %28 = arith.maximumf %26, %27 : vector<10x10x32xf32>
    %29 = vector.extract_strided_slice %28 {offsets = [0, 0, 0], sizes = [8, 8, 32], strides = [1, 1, 1]} : vector<10x10x32xf32> to vector<8x8x32xf32>
    %30 = vector.extract_strided_slice %28 {offsets = [0, 1, 0], sizes = [8, 8, 32], strides = [1, 1, 1]} : vector<10x10x32xf32> to vector<8x8x32xf32>
    %31 = vector.extract_strided_slice %28 {offsets = [0, 2, 0], sizes = [8, 8, 32], strides = [1, 1, 1]} : vector<10x10x32xf32> to vector<8x8x32xf32>
    %32 = vector.extract_strided_slice %28 {offsets = [1, 0, 0], sizes = [8, 8, 32], strides = [1, 1, 1]} : vector<10x10x32xf32> to vector<8x8x32xf32>
    %33 = vector.extract_strided_slice %28 {offsets = [1, 1, 0], sizes = [8, 8, 32], strides = [1, 1, 1]} : vector<10x10x32xf32> to vector<8x8x32xf32>
    %34 = vector.extract_strided_slice %28 {offsets = [1, 2, 0], sizes = [8, 8, 32], strides = [1, 1, 1]} : vector<10x10x32xf32> to vector<8x8x32xf32>
    %35 = vector.extract_strided_slice %28 {offsets = [2, 0, 0], sizes = [8, 8, 32], strides = [1, 1, 1]} : vector<10x10x32xf32> to vector<8x8x32xf32>
    %36 = vector.extract_strided_slice %28 {offsets = [2, 1, 0], sizes = [8, 8, 32], strides = [1, 1, 1]} : vector<10x10x32xf32> to vector<8x8x32xf32>
    %37 = vector.extract_strided_slice %28 {offsets = [2, 2, 0], sizes = [8, 8, 32], strides = [1, 1, 1]} : vector<10x10x32xf32> to vector<8x8x32xf32>
    %38 = tpu.concatenate %29, %30, %31, %32, %33, %34, %35, %36, %37 in 2 : vector<8x8x32xf32>, vector<8x8x32xf32>, vector<8x8x32xf32>, vector<8x8x32xf32>, vector<8x8x32xf32>, vector<8x8x32xf32>, vector<8x8x32xf32>, vector<8x8x32xf32>, vector<8x8x32xf32> -> vector<8x8x288xf32>
    %39 = vector.shape_cast %38 : vector<8x8x288xf32> to vector<64x288xf32>
    %40 = tpu.concatenate %19, %39 in 0 : vector<64x288xf32>, vector<64x288xf32> -> vector<128x288xf32>
    %41 = arith.truncf %40 : vector<128x288xf32> to vector<128x288xbf16>
    %c0_11 = arith.constant 0 : index
    %c0_12 = arith.constant 0 : index
    %42 = vector.load %arg4[%c0_11, %c0_12] : memref<1x64xf32, #tpu.memory_space<vmem>>, vector<1x64xf32>
    %c0_13 = arith.constant 0 : index
    %c0_14 = arith.constant 0 : index
    %43 = vector.load %arg3[%c0_13, %c0_14] : memref<288x64xbf16, #tpu.memory_space<vmem>>, vector<288x64xbf16>
    %cst_15 = arith.constant dense<0.000000e+00> : vector<128x64xf32>
    %44 = tpu.matmul %41, %43, %cst_15 {dimension_numbers = #tpu.dot_dimension_numbers<[1], [0], [0], [1], [0, 0, 1, 1], [], []>} : vector<128x288xbf16>, vector<288x64xbf16>, vector<128x64xf32> -> vector<128x64xf32>
    %45 = vector.broadcast %42 : vector<1x64xf32> to vector<128x64xf32>
    %46 = arith.addf %44, %45 : vector<128x64xf32>
    %47 = vector.extract_strided_slice %46 {offsets = [0, 0], sizes = [64, 64], strides = [1, 1]} : vector<128x64xf32> to vector<64x64xf32>
    %48 = arith.truncf %47 : vector<64x64xf32> to vector<64x64xbf16>
    %c0_16 = arith.constant 0 : index
    %c0_17 = arith.constant 0 : index
    %c0_18 = arith.constant 0 : index
    %49 = vector.load %arg5[%c0_16, %c0_17, %c0_18] : memref<2x64x64xbf16, #tpu.memory_space<vmem>>, vector<1x64x64xbf16>
    %50 = vector.shape_cast %49 : vector<1x64x64xbf16> to vector<64x64xbf16>
    %51 = vector.shape_cast %48 : vector<64x64xbf16> to vector<1x64x64xbf16>
    tpu.vector_store %arg5[%c0_16, %c0_17, %c0_18], %51 {strides = array<i32>} : memref<2x64x64xbf16, #tpu.memory_space<vmem>>, vector<1x64x64xbf16>,
    %52 = vector.extract_strided_slice %46 {offsets = [64, 0], sizes = [64, 64], strides = [1, 1]} : vector<128x64xf32> to vector<64x64xf32>
    %53 = arith.truncf %52 : vector<64x64xf32> to vector<64x64xbf16>
    %c1_19 = arith.constant 1 : index
    %c0_20 = arith.constant 0 : index
    %c0_21 = arith.constant 0 : index
    %54 = vector.load %arg5[%c1_19, %c0_20, %c0_21] : memref<2x64x64xbf16, #tpu.memory_space<vmem>>, vector<1x64x64xbf16>
    %55 = vector.shape_cast %54 : vector<1x64x64xbf16> to vector<64x64xbf16>
    %56 = vector.shape_cast %53 : vector<64x64xbf16> to vector<1x64x64xbf16>
    tpu.vector_store %arg5[%c1_19, %c0_20, %c0_21], %56 {strides = array<i32>} : memref<2x64x64xbf16, #tpu.memory_space<vmem>>, vector<1x64x64xbf16>,
    return
  }
  func.func @transform_0(%arg0: i32, %arg1: i32) -> (i32, i32, i32, i32) {
    %c0_i32 = arith.constant 0 : i32
    %c0_i32_0 = arith.constant 0 : i32
    %c0_i32_1 = arith.constant 0 : i32
    %c0_i32_2 = arith.constant 0 : i32
    return %arg0, %c0_i32, %c0_i32_0, %c0_i32_1 : i32, i32, i32, i32
  }
  func.func @transform_1(%arg0: i32, %arg1: i32) -> (i32, i32) {
    %c0_i32 = arith.constant 0 : i32
    %c0_i32_0 = arith.constant 0 : i32
    %c0_i32_1 = arith.constant 0 : i32
    return %c0_i32, %c0_i32_0 : i32, i32
  }
  func.func @transform_2(%arg0: i32, %arg1: i32) -> (i32, i32) {
    %c0_i32 = arith.constant 0 : i32
    %c0_i32_0 = arith.constant 0 : i32
    %c0_i32_1 = arith.constant 0 : i32
    return %c0_i32, %c0_i32_0 : i32, i32
  }
  func.func @transform_3(%arg0: i32, %arg1: i32) -> (i32, i32, i32) {
    %c0_i32 = arith.constant 0 : i32
    %c0_i32_0 = arith.constant 0 : i32
    return %arg0, %arg1, %c0_i32 : i32, i32, i32
  }
}

module attributes {stable_mosaic.version = 11 : i64} {
  func.func @kernel(%arg0: i32, %arg1: i32, %arg2: memref<2x16x16x16xbf16, #tpu.memory_space<vmem>>, %arg3: memref<12x144xbf16, #tpu.memory_space<vmem>>, %arg4: memref<12x1xf32, #tpu.memory_space<vmem>>, %arg5: memref<2x12x256xf32, #tpu.memory_space<vmem>>) attributes {dimension_semantics = [#tpu.dimension_semantics<parallel>, #tpu.dimension_semantics<parallel>], iteration_bounds = array<i64: 1, 1>, scalar_prefetch = 0 : i64, scratch_operands = 0 : i64, tpu.core_type = #tpu.core_type<tc>, window_params = [{transform_indices = @transform_0, window_bounds = array<i64: 2, 16, 16, 16>}, {pipeline_mode = #tpu.pipeline_mode<synchronous>, transform_indices = @transform_1, window_bounds = array<i64: 12, 144>}, {pipeline_mode = #tpu.pipeline_mode<synchronous>, transform_indices = @transform_2, window_bounds = array<i64: 12, 1>}, {transform_indices = @transform_3, window_bounds = array<i64: 2, 12, 256>}]} {
    %c0 = arith.constant 0 : index
    %c0_0 = arith.constant 0 : index
    %c0_1 = arith.constant 0 : index
    %c0_2 = arith.constant 0 : index
    %0 = vector.load %arg2[%c0, %c0_0, %c0_1, %c0_2] : memref<2x16x16x16xbf16, #tpu.memory_space<vmem>>, vector<1x16x16x16xbf16>
    %1 = vector.shape_cast %0 : vector<1x16x16x16xbf16> to vector<16x16x16xbf16>
    %2 = arith.extf %1 : vector<16x16x16xbf16> to vector<16x16x16xf32>
    %cst = arith.constant 0.000000e+00 : f32
    %3 = vector.broadcast %cst : f32 to vector<1x16x16xf32>
    %4 = tpu.concatenate %3, %2, %3 in 0 : vector<1x16x16xf32>, vector<16x16x16xf32>, vector<1x16x16xf32> -> vector<18x16x16xf32>
    %cst_3 = arith.constant 0.000000e+00 : f32
    %5 = vector.broadcast %cst_3 : f32 to vector<18x1x16xf32>
    %6 = tpu.concatenate %5, %4, %5 in 1 : vector<18x1x16xf32>, vector<18x16x16xf32>, vector<18x1x16xf32> -> vector<18x18x16xf32>
    %cst_4 = arith.constant 0.000000e+00 : f32
    %7 = vector.broadcast %cst_4 : f32 to vector<18x18x16xf32>
    %8 = arith.maximumf %6, %7 : vector<18x18x16xf32>
    %9 = vector.extract_strided_slice %8 {offsets = [0, 0, 0], sizes = [16, 16, 16], strides = [1, 1, 1]} : vector<18x18x16xf32> to vector<16x16x16xf32>
    %10 = vector.extract_strided_slice %8 {offsets = [0, 1, 0], sizes = [16, 16, 16], strides = [1, 1, 1]} : vector<18x18x16xf32> to vector<16x16x16xf32>
    %11 = vector.extract_strided_slice %8 {offsets = [0, 2, 0], sizes = [16, 16, 16], strides = [1, 1, 1]} : vector<18x18x16xf32> to vector<16x16x16xf32>
    %12 = vector.extract_strided_slice %8 {offsets = [1, 0, 0], sizes = [16, 16, 16], strides = [1, 1, 1]} : vector<18x18x16xf32> to vector<16x16x16xf32>
    %13 = vector.extract_strided_slice %8 {offsets = [1, 1, 0], sizes = [16, 16, 16], strides = [1, 1, 1]} : vector<18x18x16xf32> to vector<16x16x16xf32>
    %14 = vector.extract_strided_slice %8 {offsets = [1, 2, 0], sizes = [16, 16, 16], strides = [1, 1, 1]} : vector<18x18x16xf32> to vector<16x16x16xf32>
    %15 = vector.extract_strided_slice %8 {offsets = [2, 0, 0], sizes = [16, 16, 16], strides = [1, 1, 1]} : vector<18x18x16xf32> to vector<16x16x16xf32>
    %16 = vector.extract_strided_slice %8 {offsets = [2, 1, 0], sizes = [16, 16, 16], strides = [1, 1, 1]} : vector<18x18x16xf32> to vector<16x16x16xf32>
    %17 = vector.extract_strided_slice %8 {offsets = [2, 2, 0], sizes = [16, 16, 16], strides = [1, 1, 1]} : vector<18x18x16xf32> to vector<16x16x16xf32>
    %18 = tpu.concatenate %9, %10, %11, %12, %13, %14, %15, %16, %17 in 2 : vector<16x16x16xf32>, vector<16x16x16xf32>, vector<16x16x16xf32>, vector<16x16x16xf32>, vector<16x16x16xf32>, vector<16x16x16xf32>, vector<16x16x16xf32>, vector<16x16x16xf32>, vector<16x16x16xf32> -> vector<16x16x144xf32>
    %19 = vector.shape_cast %18 : vector<16x16x144xf32> to vector<256x144xf32>
    %c1 = arith.constant 1 : index
    %c0_5 = arith.constant 0 : index
    %c0_6 = arith.constant 0 : index
    %c0_7 = arith.constant 0 : index
    %20 = vector.load %arg2[%c1, %c0_5, %c0_6, %c0_7] : memref<2x16x16x16xbf16, #tpu.memory_space<vmem>>, vector<1x16x16x16xbf16>
    %21 = vector.shape_cast %20 : vector<1x16x16x16xbf16> to vector<16x16x16xbf16>
    %22 = arith.extf %21 : vector<16x16x16xbf16> to vector<16x16x16xf32>
    %cst_8 = arith.constant 0.000000e+00 : f32
    %23 = vector.broadcast %cst_8 : f32 to vector<1x16x16xf32>
    %24 = tpu.concatenate %23, %22, %23 in 0 : vector<1x16x16xf32>, vector<16x16x16xf32>, vector<1x16x16xf32> -> vector<18x16x16xf32>
    %cst_9 = arith.constant 0.000000e+00 : f32
    %25 = vector.broadcast %cst_9 : f32 to vector<18x1x16xf32>
    %26 = tpu.concatenate %25, %24, %25 in 1 : vector<18x1x16xf32>, vector<18x16x16xf32>, vector<18x1x16xf32> -> vector<18x18x16xf32>
    %cst_10 = arith.constant 0.000000e+00 : f32
    %27 = vector.broadcast %cst_10 : f32 to vector<18x18x16xf32>
    %28 = arith.maximumf %26, %27 : vector<18x18x16xf32>
    %29 = vector.extract_strided_slice %28 {offsets = [0, 0, 0], sizes = [16, 16, 16], strides = [1, 1, 1]} : vector<18x18x16xf32> to vector<16x16x16xf32>
    %30 = vector.extract_strided_slice %28 {offsets = [0, 1, 0], sizes = [16, 16, 16], strides = [1, 1, 1]} : vector<18x18x16xf32> to vector<16x16x16xf32>
    %31 = vector.extract_strided_slice %28 {offsets = [0, 2, 0], sizes = [16, 16, 16], strides = [1, 1, 1]} : vector<18x18x16xf32> to vector<16x16x16xf32>
    %32 = vector.extract_strided_slice %28 {offsets = [1, 0, 0], sizes = [16, 16, 16], strides = [1, 1, 1]} : vector<18x18x16xf32> to vector<16x16x16xf32>
    %33 = vector.extract_strided_slice %28 {offsets = [1, 1, 0], sizes = [16, 16, 16], strides = [1, 1, 1]} : vector<18x18x16xf32> to vector<16x16x16xf32>
    %34 = vector.extract_strided_slice %28 {offsets = [1, 2, 0], sizes = [16, 16, 16], strides = [1, 1, 1]} : vector<18x18x16xf32> to vector<16x16x16xf32>
    %35 = vector.extract_strided_slice %28 {offsets = [2, 0, 0], sizes = [16, 16, 16], strides = [1, 1, 1]} : vector<18x18x16xf32> to vector<16x16x16xf32>
    %36 = vector.extract_strided_slice %28 {offsets = [2, 1, 0], sizes = [16, 16, 16], strides = [1, 1, 1]} : vector<18x18x16xf32> to vector<16x16x16xf32>
    %37 = vector.extract_strided_slice %28 {offsets = [2, 2, 0], sizes = [16, 16, 16], strides = [1, 1, 1]} : vector<18x18x16xf32> to vector<16x16x16xf32>
    %38 = tpu.concatenate %29, %30, %31, %32, %33, %34, %35, %36, %37 in 2 : vector<16x16x16xf32>, vector<16x16x16xf32>, vector<16x16x16xf32>, vector<16x16x16xf32>, vector<16x16x16xf32>, vector<16x16x16xf32>, vector<16x16x16xf32>, vector<16x16x16xf32>, vector<16x16x16xf32> -> vector<16x16x144xf32>
    %39 = vector.shape_cast %38 : vector<16x16x144xf32> to vector<256x144xf32>
    %40 = tpu.concatenate %19, %39 in 0 : vector<256x144xf32>, vector<256x144xf32> -> vector<512x144xf32>
    %41 = arith.truncf %40 : vector<512x144xf32> to vector<512x144xbf16>
    %c0_11 = arith.constant 0 : index
    %c0_12 = arith.constant 0 : index
    %42 = vector.load %arg4[%c0_11, %c0_12] : memref<12x1xf32, #tpu.memory_space<vmem>>, vector<12x1xf32>
    %c0_13 = arith.constant 0 : index
    %c0_14 = arith.constant 0 : index
    %43 = vector.load %arg3[%c0_13, %c0_14] : memref<12x144xbf16, #tpu.memory_space<vmem>>, vector<12x144xbf16>
    %cst_15 = arith.constant dense<0.000000e+00> : vector<12x512xf32>
    %44 = tpu.matmul %43, %41, %cst_15 {dimension_numbers = #tpu.dot_dimension_numbers<[1], [1], [0], [0], [0, 0, 1, 0], [], []>} : vector<12x144xbf16>, vector<512x144xbf16>, vector<12x512xf32> -> vector<12x512xf32>
    %45 = vector.broadcast %42 : vector<12x1xf32> to vector<12x512xf32>
    %46 = arith.addf %44, %45 : vector<12x512xf32>
    %47 = vector.extract_strided_slice %46 {offsets = [0, 0], sizes = [12, 256], strides = [1, 1]} : vector<12x512xf32> to vector<12x256xf32>
    %c0_16 = arith.constant 0 : index
    %c0_17 = arith.constant 0 : index
    %c0_18 = arith.constant 0 : index
    %48 = vector.load %arg5[%c0_16, %c0_17, %c0_18] : memref<2x12x256xf32, #tpu.memory_space<vmem>>, vector<1x12x256xf32>
    %49 = vector.shape_cast %48 : vector<1x12x256xf32> to vector<12x256xf32>
    %50 = vector.shape_cast %47 : vector<12x256xf32> to vector<1x12x256xf32>
    tpu.vector_store %arg5[%c0_16, %c0_17, %c0_18], %50 {strides = array<i32>} : memref<2x12x256xf32, #tpu.memory_space<vmem>>, vector<1x12x256xf32>,
    %51 = vector.extract_strided_slice %46 {offsets = [0, 256], sizes = [12, 256], strides = [1, 1]} : vector<12x512xf32> to vector<12x256xf32>
    %c1_19 = arith.constant 1 : index
    %c0_20 = arith.constant 0 : index
    %c0_21 = arith.constant 0 : index
    %52 = vector.load %arg5[%c1_19, %c0_20, %c0_21] : memref<2x12x256xf32, #tpu.memory_space<vmem>>, vector<1x12x256xf32>
    %53 = vector.shape_cast %52 : vector<1x12x256xf32> to vector<12x256xf32>
    %54 = vector.shape_cast %51 : vector<12x256xf32> to vector<1x12x256xf32>
    tpu.vector_store %arg5[%c1_19, %c0_20, %c0_21], %54 {strides = array<i32>} : memref<2x12x256xf32, #tpu.memory_space<vmem>>, vector<1x12x256xf32>,
    return
  }
  func.func @transform_0(%arg0: i32, %arg1: i32) -> (i32, i32, i32, i32) {
    %c0_i32 = arith.constant 0 : i32
    %c0_i32_0 = arith.constant 0 : i32
    %c0_i32_1 = arith.constant 0 : i32
    %c0_i32_2 = arith.constant 0 : i32
    return %arg0, %c0_i32, %c0_i32_0, %c0_i32_1 : i32, i32, i32, i32
  }
  func.func @transform_1(%arg0: i32, %arg1: i32) -> (i32, i32) {
    %c0_i32 = arith.constant 0 : i32
    %c0_i32_0 = arith.constant 0 : i32
    %c0_i32_1 = arith.constant 0 : i32
    return %c0_i32, %c0_i32_0 : i32, i32
  }
  func.func @transform_2(%arg0: i32, %arg1: i32) -> (i32, i32) {
    %c0_i32 = arith.constant 0 : i32
    %c0_i32_0 = arith.constant 0 : i32
    %c0_i32_1 = arith.constant 0 : i32
    return %c0_i32, %c0_i32_0 : i32, i32
  }
  func.func @transform_3(%arg0: i32, %arg1: i32) -> (i32, i32, i32) {
    %c0_i32 = arith.constant 0 : i32
    %c0_i32_0 = arith.constant 0 : i32
    return %arg0, %c0_i32, %arg1 : i32, i32, i32
  }
}

</mosaic_0001>

<llo_original>
// kernel: tile.8
$region0: #{tile.8}
  #allocation2 [shape = 's32[1]{0}', space=sflag, size = 0x4, scoped, tag = 'scoped memory for tile.8']
  %s0 = inlined_call_operand.hbm [shape: f32[16], index: 0, kind: input, shape index: {}]
  %s1 = inlined_call_operand.vmem [shape: f32[4,16], index: 1, kind: output, shape index: {}]
  $region1: #{tile.8} parent=0
    #allocation0 [shape = 'u8[512]{0}', space=vmem, size = 0x400, scoped, tag = 'operand span for operand 0']
    #allocation1 [shape = 's32[1]{0}', space=sflag, size = 0x4, scoped, tag = 'scoped memory for tile.8']
    %2 = vsyncpa [#allocation1], 0
    // Predicated region
    $region2: #{tile.8} parent=1 // pred_check
      _
    $region3: #{tile.8} parent=1 // pred_check_branch
      %4 = sbr.rel (0) target = $region5
    $region4: #{tile.8} parent=1 // pred_region
      %s6 = ssub.s32 16, 16
      %7 = vsyncadd [#allocation1], %s6
      %s9 = sshll.u32 [#allocation0], 4
      %s10 = int_to_ptr.vmem [resolvable:$true] %s9
      %12 = dma.hbm_to_vmem [thread:$0]  %s0, 16, %s10, [#allocation1]
    $region5: #{tile.8} parent=1 // pred_fallthru
      _
    // Predicated region
    $region6: #{tile.8} parent=1 // pred_check
      _
    $region7: #{tile.8} parent=1 // pred_check_branch
      %14 = sbr.rel (0) target = $region9
    $region8: #{tile.8} parent=1 // pred_region
      %15 = dma.done [#allocation1], 16
    $region9: #{tile.8} parent=1 // pred_fallthru
      _
    %v16 = vld [vmem:[#allocation0] ss:$0 sm:$0xff]
    %17 = vst [vmem:[%s1] sm:$0xf] %v16
    %18 = vsyncpa [#allocation1], 1

// kernel: tile.9
$region0: #{tile.9}
  %s0 = inlined_call_operand.vmem [shape: f32[4,16], index: 0, kind: input, shape index: {}]
  %s1 = inlined_call_operand.vmem [shape: f32[1,64], index: 1, kind: output, shape index: {}]
  $region1: #{tile.9} parent=0
    #allocation0 [shape = 'u8[4096]{0}', space=vmem, size = 0x1000, scoped, tag = 'scoped mem for output reshape']
    #allocation1 [shape = 'u8[4096]{0}', space=vmem, size = 0x1000, scoped, tag = 'scoped mem for input reshape']
    %s3 = sshllo.u32 0, 4
    %v4 = vld [vmem:[%s0] sm:%s3]
    %5 = vst [vmem:[#allocation1] sm:%s3] %v4
    %v6 = vld [vmem:[#allocation1] sm:$0x1]
    %vm7 = vcmask 130048
    %8 = vst.msk [vmem:[#allocation0] sm:$0x1] %vm7, %v6
    %s9 = scalar_lea.vmem [#allocation1], 3
    %v10 = vld [vmem:[%s9] sm:$0x1]
    %11 = vrot.lane.b32.xlu0 %v10, 48
    %v12 = vpop.permute.xlu0 %11
    %vm13 = vcmask 523648
    %14 = vst.msk [vmem:[#allocation0] sm:$0x1] %vm13, %v12
    %s15 = scalar_lea.vmem [#allocation1], 2
    %v16 = vld [vmem:[%s15] sm:$0x1]
    %17 = vrot.lane.b32.xlu0 %v16, 32
    %v18 = vpop.permute.xlu0 %17
    %vm19 = vcmask 392448
    %20 = vst.msk [vmem:[#allocation0] sm:$0x1] %vm19, %v18
    %s21 = scalar_lea.vmem [#allocation1], 1
    %v22 = vld [vmem:[%s21] sm:$0x1]
    %23 = vrot.lane.b32.xlu0 %v22, 16
    %v24 = vpop.permute.xlu0 %23
    %vm25 = vcmask 261248
    %26 = vst.msk [vmem:[#allocation0] sm:$0x1] %vm25, %v24
    %s28 = sshllo.u32 0, 1
    %v30 = vld [vmem:[#allocation0] sm:%s28]
    %s31 = sshllo.u32 0, 1
    %32 = vst [vmem:[%s1] sm:%s31] %v30

// kernel: _decoder_bf16.4
$region0: #{_decoder_bf16.4}
  #allocation0 [shape = 'u32[]', space=smem, size = 0x4, offset = 0x4, fixed_abs, tag = 'smem constant byte address 0x4 - core index']
  #allocation1 [shape = 'u32[144,128]{1,0:T(1,128)}', space=vmem, size = 0x12000, scoped, tag = 'internal scratch']
  %s0 = inlined_call_operand.vmem [shape: bf16[2,8,8,32], index: 0, kind: input, shape index: {}]
  %s1 = inlined_call_operand.vmem [shape: bf16[288,64], index: 1, kind: input, shape index: {}]
  %s2 = inlined_call_operand.vmem [shape: f32[1,64], index: 2, kind: input, shape index: {}]
  %s3 = inlined_call_operand.vmem [shape: bf16[2,64,64], index: 3, kind: output, shape index: {}]
  %s4 = sld [smem:[#allocation0]]
  $region22: #{_decoder_bf16.4} parent=0
    _
  %s6 = ssub.s32 1, %s4
  %s7 = scalar_select 0, %s6, %s4
  // Predicated region
  $region2: #{_decoder_bf16.4} parent=0 // pred_check
    _
  $region3: #{_decoder_bf16.4} parent=0 // pred_check_branch
    %9 = sbr.rel (0) target = $region5
  $region4: #{_decoder_bf16.4} parent=0 // pred_region
    _
  $region5: #{_decoder_bf16.4} parent=0 // pred_fallthru
    _
  // Predicated region
  $region6: #{_decoder_bf16.4} parent=0 // pred_check
    _
  $region7: #{_decoder_bf16.4} parent=0 // pred_check_branch
    %11 = sbr.rel (0) target = $region9
  $region8: #{_decoder_bf16.4} parent=0 // pred_region
    _
  $region9: #{_decoder_bf16.4} parent=0 // pred_fallthru
    _
  // Predicated region
  $region10: #{_decoder_bf16.4} parent=0 // pred_check
    _
  $region11: #{_decoder_bf16.4} parent=0 // pred_check_branch
    %13 = sbr.rel (0) target = $region13
  $region12: #{_decoder_bf16.4} parent=0 // pred_region
    _
  $region13: #{_decoder_bf16.4} parent=0 // pred_fallthru
    _
  %v15 = vld [vmem:[%s0] sm:$0xf]
  %v16 = vld [vmem:[%s0 + $0x4] sm:$0xf]
  %v17 = vld [vmem:[%s0 + $0x8] sm:$0xf]
  %v18 = vld [vmem:[%s0 + $0xc] sm:$0xf]
  %v19 = vld [vmem:[%s0 + $0x10] sm:$0xf]
  %v20 = vld [vmem:[%s0 + $0x14] sm:$0xf]
  %v21 = vld [vmem:[%s0 + $0x18] sm:$0xf]
  %v22 = vld [vmem:[%s0 + $0x1c] sm:$0xf]
  %v23 = vunpack.c.l.bf16 %v15
  %v24 = vunpack.c.l.bf16 %v16
  %v25 = vunpack.c.l.bf16 %v17
  %v26 = vunpack.c.l.bf16 %v18
  %v27 = vunpack.c.l.bf16 %v19
  %v28 = vunpack.c.l.bf16 %v20
  %v29 = vunpack.c.l.bf16 %v21
  %v30 = vunpack.c.l.bf16 %v22
  %v40 = vrot.slane 0.0, 7
  %v41 = vrot.slane %v23, 7
  %v42 = vrot.slane %v24, 7
  %v43 = vrot.slane %v25, 7
  %v44 = vrot.slane %v26, 7
  %v45 = vrot.slane %v27, 7
  %v46 = vrot.slane %v28, 7
  %v47 = vrot.slane %v29, 7
  %v48 = vrot.slane %v30, 7
  %vm58 = vcmask 1040384
  %v59 = vsel %vm58, 0.0, %v40
  %v60 = vsel %vm58, 0.0, %v41
  %v61 = vsel %vm58, 0.0, %v42
  %v62 = vsel %vm58, 0.0, %v43
  %v63 = vsel %vm58, 0.0, %v44
  %v64 = vsel %vm58, 0.0, %v45
  %v65 = vsel %vm58, 0.0, %v46
  %v66 = vsel %vm58, 0.0, %v47
  %v67 = vsel %vm58, 0.0, %v48
  %v68 = vsel %vm58, %v40, 0.0
  %v69 = vsel %vm58, %v41, 0.0
  %v70 = vsel %vm58, %v42, 0.0
  %v71 = vsel %vm58, %v43, 0.0
  %v72 = vsel %vm58, %v44, 0.0
  %v73 = vsel %vm58, %v45, 0.0
  %v74 = vsel %vm58, %v46, 0.0
  %v75 = vsel %vm58, %v47, 0.0
  %v76 = vsel %vm58, %v48, 0.0
  %v77 = vmax.f32 %v59, 0.0
  %v78 = vmax.f32 %v68, 0.0
  %v79 = vmax.f32 %v60, 0.0
  %v80 = vmax.f32 %v69, 0.0
  %v81 = vmax.f32 %v61, 0.0
  %v82 = vmax.f32 %v70, 0.0
  %v83 = vmax.f32 %v62, 0.0
  %v84 = vmax.f32 %v71, 0.0
  %v85 = vmax.f32 %v63, 0.0
  %v86 = vmax.f32 %v72, 0.0
  %v87 = vmax.f32 %v64, 0.0
  %v88 = vmax.f32 %v73, 0.0
  %v89 = vmax.f32 %v65, 0.0
  %v90 = vmax.f32 %v74, 0.0
  %v91 = vmax.f32 %v66, 0.0
  %v92 = vmax.f32 %v75, 0.0
  %v93 = vmax.f32 %v67, 0.0
  %v94 = vmax.f32 %v76, 0.0
  %vm111 = vcmask 1046528
  %v112 = vrot.slane %v77, 1
  %v113 = vrot.slane %v78, 1
  %v114 = vsel %vm111, %v112, %v113
  %v115 = vrot.slane %v79, 1
  %v116 = vrot.slane %v80, 1
  %v117 = vsel %vm111, %v115, %v116
  %v118 = vrot.slane %v81, 1
  %v119 = vrot.slane %v82, 1
  %v120 = vsel %vm111, %v118, %v119
  %v121 = vrot.slane %v83, 1
  %v122 = vrot.slane %v84, 1
  %v123 = vsel %vm111, %v121, %v122
  %v124 = vrot.slane %v85, 1
  %v125 = vrot.slane %v86, 1
  %v126 = vsel %vm111, %v124, %v125
  %v127 = vrot.slane %v87, 1
  %v128 = vrot.slane %v88, 1
  %v129 = vsel %vm111, %v127, %v128
  %v130 = vrot.slane %v89, 1
  %v131 = vrot.slane %v90, 1
  %v132 = vsel %vm111, %v130, %v131
  %v133 = vrot.slane %v91, 1
  %v134 = vrot.slane %v92, 1
  %v135 = vsel %vm111, %v133, %v134
  %136 = vrot.lane.b32.xlu0 %v114, 32
  %v137 = vpop.permute.xlu0 %136
  %138 = vrot.lane.b32.xlu0 %v117, 32
  %v139 = vpop.permute.xlu0 %138
  %140 = vrot.lane.b32.xlu0 %v120, 32
  %v141 = vpop.permute.xlu0 %140
  %142 = vrot.lane.b32.xlu0 %v123, 32
  %v143 = vpop.permute.xlu0 %142
  %144 = vrot.lane.b32.xlu0 %v126, 32
  %v145 = vpop.permute.xlu0 %144
  %146 = vrot.lane.b32.xlu0 %v129, 32
  %v147 = vpop.permute.xlu0 %146
  %148 = vrot.lane.b32.xlu0 %v132, 32
  %v149 = vpop.permute.xlu0 %148
  %150 = vrot.lane.b32.xlu0 %v135, 32
  %v151 = vpop.permute.xlu0 %150
  %vm160 = vcmask 1045504
  %v161 = vrot.slane %v77, 2
  %v162 = vrot.slane %v78, 2
  %v163 = vsel %vm160, %v161, %v162
  %v164 = vrot.slane %v79, 2
  %v165 = vrot.slane %v80, 2
  %v166 = vsel %vm160, %v164, %v165
  %v167 = vrot.slane %v81, 2
  %v168 = vrot.slane %v82, 2
  %v169 = vsel %vm160, %v167, %v168
  %v170 = vrot.slane %v83, 2
  %v171 = vrot.slane %v84, 2
  %v172 = vsel %vm160, %v170, %v171
  %v173 = vrot.slane %v85, 2
  %v174 = vrot.slane %v86, 2
  %v175 = vsel %vm160, %v173, %v174
  %v176 = vrot.slane %v87, 2
  %v177 = vrot.slane %v88, 2
  %v178 = vsel %vm160, %v176, %v177
  %v179 = vrot.slane %v89, 2
  %v180 = vrot.slane %v90, 2
  %v181 = vsel %vm160, %v179, %v180
  %v182 = vrot.slane %v91, 2
  %v183 = vrot.slane %v92, 2
  %v184 = vsel %vm160, %v182, %v183
  %185 = vrot.lane.b32.xlu0 %v163, 64
  %v186 = vpop.permute.xlu0 %185
  %187 = vrot.lane.b32.xlu0 %v166, 64
  %v188 = vpop.permute.xlu0 %187
  %189 = vrot.lane.b32.xlu0 %v169, 64
  %v190 = vpop.permute.xlu0 %189
  %191 = vrot.lane.b32.xlu0 %v172, 64
  %v192 = vpop.permute.xlu0 %191
  %193 = vrot.lane.b32.xlu0 %v175, 64
  %v194 = vpop.permute.xlu0 %193
  %195 = vrot.lane.b32.xlu0 %v178, 64
  %v196 = vpop.permute.xlu0 %195
  %197 = vrot.lane.b32.xlu0 %v181, 64
  %v198 = vpop.permute.xlu0 %197
  %199 = vrot.lane.b32.xlu0 %v184, 64
  %v200 = vpop.permute.xlu0 %199
  %210 = vrot.lane.b32.xlu0 %v79, 96
  %v211 = vpop.permute.xlu0 %210
  %212 = vrot.lane.b32.xlu0 %v81, 96
  %v213 = vpop.permute.xlu0 %212
  %214 = vrot.lane.b32.xlu0 %v83, 96
  %v215 = vpop.permute.xlu0 %214
  %216 = vrot.lane.b32.xlu0 %v85, 96
  %v217 = vpop.permute.xlu0 %216
  %218 = vrot.lane.b32.xlu0 %v87, 96
  %v219 = vpop.permute.xlu0 %218
  %220 = vrot.lane.b32.xlu0 %v89, 96
  %v221 = vpop.permute.xlu0 %220
  %222 = vrot.lane.b32.xlu0 %v91, 96
  %v223 = vpop.permute.xlu0 %222
  %224 = vrot.lane.b32.xlu0 %v93, 96
  %v225 = vpop.permute.xlu0 %224
  %v235 = vrot.slane %v93, 1
  %v236 = vrot.slane %v94, 1
  %v237 = vsel %vm111, %v235, %v236
  %v246 = vrot.slane %v93, 2
  %v247 = vrot.slane %v94, 2
  %v248 = vsel %vm160, %v246, %v247
  %249 = vrot.lane.b32.xlu0 %v166, 32
  %v250 = vpop.permute.xlu0 %249
  %251 = vrot.lane.b32.xlu0 %v169, 32
  %v252 = vpop.permute.xlu0 %251
  %253 = vrot.lane.b32.xlu0 %v172, 32
  %v254 = vpop.permute.xlu0 %253
  %255 = vrot.lane.b32.xlu0 %v175, 32
  %v256 = vpop.permute.xlu0 %255
  %257 = vrot.lane.b32.xlu0 %v178, 32
  %v258 = vpop.permute.xlu0 %257
  %259 = vrot.lane.b32.xlu0 %v181, 32
  %v260 = vpop.permute.xlu0 %259
  %261 = vrot.lane.b32.xlu0 %v184, 32
  %v262 = vpop.permute.xlu0 %261
  %263 = vrot.lane.b32.xlu0 %v248, 32
  %v264 = vpop.permute.xlu0 %263
  %273 = vrot.lane.b32.xlu0 %v81, 64
  %v274 = vpop.permute.xlu0 %273
  %275 = vrot.lane.b32.xlu0 %v83, 64
  %v276 = vpop.permute.xlu0 %275
  %277 = vrot.lane.b32.xlu0 %v85, 64
  %v278 = vpop.permute.xlu0 %277
  %279 = vrot.lane.b32.xlu0 %v87, 64
  %v280 = vpop.permute.xlu0 %279
  %281 = vrot.lane.b32.xlu0 %v89, 64
  %v282 = vpop.permute.xlu0 %281
  %283 = vrot.lane.b32.xlu0 %v91, 64
  %v284 = vpop.permute.xlu0 %283
  %285 = vrot.lane.b32.xlu0 %v93, 64
  %v286 = vpop.permute.xlu0 %285
  %287 = vrot.lane.b32.xlu0 %v77, 64
  %v288 = vpop.permute.xlu0 %287
  %297 = vrot.lane.b32.xlu0 %v120, 96
  %v298 = vpop.permute.xlu0 %297
  %299 = vrot.lane.b32.xlu0 %v123, 96
  %v300 = vpop.permute.xlu0 %299
  %301 = vrot.lane.b32.xlu0 %v126, 96
  %v302 = vpop.permute.xlu0 %301
  %303 = vrot.lane.b32.xlu0 %v129, 96
  %v304 = vpop.permute.xlu0 %303
  %305 = vrot.lane.b32.xlu0 %v132, 96
  %v306 = vpop.permute.xlu0 %305
  %307 = vrot.lane.b32.xlu0 %v135, 96
  %v308 = vpop.permute.xlu0 %307
  %309 = vrot.lane.b32.xlu0 %v237, 96
  %v310 = vpop.permute.xlu0 %309
  %311 = vrot.lane.b32.xlu0 %v114, 96
  %v312 = vpop.permute.xlu0 %311
  %vm329 = vcmask 261120
  %v330 = vsel %vm329, %v77, %v137
  %v331 = vsel %vm329, %v79, %v139
  %v332 = vsel %vm329, %v81, %v141
  %v333 = vsel %vm329, %v83, %v143
  %v334 = vsel %vm329, %v85, %v145
  %v335 = vsel %vm329, %v87, %v147
  %v336 = vsel %vm329, %v89, %v149
  %v337 = vsel %vm329, %v91, %v151
  %vm338 = vcmask 523264
  %v339 = vsel %vm338, %v330, %v186
  %v340 = vsel %vm338, %v331, %v188
  %v341 = vsel %vm338, %v332, %v190
  %v342 = vsel %vm338, %v333, %v192
  %v343 = vsel %vm338, %v334, %v194
  %v344 = vsel %vm338, %v335, %v196
  %v345 = vsel %vm338, %v336, %v198
  %v346 = vsel %vm338, %v337, %v200
  %vm347 = vcmask 785408
  %v348 = vsel %vm347, %v339, %v211
  %v349 = vsel %vm347, %v340, %v213
  %v350 = vsel %vm347, %v341, %v215
  %v351 = vsel %vm347, %v342, %v217
  %v352 = vsel %vm347, %v343, %v219
  %v353 = vsel %vm347, %v344, %v221
  %v354 = vsel %vm347, %v345, %v223
  %v355 = vsel %vm347, %v346, %v225
  %v356 = vsel %vm329, %v117, %v250
  %v357 = vsel %vm329, %v120, %v252
  %v358 = vsel %vm329, %v123, %v254
  %v359 = vsel %vm329, %v126, %v256
  %v360 = vsel %vm329, %v129, %v258
  %v361 = vsel %vm329, %v132, %v260
  %v362 = vsel %vm329, %v135, %v262
  %v363 = vsel %vm329, %v237, %v264
  %v364 = vsel %vm338, %v356, %v274
  %v365 = vsel %vm338, %v357, %v276
  %v366 = vsel %vm338, %v358, %v278
  %v367 = vsel %vm338, %v359, %v280
  %v368 = vsel %vm338, %v360, %v282
  %v369 = vsel %vm338, %v361, %v284
  %v370 = vsel %vm338, %v362, %v286
  %v371 = vsel %vm338, %v363, %v288
  %v372 = vsel %vm347, %v364, %v298
  %v373 = vsel %vm347, %v365, %v300
  %v374 = vsel %vm347, %v366, %v302
  %v375 = vsel %vm347, %v367, %v304
  %v376 = vsel %vm347, %v368, %v306
  %v377 = vsel %vm347, %v369, %v308
  %v378 = vsel %vm347, %v370, %v310
  %v379 = vsel %vm347, %v371, %v312
  %s380 = scalar_lea.vmem %s0, 32
  %v381 = vld [vmem:[%s380] sm:$0xf]
  %v382 = vld [vmem:[%s380 + $0x4] sm:$0xf]
  %v383 = vld [vmem:[%s380 + $0x8] sm:$0xf]
  %v384 = vld [vmem:[%s380 + $0xc] sm:$0xf]
  %v385 = vld [vmem:[%s380 + $0x10] sm:$0xf]
  %v386 = vld [vmem:[%s380 + $0x14] sm:$0xf]
  %v387 = vld [vmem:[%s380 + $0x18] sm:$0xf]
  %v388 = vld [vmem:[%s380 + $0x1c] sm:$0xf]
  %v389 = vunpack.c.l.bf16 %v381
  %v390 = vunpack.c.l.bf16 %v382
  %v391 = vunpack.c.l.bf16 %v383
  %v392 = vunpack.c.l.bf16 %v384
  %v393 = vunpack.c.l.bf16 %v385
  %v394 = vunpack.c.l.bf16 %v386
  %v395 = vunpack.c.l.bf16 %v387
  %v396 = vunpack.c.l.bf16 %v388
  %v405 = vrot.slane %v389, 7
  %v406 = vrot.slane %v390, 7
  %v407 = vrot.slane %v391, 7
  %v408 = vrot.slane %v392, 7
  %v409 = vrot.slane %v393, 7
  %v410 = vrot.slane %v394, 7
  %v411 = vrot.slane %v395, 7
  %v412 = vrot.slane %v396, 7
  %v421 = vsel %vm58, 0.0, %v405
  %v422 = vsel %vm58, 0.0, %v406
  %v423 = vsel %vm58, 0.0, %v407
  %v424 = vsel %vm58, 0.0, %v408
  %v425 = vsel %vm58, 0.0, %v409
  %v426 = vsel %vm58, 0.0, %v410
  %v427 = vsel %vm58, 0.0, %v411
  %v428 = vsel %vm58, 0.0, %v412
  %v429 = vsel %vm58, %v405, 0.0
  %v430 = vsel %vm58, %v406, 0.0
  %v431 = vsel %vm58, %v407, 0.0
  %v432 = vsel %vm58, %v408, 0.0
  %v433 = vsel %vm58, %v409, 0.0
  %v434 = vsel %vm58, %v410, 0.0
  %v435 = vsel %vm58, %v411, 0.0
  %v436 = vsel %vm58, %v412, 0.0
  %v437 = vmax.f32 %v421, 0.0
  %v438 = vmax.f32 %v429, 0.0
  %v439 = vmax.f32 %v422, 0.0
  %v440 = vmax.f32 %v430, 0.0
  %v441 = vmax.f32 %v423, 0.0
  %v442 = vmax.f32 %v431, 0.0
  %v443 = vmax.f32 %v424, 0.0
  %v444 = vmax.f32 %v432, 0.0
  %v445 = vmax.f32 %v425, 0.0
  %v446 = vmax.f32 %v433, 0.0
  %v447 = vmax.f32 %v426, 0.0
  %v448 = vmax.f32 %v434, 0.0
  %v449 = vmax.f32 %v427, 0.0
  %v450 = vmax.f32 %v435, 0.0
  %v451 = vmax.f32 %v428, 0.0
  %v452 = vmax.f32 %v436, 0.0
  %v467 = vrot.slane %v437, 1
  %v468 = vrot.slane %v438, 1
  %v469 = vsel %vm111, %v467, %v468
  %v470 = vrot.slane %v439, 1
  %v471 = vrot.slane %v440, 1
  %v472 = vsel %vm111, %v470, %v471
  %v473 = vrot.slane %v441, 1
  %v474 = vrot.slane %v442, 1
  %v475 = vsel %vm111, %v473, %v474
  %v476 = vrot.slane %v443, 1
  %v477 = vrot.slane %v444, 1
  %v478 = vsel %vm111, %v476, %v477
  %v479 = vrot.slane %v445, 1
  %v480 = vrot.slane %v446, 1
  %v481 = vsel %vm111, %v479, %v480
  %v482 = vrot.slane %v447, 1
  %v483 = vrot.slane %v448, 1
  %v484 = vsel %vm111, %v482, %v483
  %v485 = vrot.slane %v449, 1
  %v486 = vrot.slane %v450, 1
  %v487 = vsel %vm111, %v485, %v486
  %488 = vrot.lane.b32.xlu0 %v469, 32
  %v489 = vpop.permute.xlu0 %488
  %490 = vrot.lane.b32.xlu0 %v472, 32
  %v491 = vpop.permute.xlu0 %490
  %492 = vrot.lane.b32.xlu0 %v475, 32
  %v493 = vpop.permute.xlu0 %492
  %494 = vrot.lane.b32.xlu0 %v478, 32
  %v495 = vpop.permute.xlu0 %494
  %496 = vrot.lane.b32.xlu0 %v481, 32
  %v497 = vpop.permute.xlu0 %496
  %498 = vrot.lane.b32.xlu0 %v484, 32
  %v499 = vpop.permute.xlu0 %498
  %500 = vrot.lane.b32.xlu0 %v487, 32
  %v501 = vpop.permute.xlu0 %500
  %v509 = vrot.slane %v437, 2
  %v510 = vrot.slane %v438, 2
  %v511 = vsel %vm160, %v509, %v510
  %v512 = vrot.slane %v439, 2
  %v513 = vrot.slane %v440, 2
  %v514 = vsel %vm160, %v512, %v513
  %v515 = vrot.slane %v441, 2
  %v516 = vrot.slane %v442, 2
  %v517 = vsel %vm160, %v515, %v516
  %v518 = vrot.slane %v443, 2
  %v519 = vrot.slane %v444, 2
  %v520 = vsel %vm160, %v518, %v519
  %v521 = vrot.slane %v445, 2
  %v522 = vrot.slane %v446, 2
  %v523 = vsel %vm160, %v521, %v522
  %v524 = vrot.slane %v447, 2
  %v525 = vrot.slane %v448, 2
  %v526 = vsel %vm160, %v524, %v525
  %v527 = vrot.slane %v449, 2
  %v528 = vrot.slane %v450, 2
  %v529 = vsel %vm160, %v527, %v528
  %530 = vrot.lane.b32.xlu0 %v511, 64
  %v531 = vpop.permute.xlu0 %530
  %532 = vrot.lane.b32.xlu0 %v514, 64
  %v533 = vpop.permute.xlu0 %532
  %534 = vrot.lane.b32.xlu0 %v517, 64
  %v535 = vpop.permute.xlu0 %534
  %536 = vrot.lane.b32.xlu0 %v520, 64
  %v537 = vpop.permute.xlu0 %536
  %538 = vrot.lane.b32.xlu0 %v523, 64
  %v539 = vpop.permute.xlu0 %538
  %540 = vrot.lane.b32.xlu0 %v526, 64
  %v541 = vpop.permute.xlu0 %540
  %542 = vrot.lane.b32.xlu0 %v529, 64
  %v543 = vpop.permute.xlu0 %542
  %552 = vrot.lane.b32.xlu0 %v437, 96
  %v553 = vpop.permute.xlu0 %552
  %554 = vrot.lane.b32.xlu0 %v439, 96
  %v555 = vpop.permute.xlu0 %554
  %556 = vrot.lane.b32.xlu0 %v441, 96
  %v557 = vpop.permute.xlu0 %556
  %558 = vrot.lane.b32.xlu0 %v443, 96
  %v559 = vpop.permute.xlu0 %558
  %560 = vrot.lane.b32.xlu0 %v445, 96
  %v561 = vpop.permute.xlu0 %560
  %562 = vrot.lane.b32.xlu0 %v447, 96
  %v563 = vpop.permute.xlu0 %562
  %564 = vrot.lane.b32.xlu0 %v449, 96
  %v565 = vpop.permute.xlu0 %564
  %566 = vrot.lane.b32.xlu0 %v451, 96
  %v567 = vpop.permute.xlu0 %566
  %v577 = vrot.slane %v451, 1
  %v578 = vrot.slane %v452, 1
  %v579 = vsel %vm111, %v577, %v578
  %v588 = vrot.slane %v451, 2
  %v589 = vrot.slane %v452, 2
  %v590 = vsel %vm160, %v588, %v589
  %591 = vrot.lane.b32.xlu0 %v511, 32
  %v592 = vpop.permute.xlu0 %591
  %593 = vrot.lane.b32.xlu0 %v514, 32
  %v594 = vpop.permute.xlu0 %593
  %595 = vrot.lane.b32.xlu0 %v517, 32
  %v596 = vpop.permute.xlu0 %595
  %597 = vrot.lane.b32.xlu0 %v520, 32
  %v598 = vpop.permute.xlu0 %597
  %599 = vrot.lane.b32.xlu0 %v523, 32
  %v600 = vpop.permute.xlu0 %599
  %601 = vrot.lane.b32.xlu0 %v526, 32
  %v602 = vpop.permute.xlu0 %601
  %603 = vrot.lane.b32.xlu0 %v529, 32
  %v604 = vpop.permute.xlu0 %603
  %605 = vrot.lane.b32.xlu0 %v590, 32
  %v606 = vpop.permute.xlu0 %605
  %615 = vrot.lane.b32.xlu0 %v439, 64
  %v616 = vpop.permute.xlu0 %615
  %617 = vrot.lane.b32.xlu0 %v441, 64
  %v618 = vpop.permute.xlu0 %617
  %619 = vrot.lane.b32.xlu0 %v443, 64
  %v620 = vpop.permute.xlu0 %619
  %621 = vrot.lane.b32.xlu0 %v445, 64
  %v622 = vpop.permute.xlu0 %621
  %623 = vrot.lane.b32.xlu0 %v447, 64
  %v624 = vpop.permute.xlu0 %623
  %625 = vrot.lane.b32.xlu0 %v449, 64
  %v626 = vpop.permute.xlu0 %625
  %627 = vrot.lane.b32.xlu0 %v451, 64
  %v628 = vpop.permute.xlu0 %627
  %636 = vrot.lane.b32.xlu0 %v472, 96
  %v637 = vpop.permute.xlu0 %636
  %638 = vrot.lane.b32.xlu0 %v475, 96
  %v639 = vpop.permute.xlu0 %638
  %640 = vrot.lane.b32.xlu0 %v478, 96
  %v641 = vpop.permute.xlu0 %640
  %642 = vrot.lane.b32.xlu0 %v481, 96
  %v643 = vpop.permute.xlu0 %642
  %644 = vrot.lane.b32.xlu0 %v484, 96
  %v645 = vpop.permute.xlu0 %644
  %646 = vrot.lane.b32.xlu0 %v487, 96
  %v647 = vpop.permute.xlu0 %646
  %648 = vrot.lane.b32.xlu0 %v579, 96
  %v649 = vpop.permute.xlu0 %648
  %v664 = vsel %vm329, %v437, %v489
  %v665 = vsel %vm329, %v439, %v491
  %v666 = vsel %vm329, %v441, %v493
  %v667 = vsel %vm329, %v443, %v495
  %v668 = vsel %vm329, %v445, %v497
  %v669 = vsel %vm329, %v447, %v499
  %v670 = vsel %vm329, %v449, %v501
  %v671 = vsel %vm338, %v664, %v531
  %v672 = vsel %vm338, %v665, %v533
  %v673 = vsel %vm338, %v666, %v535
  %v674 = vsel %vm338, %v667, %v537
  %v675 = vsel %vm338, %v668, %v539
  %v676 = vsel %vm338, %v669, %v541
  %v677 = vsel %vm338, %v670, %v543
  %v678 = vsel %vm347, %v339, %v553
  %v679 = vsel %vm347, %v671, %v555
  %v680 = vsel %vm347, %v672, %v557
  %v681 = vsel %vm347, %v673, %v559
  %v682 = vsel %vm347, %v674, %v561
  %v683 = vsel %vm347, %v675, %v563
  %v684 = vsel %vm347, %v676, %v565
  %v685 = vsel %vm347, %v677, %v567
  %v686 = vsel %vm329, %v469, %v592
  %v687 = vsel %vm329, %v472, %v594
  %v688 = vsel %vm329, %v475, %v596
  %v689 = vsel %vm329, %v478, %v598
  %v690 = vsel %vm329, %v481, %v600
  %v691 = vsel %vm329, %v484, %v602
  %v692 = vsel %vm329, %v487, %v604
  %v693 = vsel %vm329, %v579, %v606
  %v694 = vsel %vm338, %v686, %v616
  %v695 = vsel %vm338, %v687, %v618
  %v696 = vsel %vm338, %v688, %v620
  %v697 = vsel %vm338, %v689, %v622
  %v698 = vsel %vm338, %v690, %v624
  %v699 = vsel %vm338, %v691, %v626
  %v700 = vsel %vm338, %v692, %v628
  %v701 = vsel %vm338, %v693, %v288
  %v702 = vsel %vm347, %v694, %v637
  %v703 = vsel %vm347, %v695, %v639
  %v704 = vsel %vm347, %v696, %v641
  %v705 = vsel %vm347, %v697, %v643
  %v706 = vsel %vm347, %v698, %v645
  %v707 = vsel %vm347, %v699, %v647
  %v708 = vsel %vm347, %v700, %v649
  %v709 = vsel %vm347, %v701, %v312
  %v710 = vpack.c.bf16 %v349, %v348
  %v711 = vpack.c.bf16 %v373, %v372
  %v712 = vpack.c.bf16 %v172, %v169
  %v713 = vpack.c.bf16 %v351, %v350
  %v714 = vpack.c.bf16 %v375, %v374
  %v715 = vpack.c.bf16 %v178, %v175
  %v716 = vpack.c.bf16 %v353, %v352
  %v717 = vpack.c.bf16 %v377, %v376
  %v718 = vpack.c.bf16 %v184, %v181
  %v719 = vpack.c.bf16 %v355, %v354
  %v720 = vpack.c.bf16 %v379, %v378
  %v721 = vpack.c.bf16 %v163, %v248
  %v722 = vpack.c.bf16 %v679, %v678
  %v723 = vpack.c.bf16 %v703, %v702
  %v724 = vpack.c.bf16 %v517, %v514
  %v725 = vpack.c.bf16 %v681, %v680
  %v726 = vpack.c.bf16 %v705, %v704
  %v727 = vpack.c.bf16 %v523, %v520
  %v728 = vpack.c.bf16 %v683, %v682
  %v729 = vpack.c.bf16 %v707, %v706
  %v730 = vpack.c.bf16 %v529, %v526
  %v731 = vpack.c.bf16 %v685, %v684
  %v732 = vpack.c.bf16 %v709, %v708
  %v733 = vpack.c.bf16 %v163, %v590
  %v734 = vld [vmem:[%s2] sm:$0x1]
  %v735 = vld [vmem:[%s1] sm:$0xf]
  %v736 = vld [vmem:[%s1 + $0x4] sm:$0xf]
  %v737 = vld [vmem:[%s1 + $0x8] sm:$0xf]
  %v738 = vld [vmem:[%s1 + $0xc] sm:$0xf]
  %v739 = vld [vmem:[%s1 + $0x10] sm:$0xf]
  %v740 = vld [vmem:[%s1 + $0x14] sm:$0xf]
  %v741 = vld [vmem:[%s1 + $0x18] sm:$0xf]
  %v742 = vld [vmem:[%s1 + $0x1c] sm:$0xf]
  %v743 = vld [vmem:[%s1 + $0x20] sm:$0xf]
  %v744 = vld [vmem:[%s1 + $0x24] sm:$0xf]
  %v745 = vld [vmem:[%s1 + $0x28] sm:$0xf]
  %v746 = vld [vmem:[%s1 + $0x2c] sm:$0xf]
  %v747 = vld [vmem:[%s1 + $0x30] sm:$0xf]
  %v748 = vld [vmem:[%s1 + $0x34] sm:$0xf]
  %v749 = vld [vmem:[%s1 + $0x38] sm:$0xf]
  %v750 = vld [vmem:[%s1 + $0x3c] sm:$0xf]
  %v751 = vld [vmem:[%s1 + $0x40] sm:$0xf]
  %v752 = vld [vmem:[%s1 + $0x44] sm:$0xf]
  %v753 = vld [vmem:[%s1 + $0x48] sm:$0xf]
  %v754 = vld [vmem:[%s1 + $0x4c] sm:$0xf]
  %v755 = vld [vmem:[%s1 + $0x50] sm:$0xf]
  %v756 = vld [vmem:[%s1 + $0x54] sm:$0xf]
  %v757 = vld [vmem:[%s1 + $0x58] sm:$0xf]
  %v758 = vld [vmem:[%s1 + $0x5c] sm:$0xf]
  %v759 = vld [vmem:[%s1 + $0x60] sm:$0xf]
  %v760 = vld [vmem:[%s1 + $0x64] sm:$0xf]
  %v761 = vld [vmem:[%s1 + $0x68] sm:$0xf]
  %v762 = vld [vmem:[%s1 + $0x6c] sm:$0xf]
  %v763 = vld [vmem:[%s1 + $0x70] sm:$0xf]
  %v764 = vld [vmem:[%s1 + $0x74] sm:$0xf]
  %v765 = vld [vmem:[%s1 + $0x78] sm:$0xf]
  %v766 = vld [vmem:[%s1 + $0x7c] sm:$0xf]
  %v767 = vld [vmem:[%s1 + $0x80] sm:$0xf]
  %v768 = vld [vmem:[%s1 + $0x84] sm:$0xf]
  %v769 = vld [vmem:[%s1 + $0x88] sm:$0xf]
  %v770 = vld [vmem:[%s1 + $0x8c] sm:$0xf]
  %v772 = vlaneseq
  %v773 = vshrl.u32 %v772, 7
  %v774 = vsub.s32 0, %v773
  %v775 = vrot.slane %v734, %v774
  %v813 = vunpack.c.l.b16 %v735
  %v814 = vunpack.c.l.b16 %v736
  %v815 = vunpack.c.l.b16 %v737
  %v816 = vunpack.c.l.b16 %v738
  %v817 = vunpack.c.l.b16 %v739
  %v818 = vunpack.c.l.b16 %v740
  %v819 = vunpack.c.l.b16 %v741
  %v820 = vunpack.c.l.b16 %v742
  %v821 = vunpack.c.l.b16 %v743
  %v822 = vunpack.c.l.b16 %v744
  %v823 = vunpack.c.l.b16 %v745
  %v824 = vunpack.c.l.b16 %v746
  %v825 = vunpack.c.l.b16 %v747
  %v826 = vunpack.c.l.b16 %v748
  %v827 = vunpack.c.l.b16 %v749
  %v828 = vunpack.c.l.b16 %v750
  %v829 = vunpack.c.l.b16 %v751
  %v830 = vunpack.c.l.b16 %v752
  %v831 = vunpack.c.l.b16 %v753
  %v832 = vunpack.c.l.b16 %v754
  %v833 = vunpack.c.l.b16 %v755
  %v834 = vunpack.c.l.b16 %v756
  %v835 = vunpack.c.l.b16 %v757
  %v836 = vunpack.c.l.b16 %v758
  %v837 = vunpack.c.l.b16 %v759
  %v838 = vunpack.c.l.b16 %v760
  %v839 = vunpack.c.l.b16 %v761
  %v840 = vunpack.c.l.b16 %v762
  %v841 = vunpack.c.l.b16 %v763
  %v842 = vunpack.c.l.b16 %v764
  %v843 = vunpack.c.l.b16 %v765
  %v844 = vunpack.c.l.b16 %v766
  %v845 = vunpack.c.l.b16 %v767
  %v846 = vunpack.c.l.b16 %v768
  %v847 = vunpack.c.l.b16 %v769
  %v848 = vunpack.c.l.b16 %v770
  %v849 = vpack.c.b16 %v814, %v813
  %v850 = vpack.c.b16 %v816, %v815
  %v851 = vpack.c.b16 %v818, %v817
  %v852 = vpack.c.b16 %v820, %v819
  %v853 = vpack.c.b16 %v822, %v821
  %v854 = vpack.c.b16 %v824, %v823
  %v855 = vpack.c.b16 %v826, %v825
  %v856 = vpack.c.b16 %v828, %v827
  %v857 = vpack.c.b16 %v830, %v829
  %v858 = vpack.c.b16 %v832, %v831
  %v859 = vpack.c.b16 %v834, %v833
  %v860 = vpack.c.b16 %v836, %v835
  %v861 = vpack.c.b16 %v838, %v837
  %v862 = vpack.c.b16 %v840, %v839
  %v863 = vpack.c.b16 %v842, %v841
  %v864 = vpack.c.b16 %v844, %v843
  %v865 = vpack.c.b16 %v846, %v845
  %v866 = vpack.c.b16 %v848, %v847
  %v886 = vsel %vm329, %v712, 0
  %v889 = vsel %vm329, %v715, 0
  %v892 = vsel %vm329, %v718, 0
  %v895 = vsel %vm329, %v721, 0
  %v898 = vsel %vm329, %v724, 0
  %v901 = vsel %vm329, %v727, 0
  %v904 = vsel %vm329, %v730, 0
  %v907 = vsel %vm329, %v733, 0
  %909 = vmatprep.subr.bf16.mxu0 0
  %910 = vmatpush1.bf16.msra.mxu0 %v849
  %911 = vmatprep.subr.bf16.mxu0 0
  %912 = vmatpush1.bf16.msra.mxu0 %v850
  %913 = vmatprep.subr.bf16.mxu0 0
  %914 = vmatpush1.bf16.msra.mxu0 %v851
  %915 = vmatprep.subr.bf16.mxu0 0
  %916 = vmatpush1.bf16.msra.mxu0 %v852
  %917 = vmatprep.subr.bf16.mxu0 0
  %918 = vmatpush1.bf16.msra.mxu0 %v853
  %919 = vmatprep.subr.bf16.mxu0 0
  %920 = vmatpush1.bf16.msra.mxu0 %v854
  %921 = vmatprep.subr.bf16.mxu0 0
  %922 = vmatpush1.bf16.msra.mxu0 %v855
  %923 = vmatprep.subr.bf16.mxu0 0
  %924 = vmatpush1.bf16.msra.mxu0 %v856
  %925 = vmatprep.subr.bf16.mxu0 0
  %926 = vmatpush1.bf16.msra.mxu0 %v857
  %927 = vmatprep.subr.bf16.mxu0 0
  %928 = vmatpush1.bf16.msra.mxu0 %v858
  %929 = vmatprep.subr.bf16.mxu0 0
  %930 = vmatpush1.bf16.msra.mxu0 %v859
  %931 = vmatprep.subr.bf16.mxu0 0
  %932 = vmatpush1.bf16.msra.mxu0 %v860
  %933 = vmatprep.subr.bf16.mxu0 0
  %934 = vmatpush1.bf16.msra.mxu0 %v861
  %935 = vmatprep.subr.bf16.mxu0 0
  %936 = vmatpush1.bf16.msra.mxu0 %v862
  %937 = vmatprep.subr.bf16.mxu0 0
  %938 = vmatpush1.bf16.msra.mxu0 %v863
  %939 = vmatprep.subr.bf16.mxu0 0
  %940 = vmatpush1.bf16.msra.mxu0 %v864
  %941 = vmatprep.mubr.bf16.mxu0 %v711
  %942 = vmatmul.mubr.bf16.gmra.mrb[0].mxu0 %v710
  %v943 = vpop.f32.mrb[0].mxu0
  %v944 = vadd.f32 %v775, %v943
  %v945 = vpop.f32.mrb[0].mxu0
  %v946 = vpop.f32.mrb[0].mxu0
  %v947 = vadd.f32 %v775, %v946
  %v948 = vpop.f32.mrb[0].mxu0
  %949 = vmatprep.mubr.bf16.mxu0 %v714
  %950 = vmatmul.mubr.bf16.gmra.mrb[0].mxu0 %v713
  %v951 = vpop.f32.mrb[0].mxu0
  %v952 = vadd.f32 %v775, %v951
  %v953 = vpop.f32.mrb[0].mxu0
  %v954 = vpop.f32.mrb[0].mxu0
  %v955 = vadd.f32 %v775, %v954
  %v956 = vpop.f32.mrb[0].mxu0
  %957 = vmatprep.mubr.bf16.mxu0 %v717
  %958 = vmatmul.mubr.bf16.gmra.mrb[0].mxu0 %v716
  %v959 = vpop.f32.mrb[0].mxu0
  %v960 = vadd.f32 %v775, %v959
  %v961 = vpop.f32.mrb[0].mxu0
  %v962 = vpop.f32.mrb[0].mxu0
  %v963 = vadd.f32 %v775, %v962
  %v964 = vpop.f32.mrb[0].mxu0
  %965 = vmatprep.mubr.bf16.mxu0 %v720
  %966 = vmatmul.mubr.bf16.gmra.mrb[0].mxu0 %v719
  %v967 = vpop.f32.mrb[0].mxu0
  %v968 = vadd.f32 %v775, %v967
  %v969 = vpop.f32.mrb[0].mxu0
  %v970 = vpop.f32.mrb[0].mxu0
  %v971 = vadd.f32 %v775, %v970
  %v972 = vpop.f32.mrb[0].mxu0
  %973 = vmatprep.mubr.bf16.mxu0 %v723
  %974 = vmatmul.mubr.bf16.gmra.mrb[0].mxu0 %v722
  %v975 = vpop.f32.mrb[0].mxu0
  %v976 = vadd.f32 %v775, %v975
  %v977 = vpop.f32.mrb[0].mxu0
  %v978 = vpop.f32.mrb[0].mxu0
  %v979 = vadd.f32 %v775, %v978
  %v980 = vpop.f32.mrb[0].mxu0
  %981 = vmatprep.mubr.bf16.mxu0 %v726
  %982 = vmatmul.mubr.bf16.gmra.mrb[0].mxu0 %v725
  %v983 = vpop.f32.mrb[0].mxu0
  %v984 = vadd.f32 %v775, %v983
  %v985 = vpop.f32.mrb[0].mxu0
  %v986 = vpop.f32.mrb[0].mxu0
  %v987 = vadd.f32 %v775, %v986
  %v988 = vpop.f32.mrb[0].mxu0
  %989 = vmatprep.mubr.bf16.mxu0 %v729
  %990 = vmatmul.mubr.bf16.gmra.mrb[0].mxu0 %v728
  %v991 = vpop.f32.mrb[0].mxu0
  %v992 = vadd.f32 %v775, %v991
  %v993 = vpop.f32.mrb[0].mxu0
  %v994 = vpop.f32.mrb[0].mxu0
  %v995 = vadd.f32 %v775, %v994
  %v996 = vpop.f32.mrb[0].mxu0
  %997 = vmatprep.mubr.bf16.mxu0 %v732
  %998 = vmatmul.mubr.bf16.gmra.mrb[0].mxu0 %v731
  %v999 = vpop.f32.mrb[0].mxu0
  %v1000 = vadd.f32 %v775, %v999
  %v1001 = vpop.f32.mrb[0].mxu0
  %v1002 = vpop.f32.mrb[0].mxu0
  %v1003 = vadd.f32 %v775, %v1002
  %v1004 = vpop.f32.mrb[0].mxu0
  %1005 = vdwg.mxu0
  %1006 = vmatprep.subr.bf16.mxu0 0
  %1007 = vmatpush1.bf16.msra.mxu0 %v865
  %1008 = vmatprep.subr.bf16.mxu0 0
  %1009 = vmatpush1.bf16.msra.mxu0 %v866
  %1010 = vmatprep.subr.bf16.mxu0 0
  %1011 = vmatpush1.bf16.msra.mxu0 0
  %1012 = vmatprep.subr.bf16.mxu0 0
  %1013 = vmatpush1.bf16.msra.mxu0 0
  %1014 = vmatprep.subr.bf16.mxu0 0
  %1015 = vmatpush1.bf16.msra.mxu0 0
  %1016 = vmatprep.subr.bf16.mxu0 0
  %1017 = vmatpush1.bf16.msra.mxu0 0
  %1018 = vmatprep.subr.bf16.mxu0 0
  %1019 = vmatpush1.bf16.msra.mxu0 0
  %1020 = vmatprep.subr.bf16.mxu0 0
  %1021 = vmatpush1.bf16.msra.mxu0 0
  %1022 = vmatprep.subr.bf16.mxu0 0
  %1023 = vmatpush1.bf16.msra.mxu0 0
  %1024 = vmatprep.subr.bf16.mxu0 0
  %1025 = vmatpush1.bf16.msra.mxu0 0
  %1026 = vmatprep.subr.bf16.mxu0 0
  %1027 = vmatpush1.bf16.msra.mxu0 0
  %1028 = vmatprep.subr.bf16.mxu0 0
  %1029 = vmatpush1.bf16.msra.mxu0 0
  %1030 = vmatprep.subr.bf16.mxu0 0
  %1031 = vmatpush1.bf16.msra.mxu0 0
  %1032 = vmatprep.subr.bf16.mxu0 0
  %1033 = vmatpush1.bf16.msra.mxu0 0
  %1034 = vmatprep.subr.bf16.mxu0 0
  %1035 = vmatpush1.bf16.msra.mxu0 0
  %1036 = vmatprep.subr.bf16.mxu0 0
  %1037 = vmatpush1.bf16.msra.mxu0 0
  %1038 = vmatprep.mubr.bf16.mxu0 0
  %1039 = vmatmul.mubr.bf16.gmra.mrb[0].mxu0 %v886
  %v1040 = vpop.f32.mrb[0].mxu0
  %v1041 = vadd.f32 %v944, %v1040
  %v1042 = vpop.f32.mrb[0].mxu0
  %v1043 = vpop.f32.mrb[0].mxu0
  %v1044 = vadd.f32 %v947, %v1043
  %v1045 = vpop.f32.mrb[0].mxu0
  %1046 = vmatprep.mubr.bf16.mxu0 0
  %1047 = vmatmul.mubr.bf16.gmra.mrb[0].mxu0 %v889
  %v1048 = vpop.f32.mrb[0].mxu0
  %v1049 = vadd.f32 %v952, %v1048
  %v1050 = vpop.f32.mrb[0].mxu0
  %v1051 = vpop.f32.mrb[0].mxu0
  %v1052 = vadd.f32 %v955, %v1051
  %v1053 = vpop.f32.mrb[0].mxu0
  %1054 = vmatprep.mubr.bf16.mxu0 0
  %1055 = vmatmul.mubr.bf16.gmra.mrb[0].mxu0 %v892
  %v1056 = vpop.f32.mrb[0].mxu0
  %v1057 = vadd.f32 %v960, %v1056
  %v1058 = vpop.f32.mrb[0].mxu0
  %v1059 = vpop.f32.mrb[0].mxu0
  %v1060 = vadd.f32 %v963, %v1059
  %v1061 = vpop.f32.mrb[0].mxu0
  %1062 = vmatprep.mubr.bf16.mxu0 0
  %1063 = vmatmul.mubr.bf16.gmra.mrb[0].mxu0 %v895
  %v1064 = vpop.f32.mrb[0].mxu0
  %v1065 = vadd.f32 %v968, %v1064
  %v1066 = vpop.f32.mrb[0].mxu0
  %v1067 = vpop.f32.mrb[0].mxu0
  %v1068 = vadd.f32 %v971, %v1067
  %v1069 = vpop.f32.mrb[0].mxu0
  %1070 = vmatprep.mubr.bf16.mxu0 0
  %1071 = vmatmul.mubr.bf16.gmra.mrb[0].mxu0 %v898
  %v1072 = vpop.f32.mrb[0].mxu0
  %v1073 = vadd.f32 %v976, %v1072
  %v1074 = vpop.f32.mrb[0].mxu0
  %v1075 = vpop.f32.mrb[0].mxu0
  %v1076 = vadd.f32 %v979, %v1075
  %v1077 = vpop.f32.mrb[0].mxu0
  %1078 = vmatprep.mubr.bf16.mxu0 0
  %1079 = vmatmul.mubr.bf16.gmra.mrb[0].mxu0 %v901
  %v1080 = vpop.f32.mrb[0].mxu0
  %v1081 = vadd.f32 %v984, %v1080
  %v1082 = vpop.f32.mrb[0].mxu0
  %v1083 = vpop.f32.mrb[0].mxu0
  %v1084 = vadd.f32 %v987, %v1083
  %v1085 = vpop.f32.mrb[0].mxu0
  %1086 = vmatprep.mubr.bf16.mxu0 0
  %1087 = vmatmul.mubr.bf16.gmra.mrb[0].mxu0 %v904
  %v1088 = vpop.f32.mrb[0].mxu0
  %v1089 = vadd.f32 %v992, %v1088
  %v1090 = vpop.f32.mrb[0].mxu0
  %v1091 = vpop.f32.mrb[0].mxu0
  %v1092 = vadd.f32 %v995, %v1091
  %v1093 = vpop.f32.mrb[0].mxu0
  %1094 = vmatprep.mubr.bf16.mxu0 0
  %1095 = vmatmul.mubr.bf16.gmra.mrb[0].mxu0 %v907
  %v1096 = vpop.f32.mrb[0].mxu0
  %v1097 = vadd.f32 %v1000, %v1096
  %v1098 = vpop.f32.mrb[0].mxu0
  %v1099 = vpop.f32.mrb[0].mxu0
  %v1100 = vadd.f32 %v1003, %v1099
  %v1101 = vpop.f32.mrb[0].mxu0
  %1102 = vdwg.mxu0
  %v1103 = vpack.c.bf16 %v1044, %v1041
  %v1104 = vpack.c.bf16 %v1052, %v1049
  %v1105 = vpack.c.bf16 %v1060, %v1057
  %v1106 = vpack.c.bf16 %v1068, %v1065
  %v1111 = vunpack.c.l.b16 %v1103
  %v1112 = vunpack.c.h.b16 %v1103
  %v1113 = vunpack.c.l.b16 %v1104
  %v1114 = vunpack.c.h.b16 %v1104
  %v1115 = vunpack.c.l.b16 %v1105
  %v1116 = vunpack.c.h.b16 %v1105
  %v1117 = vunpack.c.l.b16 %v1106
  %v1118 = vunpack.c.h.b16 %v1106
  %v1119 = vpack.c.b16 %v1111, %v1111
  %v1120 = vpack.c.b16 %v1112, %v1112
  %v1121 = vpack.c.b16 %v1113, %v1113
  %v1122 = vpack.c.b16 %v1114, %v1114
  %v1123 = vpack.c.b16 %v1115, %v1115
  %v1124 = vpack.c.b16 %v1116, %v1116
  %v1125 = vpack.c.b16 %v1117, %v1117
  %v1126 = vpack.c.b16 %v1118, %v1118
  %vm1135 = vcmask 519168
  %1136 = vst.msk [vmem:[%s3] sm:$0xf] %vm1135, %v1119
  %1137 = vst.msk [vmem:[%s3 + $0x4] sm:$0xf] %vm1135, %v1120
  %1138 = vst.msk [vmem:[%s3 + $0x8] sm:$0xf] %vm1135, %v1121
  %1139 = vst.msk [vmem:[%s3 + $0xc] sm:$0xf] %vm1135, %v1122
  %1140 = vst.msk [vmem:[%s3 + $0x10] sm:$0xf] %vm1135, %v1123
  %1141 = vst.msk [vmem:[%s3 + $0x14] sm:$0xf] %vm1135, %v1124
  %1142 = vst.msk [vmem:[%s3 + $0x18] sm:$0xf] %vm1135, %v1125
  %1143 = vst.msk [vmem:[%s3 + $0x1c] sm:$0xf] %vm1135, %v1126
  %v1144 = vpack.c.bf16 %v1076, %v1073
  %v1145 = vpack.c.bf16 %v1084, %v1081
  %v1146 = vpack.c.bf16 %v1092, %v1089
  %v1147 = vpack.c.bf16 %v1100, %v1097
  %v1152 = vunpack.c.l.b16 %v1144
  %v1153 = vunpack.c.h.b16 %v1144
  %v1154 = vunpack.c.l.b16 %v1145
  %v1155 = vunpack.c.h.b16 %v1145
  %v1156 = vunpack.c.l.b16 %v1146
  %v1157 = vunpack.c.h.b16 %v1146
  %v1158 = vunpack.c.l.b16 %v1147
  %v1159 = vunpack.c.h.b16 %v1147
  %v1160 = vpack.c.b16 %v1152, %v1152
  %v1161 = vpack.c.b16 %v1153, %v1153
  %v1162 = vpack.c.b16 %v1154, %v1154
  %v1163 = vpack.c.b16 %v1155, %v1155
  %v1164 = vpack.c.b16 %v1156, %v1156
  %v1165 = vpack.c.b16 %v1157, %v1157
  %v1166 = vpack.c.b16 %v1158, %v1158
  %v1167 = vpack.c.b16 %v1159, %v1159
  %s1176 = scalar_lea.vmem %s3, 32
  %1177 = vst.msk [vmem:[%s1176] sm:$0xf] %vm1135, %v1160
  %1178 = vst.msk [vmem:[%s1176 + $0x4] sm:$0xf] %vm1135, %v1161
  %1179 = vst.msk [vmem:[%s1176 + $0x8] sm:$0xf] %vm1135, %v1162
  %1180 = vst.msk [vmem:[%s1176 + $0xc] sm:$0xf] %vm1135, %v1163
  %1181 = vst.msk [vmem:[%s1176 + $0x10] sm:$0xf] %vm1135, %v1164
  %1182 = vst.msk [vmem:[%s1176 + $0x14] sm:$0xf] %vm1135, %v1165
  %1183 = vst.msk [vmem:[%s1176 + $0x18] sm:$0xf] %vm1135, %v1166
  %1184 = vst.msk [vmem:[%s1176 + $0x1c] sm:$0xf] %vm1135, %v1167
  // Predicated region
  $region14: #{_decoder_bf16.4} parent=0 // pred_check
    _
  $region15: #{_decoder_bf16.4} parent=0 // pred_check_branch
    %1186 = sbr.rel (0) target = $region17
  $region16: #{_decoder_bf16.4} parent=0 // pred_region
    _
  $region17: #{_decoder_bf16.4} parent=0 // pred_fallthru
    _
  // Predicated region
  $region18: #{_decoder_bf16.4} parent=0 // pred_check
    _
  $region19: #{_decoder_bf16.4} parent=0 // pred_check_branch
    %1188 = sbr.rel (0) target = $region21
  $region20: #{_decoder_bf16.4} parent=0 // pred_region
    _
  $region21: #{_decoder_bf16.4} parent=0 // pred_fallthru
    _

// kernel: _decoder_bf16.3
$region0: #{_decoder_bf16.3}
  #allocation0 [shape = 'u32[]', space=smem, size = 0x4, offset = 0x4, fixed_abs, tag = 'smem constant byte address 0x4 - core index']
  #allocation1 [shape = 'u32[144,128]{1,0:T(1,128)}', space=vmem, size = 0x12000, scoped, tag = 'internal scratch']
  %s0 = inlined_call_operand.vmem [shape: bf16[2,8,8,32], index: 0, kind: input, shape index: {}]
  %s1 = inlined_call_operand.vmem [shape: bf16[2,288,8], index: 1, kind: input, shape index: {}]
  %s2 = inlined_call_operand.vmem [shape: f32[2,1,8], index: 2, kind: input, shape index: {}]
  %s3 = inlined_call_operand.vmem [shape: bf16[2,8,32], index: 3, kind: input, shape index: {}]
  %s4 = inlined_call_operand.vmem [shape: f32[2,1,32], index: 4, kind: input, shape index: {}]
  %s5 = inlined_call_operand.vmem [shape: bf16[288,32], index: 5, kind: input, shape index: {}]
  %s6 = inlined_call_operand.vmem [shape: f32[1,32], index: 6, kind: input, shape index: {}]
  %s7 = inlined_call_operand.vmem [shape: bf16[2,64,32], index: 7, kind: output, shape index: {}]
  %s8 = sld [smem:[#allocation0]]
  $region38: #{_decoder_bf16.3} parent=0
    _
  %s10 = ssub.s32 1, %s8
  %s11 = scalar_select 0, %s10, %s8
  // Predicated region
  $region2: #{_decoder_bf16.3} parent=0 // pred_check
    _
  $region3: #{_decoder_bf16.3} parent=0 // pred_check_branch
    %13 = sbr.rel (0) target = $region5
  $region4: #{_decoder_bf16.3} parent=0 // pred_region
    _
  $region5: #{_decoder_bf16.3} parent=0 // pred_fallthru
    _
  // Predicated region
  $region6: #{_decoder_bf16.3} parent=0 // pred_check
    _
  $region7: #{_decoder_bf16.3} parent=0 // pred_check_branch
    %15 = sbr.rel (0) target = $region9
  $region8: #{_decoder_bf16.3} parent=0 // pred_region
    _
  $region9: #{_decoder_bf16.3} parent=0 // pred_fallthru
    _
  // Predicated region
  $region10: #{_decoder_bf16.3} parent=0 // pred_check
    _
  $region11: #{_decoder_bf16.3} parent=0 // pred_check_branch
    %17 = sbr.rel (0) target = $region13
  $region12: #{_decoder_bf16.3} parent=0 // pred_region
    _
  $region13: #{_decoder_bf16.3} parent=0 // pred_fallthru
    _
  // Predicated region
  $region14: #{_decoder_bf16.3} parent=0 // pred_check
    _
  $region15: #{_decoder_bf16.3} parent=0 // pred_check_branch
    %19 = sbr.rel (0) target = $region17
  $region16: #{_decoder_bf16.3} parent=0 // pred_region
    _
  $region17: #{_decoder_bf16.3} parent=0 // pred_fallthru
    _
  // Predicated region
  $region18: #{_decoder_bf16.3} parent=0 // pred_check
    _
  $region19: #{_decoder_bf16.3} parent=0 // pred_check_branch
    %21 = sbr.rel (0) target = $region21
  $region20: #{_decoder_bf16.3} parent=0 // pred_region
    _
  $region21: #{_decoder_bf16.3} parent=0 // pred_fallthru
    _
  // Predicated region
  $region22: #{_decoder_bf16.3} parent=0 // pred_check
    _
  $region23: #{_decoder_bf16.3} parent=0 // pred_check_branch
    %23 = sbr.rel (0) target = $region25
  $region24: #{_decoder_bf16.3} parent=0 // pred_region
    _
  $region25: #{_decoder_bf16.3} parent=0 // pred_fallthru
    _
  // Predicated region
  $region26: #{_decoder_bf16.3} parent=0 // pred_check
    _
  $region27: #{_decoder_bf16.3} parent=0 // pred_check_branch
    %25 = sbr.rel (0) target = $region29
  $region28: #{_decoder_bf16.3} parent=0 // pred_region
    _
  $region29: #{_decoder_bf16.3} parent=0 // pred_fallthru
    _
  %v27 = vld [vmem:[%s0] sm:$0xf]
  %v28 = vld [vmem:[%s0 + $0x4] sm:$0xf]
  %v29 = vld [vmem:[%s0 + $0x8] sm:$0xf]
  %v30 = vld [vmem:[%s0 + $0xc] sm:$0xf]
  %v31 = vld [vmem:[%s0 + $0x10] sm:$0xf]
  %v32 = vld [vmem:[%s0 + $0x14] sm:$0xf]
  %v33 = vld [vmem:[%s0 + $0x18] sm:$0xf]
  %v34 = vld [vmem:[%s0 + $0x1c] sm:$0xf]
  %v35 = vunpack.c.l.bf16 %v27
  %v36 = vunpack.c.l.bf16 %v28
  %v37 = vunpack.c.l.bf16 %v29
  %v38 = vunpack.c.l.bf16 %v30
  %v39 = vunpack.c.l.bf16 %v31
  %v40 = vunpack.c.l.bf16 %v32
  %v41 = vunpack.c.l.bf16 %v33
  %v42 = vunpack.c.l.bf16 %v34
  %s43 = scalar_lea.vmem %s0, 32
  %v44 = vld [vmem:[%s43] sm:$0xf]
  %v45 = vld [vmem:[%s43 + $0x4] sm:$0xf]
  %v46 = vld [vmem:[%s43 + $0x8] sm:$0xf]
  %v47 = vld [vmem:[%s43 + $0xc] sm:$0xf]
  %v48 = vld [vmem:[%s43 + $0x10] sm:$0xf]
  %v49 = vld [vmem:[%s43 + $0x14] sm:$0xf]
  %v50 = vld [vmem:[%s43 + $0x18] sm:$0xf]
  %v51 = vld [vmem:[%s43 + $0x1c] sm:$0xf]
  %v52 = vunpack.c.l.bf16 %v44
  %v53 = vunpack.c.l.bf16 %v45
  %v54 = vunpack.c.l.bf16 %v46
  %v55 = vunpack.c.l.bf16 %v47
  %v56 = vunpack.c.l.bf16 %v48
  %v57 = vunpack.c.l.bf16 %v49
  %v58 = vunpack.c.l.bf16 %v50
  %v59 = vunpack.c.l.bf16 %v51
  %v60 = vmax.f32 %v35, 0.0
  %v61 = vmax.f32 %v36, 0.0
  %v62 = vmax.f32 %v37, 0.0
  %v63 = vmax.f32 %v38, 0.0
  %v64 = vmax.f32 %v39, 0.0
  %v65 = vmax.f32 %v40, 0.0
  %v66 = vmax.f32 %v41, 0.0
  %v67 = vmax.f32 %v42, 0.0
  %v77 = vrot.slane 0.0, 7
  %v78 = vrot.slane %v60, 7
  %v79 = vrot.slane %v61, 7
  %v80 = vrot.slane %v62, 7
  %v81 = vrot.slane %v63, 7
  %v82 = vrot.slane %v64, 7
  %v83 = vrot.slane %v65, 7
  %v84 = vrot.slane %v66, 7
  %v85 = vrot.slane %v67, 7
  %vm95 = vcmask 1040384
  %v96 = vsel %vm95, 0.0, %v77
  %v97 = vsel %vm95, 0.0, %v78
  %v98 = vsel %vm95, 0.0, %v79
  %v99 = vsel %vm95, 0.0, %v80
  %v100 = vsel %vm95, 0.0, %v81
  %v101 = vsel %vm95, 0.0, %v82
  %v102 = vsel %vm95, 0.0, %v83
  %v103 = vsel %vm95, 0.0, %v84
  %v104 = vsel %vm95, 0.0, %v85
  %v105 = vsel %vm95, %v77, 0.0
  %v106 = vsel %vm95, %v78, 0.0
  %v107 = vsel %vm95, %v79, 0.0
  %v108 = vsel %vm95, %v80, 0.0
  %v109 = vsel %vm95, %v81, 0.0
  %v110 = vsel %vm95, %v82, 0.0
  %v111 = vsel %vm95, %v83, 0.0
  %v112 = vsel %vm95, %v84, 0.0
  %v113 = vsel %vm95, %v85, 0.0
  %vm130 = vcmask 1046528
  %v131 = vrot.slane %v96, 1
  %v132 = vrot.slane %v105, 1
  %v133 = vsel %vm130, %v131, %v132
  %v134 = vrot.slane %v97, 1
  %v135 = vrot.slane %v106, 1
  %v136 = vsel %vm130, %v134, %v135
  %v137 = vrot.slane %v98, 1
  %v138 = vrot.slane %v107, 1
  %v139 = vsel %vm130, %v137, %v138
  %v140 = vrot.slane %v99, 1
  %v141 = vrot.slane %v108, 1
  %v142 = vsel %vm130, %v140, %v141
  %v143 = vrot.slane %v100, 1
  %v144 = vrot.slane %v109, 1
  %v145 = vsel %vm130, %v143, %v144
  %v146 = vrot.slane %v101, 1
  %v147 = vrot.slane %v110, 1
  %v148 = vsel %vm130, %v146, %v147
  %v149 = vrot.slane %v102, 1
  %v150 = vrot.slane %v111, 1
  %v151 = vsel %vm130, %v149, %v150
  %v152 = vrot.slane %v103, 1
  %v153 = vrot.slane %v112, 1
  %v154 = vsel %vm130, %v152, %v153
  %155 = vrot.lane.b32.xlu0 %v133, 32
  %v156 = vpop.permute.xlu0 %155
  %157 = vrot.lane.b32.xlu0 %v136, 32
  %v158 = vpop.permute.xlu0 %157
  %159 = vrot.lane.b32.xlu0 %v139, 32
  %v160 = vpop.permute.xlu0 %159
  %161 = vrot.lane.b32.xlu0 %v142, 32
  %v162 = vpop.permute.xlu0 %161
  %163 = vrot.lane.b32.xlu0 %v145, 32
  %v164 = vpop.permute.xlu0 %163
  %165 = vrot.lane.b32.xlu0 %v148, 32
  %v166 = vpop.permute.xlu0 %165
  %167 = vrot.lane.b32.xlu0 %v151, 32
  %v168 = vpop.permute.xlu0 %167
  %169 = vrot.lane.b32.xlu0 %v154, 32
  %v170 = vpop.permute.xlu0 %169
  %vm179 = vcmask 1045504
  %v180 = vrot.slane %v96, 2
  %v181 = vrot.slane %v105, 2
  %v182 = vsel %vm179, %v180, %v181
  %v183 = vrot.slane %v97, 2
  %v184 = vrot.slane %v106, 2
  %v185 = vsel %vm179, %v183, %v184
  %v186 = vrot.slane %v98, 2
  %v187 = vrot.slane %v107, 2
  %v188 = vsel %vm179, %v186, %v187
  %v189 = vrot.slane %v99, 2
  %v190 = vrot.slane %v108, 2
  %v191 = vsel %vm179, %v189, %v190
  %v192 = vrot.slane %v100, 2
  %v193 = vrot.slane %v109, 2
  %v194 = vsel %vm179, %v192, %v193
  %v195 = vrot.slane %v101, 2
  %v196 = vrot.slane %v110, 2
  %v197 = vsel %vm179, %v195, %v196
  %v198 = vrot.slane %v102, 2
  %v199 = vrot.slane %v111, 2
  %v200 = vsel %vm179, %v198, %v199
  %v201 = vrot.slane %v103, 2
  %v202 = vrot.slane %v112, 2
  %v203 = vsel %vm179, %v201, %v202
  %204 = vrot.lane.b32.xlu0 %v182, 64
  %v205 = vpop.permute.xlu0 %204
  %206 = vrot.lane.b32.xlu0 %v185, 64
  %v207 = vpop.permute.xlu0 %206
  %208 = vrot.lane.b32.xlu0 %v188, 64
  %v209 = vpop.permute.xlu0 %208
  %210 = vrot.lane.b32.xlu0 %v191, 64
  %v211 = vpop.permute.xlu0 %210
  %212 = vrot.lane.b32.xlu0 %v194, 64
  %v213 = vpop.permute.xlu0 %212
  %214 = vrot.lane.b32.xlu0 %v197, 64
  %v215 = vpop.permute.xlu0 %214
  %216 = vrot.lane.b32.xlu0 %v200, 64
  %v217 = vpop.permute.xlu0 %216
  %218 = vrot.lane.b32.xlu0 %v203, 64
  %v219 = vpop.permute.xlu0 %218
  %229 = vrot.lane.b32.xlu0 %v97, 96
  %v230 = vpop.permute.xlu0 %229
  %231 = vrot.lane.b32.xlu0 %v98, 96
  %v232 = vpop.permute.xlu0 %231
  %233 = vrot.lane.b32.xlu0 %v99, 96
  %v234 = vpop.permute.xlu0 %233
  %235 = vrot.lane.b32.xlu0 %v100, 96
  %v236 = vpop.permute.xlu0 %235
  %237 = vrot.lane.b32.xlu0 %v101, 96
  %v238 = vpop.permute.xlu0 %237
  %239 = vrot.lane.b32.xlu0 %v102, 96
  %v240 = vpop.permute.xlu0 %239
  %241 = vrot.lane.b32.xlu0 %v103, 96
  %v242 = vpop.permute.xlu0 %241
  %243 = vrot.lane.b32.xlu0 %v104, 96
  %v244 = vpop.permute.xlu0 %243
  %v254 = vrot.slane %v104, 1
  %v255 = vrot.slane %v113, 1
  %v256 = vsel %vm130, %v254, %v255
  %v265 = vrot.slane %v104, 2
  %v266 = vrot.slane %v113, 2
  %v267 = vsel %vm179, %v265, %v266
  %268 = vrot.lane.b32.xlu0 %v185, 32
  %v269 = vpop.permute.xlu0 %268
  %270 = vrot.lane.b32.xlu0 %v188, 32
  %v271 = vpop.permute.xlu0 %270
  %272 = vrot.lane.b32.xlu0 %v191, 32
  %v273 = vpop.permute.xlu0 %272
  %274 = vrot.lane.b32.xlu0 %v194, 32
  %v275 = vpop.permute.xlu0 %274
  %276 = vrot.lane.b32.xlu0 %v197, 32
  %v277 = vpop.permute.xlu0 %276
  %278 = vrot.lane.b32.xlu0 %v200, 32
  %v279 = vpop.permute.xlu0 %278
  %280 = vrot.lane.b32.xlu0 %v203, 32
  %v281 = vpop.permute.xlu0 %280
  %282 = vrot.lane.b32.xlu0 %v267, 32
  %v283 = vpop.permute.xlu0 %282
  %292 = vrot.lane.b32.xlu0 %v98, 64
  %v293 = vpop.permute.xlu0 %292
  %294 = vrot.lane.b32.xlu0 %v99, 64
  %v295 = vpop.permute.xlu0 %294
  %296 = vrot.lane.b32.xlu0 %v100, 64
  %v297 = vpop.permute.xlu0 %296
  %298 = vrot.lane.b32.xlu0 %v101, 64
  %v299 = vpop.permute.xlu0 %298
  %300 = vrot.lane.b32.xlu0 %v102, 64
  %v301 = vpop.permute.xlu0 %300
  %302 = vrot.lane.b32.xlu0 %v103, 64
  %v303 = vpop.permute.xlu0 %302
  %304 = vrot.lane.b32.xlu0 %v104, 64
  %v305 = vpop.permute.xlu0 %304
  %306 = vrot.lane.b32.xlu0 %v96, 64
  %v307 = vpop.permute.xlu0 %306
  %316 = vrot.lane.b32.xlu0 %v139, 96
  %v317 = vpop.permute.xlu0 %316
  %318 = vrot.lane.b32.xlu0 %v142, 96
  %v319 = vpop.permute.xlu0 %318
  %320 = vrot.lane.b32.xlu0 %v145, 96
  %v321 = vpop.permute.xlu0 %320
  %322 = vrot.lane.b32.xlu0 %v148, 96
  %v323 = vpop.permute.xlu0 %322
  %324 = vrot.lane.b32.xlu0 %v151, 96
  %v325 = vpop.permute.xlu0 %324
  %326 = vrot.lane.b32.xlu0 %v154, 96
  %v327 = vpop.permute.xlu0 %326
  %328 = vrot.lane.b32.xlu0 %v256, 96
  %v329 = vpop.permute.xlu0 %328
  %330 = vrot.lane.b32.xlu0 %v133, 96
  %v331 = vpop.permute.xlu0 %330
  %vm348 = vcmask 261120
  %v349 = vsel %vm348, %v96, %v156
  %v350 = vsel %vm348, %v97, %v158
  %v351 = vsel %vm348, %v98, %v160
  %v352 = vsel %vm348, %v99, %v162
  %v353 = vsel %vm348, %v100, %v164
  %v354 = vsel %vm348, %v101, %v166
  %v355 = vsel %vm348, %v102, %v168
  %v356 = vsel %vm348, %v103, %v170
  %vm357 = vcmask 523264
  %v358 = vsel %vm357, %v349, %v205
  %v359 = vsel %vm357, %v350, %v207
  %v360 = vsel %vm357, %v351, %v209
  %v361 = vsel %vm357, %v352, %v211
  %v362 = vsel %vm357, %v353, %v213
  %v363 = vsel %vm357, %v354, %v215
  %v364 = vsel %vm357, %v355, %v217
  %v365 = vsel %vm357, %v356, %v219
  %vm366 = vcmask 785408
  %v367 = vsel %vm366, %v358, %v230
  %v368 = vsel %vm366, %v359, %v232
  %v369 = vsel %vm366, %v360, %v234
  %v370 = vsel %vm366, %v361, %v236
  %v371 = vsel %vm366, %v362, %v238
  %v372 = vsel %vm366, %v363, %v240
  %v373 = vsel %vm366, %v364, %v242
  %v374 = vsel %vm366, %v365, %v244
  %v375 = vsel %vm348, %v136, %v269
  %v376 = vsel %vm348, %v139, %v271
  %v377 = vsel %vm348, %v142, %v273
  %v378 = vsel %vm348, %v145, %v275
  %v379 = vsel %vm348, %v148, %v277
  %v380 = vsel %vm348, %v151, %v279
  %v381 = vsel %vm348, %v154, %v281
  %v382 = vsel %vm348, %v256, %v283
  %v383 = vsel %vm357, %v375, %v293
  %v384 = vsel %vm357, %v376, %v295
  %v385 = vsel %vm357, %v377, %v297
  %v386 = vsel %vm357, %v378, %v299
  %v387 = vsel %vm357, %v379, %v301
  %v388 = vsel %vm357, %v380, %v303
  %v389 = vsel %vm357, %v381, %v305
  %v390 = vsel %vm357, %v382, %v307
  %v391 = vsel %vm366, %v383, %v317
  %v392 = vsel %vm366, %v384, %v319
  %v393 = vsel %vm366, %v385, %v321
  %v394 = vsel %vm366, %v386, %v323
  %v395 = vsel %vm366, %v387, %v325
  %v396 = vsel %vm366, %v388, %v327
  %v397 = vsel %vm366, %v389, %v329
  %v398 = vsel %vm366, %v390, %v331
  %v399 = vmax.f32 %v52, 0.0
  %v400 = vmax.f32 %v53, 0.0
  %v401 = vmax.f32 %v54, 0.0
  %v402 = vmax.f32 %v55, 0.0
  %v403 = vmax.f32 %v56, 0.0
  %v404 = vmax.f32 %v57, 0.0
  %v405 = vmax.f32 %v58, 0.0
  %v406 = vmax.f32 %v59, 0.0
  %v415 = vrot.slane %v399, 7
  %v416 = vrot.slane %v400, 7
  %v417 = vrot.slane %v401, 7
  %v418 = vrot.slane %v402, 7
  %v419 = vrot.slane %v403, 7
  %v420 = vrot.slane %v404, 7
  %v421 = vrot.slane %v405, 7
  %v422 = vrot.slane %v406, 7
  %v431 = vsel %vm95, 0.0, %v415
  %v432 = vsel %vm95, 0.0, %v416
  %v433 = vsel %vm95, 0.0, %v417
  %v434 = vsel %vm95, 0.0, %v418
  %v435 = vsel %vm95, 0.0, %v419
  %v436 = vsel %vm95, 0.0, %v420
  %v437 = vsel %vm95, 0.0, %v421
  %v438 = vsel %vm95, 0.0, %v422
  %v439 = vsel %vm95, %v415, 0.0
  %v440 = vsel %vm95, %v416, 0.0
  %v441 = vsel %vm95, %v417, 0.0
  %v442 = vsel %vm95, %v418, 0.0
  %v443 = vsel %vm95, %v419, 0.0
  %v444 = vsel %vm95, %v420, 0.0
  %v445 = vsel %vm95, %v421, 0.0
  %v446 = vsel %vm95, %v422, 0.0
  %v461 = vrot.slane %v431, 1
  %v462 = vrot.slane %v439, 1
  %v463 = vsel %vm130, %v461, %v462
  %v464 = vrot.slane %v432, 1
  %v465 = vrot.slane %v440, 1
  %v466 = vsel %vm130, %v464, %v465
  %v467 = vrot.slane %v433, 1
  %v468 = vrot.slane %v441, 1
  %v469 = vsel %vm130, %v467, %v468
  %v470 = vrot.slane %v434, 1
  %v471 = vrot.slane %v442, 1
  %v472 = vsel %vm130, %v470, %v471
  %v473 = vrot.slane %v435, 1
  %v474 = vrot.slane %v443, 1
  %v475 = vsel %vm130, %v473, %v474
  %v476 = vrot.slane %v436, 1
  %v477 = vrot.slane %v444, 1
  %v478 = vsel %vm130, %v476, %v477
  %v479 = vrot.slane %v437, 1
  %v480 = vrot.slane %v445, 1
  %v481 = vsel %vm130, %v479, %v480
  %482 = vrot.lane.b32.xlu0 %v463, 32
  %v483 = vpop.permute.xlu0 %482
  %484 = vrot.lane.b32.xlu0 %v466, 32
  %v485 = vpop.permute.xlu0 %484
  %486 = vrot.lane.b32.xlu0 %v469, 32
  %v487 = vpop.permute.xlu0 %486
  %488 = vrot.lane.b32.xlu0 %v472, 32
  %v489 = vpop.permute.xlu0 %488
  %490 = vrot.lane.b32.xlu0 %v475, 32
  %v491 = vpop.permute.xlu0 %490
  %492 = vrot.lane.b32.xlu0 %v478, 32
  %v493 = vpop.permute.xlu0 %492
  %494 = vrot.lane.b32.xlu0 %v481, 32
  %v495 = vpop.permute.xlu0 %494
  %v503 = vrot.slane %v431, 2
  %v504 = vrot.slane %v439, 2
  %v505 = vsel %vm179, %v503, %v504
  %v506 = vrot.slane %v432, 2
  %v507 = vrot.slane %v440, 2
  %v508 = vsel %vm179, %v506, %v507
  %v509 = vrot.slane %v433, 2
  %v510 = vrot.slane %v441, 2
  %v511 = vsel %vm179, %v509, %v510
  %v512 = vrot.slane %v434, 2
  %v513 = vrot.slane %v442, 2
  %v514 = vsel %vm179, %v512, %v513
  %v515 = vrot.slane %v435, 2
  %v516 = vrot.slane %v443, 2
  %v517 = vsel %vm179, %v515, %v516
  %v518 = vrot.slane %v436, 2
  %v519 = vrot.slane %v444, 2
  %v520 = vsel %vm179, %v518, %v519
  %v521 = vrot.slane %v437, 2
  %v522 = vrot.slane %v445, 2
  %v523 = vsel %vm179, %v521, %v522
  %524 = vrot.lane.b32.xlu0 %v505, 64
  %v525 = vpop.permute.xlu0 %524
  %526 = vrot.lane.b32.xlu0 %v508, 64
  %v527 = vpop.permute.xlu0 %526
  %528 = vrot.lane.b32.xlu0 %v511, 64
  %v529 = vpop.permute.xlu0 %528
  %530 = vrot.lane.b32.xlu0 %v514, 64
  %v531 = vpop.permute.xlu0 %530
  %532 = vrot.lane.b32.xlu0 %v517, 64
  %v533 = vpop.permute.xlu0 %532
  %534 = vrot.lane.b32.xlu0 %v520, 64
  %v535 = vpop.permute.xlu0 %534
  %536 = vrot.lane.b32.xlu0 %v523, 64
  %v537 = vpop.permute.xlu0 %536
  %546 = vrot.lane.b32.xlu0 %v431, 96
  %v547 = vpop.permute.xlu0 %546
  %548 = vrot.lane.b32.xlu0 %v432, 96
  %v549 = vpop.permute.xlu0 %548
  %550 = vrot.lane.b32.xlu0 %v433, 96
  %v551 = vpop.permute.xlu0 %550
  %552 = vrot.lane.b32.xlu0 %v434, 96
  %v553 = vpop.permute.xlu0 %552
  %554 = vrot.lane.b32.xlu0 %v435, 96
  %v555 = vpop.permute.xlu0 %554
  %556 = vrot.lane.b32.xlu0 %v436, 96
  %v557 = vpop.permute.xlu0 %556
  %558 = vrot.lane.b32.xlu0 %v437, 96
  %v559 = vpop.permute.xlu0 %558
  %560 = vrot.lane.b32.xlu0 %v438, 96
  %v561 = vpop.permute.xlu0 %560
  %v571 = vrot.slane %v438, 1
  %v572 = vrot.slane %v446, 1
  %v573 = vsel %vm130, %v571, %v572
  %v582 = vrot.slane %v438, 2
  %v583 = vrot.slane %v446, 2
  %v584 = vsel %vm179, %v582, %v583
  %585 = vrot.lane.b32.xlu0 %v505, 32
  %v586 = vpop.permute.xlu0 %585
  %587 = vrot.lane.b32.xlu0 %v508, 32
  %v588 = vpop.permute.xlu0 %587
  %589 = vrot.lane.b32.xlu0 %v511, 32
  %v590 = vpop.permute.xlu0 %589
  %591 = vrot.lane.b32.xlu0 %v514, 32
  %v592 = vpop.permute.xlu0 %591
  %593 = vrot.lane.b32.xlu0 %v517, 32
  %v594 = vpop.permute.xlu0 %593
  %595 = vrot.lane.b32.xlu0 %v520, 32
  %v596 = vpop.permute.xlu0 %595
  %597 = vrot.lane.b32.xlu0 %v523, 32
  %v598 = vpop.permute.xlu0 %597
  %599 = vrot.lane.b32.xlu0 %v584, 32
  %v600 = vpop.permute.xlu0 %599
  %609 = vrot.lane.b32.xlu0 %v432, 64
  %v610 = vpop.permute.xlu0 %609
  %611 = vrot.lane.b32.xlu0 %v433, 64
  %v612 = vpop.permute.xlu0 %611
  %613 = vrot.lane.b32.xlu0 %v434, 64
  %v614 = vpop.permute.xlu0 %613
  %615 = vrot.lane.b32.xlu0 %v435, 64
  %v616 = vpop.permute.xlu0 %615
  %617 = vrot.lane.b32.xlu0 %v436, 64
  %v618 = vpop.permute.xlu0 %617
  %619 = vrot.lane.b32.xlu0 %v437, 64
  %v620 = vpop.permute.xlu0 %619
  %621 = vrot.lane.b32.xlu0 %v438, 64
  %v622 = vpop.permute.xlu0 %621
  %630 = vrot.lane.b32.xlu0 %v466, 96
  %v631 = vpop.permute.xlu0 %630
  %632 = vrot.lane.b32.xlu0 %v469, 96
  %v633 = vpop.permute.xlu0 %632
  %634 = vrot.lane.b32.xlu0 %v472, 96
  %v635 = vpop.permute.xlu0 %634
  %636 = vrot.lane.b32.xlu0 %v475, 96
  %v637 = vpop.permute.xlu0 %636
  %638 = vrot.lane.b32.xlu0 %v478, 96
  %v639 = vpop.permute.xlu0 %638
  %640 = vrot.lane.b32.xlu0 %v481, 96
  %v641 = vpop.permute.xlu0 %640
  %642 = vrot.lane.b32.xlu0 %v573, 96
  %v643 = vpop.permute.xlu0 %642
  %v658 = vsel %vm348, %v431, %v483
  %v659 = vsel %vm348, %v432, %v485
  %v660 = vsel %vm348, %v433, %v487
  %v661 = vsel %vm348, %v434, %v489
  %v662 = vsel %vm348, %v435, %v491
  %v663 = vsel %vm348, %v436, %v493
  %v664 = vsel %vm348, %v437, %v495
  %v665 = vsel %vm357, %v658, %v525
  %v666 = vsel %vm357, %v659, %v527
  %v667 = vsel %vm357, %v660, %v529
  %v668 = vsel %vm357, %v661, %v531
  %v669 = vsel %vm357, %v662, %v533
  %v670 = vsel %vm357, %v663, %v535
  %v671 = vsel %vm357, %v664, %v537
  %v672 = vsel %vm366, %v358, %v547
  %v673 = vsel %vm366, %v665, %v549
  %v674 = vsel %vm366, %v666, %v551
  %v675 = vsel %vm366, %v667, %v553
  %v676 = vsel %vm366, %v668, %v555
  %v677 = vsel %vm366, %v669, %v557
  %v678 = vsel %vm366, %v670, %v559
  %v679 = vsel %vm366, %v671, %v561
  %v680 = vsel %vm348, %v463, %v586
  %v681 = vsel %vm348, %v466, %v588
  %v682 = vsel %vm348, %v469, %v590
  %v683 = vsel %vm348, %v472, %v592
  %v684 = vsel %vm348, %v475, %v594
  %v685 = vsel %vm348, %v478, %v596
  %v686 = vsel %vm348, %v481, %v598
  %v687 = vsel %vm348, %v573, %v600
  %v688 = vsel %vm357, %v680, %v610
  %v689 = vsel %vm357, %v681, %v612
  %v690 = vsel %vm357, %v682, %v614
  %v691 = vsel %vm357, %v683, %v616
  %v692 = vsel %vm357, %v684, %v618
  %v693 = vsel %vm357, %v685, %v620
  %v694 = vsel %vm357, %v686, %v622
  %v695 = vsel %vm357, %v687, %v307
  %v696 = vsel %vm366, %v688, %v631
  %v697 = vsel %vm366, %v689, %v633
  %v698 = vsel %vm366, %v690, %v635
  %v699 = vsel %vm366, %v691, %v637
  %v700 = vsel %vm366, %v692, %v639
  %v701 = vsel %vm366, %v693, %v641
  %v702 = vsel %vm366, %v694, %v643
  %v703 = vsel %vm366, %v695, %v331
  %v704 = vpack.c.bf16 %v368, %v367
  %v705 = vpack.c.bf16 %v392, %v391
  %v706 = vpack.c.bf16 %v191, %v188
  %v707 = vpack.c.bf16 %v370, %v369
  %v708 = vpack.c.bf16 %v394, %v393
  %v709 = vpack.c.bf16 %v197, %v194
  %v710 = vpack.c.bf16 %v372, %v371
  %v711 = vpack.c.bf16 %v396, %v395
  %v712 = vpack.c.bf16 %v203, %v200
  %v713 = vpack.c.bf16 %v374, %v373
  %v714 = vpack.c.bf16 %v398, %v397
  %v715 = vpack.c.bf16 %v182, %v267
  %v716 = vpack.c.bf16 %v673, %v672
  %v717 = vpack.c.bf16 %v697, %v696
  %v718 = vpack.c.bf16 %v511, %v508
  %v719 = vpack.c.bf16 %v675, %v674
  %v720 = vpack.c.bf16 %v699, %v698
  %v721 = vpack.c.bf16 %v517, %v514
  %v722 = vpack.c.bf16 %v677, %v676
  %v723 = vpack.c.bf16 %v701, %v700
  %v724 = vpack.c.bf16 %v523, %v520
  %v725 = vpack.c.bf16 %v679, %v678
  %v726 = vpack.c.bf16 %v703, %v702
  %v727 = vpack.c.bf16 %v182, %v584
  %v728 = vld [vmem:[%s1] sm:$0xf]
  %v729 = vld [vmem:[%s1 + $0x4] sm:$0xf]
  %v730 = vld [vmem:[%s1 + $0x8] sm:$0xf]
  %v731 = vld [vmem:[%s1 + $0xc] sm:$0xf]
  %v732 = vld [vmem:[%s1 + $0x10] sm:$0xf]
  %v733 = vld [vmem:[%s1 + $0x14] sm:$0xf]
  %v734 = vld [vmem:[%s1 + $0x18] sm:$0xf]
  %v735 = vld [vmem:[%s1 + $0x1c] sm:$0xf]
  %v736 = vld [vmem:[%s1 + $0x20] sm:$0xf]
  %v737 = vld [vmem:[%s1 + $0x24] sm:$0xf]
  %v738 = vld [vmem:[%s1 + $0x28] sm:$0xf]
  %v739 = vld [vmem:[%s1 + $0x2c] sm:$0xf]
  %v740 = vld [vmem:[%s1 + $0x30] sm:$0xf]
  %v741 = vld [vmem:[%s1 + $0x34] sm:$0xf]
  %v742 = vld [vmem:[%s1 + $0x38] sm:$0xf]
  %v743 = vld [vmem:[%s1 + $0x3c] sm:$0xf]
  %v744 = vld [vmem:[%s1 + $0x40] sm:$0xf]
  %v745 = vld [vmem:[%s1 + $0x44] sm:$0xf]
  %v746 = vld [vmem:[%s1 + $0x48] sm:$0xf]
  %v747 = vld [vmem:[%s1 + $0x4c] sm:$0xf]
  %v748 = vld [vmem:[%s1 + $0x50] sm:$0xf]
  %v749 = vld [vmem:[%s1 + $0x54] sm:$0xf]
  %v750 = vld [vmem:[%s1 + $0x58] sm:$0xf]
  %v751 = vld [vmem:[%s1 + $0x5c] sm:$0xf]
  %v752 = vld [vmem:[%s1 + $0x60] sm:$0xf]
  %v753 = vld [vmem:[%s1 + $0x64] sm:$0xf]
  %v754 = vld [vmem:[%s1 + $0x68] sm:$0xf]
  %v755 = vld [vmem:[%s1 + $0x6c] sm:$0xf]
  %v756 = vld [vmem:[%s1 + $0x70] sm:$0xf]
  %v757 = vld [vmem:[%s1 + $0x74] sm:$0xf]
  %v758 = vld [vmem:[%s1 + $0x78] sm:$0xf]
  %v759 = vld [vmem:[%s1 + $0x7c] sm:$0xf]
  %v760 = vld [vmem:[%s1 + $0x80] sm:$0xf]
  %v761 = vld [vmem:[%s1 + $0x84] sm:$0xf]
  %v762 = vld [vmem:[%s1 + $0x88] sm:$0xf]
  %v763 = vld [vmem:[%s1 + $0x8c] sm:$0xf]
  %v764 = vld [vmem:[%s2] sm:$0x1]
  %v766 = vlaneseq
  %v767 = vshrl.u32 %v766, 7
  %v768 = vsub.s32 0, %v767
  %v769 = vrot.slane %v764, %v768
  %v807 = vunpack.c.l.b16 %v728
  %v808 = vunpack.c.l.b16 %v729
  %v809 = vunpack.c.l.b16 %v730
  %v810 = vunpack.c.l.b16 %v731
  %v811 = vunpack.c.l.b16 %v732
  %v812 = vunpack.c.l.b16 %v733
  %v813 = vunpack.c.l.b16 %v734
  %v814 = vunpack.c.l.b16 %v735
  %v815 = vunpack.c.l.b16 %v736
  %v816 = vunpack.c.l.b16 %v737
  %v817 = vunpack.c.l.b16 %v738
  %v818 = vunpack.c.l.b16 %v739
  %v819 = vunpack.c.l.b16 %v740
  %v820 = vunpack.c.l.b16 %v741
  %v821 = vunpack.c.l.b16 %v742
  %v822 = vunpack.c.l.b16 %v743
  %v823 = vunpack.c.l.b16 %v744
  %v824 = vunpack.c.l.b16 %v745
  %v825 = vunpack.c.l.b16 %v746
  %v826 = vunpack.c.l.b16 %v747
  %v827 = vunpack.c.l.b16 %v748
  %v828 = vunpack.c.l.b16 %v749
  %v829 = vunpack.c.l.b16 %v750
  %v830 = vunpack.c.l.b16 %v751
  %v831 = vunpack.c.l.b16 %v752
  %v832 = vunpack.c.l.b16 %v753
  %v833 = vunpack.c.l.b16 %v754
  %v834 = vunpack.c.l.b16 %v755
  %v835 = vunpack.c.l.b16 %v756
  %v836 = vunpack.c.l.b16 %v757
  %v837 = vunpack.c.l.b16 %v758
  %v838 = vunpack.c.l.b16 %v759
  %v839 = vunpack.c.l.b16 %v760
  %v840 = vunpack.c.l.b16 %v761
  %v841 = vunpack.c.l.b16 %v762
  %v842 = vunpack.c.l.b16 %v763
  %v843 = vpack.c.b16 %v808, %v807
  %v844 = vpack.c.b16 %v810, %v809
  %v845 = vpack.c.b16 %v812, %v811
  %v846 = vpack.c.b16 %v814, %v813
  %v847 = vpack.c.b16 %v816, %v815
  %v848 = vpack.c.b16 %v818, %v817
  %v849 = vpack.c.b16 %v820, %v819
  %v850 = vpack.c.b16 %v822, %v821
  %v851 = vpack.c.b16 %v824, %v823
  %v852 = vpack.c.b16 %v826, %v825
  %v853 = vpack.c.b16 %v828, %v827
  %v854 = vpack.c.b16 %v830, %v829
  %v855 = vpack.c.b16 %v832, %v831
  %v856 = vpack.c.b16 %v834, %v833
  %v857 = vpack.c.b16 %v836, %v835
  %v858 = vpack.c.b16 %v838, %v837
  %v859 = vpack.c.b16 %v840, %v839
  %v860 = vpack.c.b16 %v842, %v841
  %v880 = vsel %vm348, %v706, 0
  %v883 = vsel %vm348, %v709, 0
  %v886 = vsel %vm348, %v712, 0
  %v889 = vsel %vm348, %v715, 0
  %v892 = vsel %vm348, %v718, 0
  %v895 = vsel %vm348, %v721, 0
  %v898 = vsel %vm348, %v724, 0
  %v901 = vsel %vm348, %v727, 0
  %903 = vmatprep.subr.bf16.mxu0 0
  %904 = vmatpush1.bf16.msra.mxu0 %v843
  %905 = vmatprep.subr.bf16.mxu0 0
  %906 = vmatpush1.bf16.msra.mxu0 %v844
  %907 = vmatprep.subr.bf16.mxu0 0
  %908 = vmatpush1.bf16.msra.mxu0 %v845
  %909 = vmatprep.subr.bf16.mxu0 0
  %910 = vmatpush1.bf16.msra.mxu0 %v846
  %911 = vmatprep.subr.bf16.mxu0 0
  %912 = vmatpush1.bf16.msra.mxu0 %v847
  %913 = vmatprep.subr.bf16.mxu0 0
  %914 = vmatpush1.bf16.msra.mxu0 %v848
  %915 = vmatprep.subr.bf16.mxu0 0
  %916 = vmatpush1.bf16.msra.mxu0 %v849
  %917 = vmatprep.subr.bf16.mxu0 0
  %918 = vmatpush1.bf16.msra.mxu0 %v850
  %919 = vmatprep.subr.bf16.mxu0 0
  %920 = vmatpush1.bf16.msra.mxu0 %v851
  %921 = vmatprep.subr.bf16.mxu0 0
  %922 = vmatpush1.bf16.msra.mxu0 %v852
  %923 = vmatprep.subr.bf16.mxu0 0
  %924 = vmatpush1.bf16.msra.mxu0 %v853
  %925 = vmatprep.subr.bf16.mxu0 0
  %926 = vmatpush1.bf16.msra.mxu0 %v854
  %927 = vmatprep.subr.bf16.mxu0 0
  %928 = vmatpush1.bf16.msra.mxu0 %v855
  %929 = vmatprep.subr.bf16.mxu0 0
  %930 = vmatpush1.bf16.msra.mxu0 %v856
  %931 = vmatprep.subr.bf16.mxu0 0
  %932 = vmatpush1.bf16.msra.mxu0 %v857
  %933 = vmatprep.subr.bf16.mxu0 0
  %934 = vmatpush1.bf16.msra.mxu0 %v858
  %935 = vmatprep.mubr.bf16.mxu0 %v705
  %936 = vmatmul.mubr.bf16.gmra.mrb[0].mxu0 %v704
  %v937 = vpop.f32.mrb[0].mxu0
  %v938 = vadd.f32 %v769, %v937
  %v939 = vpop.f32.mrb[0].mxu0
  %v940 = vpop.f32.mrb[0].mxu0
  %v941 = vadd.f32 %v769, %v940
  %v942 = vpop.f32.mrb[0].mxu0
  %943 = vmatprep.mubr.bf16.mxu0 %v708
  %944 = vmatmul.mubr.bf16.gmra.mrb[0].mxu0 %v707
  %v945 = vpop.f32.mrb[0].mxu0
  %v946 = vadd.f32 %v769, %v945
  %v947 = vpop.f32.mrb[0].mxu0
  %v948 = vpop.f32.mrb[0].mxu0
  %v949 = vadd.f32 %v769, %v948
  %v950 = vpop.f32.mrb[0].mxu0
  %951 = vmatprep.mubr.bf16.mxu0 %v711
  %952 = vmatmul.mubr.bf16.gmra.mrb[0].mxu0 %v710
  %v953 = vpop.f32.mrb[0].mxu0
  %v954 = vadd.f32 %v769, %v953
  %v955 = vpop.f32.mrb[0].mxu0
  %v956 = vpop.f32.mrb[0].mxu0
  %v957 = vadd.f32 %v769, %v956
  %v958 = vpop.f32.mrb[0].mxu0
  %959 = vmatprep.mubr.bf16.mxu0 %v714
  %960 = vmatmul.mubr.bf16.gmra.mrb[0].mxu0 %v713
  %v961 = vpop.f32.mrb[0].mxu0
  %v962 = vadd.f32 %v769, %v961
  %v963 = vpop.f32.mrb[0].mxu0
  %v964 = vpop.f32.mrb[0].mxu0
  %v965 = vadd.f32 %v769, %v964
  %v966 = vpop.f32.mrb[0].mxu0
  %967 = vmatprep.mubr.bf16.mxu0 %v717
  %968 = vmatmul.mubr.bf16.gmra.mrb[0].mxu0 %v716
  %v969 = vpop.f32.mrb[0].mxu0
  %v970 = vadd.f32 %v769, %v969
  %v971 = vpop.f32.mrb[0].mxu0
  %v972 = vpop.f32.mrb[0].mxu0
  %v973 = vadd.f32 %v769, %v972
  %v974 = vpop.f32.mrb[0].mxu0
  %975 = vmatprep.mubr.bf16.mxu0 %v720
  %976 = vmatmul.mubr.bf16.gmra.mrb[0].mxu0 %v719
  %v977 = vpop.f32.mrb[0].mxu0
  %v978 = vadd.f32 %v769, %v977
  %v979 = vpop.f32.mrb[0].mxu0
  %v980 = vpop.f32.mrb[0].mxu0
  %v981 = vadd.f32 %v769, %v980
  %v982 = vpop.f32.mrb[0].mxu0
  %983 = vmatprep.mubr.bf16.mxu0 %v723
  %984 = vmatmul.mubr.bf16.gmra.mrb[0].mxu0 %v722
  %v985 = vpop.f32.mrb[0].mxu0
  %v986 = vadd.f32 %v769, %v985
  %v987 = vpop.f32.mrb[0].mxu0
  %v988 = vpop.f32.mrb[0].mxu0
  %v989 = vadd.f32 %v769, %v988
  %v990 = vpop.f32.mrb[0].mxu0
  %991 = vmatprep.mubr.bf16.mxu0 %v726
  %992 = vmatmul.mubr.bf16.gmra.mrb[0].mxu0 %v725
  %v993 = vpop.f32.mrb[0].mxu0
  %v994 = vadd.f32 %v769, %v993
  %v995 = vpop.f32.mrb[0].mxu0
  %v996 = vpop.f32.mrb[0].mxu0
  %v997 = vadd.f32 %v769, %v996
  %v998 = vpop.f32.mrb[0].mxu0
  %999 = vdwg.mxu0
  %1000 = vmatprep.subr.bf16.mxu0 0
  %1001 = vmatpush1.bf16.msra.mxu0 %v859
  %1002 = vmatprep.subr.bf16.mxu0 0
  %1003 = vmatpush1.bf16.msra.mxu0 %v860
  %1004 = vmatprep.subr.bf16.mxu0 0
  %1005 = vmatpush1.bf16.msra.mxu0 0
  %1006 = vmatprep.subr.bf16.mxu0 0
  %1007 = vmatpush1.bf16.msra.mxu0 0
  %1008 = vmatprep.subr.bf16.mxu0 0
  %1009 = vmatpush1.bf16.msra.mxu0 0
  %1010 = vmatprep.subr.bf16.mxu0 0
  %1011 = vmatpush1.bf16.msra.mxu0 0
  %1012 = vmatprep.subr.bf16.mxu0 0
  %1013 = vmatpush1.bf16.msra.mxu0 0
  %1014 = vmatprep.subr.bf16.mxu0 0
  %1015 = vmatpush1.bf16.msra.mxu0 0
  %1016 = vmatprep.subr.bf16.mxu0 0
  %1017 = vmatpush1.bf16.msra.mxu0 0
  %1018 = vmatprep.subr.bf16.mxu0 0
  %1019 = vmatpush1.bf16.msra.mxu0 0
  %1020 = vmatprep.subr.bf16.mxu0 0
  %1021 = vmatpush1.bf16.msra.mxu0 0
  %1022 = vmatprep.subr.bf16.mxu0 0
  %1023 = vmatpush1.bf16.msra.mxu0 0
  %1024 = vmatprep.subr.bf16.mxu0 0
  %1025 = vmatpush1.bf16.msra.mxu0 0
  %1026 = vmatprep.subr.bf16.mxu0 0
  %1027 = vmatpush1.bf16.msra.mxu0 0
  %1028 = vmatprep.subr.bf16.mxu0 0
  %1029 = vmatpush1.bf16.msra.mxu0 0
  %1030 = vmatprep.subr.bf16.mxu0 0
  %1031 = vmatpush1.bf16.msra.mxu0 0
  %1032 = vmatprep.mubr.bf16.mxu0 0
  %1033 = vmatmul.mubr.bf16.gmra.mrb[0].mxu0 %v880
  %v1034 = vpop.f32.mrb[0].mxu0
  %v1035 = vadd.f32 %v938, %v1034
  %v1036 = vpop.f32.mrb[0].mxu0
  %v1037 = vpop.f32.mrb[0].mxu0
  %v1038 = vadd.f32 %v941, %v1037
  %v1039 = vpop.f32.mrb[0].mxu0
  %1040 = vmatprep.mubr.bf16.mxu0 0
  %1041 = vmatmul.mubr.bf16.gmra.mrb[0].mxu0 %v883
  %v1042 = vpop.f32.mrb[0].mxu0
  %v1043 = vadd.f32 %v946, %v1042
  %v1044 = vpop.f32.mrb[0].mxu0
  %v1045 = vpop.f32.mrb[0].mxu0
  %v1046 = vadd.f32 %v949, %v1045
  %v1047 = vpop.f32.mrb[0].mxu0
  %1048 = vmatprep.mubr.bf16.mxu0 0
  %1049 = vmatmul.mubr.bf16.gmra.mrb[0].mxu0 %v886
  %v1050 = vpop.f32.mrb[0].mxu0
  %v1051 = vadd.f32 %v954, %v1050
  %v1052 = vpop.f32.mrb[0].mxu0
  %v1053 = vpop.f32.mrb[0].mxu0
  %v1054 = vadd.f32 %v957, %v1053
  %v1055 = vpop.f32.mrb[0].mxu0
  %1056 = vmatprep.mubr.bf16.mxu0 0
  %1057 = vmatmul.mubr.bf16.gmra.mrb[0].mxu0 %v889
  %v1058 = vpop.f32.mrb[0].mxu0
  %v1059 = vadd.f32 %v962, %v1058
  %v1060 = vpop.f32.mrb[0].mxu0
  %v1061 = vpop.f32.mrb[0].mxu0
  %v1062 = vadd.f32 %v965, %v1061
  %v1063 = vpop.f32.mrb[0].mxu0
  %1064 = vmatprep.mubr.bf16.mxu0 0
  %1065 = vmatmul.mubr.bf16.gmra.mrb[0].mxu0 %v892
  %v1066 = vpop.f32.mrb[0].mxu0
  %v1067 = vadd.f32 %v970, %v1066
  %v1068 = vpop.f32.mrb[0].mxu0
  %v1069 = vpop.f32.mrb[0].mxu0
  %v1070 = vadd.f32 %v973, %v1069
  %v1071 = vpop.f32.mrb[0].mxu0
  %1072 = vmatprep.mubr.bf16.mxu0 0
  %1073 = vmatmul.mubr.bf16.gmra.mrb[0].mxu0 %v895
  %v1074 = vpop.f32.mrb[0].mxu0
  %v1075 = vadd.f32 %v978, %v1074
  %v1076 = vpop.f32.mrb[0].mxu0
  %v1077 = vpop.f32.mrb[0].mxu0
  %v1078 = vadd.f32 %v981, %v1077
  %v1079 = vpop.f32.mrb[0].mxu0
  %1080 = vmatprep.mubr.bf16.mxu0 0
  %1081 = vmatmul.mubr.bf16.gmra.mrb[0].mxu0 %v898
  %v1082 = vpop.f32.mrb[0].mxu0
  %v1083 = vadd.f32 %v986, %v1082
  %v1084 = vpop.f32.mrb[0].mxu0
  %v1085 = vpop.f32.mrb[0].mxu0
  %v1086 = vadd.f32 %v989, %v1085
  %v1087 = vpop.f32.mrb[0].mxu0
  %1088 = vmatprep.mubr.bf16.mxu0 0
  %1089 = vmatmul.mubr.bf16.gmra.mrb[0].mxu0 %v901
  %v1090 = vpop.f32.mrb[0].mxu0
  %v1091 = vadd.f32 %v994, %v1090
  %v1092 = vpop.f32.mrb[0].mxu0
  %v1093 = vpop.f32.mrb[0].mxu0
  %v1094 = vadd.f32 %v997, %v1093
  %v1095 = vpop.f32.mrb[0].mxu0
  %1096 = vdwg.mxu0
  %v1097 = vmax.f32 %v1035, 0.0
  %v1098 = vmax.f32 %v1038, 0.0
  %v1099 = vmax.f32 %v1043, 0.0
  %v1100 = vmax.f32 %v1046, 0.0
  %v1101 = vmax.f32 %v1051, 0.0
  %v1102 = vmax.f32 %v1054, 0.0
  %v1103 = vmax.f32 %v1059, 0.0
  %v1104 = vmax.f32 %v1062, 0.0
  %v1105 = vmax.f32 %v1067, 0.0
  %v1106 = vmax.f32 %v1070, 0.0
  %v1107 = vmax.f32 %v1075, 0.0
  %v1108 = vmax.f32 %v1078, 0.0
  %v1109 = vmax.f32 %v1083, 0.0
  %v1110 = vmax.f32 %v1086, 0.0
  %v1111 = vmax.f32 %v1091, 0.0
  %v1112 = vmax.f32 %v1094, 0.0
  %v1113 = vpack.c.bf16 %v1098, %v1097
  %v1114 = vpack.c.bf16 %v1100, %v1099
  %v1115 = vpack.c.bf16 %v1102, %v1101
  %v1116 = vpack.c.bf16 %v1104, %v1103
  %v1117 = vpack.c.bf16 %v1106, %v1105
  %v1118 = vpack.c.bf16 %v1108, %v1107
  %v1119 = vpack.c.bf16 %v1110, %v1109
  %v1120 = vpack.c.bf16 %v1112, %v1111
  %v1121 = vld [vmem:[%s3] sm:$0xf]
  %v1122 = vld [vmem:[%s4] sm:$0x1]
  %v1124 = vlaneseq
  %v1125 = vshrl.u32 %v1124, 7
  %v1126 = vsub.s32 0, %v1125
  %v1127 = vrot.slane %v1122, %v1126
  %vm1129 = vcmask 64512
  %v1131 = vsel %vm1129, %v1113, 0
  %v1134 = vsel %vm1129, %v1114, 0
  %v1137 = vsel %vm1129, %v1115, 0
  %v1140 = vsel %vm1129, %v1116, 0
  %v1143 = vsel %vm1129, %v1117, 0
  %v1146 = vsel %vm1129, %v1118, 0
  %v1149 = vsel %vm1129, %v1119, 0
  %v1152 = vsel %vm1129, %v1120, 0
  %vm1154 = vcmask 1043456
  %v1156 = vsel %vm1154, %v1121, 0
  %1158 = vmatprep.subr.bf16.mxu0 0
  %1159 = vmatpush1.bf16.msra.mxu0 %v1156
  %1160 = vmatprep.subr.bf16.mxu0 0
  %1161 = vmatpush1.bf16.msra.mxu0 0
  %1162 = vmatprep.subr.bf16.mxu0 0
  %1163 = vmatpush1.bf16.msra.mxu0 0
  %1164 = vmatprep.subr.bf16.mxu0 0
  %1165 = vmatpush1.bf16.msra.mxu0 0
  %1166 = vmatprep.subr.bf16.mxu0 0
  %1167 = vmatpush1.bf16.msra.mxu0 0
  %1168 = vmatprep.subr.bf16.mxu0 0
  %1169 = vmatpush1.bf16.msra.mxu0 0
  %1170 = vmatprep.subr.bf16.mxu0 0
  %1171 = vmatpush1.bf16.msra.mxu0 0
  %1172 = vmatprep.subr.bf16.mxu0 0
  %1173 = vmatpush1.bf16.msra.mxu0 0
  %1174 = vmatprep.subr.bf16.mxu0 0
  %1175 = vmatpush1.bf16.msra.mxu0 0
  %1176 = vmatprep.subr.bf16.mxu0 0
  %1177 = vmatpush1.bf16.msra.mxu0 0
  %1178 = vmatprep.subr.bf16.mxu0 0
  %1179 = vmatpush1.bf16.msra.mxu0 0
  %1180 = vmatprep.subr.bf16.mxu0 0
  %1181 = vmatpush1.bf16.msra.mxu0 0
  %1182 = vmatprep.subr.bf16.mxu0 0
  %1183 = vmatpush1.bf16.msra.mxu0 0
  %1184 = vmatprep.subr.bf16.mxu0 0
  %1185 = vmatpush1.bf16.msra.mxu0 0
  %1186 = vmatprep.subr.bf16.mxu0 0
  %1187 = vmatpush1.bf16.msra.mxu0 0
  %1188 = vmatprep.subr.bf16.mxu0 0
  %1189 = vmatpush1.bf16.msra.mxu0 0
  %1190 = vmatprep.mubr.bf16.mxu0 0
  %1191 = vmatmul.mubr.bf16.gmra.mrb[0].mxu0 %v1131
  %v1192 = vpop.f32.mrb[0].mxu0
  %v1193 = vadd.f32 %v1127, %v1192
  %v1194 = vpop.f32.mrb[0].mxu0
  %v1195 = vpop.f32.mrb[0].mxu0
  %v1196 = vadd.f32 %v1127, %v1195
  %v1197 = vpop.f32.mrb[0].mxu0
  %1198 = vmatprep.mubr.bf16.mxu0 0
  %1199 = vmatmul.mubr.bf16.gmra.mrb[0].mxu0 %v1134
  %v1200 = vpop.f32.mrb[0].mxu0
  %v1201 = vadd.f32 %v1127, %v1200
  %v1202 = vpop.f32.mrb[0].mxu0
  %v1203 = vpop.f32.mrb[0].mxu0
  %v1204 = vadd.f32 %v1127, %v1203
  %v1205 = vpop.f32.mrb[0].mxu0
  %1206 = vmatprep.mubr.bf16.mxu0 0
  %1207 = vmatmul.mubr.bf16.gmra.mrb[0].mxu0 %v1137
  %v1208 = vpop.f32.mrb[0].mxu0
  %v1209 = vadd.f32 %v1127, %v1208
  %v1210 = vpop.f32.mrb[0].mxu0
  %v1211 = vpop.f32.mrb[0].mxu0
  %v1212 = vadd.f32 %v1127, %v1211
  %v1213 = vpop.f32.mrb[0].mxu0
  %1214 = vmatprep.mubr.bf16.mxu0 0
  %1215 = vmatmul.mubr.bf16.gmra.mrb[0].mxu0 %v1140
  %v1216 = vpop.f32.mrb[0].mxu0
  %v1217 = vadd.f32 %v1127, %v1216
  %v1218 = vpop.f32.mrb[0].mxu0
  %v1219 = vpop.f32.mrb[0].mxu0
  %v1220 = vadd.f32 %v1127, %v1219
  %v1221 = vpop.f32.mrb[0].mxu0
  %1222 = vmatprep.mubr.bf16.mxu0 0
  %1223 = vmatmul.mubr.bf16.gmra.mrb[0].mxu0 %v1143
  %v1224 = vpop.f32.mrb[0].mxu0
  %v1225 = vadd.f32 %v1127, %v1224
  %v1226 = vpop.f32.mrb[0].mxu0
  %v1227 = vpop.f32.mrb[0].mxu0
  %v1228 = vadd.f32 %v1127, %v1227
  %v1229 = vpop.f32.mrb[0].mxu0
  %1230 = vmatprep.mubr.bf16.mxu0 0
  %1231 = vmatmul.mubr.bf16.gmra.mrb[0].mxu0 %v1146
  %v1232 = vpop.f32.mrb[0].mxu0
  %v1233 = vadd.f32 %v1127, %v1232
  %v1234 = vpop.f32.mrb[0].mxu0
  %v1235 = vpop.f32.mrb[0].mxu0
  %v1236 = vadd.f32 %v1127, %v1235
  %v1237 = vpop.f32.mrb[0].mxu0
  %1238 = vmatprep.mubr.bf16.mxu0 0
  %1239 = vmatmul.mubr.bf16.gmra.mrb[0].mxu0 %v1149
  %v1240 = vpop.f32.mrb[0].mxu0
  %v1241 = vadd.f32 %v1127, %v1240
  %v1242 = vpop.f32.mrb[0].mxu0
  %v1243 = vpop.f32.mrb[0].mxu0
  %v1244 = vadd.f32 %v1127, %v1243
  %v1245 = vpop.f32.mrb[0].mxu0
  %1246 = vmatprep.mubr.bf16.mxu0 0
  %1247 = vmatmul.mubr.bf16.gmra.mrb[0].mxu0 %v1152
  %v1248 = vpop.f32.mrb[0].mxu0
  %v1249 = vadd.f32 %v1127, %v1248
  %v1250 = vpop.f32.mrb[0].mxu0
  %v1251 = vpop.f32.mrb[0].mxu0
  %v1252 = vadd.f32 %v1127, %v1251
  %v1253 = vpop.f32.mrb[0].mxu0
  %1254 = vdwg.mxu0
  %v1255 = vadd.f32 %v35, %v1193
  %v1256 = vadd.f32 %v36, %v1196
  %v1257 = vadd.f32 %v37, %v1201
  %v1258 = vadd.f32 %v38, %v1204
  %v1259 = vadd.f32 %v39, %v1209
  %v1260 = vadd.f32 %v40, %v1212
  %v1261 = vadd.f32 %v41, %v1217
  %v1262 = vadd.f32 %v42, %v1220
  %v1263 = vadd.f32 %v52, %v1225
  %v1264 = vadd.f32 %v53, %v1228
  %v1265 = vadd.f32 %v54, %v1233
  %v1266 = vadd.f32 %v55, %v1236
  %v1267 = vadd.f32 %v56, %v1241
  %v1268 = vadd.f32 %v57, %v1244
  %v1269 = vadd.f32 %v58, %v1249
  %v1270 = vadd.f32 %v59, %v1252
  %v1271 = vmax.f32 %v1255, 0.0
  %v1272 = vmax.f32 %v1256, 0.0
  %v1273 = vmax.f32 %v1257, 0.0
  %v1274 = vmax.f32 %v1258, 0.0
  %v1275 = vmax.f32 %v1259, 0.0
  %v1276 = vmax.f32 %v1260, 0.0
  %v1277 = vmax.f32 %v1261, 0.0
  %v1278 = vmax.f32 %v1262, 0.0
  %v1287 = vrot.slane %v1271, 7
  %v1288 = vrot.slane %v1272, 7
  %v1289 = vrot.slane %v1273, 7
  %v1290 = vrot.slane %v1274, 7
  %v1291 = vrot.slane %v1275, 7
  %v1292 = vrot.slane %v1276, 7
  %v1293 = vrot.slane %v1277, 7
  %v1294 = vrot.slane %v1278, 7
  %v1303 = vsel %vm95, 0.0, %v1287
  %v1304 = vsel %vm95, 0.0, %v1288
  %v1305 = vsel %vm95, 0.0, %v1289
  %v1306 = vsel %vm95, 0.0, %v1290
  %v1307 = vsel %vm95, 0.0, %v1291
  %v1308 = vsel %vm95, 0.0, %v1292
  %v1309 = vsel %vm95, 0.0, %v1293
  %v1310 = vsel %vm95, 0.0, %v1294
  %v1311 = vsel %vm95, %v1287, 0.0
  %v1312 = vsel %vm95, %v1288, 0.0
  %v1313 = vsel %vm95, %v1289, 0.0
  %v1314 = vsel %vm95, %v1290, 0.0
  %v1315 = vsel %vm95, %v1291, 0.0
  %v1316 = vsel %vm95, %v1292, 0.0
  %v1317 = vsel %vm95, %v1293, 0.0
  %v1318 = vsel %vm95, %v1294, 0.0
  %v1333 = vrot.slane %v1303, 1
  %v1334 = vrot.slane %v1311, 1
  %v1335 = vsel %vm130, %v1333, %v1334
  %v1336 = vrot.slane %v1304, 1
  %v1337 = vrot.slane %v1312, 1
  %v1338 = vsel %vm130, %v1336, %v1337
  %v1339 = vrot.slane %v1305, 1
  %v1340 = vrot.slane %v1313, 1
  %v1341 = vsel %vm130, %v1339, %v1340
  %v1342 = vrot.slane %v1306, 1
  %v1343 = vrot.slane %v1314, 1
  %v1344 = vsel %vm130, %v1342, %v1343
  %v1345 = vrot.slane %v1307, 1
  %v1346 = vrot.slane %v1315, 1
  %v1347 = vsel %vm130, %v1345, %v1346
  %v1348 = vrot.slane %v1308, 1
  %v1349 = vrot.slane %v1316, 1
  %v1350 = vsel %vm130, %v1348, %v1349
  %v1351 = vrot.slane %v1309, 1
  %v1352 = vrot.slane %v1317, 1
  %v1353 = vsel %vm130, %v1351, %v1352
  %1354 = vrot.lane.b32.xlu0 %v1335, 32
  %v1355 = vpop.permute.xlu0 %1354
  %1356 = vrot.lane.b32.xlu0 %v1338, 32
  %v1357 = vpop.permute.xlu0 %1356
  %1358 = vrot.lane.b32.xlu0 %v1341, 32
  %v1359 = vpop.permute.xlu0 %1358
  %1360 = vrot.lane.b32.xlu0 %v1344, 32
  %v1361 = vpop.permute.xlu0 %1360
  %1362 = vrot.lane.b32.xlu0 %v1347, 32
  %v1363 = vpop.permute.xlu0 %1362
  %1364 = vrot.lane.b32.xlu0 %v1350, 32
  %v1365 = vpop.permute.xlu0 %1364
  %1366 = vrot.lane.b32.xlu0 %v1353, 32
  %v1367 = vpop.permute.xlu0 %1366
  %v1375 = vrot.slane %v1303, 2
  %v1376 = vrot.slane %v1311, 2
  %v1377 = vsel %vm179, %v1375, %v1376
  %v1378 = vrot.slane %v1304, 2
  %v1379 = vrot.slane %v1312, 2
  %v1380 = vsel %vm179, %v1378, %v1379
  %v1381 = vrot.slane %v1305, 2
  %v1382 = vrot.slane %v1313, 2
  %v1383 = vsel %vm179, %v1381, %v1382
  %v1384 = vrot.slane %v1306, 2
  %v1385 = vrot.slane %v1314, 2
  %v1386 = vsel %vm179, %v1384, %v1385
  %v1387 = vrot.slane %v1307, 2
  %v1388 = vrot.slane %v1315, 2
  %v1389 = vsel %vm179, %v1387, %v1388
  %v1390 = vrot.slane %v1308, 2
  %v1391 = vrot.slane %v1316, 2
  %v1392 = vsel %vm179, %v1390, %v1391
  %v1393 = vrot.slane %v1309, 2
  %v1394 = vrot.slane %v1317, 2
  %v1395 = vsel %vm179, %v1393, %v1394
  %1396 = vrot.lane.b32.xlu0 %v1377, 64
  %v1397 = vpop.permute.xlu0 %1396
  %1398 = vrot.lane.b32.xlu0 %v1380, 64
  %v1399 = vpop.permute.xlu0 %1398
  %1400 = vrot.lane.b32.xlu0 %v1383, 64
  %v1401 = vpop.permute.xlu0 %1400
  %1402 = vrot.lane.b32.xlu0 %v1386, 64
  %v1403 = vpop.permute.xlu0 %1402
  %1404 = vrot.lane.b32.xlu0 %v1389, 64
  %v1405 = vpop.permute.xlu0 %1404
  %1406 = vrot.lane.b32.xlu0 %v1392, 64
  %v1407 = vpop.permute.xlu0 %1406
  %1408 = vrot.lane.b32.xlu0 %v1395, 64
  %v1409 = vpop.permute.xlu0 %1408
  %1418 = vrot.lane.b32.xlu0 %v1303, 96
  %v1419 = vpop.permute.xlu0 %1418
  %1420 = vrot.lane.b32.xlu0 %v1304, 96
  %v1421 = vpop.permute.xlu0 %1420
  %1422 = vrot.lane.b32.xlu0 %v1305, 96
  %v1423 = vpop.permute.xlu0 %1422
  %1424 = vrot.lane.b32.xlu0 %v1306, 96
  %v1425 = vpop.permute.xlu0 %1424
  %1426 = vrot.lane.b32.xlu0 %v1307, 96
  %v1427 = vpop.permute.xlu0 %1426
  %1428 = vrot.lane.b32.xlu0 %v1308, 96
  %v1429 = vpop.permute.xlu0 %1428
  %1430 = vrot.lane.b32.xlu0 %v1309, 96
  %v1431 = vpop.permute.xlu0 %1430
  %1432 = vrot.lane.b32.xlu0 %v1310, 96
  %v1433 = vpop.permute.xlu0 %1432
  %v1443 = vrot.slane %v1310, 1
  %v1444 = vrot.slane %v1318, 1
  %v1445 = vsel %vm130, %v1443, %v1444
  %v1454 = vrot.slane %v1310, 2
  %v1455 = vrot.slane %v1318, 2
  %v1456 = vsel %vm179, %v1454, %v1455
  %1457 = vrot.lane.b32.xlu0 %v1377, 32
  %v1458 = vpop.permute.xlu0 %1457
  %1459 = vrot.lane.b32.xlu0 %v1380, 32
  %v1460 = vpop.permute.xlu0 %1459
  %1461 = vrot.lane.b32.xlu0 %v1383, 32
  %v1462 = vpop.permute.xlu0 %1461
  %1463 = vrot.lane.b32.xlu0 %v1386, 32
  %v1464 = vpop.permute.xlu0 %1463
  %1465 = vrot.lane.b32.xlu0 %v1389, 32
  %v1466 = vpop.permute.xlu0 %1465
  %1467 = vrot.lane.b32.xlu0 %v1392, 32
  %v1468 = vpop.permute.xlu0 %1467
  %1469 = vrot.lane.b32.xlu0 %v1395, 32
  %v1470 = vpop.permute.xlu0 %1469
  %1471 = vrot.lane.b32.xlu0 %v1456, 32
  %v1472 = vpop.permute.xlu0 %1471
  %1481 = vrot.lane.b32.xlu0 %v1304, 64
  %v1482 = vpop.permute.xlu0 %1481
  %1483 = vrot.lane.b32.xlu0 %v1305, 64
  %v1484 = vpop.permute.xlu0 %1483
  %1485 = vrot.lane.b32.xlu0 %v1306, 64
  %v1486 = vpop.permute.xlu0 %1485
  %1487 = vrot.lane.b32.xlu0 %v1307, 64
  %v1488 = vpop.permute.xlu0 %1487
  %1489 = vrot.lane.b32.xlu0 %v1308, 64
  %v1490 = vpop.permute.xlu0 %1489
  %1491 = vrot.lane.b32.xlu0 %v1309, 64
  %v1492 = vpop.permute.xlu0 %1491
  %1493 = vrot.lane.b32.xlu0 %v1310, 64
  %v1494 = vpop.permute.xlu0 %1493
  %1502 = vrot.lane.b32.xlu0 %v1338, 96
  %v1503 = vpop.permute.xlu0 %1502
  %1504 = vrot.lane.b32.xlu0 %v1341, 96
  %v1505 = vpop.permute.xlu0 %1504
  %1506 = vrot.lane.b32.xlu0 %v1344, 96
  %v1507 = vpop.permute.xlu0 %1506
  %1508 = vrot.lane.b32.xlu0 %v1347, 96
  %v1509 = vpop.permute.xlu0 %1508
  %1510 = vrot.lane.b32.xlu0 %v1350, 96
  %v1511 = vpop.permute.xlu0 %1510
  %1512 = vrot.lane.b32.xlu0 %v1353, 96
  %v1513 = vpop.permute.xlu0 %1512
  %1514 = vrot.lane.b32.xlu0 %v1445, 96
  %v1515 = vpop.permute.xlu0 %1514
  %v1530 = vsel %vm348, %v1303, %v1355
  %v1531 = vsel %vm348, %v1304, %v1357
  %v1532 = vsel %vm348, %v1305, %v1359
  %v1533 = vsel %vm348, %v1306, %v1361
  %v1534 = vsel %vm348, %v1307, %v1363
  %v1535 = vsel %vm348, %v1308, %v1365
  %v1536 = vsel %vm348, %v1309, %v1367
  %v1537 = vsel %vm357, %v1530, %v1397
  %v1538 = vsel %vm357, %v1531, %v1399
  %v1539 = vsel %vm357, %v1532, %v1401
  %v1540 = vsel %vm357, %v1533, %v1403
  %v1541 = vsel %vm357, %v1534, %v1405
  %v1542 = vsel %vm357, %v1535, %v1407
  %v1543 = vsel %vm357, %v1536, %v1409
  %v1544 = vsel %vm366, %v358, %v1419
  %v1545 = vsel %vm366, %v1537, %v1421
  %v1546 = vsel %vm366, %v1538, %v1423
  %v1547 = vsel %vm366, %v1539, %v1425
  %v1548 = vsel %vm366, %v1540, %v1427
  %v1549 = vsel %vm366, %v1541, %v1429
  %v1550 = vsel %vm366, %v1542, %v1431
  %v1551 = vsel %vm366, %v1543, %v1433
  %v1552 = vsel %vm348, %v1335, %v1458
  %v1553 = vsel %vm348, %v1338, %v1460
  %v1554 = vsel %vm348, %v1341, %v1462
  %v1555 = vsel %vm348, %v1344, %v1464
  %v1556 = vsel %vm348, %v1347, %v1466
  %v1557 = vsel %vm348, %v1350, %v1468
  %v1558 = vsel %vm348, %v1353, %v1470
  %v1559 = vsel %vm348, %v1445, %v1472
  %v1560 = vsel %vm357, %v1552, %v1482
  %v1561 = vsel %vm357, %v1553, %v1484
  %v1562 = vsel %vm357, %v1554, %v1486
  %v1563 = vsel %vm357, %v1555, %v1488
  %v1564 = vsel %vm357, %v1556, %v1490
  %v1565 = vsel %vm357, %v1557, %v1492
  %v1566 = vsel %vm357, %v1558, %v1494
  %v1567 = vsel %vm357, %v1559, %v307
  %v1568 = vsel %vm366, %v1560, %v1503
  %v1569 = vsel %vm366, %v1561, %v1505
  %v1570 = vsel %vm366, %v1562, %v1507
  %v1571 = vsel %vm366, %v1563, %v1509
  %v1572 = vsel %vm366, %v1564, %v1511
  %v1573 = vsel %vm366, %v1565, %v1513
  %v1574 = vsel %vm366, %v1566, %v1515
  %v1575 = vsel %vm366, %v1567, %v331
  %v1576 = vmax.f32 %v1263, 0.0
  %v1577 = vmax.f32 %v1264, 0.0
  %v1578 = vmax.f32 %v1265, 0.0
  %v1579 = vmax.f32 %v1266, 0.0
  %v1580 = vmax.f32 %v1267, 0.0
  %v1581 = vmax.f32 %v1268, 0.0
  %v1582 = vmax.f32 %v1269, 0.0
  %v1583 = vmax.f32 %v1270, 0.0
  %v1592 = vrot.slane %v1576, 7
  %v1593 = vrot.slane %v1577, 7
  %v1594 = vrot.slane %v1578, 7
  %v1595 = vrot.slane %v1579, 7
  %v1596 = vrot.slane %v1580, 7
  %v1597 = vrot.slane %v1581, 7
  %v1598 = vrot.slane %v1582, 7
  %v1599 = vrot.slane %v1583, 7
  %v1608 = vsel %vm95, 0.0, %v1592
  %v1609 = vsel %vm95, 0.0, %v1593
  %v1610 = vsel %vm95, 0.0, %v1594
  %v1611 = vsel %vm95, 0.0, %v1595
  %v1612 = vsel %vm95, 0.0, %v1596
  %v1613 = vsel %vm95, 0.0, %v1597
  %v1614 = vsel %vm95, 0.0, %v1598
  %v1615 = vsel %vm95, 0.0, %v1599
  %v1616 = vsel %vm95, %v1592, 0.0
  %v1617 = vsel %vm95, %v1593, 0.0
  %v1618 = vsel %vm95, %v1594, 0.0
  %v1619 = vsel %vm95, %v1595, 0.0
  %v1620 = vsel %vm95, %v1596, 0.0
  %v1621 = vsel %vm95, %v1597, 0.0
  %v1622 = vsel %vm95, %v1598, 0.0
  %v1623 = vsel %vm95, %v1599, 0.0
  %v1638 = vrot.slane %v1608, 1
  %v1639 = vrot.slane %v1616, 1
  %v1640 = vsel %vm130, %v1638, %v1639
  %v1641 = vrot.slane %v1609, 1
  %v1642 = vrot.slane %v1617, 1
  %v1643 = vsel %vm130, %v1641, %v1642
  %v1644 = vrot.slane %v1610, 1
  %v1645 = vrot.slane %v1618, 1
  %v1646 = vsel %vm130, %v1644, %v1645
  %v1647 = vrot.slane %v1611, 1
  %v1648 = vrot.slane %v1619, 1
  %v1649 = vsel %vm130, %v1647, %v1648
  %v1650 = vrot.slane %v1612, 1
  %v1651 = vrot.slane %v1620, 1
  %v1652 = vsel %vm130, %v1650, %v1651
  %v1653 = vrot.slane %v1613, 1
  %v1654 = vrot.slane %v1621, 1
  %v1655 = vsel %vm130, %v1653, %v1654
  %v1656 = vrot.slane %v1614, 1
  %v1657 = vrot.slane %v1622, 1
  %v1658 = vsel %vm130, %v1656, %v1657
  %1659 = vrot.lane.b32.xlu0 %v1640, 32
  %v1660 = vpop.permute.xlu0 %1659
  %1661 = vrot.lane.b32.xlu0 %v1643, 32
  %v1662 = vpop.permute.xlu0 %1661
  %1663 = vrot.lane.b32.xlu0 %v1646, 32
  %v1664 = vpop.permute.xlu0 %1663
  %1665 = vrot.lane.b32.xlu0 %v1649, 32
  %v1666 = vpop.permute.xlu0 %1665
  %1667 = vrot.lane.b32.xlu0 %v1652, 32
  %v1668 = vpop.permute.xlu0 %1667
  %1669 = vrot.lane.b32.xlu0 %v1655, 32
  %v1670 = vpop.permute.xlu0 %1669
  %1671 = vrot.lane.b32.xlu0 %v1658, 32
  %v1672 = vpop.permute.xlu0 %1671
  %v1680 = vrot.slane %v1608, 2
  %v1681 = vrot.slane %v1616, 2
  %v1682 = vsel %vm179, %v1680, %v1681
  %v1683 = vrot.slane %v1609, 2
  %v1684 = vrot.slane %v1617, 2
  %v1685 = vsel %vm179, %v1683, %v1684
  %v1686 = vrot.slane %v1610, 2
  %v1687 = vrot.slane %v1618, 2
  %v1688 = vsel %vm179, %v1686, %v1687
  %v1689 = vrot.slane %v1611, 2
  %v1690 = vrot.slane %v1619, 2
  %v1691 = vsel %vm179, %v1689, %v1690
  %v1692 = vrot.slane %v1612, 2
  %v1693 = vrot.slane %v1620, 2
  %v1694 = vsel %vm179, %v1692, %v1693
  %v1695 = vrot.slane %v1613, 2
  %v1696 = vrot.slane %v1621, 2
  %v1697 = vsel %vm179, %v1695, %v1696
  %v1698 = vrot.slane %v1614, 2
  %v1699 = vrot.slane %v1622, 2
  %v1700 = vsel %vm179, %v1698, %v1699
  %1701 = vrot.lane.b32.xlu0 %v1682, 64
  %v1702 = vpop.permute.xlu0 %1701
  %1703 = vrot.lane.b32.xlu0 %v1685, 64
  %v1704 = vpop.permute.xlu0 %1703
  %1705 = vrot.lane.b32.xlu0 %v1688, 64
  %v1706 = vpop.permute.xlu0 %1705
  %1707 = vrot.lane.b32.xlu0 %v1691, 64
  %v1708 = vpop.permute.xlu0 %1707
  %1709 = vrot.lane.b32.xlu0 %v1694, 64
  %v1710 = vpop.permute.xlu0 %1709
  %1711 = vrot.lane.b32.xlu0 %v1697, 64
  %v1712 = vpop.permute.xlu0 %1711
  %1713 = vrot.lane.b32.xlu0 %v1700, 64
  %v1714 = vpop.permute.xlu0 %1713
  %1723 = vrot.lane.b32.xlu0 %v1608, 96
  %v1724 = vpop.permute.xlu0 %1723
  %1725 = vrot.lane.b32.xlu0 %v1609, 96
  %v1726 = vpop.permute.xlu0 %1725
  %1727 = vrot.lane.b32.xlu0 %v1610, 96
  %v1728 = vpop.permute.xlu0 %1727
  %1729 = vrot.lane.b32.xlu0 %v1611, 96
  %v1730 = vpop.permute.xlu0 %1729
  %1731 = vrot.lane.b32.xlu0 %v1612, 96
  %v1732 = vpop.permute.xlu0 %1731
  %1733 = vrot.lane.b32.xlu0 %v1613, 96
  %v1734 = vpop.permute.xlu0 %1733
  %1735 = vrot.lane.b32.xlu0 %v1614, 96
  %v1736 = vpop.permute.xlu0 %1735
  %1737 = vrot.lane.b32.xlu0 %v1615, 96
  %v1738 = vpop.permute.xlu0 %1737
  %v1748 = vrot.slane %v1615, 1
  %v1749 = vrot.slane %v1623, 1
  %v1750 = vsel %vm130, %v1748, %v1749
  %v1759 = vrot.slane %v1615, 2
  %v1760 = vrot.slane %v1623, 2
  %v1761 = vsel %vm179, %v1759, %v1760
  %1762 = vrot.lane.b32.xlu0 %v1682, 32
  %v1763 = vpop.permute.xlu0 %1762
  %1764 = vrot.lane.b32.xlu0 %v1685, 32
  %v1765 = vpop.permute.xlu0 %1764
  %1766 = vrot.lane.b32.xlu0 %v1688, 32
  %v1767 = vpop.permute.xlu0 %1766
  %1768 = vrot.lane.b32.xlu0 %v1691, 32
  %v1769 = vpop.permute.xlu0 %1768
  %1770 = vrot.lane.b32.xlu0 %v1694, 32
  %v1771 = vpop.permute.xlu0 %1770
  %1772 = vrot.lane.b32.xlu0 %v1697, 32
  %v1773 = vpop.permute.xlu0 %1772
  %1774 = vrot.lane.b32.xlu0 %v1700, 32
  %v1775 = vpop.permute.xlu0 %1774
  %1776 = vrot.lane.b32.xlu0 %v1761, 32
  %v1777 = vpop.permute.xlu0 %1776
  %1786 = vrot.lane.b32.xlu0 %v1609, 64
  %v1787 = vpop.permute.xlu0 %1786
  %1788 = vrot.lane.b32.xlu0 %v1610, 64
  %v1789 = vpop.permute.xlu0 %1788
  %1790 = vrot.lane.b32.xlu0 %v1611, 64
  %v1791 = vpop.permute.xlu0 %1790
  %1792 = vrot.lane.b32.xlu0 %v1612, 64
  %v1793 = vpop.permute.xlu0 %1792
  %1794 = vrot.lane.b32.xlu0 %v1613, 64
  %v1795 = vpop.permute.xlu0 %1794
  %1796 = vrot.lane.b32.xlu0 %v1614, 64
  %v1797 = vpop.permute.xlu0 %1796
  %1798 = vrot.lane.b32.xlu0 %v1615, 64
  %v1799 = vpop.permute.xlu0 %1798
  %1807 = vrot.lane.b32.xlu0 %v1643, 96
  %v1808 = vpop.permute.xlu0 %1807
  %1809 = vrot.lane.b32.xlu0 %v1646, 96
  %v1810 = vpop.permute.xlu0 %1809
  %1811 = vrot.lane.b32.xlu0 %v1649, 96
  %v1812 = vpop.permute.xlu0 %1811
  %1813 = vrot.lane.b32.xlu0 %v1652, 96
  %v1814 = vpop.permute.xlu0 %1813
  %1815 = vrot.lane.b32.xlu0 %v1655, 96
  %v1816 = vpop.permute.xlu0 %1815
  %1817 = vrot.lane.b32.xlu0 %v1658, 96
  %v1818 = vpop.permute.xlu0 %1817
  %1819 = vrot.lane.b32.xlu0 %v1750, 96
  %v1820 = vpop.permute.xlu0 %1819
  %v1835 = vsel %vm348, %v1608, %v1660
  %v1836 = vsel %vm348, %v1609, %v1662
  %v1837 = vsel %vm348, %v1610, %v1664
  %v1838 = vsel %vm348, %v1611, %v1666
  %v1839 = vsel %vm348, %v1612, %v1668
  %v1840 = vsel %vm348, %v1613, %v1670
  %v1841 = vsel %vm348, %v1614, %v1672
  %v1842 = vsel %vm357, %v1835, %v1702
  %v1843 = vsel %vm357, %v1836, %v1704
  %v1844 = vsel %vm357, %v1837, %v1706
  %v1845 = vsel %vm357, %v1838, %v1708
  %v1846 = vsel %vm357, %v1839, %v1710
  %v1847 = vsel %vm357, %v1840, %v1712
  %v1848 = vsel %vm357, %v1841, %v1714
  %v1849 = vsel %vm366, %v358, %v1724
  %v1850 = vsel %vm366, %v1842, %v1726
  %v1851 = vsel %vm366, %v1843, %v1728
  %v1852 = vsel %vm366, %v1844, %v1730
  %v1853 = vsel %vm366, %v1845, %v1732
  %v1854 = vsel %vm366, %v1846, %v1734
  %v1855 = vsel %vm366, %v1847, %v1736
  %v1856 = vsel %vm366, %v1848, %v1738
  %v1857 = vsel %vm348, %v1640, %v1763
  %v1858 = vsel %vm348, %v1643, %v1765
  %v1859 = vsel %vm348, %v1646, %v1767
  %v1860 = vsel %vm348, %v1649, %v1769
  %v1861 = vsel %vm348, %v1652, %v1771
  %v1862 = vsel %vm348, %v1655, %v1773
  %v1863 = vsel %vm348, %v1658, %v1775
  %v1864 = vsel %vm348, %v1750, %v1777
  %v1865 = vsel %vm357, %v1857, %v1787
  %v1866 = vsel %vm357, %v1858, %v1789
  %v1867 = vsel %vm357, %v1859, %v1791
  %v1868 = vsel %vm357, %v1860, %v1793
  %v1869 = vsel %vm357, %v1861, %v1795
  %v1870 = vsel %vm357, %v1862, %v1797
  %v1871 = vsel %vm357, %v1863, %v1799
  %v1872 = vsel %vm357, %v1864, %v307
  %v1873 = vsel %vm366, %v1865, %v1808
  %v1874 = vsel %vm366, %v1866, %v1810
  %v1875 = vsel %vm366, %v1867, %v1812
  %v1876 = vsel %vm366, %v1868, %v1814
  %v1877 = vsel %vm366, %v1869, %v1816
  %v1878 = vsel %vm366, %v1870, %v1818
  %v1879 = vsel %vm366, %v1871, %v1820
  %v1880 = vsel %vm366, %v1872, %v331
  %v1881 = vpack.c.bf16 %v1545, %v1544
  %v1882 = vpack.c.bf16 %v1569, %v1568
  %v1883 = vpack.c.bf16 %v1383, %v1380
  %v1884 = vpack.c.bf16 %v1547, %v1546
  %v1885 = vpack.c.bf16 %v1571, %v1570
  %v1886 = vpack.c.bf16 %v1389, %v1386
  %v1887 = vpack.c.bf16 %v1549, %v1548
  %v1888 = vpack.c.bf16 %v1573, %v1572
  %v1889 = vpack.c.bf16 %v1395, %v1392
  %v1890 = vpack.c.bf16 %v1551, %v1550
  %v1891 = vpack.c.bf16 %v1575, %v1574
  %v1892 = vpack.c.bf16 %v182, %v1456
  %v1893 = vpack.c.bf16 %v1850, %v1849
  %v1894 = vpack.c.bf16 %v1874, %v1873
  %v1895 = vpack.c.bf16 %v1688, %v1685
  %v1896 = vpack.c.bf16 %v1852, %v1851
  %v1897 = vpack.c.bf16 %v1876, %v1875
  %v1898 = vpack.c.bf16 %v1694, %v1691
  %v1899 = vpack.c.bf16 %v1854, %v1853
  %v1900 = vpack.c.bf16 %v1878, %v1877
  %v1901 = vpack.c.bf16 %v1700, %v1697
  %v1902 = vpack.c.bf16 %v1856, %v1855
  %v1903 = vpack.c.bf16 %v1880, %v1879
  %v1904 = vpack.c.bf16 %v182, %v1761
  %s1905 = scalar_lea.vmem %s1, 144
  %v1906 = vld [vmem:[%s1905] sm:$0xf]
  %v1907 = vld [vmem:[%s1905 + $0x4] sm:$0xf]
  %v1908 = vld [vmem:[%s1905 + $0x8] sm:$0xf]
  %v1909 = vld [vmem:[%s1905 + $0xc] sm:$0xf]
  %v1910 = vld [vmem:[%s1905 + $0x10] sm:$0xf]
  %v1911 = vld [vmem:[%s1905 + $0x14] sm:$0xf]
  %v1912 = vld [vmem:[%s1905 + $0x18] sm:$0xf]
  %v1913 = vld [vmem:[%s1905 + $0x1c] sm:$0xf]
  %v1914 = vld [vmem:[%s1905 + $0x20] sm:$0xf]
  %v1915 = vld [vmem:[%s1905 + $0x24] sm:$0xf]
  %v1916 = vld [vmem:[%s1905 + $0x28] sm:$0xf]
  %v1917 = vld [vmem:[%s1905 + $0x2c] sm:$0xf]
  %v1918 = vld [vmem:[%s1905 + $0x30] sm:$0xf]
  %v1919 = vld [vmem:[%s1905 + $0x34] sm:$0xf]
  %v1920 = vld [vmem:[%s1905 + $0x38] sm:$0xf]
  %v1921 = vld [vmem:[%s1905 + $0x3c] sm:$0xf]
  %v1922 = vld [vmem:[%s1905 + $0x40] sm:$0xf]
  %v1923 = vld [vmem:[%s1905 + $0x44] sm:$0xf]
  %v1924 = vld [vmem:[%s1905 + $0x48] sm:$0xf]
  %v1925 = vld [vmem:[%s1905 + $0x4c] sm:$0xf]
  %v1926 = vld [vmem:[%s1905 + $0x50] sm:$0xf]
  %v1927 = vld [vmem:[%s1905 + $0x54] sm:$0xf]
  %v1928 = vld [vmem:[%s1905 + $0x58] sm:$0xf]
  %v1929 = vld [vmem:[%s1905 + $0x5c] sm:$0xf]
  %v1930 = vld [vmem:[%s1905 + $0x60] sm:$0xf]
  %v1931 = vld [vmem:[%s1905 + $0x64] sm:$0xf]
  %v1932 = vld [vmem:[%s1905 + $0x68] sm:$0xf]
  %v1933 = vld [vmem:[%s1905 + $0x6c] sm:$0xf]
  %v1934 = vld [vmem:[%s1905 + $0x70] sm:$0xf]
  %v1935 = vld [vmem:[%s1905 + $0x74] sm:$0xf]
  %v1936 = vld [vmem:[%s1905 + $0x78] sm:$0xf]
  %v1937 = vld [vmem:[%s1905 + $0x7c] sm:$0xf]
  %v1938 = vld [vmem:[%s1905 + $0x80] sm:$0xf]
  %v1939 = vld [vmem:[%s1905 + $0x84] sm:$0xf]
  %v1940 = vld [vmem:[%s1905 + $0x88] sm:$0xf]
  %v1941 = vld [vmem:[%s1905 + $0x8c] sm:$0xf]
  %s1942 = scalar_lea.vmem %s2, 1
  %v1943 = vld [vmem:[%s1942] sm:$0x1]
  %v1945 = vlaneseq
  %v1946 = vshrl.u32 %v1945, 7
  %v1947 = vsub.s32 0, %v1946
  %v1948 = vrot.slane %v1943, %v1947
  %v1986 = vunpack.c.l.b16 %v1906
  %v1987 = vunpack.c.l.b16 %v1907
  %v1988 = vunpack.c.l.b16 %v1908
  %v1989 = vunpack.c.l.b16 %v1909
  %v1990 = vunpack.c.l.b16 %v1910
  %v1991 = vunpack.c.l.b16 %v1911
  %v1992 = vunpack.c.l.b16 %v1912
  %v1993 = vunpack.c.l.b16 %v1913
  %v1994 = vunpack.c.l.b16 %v1914
  %v1995 = vunpack.c.l.b16 %v1915
  %v1996 = vunpack.c.l.b16 %v1916
  %v1997 = vunpack.c.l.b16 %v1917
  %v1998 = vunpack.c.l.b16 %v1918
  %v1999 = vunpack.c.l.b16 %v1919
  %v2000 = vunpack.c.l.b16 %v1920
  %v2001 = vunpack.c.l.b16 %v1921
  %v2002 = vunpack.c.l.b16 %v1922
  %v2003 = vunpack.c.l.b16 %v1923
  %v2004 = vunpack.c.l.b16 %v1924
  %v2005 = vunpack.c.l.b16 %v1925
  %v2006 = vunpack.c.l.b16 %v1926
  %v2007 = vunpack.c.l.b16 %v1927
  %v2008 = vunpack.c.l.b16 %v1928
  %v2009 = vunpack.c.l.b16 %v1929
  %v2010 = vunpack.c.l.b16 %v1930
  %v2011 = vunpack.c.l.b16 %v1931
  %v2012 = vunpack.c.l.b16 %v1932
  %v2013 = vunpack.c.l.b16 %v1933
  %v2014 = vunpack.c.l.b16 %v1934
  %v2015 = vunpack.c.l.b16 %v1935
  %v2016 = vunpack.c.l.b16 %v1936
  %v2017 = vunpack.c.l.b16 %v1937
  %v2018 = vunpack.c.l.b16 %v1938
  %v2019 = vunpack.c.l.b16 %v1939
  %v2020 = vunpack.c.l.b16 %v1940
  %v2021 = vunpack.c.l.b16 %v1941
  %v2022 = vpack.c.b16 %v1987, %v1986
  %v2023 = vpack.c.b16 %v1989, %v1988
  %v2024 = vpack.c.b16 %v1991, %v1990
  %v2025 = vpack.c.b16 %v1993, %v1992
  %v2026 = vpack.c.b16 %v1995, %v1994
  %v2027 = vpack.c.b16 %v1997, %v1996
  %v2028 = vpack.c.b16 %v1999, %v1998
  %v2029 = vpack.c.b16 %v2001, %v2000
  %v2030 = vpack.c.b16 %v2003, %v2002
  %v2031 = vpack.c.b16 %v2005, %v2004
  %v2032 = vpack.c.b16 %v2007, %v2006
  %v2033 = vpack.c.b16 %v2009, %v2008
  %v2034 = vpack.c.b16 %v2011, %v2010
  %v2035 = vpack.c.b16 %v2013, %v2012
  %v2036 = vpack.c.b16 %v2015, %v2014
  %v2037 = vpack.c.b16 %v2017, %v2016
  %v2038 = vpack.c.b16 %v2019, %v2018
  %v2039 = vpack.c.b16 %v2021, %v2020
  %v2059 = vsel %vm348, %v1883, 0
  %v2062 = vsel %vm348, %v1886, 0
  %v2065 = vsel %vm348, %v1889, 0
  %v2068 = vsel %vm348, %v1892, 0
  %v2071 = vsel %vm348, %v1895, 0
  %v2074 = vsel %vm348, %v1898, 0
  %v2077 = vsel %vm348, %v1901, 0
  %v2080 = vsel %vm348, %v1904, 0
  %2082 = vmatprep.subr.bf16.mxu0 0
  %2083 = vmatpush1.bf16.msra.mxu0 %v2022
  %2084 = vmatprep.subr.bf16.mxu0 0
  %2085 = vmatpush1.bf16.msra.mxu0 %v2023
  %2086 = vmatprep.subr.bf16.mxu0 0
  %2087 = vmatpush1.bf16.msra.mxu0 %v2024
  %2088 = vmatprep.subr.bf16.mxu0 0
  %2089 = vmatpush1.bf16.msra.mxu0 %v2025
  %2090 = vmatprep.subr.bf16.mxu0 0
  %2091 = vmatpush1.bf16.msra.mxu0 %v2026
  %2092 = vmatprep.subr.bf16.mxu0 0
  %2093 = vmatpush1.bf16.msra.mxu0 %v2027
  %2094 = vmatprep.subr.bf16.mxu0 0
  %2095 = vmatpush1.bf16.msra.mxu0 %v2028
  %2096 = vmatprep.subr.bf16.mxu0 0
  %2097 = vmatpush1.bf16.msra.mxu0 %v2029
  %2098 = vmatprep.subr.bf16.mxu0 0
  %2099 = vmatpush1.bf16.msra.mxu0 %v2030
  %2100 = vmatprep.subr.bf16.mxu0 0
  %2101 = vmatpush1.bf16.msra.mxu0 %v2031
  %2102 = vmatprep.subr.bf16.mxu0 0
  %2103 = vmatpush1.bf16.msra.mxu0 %v2032
  %2104 = vmatprep.subr.bf16.mxu0 0
  %2105 = vmatpush1.bf16.msra.mxu0 %v2033
  %2106 = vmatprep.subr.bf16.mxu0 0
  %2107 = vmatpush1.bf16.msra.mxu0 %v2034
  %2108 = vmatprep.subr.bf16.mxu0 0
  %2109 = vmatpush1.bf16.msra.mxu0 %v2035
  %2110 = vmatprep.subr.bf16.mxu0 0
  %2111 = vmatpush1.bf16.msra.mxu0 %v2036
  %2112 = vmatprep.subr.bf16.mxu0 0
  %2113 = vmatpush1.bf16.msra.mxu0 %v2037
  %2114 = vmatprep.mubr.bf16.mxu0 %v1882
  %2115 = vmatmul.mubr.bf16.gmra.mrb[0].mxu0 %v1881
  %v2116 = vpop.f32.mrb[0].mxu0
  %v2117 = vadd.f32 %v1948, %v2116
  %v2118 = vpop.f32.mrb[0].mxu0
  %v2119 = vpop.f32.mrb[0].mxu0
  %v2120 = vadd.f32 %v1948, %v2119
  %v2121 = vpop.f32.mrb[0].mxu0
  %2122 = vmatprep.mubr.bf16.mxu0 %v1885
  %2123 = vmatmul.mubr.bf16.gmra.mrb[0].mxu0 %v1884
  %v2124 = vpop.f32.mrb[0].mxu0
  %v2125 = vadd.f32 %v1948, %v2124
  %v2126 = vpop.f32.mrb[0].mxu0
  %v2127 = vpop.f32.mrb[0].mxu0
  %v2128 = vadd.f32 %v1948, %v2127
  %v2129 = vpop.f32.mrb[0].mxu0
  %2130 = vmatprep.mubr.bf16.mxu0 %v1888
  %2131 = vmatmul.mubr.bf16.gmra.mrb[0].mxu0 %v1887
  %v2132 = vpop.f32.mrb[0].mxu0
  %v2133 = vadd.f32 %v1948, %v2132
  %v2134 = vpop.f32.mrb[0].mxu0
  %v2135 = vpop.f32.mrb[0].mxu0
  %v2136 = vadd.f32 %v1948, %v2135
  %v2137 = vpop.f32.mrb[0].mxu0
  %2138 = vmatprep.mubr.bf16.mxu0 %v1891
  %2139 = vmatmul.mubr.bf16.gmra.mrb[0].mxu0 %v1890
  %v2140 = vpop.f32.mrb[0].mxu0
  %v2141 = vadd.f32 %v1948, %v2140
  %v2142 = vpop.f32.mrb[0].mxu0
  %v2143 = vpop.f32.mrb[0].mxu0
  %v2144 = vadd.f32 %v1948, %v2143
  %v2145 = vpop.f32.mrb[0].mxu0
  %2146 = vmatprep.mubr.bf16.mxu0 %v1894
  %2147 = vmatmul.mubr.bf16.gmra.mrb[0].mxu0 %v1893
  %v2148 = vpop.f32.mrb[0].mxu0
  %v2149 = vadd.f32 %v1948, %v2148
  %v2150 = vpop.f32.mrb[0].mxu0
  %v2151 = vpop.f32.mrb[0].mxu0
  %v2152 = vadd.f32 %v1948, %v2151
  %v2153 = vpop.f32.mrb[0].mxu0
  %2154 = vmatprep.mubr.bf16.mxu0 %v1897
  %2155 = vmatmul.mubr.bf16.gmra.mrb[0].mxu0 %v1896
  %v2156 = vpop.f32.mrb[0].mxu0
  %v2157 = vadd.f32 %v1948, %v2156
  %v2158 = vpop.f32.mrb[0].mxu0
  %v2159 = vpop.f32.mrb[0].mxu0
  %v2160 = vadd.f32 %v1948, %v2159
  %v2161 = vpop.f32.mrb[0].mxu0
  %2162 = vmatprep.mubr.bf16.mxu0 %v1900
  %2163 = vmatmul.mubr.bf16.gmra.mrb[0].mxu0 %v1899
  %v2164 = vpop.f32.mrb[0].mxu0
  %v2165 = vadd.f32 %v1948, %v2164
  %v2166 = vpop.f32.mrb[0].mxu0
  %v2167 = vpop.f32.mrb[0].mxu0
  %v2168 = vadd.f32 %v1948, %v2167
  %v2169 = vpop.f32.mrb[0].mxu0
  %2170 = vmatprep.mubr.bf16.mxu0 %v1903
  %2171 = vmatmul.mubr.bf16.gmra.mrb[0].mxu0 %v1902
  %v2172 = vpop.f32.mrb[0].mxu0
  %v2173 = vadd.f32 %v1948, %v2172
  %v2174 = vpop.f32.mrb[0].mxu0
  %v2175 = vpop.f32.mrb[0].mxu0
  %v2176 = vadd.f32 %v1948, %v2175
  %v2177 = vpop.f32.mrb[0].mxu0
  %2178 = vdwg.mxu0
  %2179 = vmatprep.subr.bf16.mxu0 0
  %2180 = vmatpush1.bf16.msra.mxu0 %v2038
  %2181 = vmatprep.subr.bf16.mxu0 0
  %2182 = vmatpush1.bf16.msra.mxu0 %v2039
  %2183 = vmatprep.subr.bf16.mxu0 0
  %2184 = vmatpush1.bf16.msra.mxu0 0
  %2185 = vmatprep.subr.bf16.mxu0 0
  %2186 = vmatpush1.bf16.msra.mxu0 0
  %2187 = vmatprep.subr.bf16.mxu0 0
  %2188 = vmatpush1.bf16.msra.mxu0 0
  %2189 = vmatprep.subr.bf16.mxu0 0
  %2190 = vmatpush1.bf16.msra.mxu0 0
  %2191 = vmatprep.subr.bf16.mxu0 0
  %2192 = vmatpush1.bf16.msra.mxu0 0
  %2193 = vmatprep.subr.bf16.mxu0 0
  %2194 = vmatpush1.bf16.msra.mxu0 0
  %2195 = vmatprep.subr.bf16.mxu0 0
  %2196 = vmatpush1.bf16.msra.mxu0 0
  %2197 = vmatprep.subr.bf16.mxu0 0
  %2198 = vmatpush1.bf16.msra.mxu0 0
  %2199 = vmatprep.subr.bf16.mxu0 0
  %2200 = vmatpush1.bf16.msra.mxu0 0
  %2201 = vmatprep.subr.bf16.mxu0 0
  %2202 = vmatpush1.bf16.msra.mxu0 0
  %2203 = vmatprep.subr.bf16.mxu0 0
  %2204 = vmatpush1.bf16.msra.mxu0 0
  %2205 = vmatprep.subr.bf16.mxu0 0
  %2206 = vmatpush1.bf16.msra.mxu0 0
  %2207 = vmatprep.subr.bf16.mxu0 0
  %2208 = vmatpush1.bf16.msra.mxu0 0
  %2209 = vmatprep.subr.bf16.mxu0 0
  %2210 = vmatpush1.bf16.msra.mxu0 0
  %2211 = vmatprep.mubr.bf16.mxu0 0
  %2212 = vmatmul.mubr.bf16.gmra.mrb[0].mxu0 %v2059
  %v2213 = vpop.f32.mrb[0].mxu0
  %v2214 = vadd.f32 %v2117, %v2213
  %v2215 = vpop.f32.mrb[0].mxu0
  %v2216 = vpop.f32.mrb[0].mxu0
  %v2217 = vadd.f32 %v2120, %v2216
  %v2218 = vpop.f32.mrb[0].mxu0
  %2219 = vmatprep.mubr.bf16.mxu0 0
  %2220 = vmatmul.mubr.bf16.gmra.mrb[0].mxu0 %v2062
  %v2221 = vpop.f32.mrb[0].mxu0
  %v2222 = vadd.f32 %v2125, %v2221
  %v2223 = vpop.f32.mrb[0].mxu0
  %v2224 = vpop.f32.mrb[0].mxu0
  %v2225 = vadd.f32 %v2128, %v2224
  %v2226 = vpop.f32.mrb[0].mxu0
  %2227 = vmatprep.mubr.bf16.mxu0 0
  %2228 = vmatmul.mubr.bf16.gmra.mrb[0].mxu0 %v2065
  %v2229 = vpop.f32.mrb[0].mxu0
  %v2230 = vadd.f32 %v2133, %v2229
  %v2231 = vpop.f32.mrb[0].mxu0
  %v2232 = vpop.f32.mrb[0].mxu0
  %v2233 = vadd.f32 %v2136, %v2232
  %v2234 = vpop.f32.mrb[0].mxu0
  %2235 = vmatprep.mubr.bf16.mxu0 0
  %2236 = vmatmul.mubr.bf16.gmra.mrb[0].mxu0 %v2068
  %v2237 = vpop.f32.mrb[0].mxu0
  %v2238 = vadd.f32 %v2141, %v2237
  %v2239 = vpop.f32.mrb[0].mxu0
  %v2240 = vpop.f32.mrb[0].mxu0
  %v2241 = vadd.f32 %v2144, %v2240
  %v2242 = vpop.f32.mrb[0].mxu0
  %2243 = vmatprep.mubr.bf16.mxu0 0
  %2244 = vmatmul.mubr.bf16.gmra.mrb[0].mxu0 %v2071
  %v2245 = vpop.f32.mrb[0].mxu0
  %v2246 = vadd.f32 %v2149, %v2245
  %v2247 = vpop.f32.mrb[0].mxu0
  %v2248 = vpop.f32.mrb[0].mxu0
  %v2249 = vadd.f32 %v2152, %v2248
  %v2250 = vpop.f32.mrb[0].mxu0
  %2251 = vmatprep.mubr.bf16.mxu0 0
  %2252 = vmatmul.mubr.bf16.gmra.mrb[0].mxu0 %v2074
  %v2253 = vpop.f32.mrb[0].mxu0
  %v2254 = vadd.f32 %v2157, %v2253
  %v2255 = vpop.f32.mrb[0].mxu0
  %v2256 = vpop.f32.mrb[0].mxu0
  %v2257 = vadd.f32 %v2160, %v2256
  %v2258 = vpop.f32.mrb[0].mxu0
  %2259 = vmatprep.mubr.bf16.mxu0 0
  %2260 = vmatmul.mubr.bf16.gmra.mrb[0].mxu0 %v2077
  %v2261 = vpop.f32.mrb[0].mxu0
  %v2262 = vadd.f32 %v2165, %v2261
  %v2263 = vpop.f32.mrb[0].mxu0
  %v2264 = vpop.f32.mrb[0].mxu0
  %v2265 = vadd.f32 %v2168, %v2264
  %v2266 = vpop.f32.mrb[0].mxu0
  %2267 = vmatprep.mubr.bf16.mxu0 0
  %2268 = vmatmul.mubr.bf16.gmra.mrb[0].mxu0 %v2080
  %v2269 = vpop.f32.mrb[0].mxu0
  %v2270 = vadd.f32 %v2173, %v2269
  %v2271 = vpop.f32.mrb[0].mxu0
  %v2272 = vpop.f32.mrb[0].mxu0
  %v2273 = vadd.f32 %v2176, %v2272
  %v2274 = vpop.f32.mrb[0].mxu0
  %2275 = vdwg.mxu0
  %v2276 = vmax.f32 %v2214, 0.0
  %v2277 = vmax.f32 %v2217, 0.0
  %v2278 = vmax.f32 %v2222, 0.0
  %v2279 = vmax.f32 %v2225, 0.0
  %v2280 = vmax.f32 %v2230, 0.0
  %v2281 = vmax.f32 %v2233, 0.0
  %v2282 = vmax.f32 %v2238, 0.0
  %v2283 = vmax.f32 %v2241, 0.0
  %v2284 = vmax.f32 %v2246, 0.0
  %v2285 = vmax.f32 %v2249, 0.0
  %v2286 = vmax.f32 %v2254, 0.0
  %v2287 = vmax.f32 %v2257, 0.0
  %v2288 = vmax.f32 %v2262, 0.0
  %v2289 = vmax.f32 %v2265, 0.0
  %v2290 = vmax.f32 %v2270, 0.0
  %v2291 = vmax.f32 %v2273, 0.0
  %v2292 = vpack.c.bf16 %v2277, %v2276
  %v2293 = vpack.c.bf16 %v2279, %v2278
  %v2294 = vpack.c.bf16 %v2281, %v2280
  %v2295 = vpack.c.bf16 %v2283, %v2282
  %v2296 = vpack.c.bf16 %v2285, %v2284
  %v2297 = vpack.c.bf16 %v2287, %v2286
  %v2298 = vpack.c.bf16 %v2289, %v2288
  %v2299 = vpack.c.bf16 %v2291, %v2290
  %s2300 = scalar_lea.vmem %s3, 4
  %v2301 = vld [vmem:[%s2300] sm:$0xf]
  %s2302 = scalar_lea.vmem %s4, 1
  %v2303 = vld [vmem:[%s2302] sm:$0x1]
  %v2305 = vlaneseq
  %v2306 = vshrl.u32 %v2305, 7
  %v2307 = vsub.s32 0, %v2306
  %v2308 = vrot.slane %v2303, %v2307
  %v2311 = vsel %vm1129, %v2292, 0
  %v2314 = vsel %vm1129, %v2293, 0
  %v2317 = vsel %vm1129, %v2294, 0
  %v2320 = vsel %vm1129, %v2295, 0
  %v2323 = vsel %vm1129, %v2296, 0
  %v2326 = vsel %vm1129, %v2297, 0
  %v2329 = vsel %vm1129, %v2298, 0
  %v2332 = vsel %vm1129, %v2299, 0
  %v2335 = vsel %vm1154, %v2301, 0
  %2337 = vmatprep.subr.bf16.mxu0 0
  %2338 = vmatpush1.bf16.msra.mxu0 %v2335
  %2339 = vmatprep.subr.bf16.mxu0 0
  %2340 = vmatpush1.bf16.msra.mxu0 0
  %2341 = vmatprep.subr.bf16.mxu0 0
  %2342 = vmatpush1.bf16.msra.mxu0 0
  %2343 = vmatprep.subr.bf16.mxu0 0
  %2344 = vmatpush1.bf16.msra.mxu0 0
  %2345 = vmatprep.subr.bf16.mxu0 0
  %2346 = vmatpush1.bf16.msra.mxu0 0
  %2347 = vmatprep.subr.bf16.mxu0 0
  %2348 = vmatpush1.bf16.msra.mxu0 0
  %2349 = vmatprep.subr.bf16.mxu0 0
  %2350 = vmatpush1.bf16.msra.mxu0 0
  %2351 = vmatprep.subr.bf16.mxu0 0
  %2352 = vmatpush1.bf16.msra.mxu0 0
  %2353 = vmatprep.subr.bf16.mxu0 0
  %2354 = vmatpush1.bf16.msra.mxu0 0
  %2355 = vmatprep.subr.bf16.mxu0 0
  %2356 = vmatpush1.bf16.msra.mxu0 0
  %2357 = vmatprep.subr.bf16.mxu0 0
  %2358 = vmatpush1.bf16.msra.mxu0 0
  %2359 = vmatprep.subr.bf16.mxu0 0
  %2360 = vmatpush1.bf16.msra.mxu0 0
  %2361 = vmatprep.subr.bf16.mxu0 0
  %2362 = vmatpush1.bf16.msra.mxu0 0
  %2363 = vmatprep.subr.bf16.mxu0 0
  %2364 = vmatpush1.bf16.msra.mxu0 0
  %2365 = vmatprep.subr.bf16.mxu0 0
  %2366 = vmatpush1.bf16.msra.mxu0 0
  %2367 = vmatprep.subr.bf16.mxu0 0
  %2368 = vmatpush1.bf16.msra.mxu0 0
  %2369 = vmatprep.mubr.bf16.mxu0 0
  %2370 = vmatmul.mubr.bf16.gmra.mrb[0].mxu0 %v2311
  %v2371 = vpop.f32.mrb[0].mxu0
  %v2372 = vadd.f32 %v2308, %v2371
  %v2373 = vpop.f32.mrb[0].mxu0
  %v2374 = vpop.f32.mrb[0].mxu0
  %v2375 = vadd.f32 %v2308, %v2374
  %v2376 = vpop.f32.mrb[0].mxu0
  %2377 = vmatprep.mubr.bf16.mxu0 0
  %2378 = vmatmul.mubr.bf16.gmra.mrb[0].mxu0 %v2314
  %v2379 = vpop.f32.mrb[0].mxu0
  %v2380 = vadd.f32 %v2308, %v2379
  %v2381 = vpop.f32.mrb[0].mxu0
  %v2382 = vpop.f32.mrb[0].mxu0
  %v2383 = vadd.f32 %v2308, %v2382
  %v2384 = vpop.f32.mrb[0].mxu0
  %2385 = vmatprep.mubr.bf16.mxu0 0
  %2386 = vmatmul.mubr.bf16.gmra.mrb[0].mxu0 %v2317
  %v2387 = vpop.f32.mrb[0].mxu0
  %v2388 = vadd.f32 %v2308, %v2387
  %v2389 = vpop.f32.mrb[0].mxu0
  %v2390 = vpop.f32.mrb[0].mxu0
  %v2391 = vadd.f32 %v2308, %v2390
  %v2392 = vpop.f32.mrb[0].mxu0
  %2393 = vmatprep.mubr.bf16.mxu0 0
  %2394 = vmatmul.mubr.bf16.gmra.mrb[0].mxu0 %v2320
  %v2395 = vpop.f32.mrb[0].mxu0
  %v2396 = vadd.f32 %v2308, %v2395
  %v2397 = vpop.f32.mrb[0].mxu0
  %v2398 = vpop.f32.mrb[0].mxu0
  %v2399 = vadd.f32 %v2308, %v2398
  %v2400 = vpop.f32.mrb[0].mxu0
  %2401 = vmatprep.mubr.bf16.mxu0 0
  %2402 = vmatmul.mubr.bf16.gmra.mrb[0].mxu0 %v2323
  %v2403 = vpop.f32.mrb[0].mxu0
  %v2404 = vadd.f32 %v2308, %v2403
  %v2405 = vpop.f32.mrb[0].mxu0
  %v2406 = vpop.f32.mrb[0].mxu0
  %v2407 = vadd.f32 %v2308, %v2406
  %v2408 = vpop.f32.mrb[0].mxu0
  %2409 = vmatprep.mubr.bf16.mxu0 0
  %2410 = vmatmul.mubr.bf16.gmra.mrb[0].mxu0 %v2326
  %v2411 = vpop.f32.mrb[0].mxu0
  %v2412 = vadd.f32 %v2308, %v2411
  %v2413 = vpop.f32.mrb[0].mxu0
  %v2414 = vpop.f32.mrb[0].mxu0
  %v2415 = vadd.f32 %v2308, %v2414
  %v2416 = vpop.f32.mrb[0].mxu0
  %2417 = vmatprep.mubr.bf16.mxu0 0
  %2418 = vmatmul.mubr.bf16.gmra.mrb[0].mxu0 %v2329
  %v2419 = vpop.f32.mrb[0].mxu0
  %v2420 = vadd.f32 %v2308, %v2419
  %v2421 = vpop.f32.mrb[0].mxu0
  %v2422 = vpop.f32.mrb[0].mxu0
  %v2423 = vadd.f32 %v2308, %v2422
  %v2424 = vpop.f32.mrb[0].mxu0
  %2425 = vmatprep.mubr.bf16.mxu0 0
  %2426 = vmatmul.mubr.bf16.gmra.mrb[0].mxu0 %v2332
  %v2427 = vpop.f32.mrb[0].mxu0
  %v2428 = vadd.f32 %v2308, %v2427
  %v2429 = vpop.f32.mrb[0].mxu0
  %v2430 = vpop.f32.mrb[0].mxu0
  %v2431 = vadd.f32 %v2308, %v2430
  %v2432 = vpop.f32.mrb[0].mxu0
  %2433 = vdwg.mxu0
  %v2434 = vadd.f32 %v1255, %v2372
  %v2435 = vadd.f32 %v1256, %v2375
  %v2436 = vadd.f32 %v1257, %v2380
  %v2437 = vadd.f32 %v1258, %v2383
  %v2438 = vadd.f32 %v1259, %v2388
  %v2439 = vadd.f32 %v1260, %v2391
  %v2440 = vadd.f32 %v1261, %v2396
  %v2441 = vadd.f32 %v1262, %v2399
  %v2442 = vadd.f32 %v1263, %v2404
  %v2443 = vadd.f32 %v1264, %v2407
  %v2444 = vadd.f32 %v1265, %v2412
  %v2445 = vadd.f32 %v1266, %v2415
  %v2446 = vadd.f32 %v1267, %v2420
  %v2447 = vadd.f32 %v1268, %v2423
  %v2448 = vadd.f32 %v1269, %v2428
  %v2449 = vadd.f32 %v1270, %v2431
  %v2450 = vmax.f32 %v2434, 0.0
  %v2451 = vmax.f32 %v2435, 0.0
  %v2452 = vmax.f32 %v2436, 0.0
  %v2453 = vmax.f32 %v2437, 0.0
  %v2454 = vmax.f32 %v2438, 0.0
  %v2455 = vmax.f32 %v2439, 0.0
  %v2456 = vmax.f32 %v2440, 0.0
  %v2457 = vmax.f32 %v2441, 0.0
  %v2466 = vrot.slane %v2450, 7
  %v2467 = vrot.slane %v2451, 7
  %v2468 = vrot.slane %v2452, 7
  %v2469 = vrot.slane %v2453, 7
  %v2470 = vrot.slane %v2454, 7
  %v2471 = vrot.slane %v2455, 7
  %v2472 = vrot.slane %v2456, 7
  %v2473 = vrot.slane %v2457, 7
  %v2482 = vsel %vm95, 0.0, %v2466
  %v2483 = vsel %vm95, 0.0, %v2467
  %v2484 = vsel %vm95, 0.0, %v2468
  %v2485 = vsel %vm95, 0.0, %v2469
  %v2486 = vsel %vm95, 0.0, %v2470
  %v2487 = vsel %vm95, 0.0, %v2471
  %v2488 = vsel %vm95, 0.0, %v2472
  %v2489 = vsel %vm95, 0.0, %v2473
  %v2490 = vsel %vm95, %v2466, 0.0
  %v2491 = vsel %vm95, %v2467, 0.0
  %v2492 = vsel %vm95, %v2468, 0.0
  %v2493 = vsel %vm95, %v2469, 0.0
  %v2494 = vsel %vm95, %v2470, 0.0
  %v2495 = vsel %vm95, %v2471, 0.0
  %v2496 = vsel %vm95, %v2472, 0.0
  %v2497 = vsel %vm95, %v2473, 0.0
  %v2512 = vrot.slane %v2482, 1
  %v2513 = vrot.slane %v2490, 1
  %v2514 = vsel %vm130, %v2512, %v2513
  %v2515 = vrot.slane %v2483, 1
  %v2516 = vrot.slane %v2491, 1
  %v2517 = vsel %vm130, %v2515, %v2516
  %v2518 = vrot.slane %v2484, 1
  %v2519 = vrot.slane %v2492, 1
  %v2520 = vsel %vm130, %v2518, %v2519
  %v2521 = vrot.slane %v2485, 1
  %v2522 = vrot.slane %v2493, 1
  %v2523 = vsel %vm130, %v2521, %v2522
  %v2524 = vrot.slane %v2486, 1
  %v2525 = vrot.slane %v2494, 1
  %v2526 = vsel %vm130, %v2524, %v2525
  %v2527 = vrot.slane %v2487, 1
  %v2528 = vrot.slane %v2495, 1
  %v2529 = vsel %vm130, %v2527, %v2528
  %v2530 = vrot.slane %v2488, 1
  %v2531 = vrot.slane %v2496, 1
  %v2532 = vsel %vm130, %v2530, %v2531
  %2533 = vrot.lane.b32.xlu0 %v2514, 32
  %v2534 = vpop.permute.xlu0 %2533
  %2535 = vrot.lane.b32.xlu0 %v2517, 32
  %v2536 = vpop.permute.xlu0 %2535
  %2537 = vrot.lane.b32.xlu0 %v2520, 32
  %v2538 = vpop.permute.xlu0 %2537
  %2539 = vrot.lane.b32.xlu0 %v2523, 32
  %v2540 = vpop.permute.xlu0 %2539
  %2541 = vrot.lane.b32.xlu0 %v2526, 32
  %v2542 = vpop.permute.xlu0 %2541
  %2543 = vrot.lane.b32.xlu0 %v2529, 32
  %v2544 = vpop.permute.xlu0 %2543
  %2545 = vrot.lane.b32.xlu0 %v2532, 32
  %v2546 = vpop.permute.xlu0 %2545
  %v2554 = vrot.slane %v2482, 2
  %v2555 = vrot.slane %v2490, 2
  %v2556 = vsel %vm179, %v2554, %v2555
  %v2557 = vrot.slane %v2483, 2
  %v2558 = vrot.slane %v2491, 2
  %v2559 = vsel %vm179, %v2557, %v2558
  %v2560 = vrot.slane %v2484, 2
  %v2561 = vrot.slane %v2492, 2
  %v2562 = vsel %vm179, %v2560, %v2561
  %v2563 = vrot.slane %v2485, 2
  %v2564 = vrot.slane %v2493, 2
  %v2565 = vsel %vm179, %v2563, %v2564
  %v2566 = vrot.slane %v2486, 2
  %v2567 = vrot.slane %v2494, 2
  %v2568 = vsel %vm179, %v2566, %v2567
  %v2569 = vrot.slane %v2487, 2
  %v2570 = vrot.slane %v2495, 2
  %v2571 = vsel %vm179, %v2569, %v2570
  %v2572 = vrot.slane %v2488, 2
  %v2573 = vrot.slane %v2496, 2
  %v2574 = vsel %vm179, %v2572, %v2573
  %2575 = vrot.lane.b32.xlu0 %v2556, 64
  %v2576 = vpop.permute.xlu0 %2575
  %2577 = vrot.lane.b32.xlu0 %v2559, 64
  %v2578 = vpop.permute.xlu0 %2577
  %2579 = vrot.lane.b32.xlu0 %v2562, 64
  %v2580 = vpop.permute.xlu0 %2579
  %2581 = vrot.lane.b32.xlu0 %v2565, 64
  %v2582 = vpop.permute.xlu0 %2581
  %2583 = vrot.lane.b32.xlu0 %v2568, 64
  %v2584 = vpop.permute.xlu0 %2583
  %2585 = vrot.lane.b32.xlu0 %v2571, 64
  %v2586 = vpop.permute.xlu0 %2585
  %2587 = vrot.lane.b32.xlu0 %v2574, 64
  %v2588 = vpop.permute.xlu0 %2587
  %2597 = vrot.lane.b32.xlu0 %v2482, 96
  %v2598 = vpop.permute.xlu0 %2597
  %2599 = vrot.lane.b32.xlu0 %v2483, 96
  %v2600 = vpop.permute.xlu0 %2599
  %2601 = vrot.lane.b32.xlu0 %v2484, 96
  %v2602 = vpop.permute.xlu0 %2601
  %2603 = vrot.lane.b32.xlu0 %v2485, 96
  %v2604 = vpop.permute.xlu0 %2603
  %2605 = vrot.lane.b32.xlu0 %v2486, 96
  %v2606 = vpop.permute.xlu0 %2605
  %2607 = vrot.lane.b32.xlu0 %v2487, 96
  %v2608 = vpop.permute.xlu0 %2607
  %2609 = vrot.lane.b32.xlu0 %v2488, 96
  %v2610 = vpop.permute.xlu0 %2609
  %2611 = vrot.lane.b32.xlu0 %v2489, 96
  %v2612 = vpop.permute.xlu0 %2611
  %v2622 = vrot.slane %v2489, 1
  %v2623 = vrot.slane %v2497, 1
  %v2624 = vsel %vm130, %v2622, %v2623
  %v2633 = vrot.slane %v2489, 2
  %v2634 = vrot.slane %v2497, 2
  %v2635 = vsel %vm179, %v2633, %v2634
  %2636 = vrot.lane.b32.xlu0 %v2556, 32
  %v2637 = vpop.permute.xlu0 %2636
  %2638 = vrot.lane.b32.xlu0 %v2559, 32
  %v2639 = vpop.permute.xlu0 %2638
  %2640 = vrot.lane.b32.xlu0 %v2562, 32
  %v2641 = vpop.permute.xlu0 %2640
  %2642 = vrot.lane.b32.xlu0 %v2565, 32
  %v2643 = vpop.permute.xlu0 %2642
  %2644 = vrot.lane.b32.xlu0 %v2568, 32
  %v2645 = vpop.permute.xlu0 %2644
  %2646 = vrot.lane.b32.xlu0 %v2571, 32
  %v2647 = vpop.permute.xlu0 %2646
  %2648 = vrot.lane.b32.xlu0 %v2574, 32
  %v2649 = vpop.permute.xlu0 %2648
  %2650 = vrot.lane.b32.xlu0 %v2635, 32
  %v2651 = vpop.permute.xlu0 %2650
  %2660 = vrot.lane.b32.xlu0 %v2483, 64
  %v2661 = vpop.permute.xlu0 %2660
  %2662 = vrot.lane.b32.xlu0 %v2484, 64
  %v2663 = vpop.permute.xlu0 %2662
  %2664 = vrot.lane.b32.xlu0 %v2485, 64
  %v2665 = vpop.permute.xlu0 %2664
  %2666 = vrot.lane.b32.xlu0 %v2486, 64
  %v2667 = vpop.permute.xlu0 %2666
  %2668 = vrot.lane.b32.xlu0 %v2487, 64
  %v2669 = vpop.permute.xlu0 %2668
  %2670 = vrot.lane.b32.xlu0 %v2488, 64
  %v2671 = vpop.permute.xlu0 %2670
  %2672 = vrot.lane.b32.xlu0 %v2489, 64
  %v2673 = vpop.permute.xlu0 %2672
  %2681 = vrot.lane.b32.xlu0 %v2517, 96
  %v2682 = vpop.permute.xlu0 %2681
  %2683 = vrot.lane.b32.xlu0 %v2520, 96
  %v2684 = vpop.permute.xlu0 %2683
  %2685 = vrot.lane.b32.xlu0 %v2523, 96
  %v2686 = vpop.permute.xlu0 %2685
  %2687 = vrot.lane.b32.xlu0 %v2526, 96
  %v2688 = vpop.permute.xlu0 %2687
  %2689 = vrot.lane.b32.xlu0 %v2529, 96
  %v2690 = vpop.permute.xlu0 %2689
  %2691 = vrot.lane.b32.xlu0 %v2532, 96
  %v2692 = vpop.permute.xlu0 %2691
  %2693 = vrot.lane.b32.xlu0 %v2624, 96
  %v2694 = vpop.permute.xlu0 %2693
  %v2709 = vsel %vm348, %v2482, %v2534
  %v2710 = vsel %vm348, %v2483, %v2536
  %v2711 = vsel %vm348, %v2484, %v2538
  %v2712 = vsel %vm348, %v2485, %v2540
  %v2713 = vsel %vm348, %v2486, %v2542
  %v2714 = vsel %vm348, %v2487, %v2544
  %v2715 = vsel %vm348, %v2488, %v2546
  %v2716 = vsel %vm357, %v2709, %v2576
  %v2717 = vsel %vm357, %v2710, %v2578
  %v2718 = vsel %vm357, %v2711, %v2580
  %v2719 = vsel %vm357, %v2712, %v2582
  %v2720 = vsel %vm357, %v2713, %v2584
  %v2721 = vsel %vm357, %v2714, %v2586
  %v2722 = vsel %vm357, %v2715, %v2588
  %v2723 = vsel %vm366, %v358, %v2598
  %v2724 = vsel %vm366, %v2716, %v2600
  %v2725 = vsel %vm366, %v2717, %v2602
  %v2726 = vsel %vm366, %v2718, %v2604
  %v2727 = vsel %vm366, %v2719, %v2606
  %v2728 = vsel %vm366, %v2720, %v2608
  %v2729 = vsel %vm366, %v2721, %v2610
  %v2730 = vsel %vm366, %v2722, %v2612
  %v2731 = vsel %vm348, %v2514, %v2637
  %v2732 = vsel %vm348, %v2517, %v2639
  %v2733 = vsel %vm348, %v2520, %v2641
  %v2734 = vsel %vm348, %v2523, %v2643
  %v2735 = vsel %vm348, %v2526, %v2645
  %v2736 = vsel %vm348, %v2529, %v2647
  %v2737 = vsel %vm348, %v2532, %v2649
  %v2738 = vsel %vm348, %v2624, %v2651
  %v2739 = vsel %vm357, %v2731, %v2661
  %v2740 = vsel %vm357, %v2732, %v2663
  %v2741 = vsel %vm357, %v2733, %v2665
  %v2742 = vsel %vm357, %v2734, %v2667
  %v2743 = vsel %vm357, %v2735, %v2669
  %v2744 = vsel %vm357, %v2736, %v2671
  %v2745 = vsel %vm357, %v2737, %v2673
  %v2746 = vsel %vm357, %v2738, %v307
  %v2747 = vsel %vm366, %v2739, %v2682
  %v2748 = vsel %vm366, %v2740, %v2684
  %v2749 = vsel %vm366, %v2741, %v2686
  %v2750 = vsel %vm366, %v2742, %v2688
  %v2751 = vsel %vm366, %v2743, %v2690
  %v2752 = vsel %vm366, %v2744, %v2692
  %v2753 = vsel %vm366, %v2745, %v2694
  %v2754 = vsel %vm366, %v2746, %v331
  %v2755 = vmax.f32 %v2442, 0.0
  %v2756 = vmax.f32 %v2443, 0.0
  %v2757 = vmax.f32 %v2444, 0.0
  %v2758 = vmax.f32 %v2445, 0.0
  %v2759 = vmax.f32 %v2446, 0.0
  %v2760 = vmax.f32 %v2447, 0.0
  %v2761 = vmax.f32 %v2448, 0.0
  %v2762 = vmax.f32 %v2449, 0.0
  %v2771 = vrot.slane %v2755, 7
  %v2772 = vrot.slane %v2756, 7
  %v2773 = vrot.slane %v2757, 7
  %v2774 = vrot.slane %v2758, 7
  %v2775 = vrot.slane %v2759, 7
  %v2776 = vrot.slane %v2760, 7
  %v2777 = vrot.slane %v2761, 7
  %v2778 = vrot.slane %v2762, 7
  %v2787 = vsel %vm95, 0.0, %v2771
  %v2788 = vsel %vm95, 0.0, %v2772
  %v2789 = vsel %vm95, 0.0, %v2773
  %v2790 = vsel %vm95, 0.0, %v2774
  %v2791 = vsel %vm95, 0.0, %v2775
  %v2792 = vsel %vm95, 0.0, %v2776
  %v2793 = vsel %vm95, 0.0, %v2777
  %v2794 = vsel %vm95, 0.0, %v2778
  %v2795 = vsel %vm95, %v2771, 0.0
  %v2796 = vsel %vm95, %v2772, 0.0
  %v2797 = vsel %vm95, %v2773, 0.0
  %v2798 = vsel %vm95, %v2774, 0.0
  %v2799 = vsel %vm95, %v2775, 0.0
  %v2800 = vsel %vm95, %v2776, 0.0
  %v2801 = vsel %vm95, %v2777, 0.0
  %v2802 = vsel %vm95, %v2778, 0.0
  %v2817 = vrot.slane %v2787, 1
  %v2818 = vrot.slane %v2795, 1
  %v2819 = vsel %vm130, %v2817, %v2818
  %v2820 = vrot.slane %v2788, 1
  %v2821 = vrot.slane %v2796, 1
  %v2822 = vsel %vm130, %v2820, %v2821
  %v2823 = vrot.slane %v2789, 1
  %v2824 = vrot.slane %v2797, 1
  %v2825 = vsel %vm130, %v2823, %v2824
  %v2826 = vrot.slane %v2790, 1
  %v2827 = vrot.slane %v2798, 1
  %v2828 = vsel %vm130, %v2826, %v2827
  %v2829 = vrot.slane %v2791, 1
  %v2830 = vrot.slane %v2799, 1
  %v2831 = vsel %vm130, %v2829, %v2830
  %v2832 = vrot.slane %v2792, 1
  %v2833 = vrot.slane %v2800, 1
  %v2834 = vsel %vm130, %v2832, %v2833
  %v2835 = vrot.slane %v2793, 1
  %v2836 = vrot.slane %v2801, 1
  %v2837 = vsel %vm130, %v2835, %v2836
  %2838 = vrot.lane.b32.xlu0 %v2819, 32
  %v2839 = vpop.permute.xlu0 %2838
  %2840 = vrot.lane.b32.xlu0 %v2822, 32
  %v2841 = vpop.permute.xlu0 %2840
  %2842 = vrot.lane.b32.xlu0 %v2825, 32
  %v2843 = vpop.permute.xlu0 %2842
  %2844 = vrot.lane.b32.xlu0 %v2828, 32
  %v2845 = vpop.permute.xlu0 %2844
  %2846 = vrot.lane.b32.xlu0 %v2831, 32
  %v2847 = vpop.permute.xlu0 %2846
  %2848 = vrot.lane.b32.xlu0 %v2834, 32
  %v2849 = vpop.permute.xlu0 %2848
  %2850 = vrot.lane.b32.xlu0 %v2837, 32
  %v2851 = vpop.permute.xlu0 %2850
  %v2859 = vrot.slane %v2787, 2
  %v2860 = vrot.slane %v2795, 2
  %v2861 = vsel %vm179, %v2859, %v2860
  %v2862 = vrot.slane %v2788, 2
  %v2863 = vrot.slane %v2796, 2
  %v2864 = vsel %vm179, %v2862, %v2863
  %v2865 = vrot.slane %v2789, 2
  %v2866 = vrot.slane %v2797, 2
  %v2867 = vsel %vm179, %v2865, %v2866
  %v2868 = vrot.slane %v2790, 2
  %v2869 = vrot.slane %v2798, 2
  %v2870 = vsel %vm179, %v2868, %v2869
  %v2871 = vrot.slane %v2791, 2
  %v2872 = vrot.slane %v2799, 2
  %v2873 = vsel %vm179, %v2871, %v2872
  %v2874 = vrot.slane %v2792, 2
  %v2875 = vrot.slane %v2800, 2
  %v2876 = vsel %vm179, %v2874, %v2875
  %v2877 = vrot.slane %v2793, 2
  %v2878 = vrot.slane %v2801, 2
  %v2879 = vsel %vm179, %v2877, %v2878
  %2880 = vrot.lane.b32.xlu0 %v2861, 64
  %v2881 = vpop.permute.xlu0 %2880
  %2882 = vrot.lane.b32.xlu0 %v2864, 64
  %v2883 = vpop.permute.xlu0 %2882
  %2884 = vrot.lane.b32.xlu0 %v2867, 64
  %v2885 = vpop.permute.xlu0 %2884
  %2886 = vrot.lane.b32.xlu0 %v2870, 64
  %v2887 = vpop.permute.xlu0 %2886
  %2888 = vrot.lane.b32.xlu0 %v2873, 64
  %v2889 = vpop.permute.xlu0 %2888
  %2890 = vrot.lane.b32.xlu0 %v2876, 64
  %v2891 = vpop.permute.xlu0 %2890
  %2892 = vrot.lane.b32.xlu0 %v2879, 64
  %v2893 = vpop.permute.xlu0 %2892
  %2902 = vrot.lane.b32.xlu0 %v2787, 96
  %v2903 = vpop.permute.xlu0 %2902
  %2904 = vrot.lane.b32.xlu0 %v2788, 96
  %v2905 = vpop.permute.xlu0 %2904
  %2906 = vrot.lane.b32.xlu0 %v2789, 96
  %v2907 = vpop.permute.xlu0 %2906
  %2908 = vrot.lane.b32.xlu0 %v2790, 96
  %v2909 = vpop.permute.xlu0 %2908
  %2910 = vrot.lane.b32.xlu0 %v2791, 96
  %v2911 = vpop.permute.xlu0 %2910
  %2912 = vrot.lane.b32.xlu0 %v2792, 96
  %v2913 = vpop.permute.xlu0 %2912
  %2914 = vrot.lane.b32.xlu0 %v2793, 96
  %v2915 = vpop.permute.xlu0 %2914
  %2916 = vrot.lane.b32.xlu0 %v2794, 96
  %v2917 = vpop.permute.xlu0 %2916
  %v2927 = vrot.slane %v2794, 1
  %v2928 = vrot.slane %v2802, 1
  %v2929 = vsel %vm130, %v2927, %v2928
  %v2938 = vrot.slane %v2794, 2
  %v2939 = vrot.slane %v2802, 2
  %v2940 = vsel %vm179, %v2938, %v2939
  %2941 = vrot.lane.b32.xlu0 %v2861, 32
  %v2942 = vpop.permute.xlu0 %2941
  %2943 = vrot.lane.b32.xlu0 %v2864, 32
  %v2944 = vpop.permute.xlu0 %2943
  %2945 = vrot.lane.b32.xlu0 %v2867, 32
  %v2946 = vpop.permute.xlu0 %2945
  %2947 = vrot.lane.b32.xlu0 %v2870, 32
  %v2948 = vpop.permute.xlu0 %2947
  %2949 = vrot.lane.b32.xlu0 %v2873, 32
  %v2950 = vpop.permute.xlu0 %2949
  %2951 = vrot.lane.b32.xlu0 %v2876, 32
  %v2952 = vpop.permute.xlu0 %2951
  %2953 = vrot.lane.b32.xlu0 %v2879, 32
  %v2954 = vpop.permute.xlu0 %2953
  %2955 = vrot.lane.b32.xlu0 %v2940, 32
  %v2956 = vpop.permute.xlu0 %2955
  %2965 = vrot.lane.b32.xlu0 %v2788, 64
  %v2966 = vpop.permute.xlu0 %2965
  %2967 = vrot.lane.b32.xlu0 %v2789, 64
  %v2968 = vpop.permute.xlu0 %2967
  %2969 = vrot.lane.b32.xlu0 %v2790, 64
  %v2970 = vpop.permute.xlu0 %2969
  %2971 = vrot.lane.b32.xlu0 %v2791, 64
  %v2972 = vpop.permute.xlu0 %2971
  %2973 = vrot.lane.b32.xlu0 %v2792, 64
  %v2974 = vpop.permute.xlu0 %2973
  %2975 = vrot.lane.b32.xlu0 %v2793, 64
  %v2976 = vpop.permute.xlu0 %2975
  %2977 = vrot.lane.b32.xlu0 %v2794, 64
  %v2978 = vpop.permute.xlu0 %2977
  %2986 = vrot.lane.b32.xlu0 %v2822, 96
  %v2987 = vpop.permute.xlu0 %2986
  %2988 = vrot.lane.b32.xlu0 %v2825, 96
  %v2989 = vpop.permute.xlu0 %2988
  %2990 = vrot.lane.b32.xlu0 %v2828, 96
  %v2991 = vpop.permute.xlu0 %2990
  %2992 = vrot.lane.b32.xlu0 %v2831, 96
  %v2993 = vpop.permute.xlu0 %2992
  %2994 = vrot.lane.b32.xlu0 %v2834, 96
  %v2995 = vpop.permute.xlu0 %2994
  %2996 = vrot.lane.b32.xlu0 %v2837, 96
  %v2997 = vpop.permute.xlu0 %2996
  %2998 = vrot.lane.b32.xlu0 %v2929, 96
  %v2999 = vpop.permute.xlu0 %2998
  %v3014 = vsel %vm348, %v2787, %v2839
  %v3015 = vsel %vm348, %v2788, %v2841
  %v3016 = vsel %vm348, %v2789, %v2843
  %v3017 = vsel %vm348, %v2790, %v2845
  %v3018 = vsel %vm348, %v2791, %v2847
  %v3019 = vsel %vm348, %v2792, %v2849
  %v3020 = vsel %vm348, %v2793, %v2851
  %v3021 = vsel %vm357, %v3014, %v2881
  %v3022 = vsel %vm357, %v3015, %v2883
  %v3023 = vsel %vm357, %v3016, %v2885
  %v3024 = vsel %vm357, %v3017, %v2887
  %v3025 = vsel %vm357, %v3018, %v2889
  %v3026 = vsel %vm357, %v3019, %v2891
  %v3027 = vsel %vm357, %v3020, %v2893
  %v3028 = vsel %vm366, %v358, %v2903
  %v3029 = vsel %vm366, %v3021, %v2905
  %v3030 = vsel %vm366, %v3022, %v2907
  %v3031 = vsel %vm366, %v3023, %v2909
  %v3032 = vsel %vm366, %v3024, %v2911
  %v3033 = vsel %vm366, %v3025, %v2913
  %v3034 = vsel %vm366, %v3026, %v2915
  %v3035 = vsel %vm366, %v3027, %v2917
  %v3036 = vsel %vm348, %v2819, %v2942
  %v3037 = vsel %vm348, %v2822, %v2944
  %v3038 = vsel %vm348, %v2825, %v2946
  %v3039 = vsel %vm348, %v2828, %v2948
  %v3040 = vsel %vm348, %v2831, %v2950
  %v3041 = vsel %vm348, %v2834, %v2952
  %v3042 = vsel %vm348, %v2837, %v2954
  %v3043 = vsel %vm348, %v2929, %v2956
  %v3044 = vsel %vm357, %v3036, %v2966
  %v3045 = vsel %vm357, %v3037, %v2968
  %v3046 = vsel %vm357, %v3038, %v2970
  %v3047 = vsel %vm357, %v3039, %v2972
  %v3048 = vsel %vm357, %v3040, %v2974
  %v3049 = vsel %vm357, %v3041, %v2976
  %v3050 = vsel %vm357, %v3042, %v2978
  %v3051 = vsel %vm357, %v3043, %v307
  %v3052 = vsel %vm366, %v3044, %v2987
  %v3053 = vsel %vm366, %v3045, %v2989
  %v3054 = vsel %vm366, %v3046, %v2991
  %v3055 = vsel %vm366, %v3047, %v2993
  %v3056 = vsel %vm366, %v3048, %v2995
  %v3057 = vsel %vm366, %v3049, %v2997
  %v3058 = vsel %vm366, %v3050, %v2999
  %v3059 = vsel %vm366, %v3051, %v331
  %v3060 = vpack.c.bf16 %v2724, %v2723
  %v3061 = vpack.c.bf16 %v2748, %v2747
  %v3062 = vpack.c.bf16 %v2562, %v2559
  %v3063 = vpack.c.bf16 %v2726, %v2725
  %v3064 = vpack.c.bf16 %v2750, %v2749
  %v3065 = vpack.c.bf16 %v2568, %v2565
  %v3066 = vpack.c.bf16 %v2728, %v2727
  %v3067 = vpack.c.bf16 %v2752, %v2751
  %v3068 = vpack.c.bf16 %v2574, %v2571
  %v3069 = vpack.c.bf16 %v2730, %v2729
  %v3070 = vpack.c.bf16 %v2754, %v2753
  %v3071 = vpack.c.bf16 %v182, %v2635
  %v3072 = vpack.c.bf16 %v3029, %v3028
  %v3073 = vpack.c.bf16 %v3053, %v3052
  %v3074 = vpack.c.bf16 %v2867, %v2864
  %v3075 = vpack.c.bf16 %v3031, %v3030
  %v3076 = vpack.c.bf16 %v3055, %v3054
  %v3077 = vpack.c.bf16 %v2873, %v2870
  %v3078 = vpack.c.bf16 %v3033, %v3032
  %v3079 = vpack.c.bf16 %v3057, %v3056
  %v3080 = vpack.c.bf16 %v2879, %v2876
  %v3081 = vpack.c.bf16 %v3035, %v3034
  %v3082 = vpack.c.bf16 %v3059, %v3058
  %v3083 = vpack.c.bf16 %v182, %v2940
  %v3084 = vld [vmem:[%s5] sm:$0xf]
  %v3085 = vld [vmem:[%s5 + $0x4] sm:$0xf]
  %v3086 = vld [vmem:[%s5 + $0x8] sm:$0xf]
  %v3087 = vld [vmem:[%s5 + $0xc] sm:$0xf]
  %v3088 = vld [vmem:[%s5 + $0x10] sm:$0xf]
  %v3089 = vld [vmem:[%s5 + $0x14] sm:$0xf]
  %v3090 = vld [vmem:[%s5 + $0x18] sm:$0xf]
  %v3091 = vld [vmem:[%s5 + $0x1c] sm:$0xf]
  %v3092 = vld [vmem:[%s5 + $0x20] sm:$0xf]
  %v3093 = vld [vmem:[%s5 + $0x24] sm:$0xf]
  %v3094 = vld [vmem:[%s5 + $0x28] sm:$0xf]
  %v3095 = vld [vmem:[%s5 + $0x2c] sm:$0xf]
  %v3096 = vld [vmem:[%s5 + $0x30] sm:$0xf]
  %v3097 = vld [vmem:[%s5 + $0x34] sm:$0xf]
  %v3098 = vld [vmem:[%s5 + $0x38] sm:$0xf]
  %v3099 = vld [vmem:[%s5 + $0x3c] sm:$0xf]
  %v3100 = vld [vmem:[%s5 + $0x40] sm:$0xf]
  %v3101 = vld [vmem:[%s5 + $0x44] sm:$0xf]
  %v3102 = vld [vmem:[%s5 + $0x48] sm:$0xf]
  %v3103 = vld [vmem:[%s5 + $0x4c] sm:$0xf]
  %v3104 = vld [vmem:[%s5 + $0x50] sm:$0xf]
  %v3105 = vld [vmem:[%s5 + $0x54] sm:$0xf]
  %v3106 = vld [vmem:[%s5 + $0x58] sm:$0xf]
  %v3107 = vld [vmem:[%s5 + $0x5c] sm:$0xf]
  %v3108 = vld [vmem:[%s5 + $0x60] sm:$0xf]
  %v3109 = vld [vmem:[%s5 + $0x64] sm:$0xf]
  %v3110 = vld [vmem:[%s5 + $0x68] sm:$0xf]
  %v3111 = vld [vmem:[%s5 + $0x6c] sm:$0xf]
  %v3112 = vld [vmem:[%s5 + $0x70] sm:$0xf]
  %v3113 = vld [vmem:[%s5 + $0x74] sm:$0xf]
  %v3114 = vld [vmem:[%s5 + $0x78] sm:$0xf]
  %v3115 = vld [vmem:[%s5 + $0x7c] sm:$0xf]
  %v3116 = vld [vmem:[%s5 + $0x80] sm:$0xf]
  %v3117 = vld [vmem:[%s5 + $0x84] sm:$0xf]
  %v3118 = vld [vmem:[%s5 + $0x88] sm:$0xf]
  %v3119 = vld [vmem:[%s5 + $0x8c] sm:$0xf]
  %v3120 = vld [vmem:[%s6] sm:$0x1]
  %v3122 = vlaneseq
  %v3123 = vshrl.u32 %v3122, 7
  %v3124 = vsub.s32 0, %v3123
  %v3125 = vrot.slane %v3120, %v3124
  %v3163 = vunpack.c.l.b16 %v3084
  %v3164 = vunpack.c.l.b16 %v3085
  %v3165 = vunpack.c.l.b16 %v3086
  %v3166 = vunpack.c.l.b16 %v3087
  %v3167 = vunpack.c.l.b16 %v3088
  %v3168 = vunpack.c.l.b16 %v3089
  %v3169 = vunpack.c.l.b16 %v3090
  %v3170 = vunpack.c.l.b16 %v3091
  %v3171 = vunpack.c.l.b16 %v3092
  %v3172 = vunpack.c.l.b16 %v3093
  %v3173 = vunpack.c.l.b16 %v3094
  %v3174 = vunpack.c.l.b16 %v3095
  %v3175 = vunpack.c.l.b16 %v3096
  %v3176 = vunpack.c.l.b16 %v3097
  %v3177 = vunpack.c.l.b16 %v3098
  %v3178 = vunpack.c.l.b16 %v3099
  %v3179 = vunpack.c.l.b16 %v3100
  %v3180 = vunpack.c.l.b16 %v3101
  %v3181 = vunpack.c.l.b16 %v3102
  %v3182 = vunpack.c.l.b16 %v3103
  %v3183 = vunpack.c.l.b16 %v3104
  %v3184 = vunpack.c.l.b16 %v3105
  %v3185 = vunpack.c.l.b16 %v3106
  %v3186 = vunpack.c.l.b16 %v3107
  %v3187 = vunpack.c.l.b16 %v3108
  %v3188 = vunpack.c.l.b16 %v3109
  %v3189 = vunpack.c.l.b16 %v3110
  %v3190 = vunpack.c.l.b16 %v3111
  %v3191 = vunpack.c.l.b16 %v3112
  %v3192 = vunpack.c.l.b16 %v3113
  %v3193 = vunpack.c.l.b16 %v3114
  %v3194 = vunpack.c.l.b16 %v3115
  %v3195 = vunpack.c.l.b16 %v3116
  %v3196 = vunpack.c.l.b16 %v3117
  %v3197 = vunpack.c.l.b16 %v3118
  %v3198 = vunpack.c.l.b16 %v3119
  %v3199 = vpack.c.b16 %v3164, %v3163
  %v3200 = vpack.c.b16 %v3166, %v3165
  %v3201 = vpack.c.b16 %v3168, %v3167
  %v3202 = vpack.c.b16 %v3170, %v3169
  %v3203 = vpack.c.b16 %v3172, %v3171
  %v3204 = vpack.c.b16 %v3174, %v3173
  %v3205 = vpack.c.b16 %v3176, %v3175
  %v3206 = vpack.c.b16 %v3178, %v3177
  %v3207 = vpack.c.b16 %v3180, %v3179
  %v3208 = vpack.c.b16 %v3182, %v3181
  %v3209 = vpack.c.b16 %v3184, %v3183
  %v3210 = vpack.c.b16 %v3186, %v3185
  %v3211 = vpack.c.b16 %v3188, %v3187
  %v3212 = vpack.c.b16 %v3190, %v3189
  %v3213 = vpack.c.b16 %v3192, %v3191
  %v3214 = vpack.c.b16 %v3194, %v3193
  %v3215 = vpack.c.b16 %v3196, %v3195
  %v3216 = vpack.c.b16 %v3198, %v3197
  %v3236 = vsel %vm348, %v3062, 0
  %v3239 = vsel %vm348, %v3065, 0
  %v3242 = vsel %vm348, %v3068, 0
  %v3245 = vsel %vm348, %v3071, 0
  %v3248 = vsel %vm348, %v3074, 0
  %v3251 = vsel %vm348, %v3077, 0
  %v3254 = vsel %vm348, %v3080, 0
  %v3257 = vsel %vm348, %v3083, 0
  %3259 = vmatprep.subr.bf16.mxu0 0
  %3260 = vmatpush1.bf16.msra.mxu0 %v3199
  %3261 = vmatprep.subr.bf16.mxu0 0
  %3262 = vmatpush1.bf16.msra.mxu0 %v3200
  %3263 = vmatprep.subr.bf16.mxu0 0
  %3264 = vmatpush1.bf16.msra.mxu0 %v3201
  %3265 = vmatprep.subr.bf16.mxu0 0
  %3266 = vmatpush1.bf16.msra.mxu0 %v3202
  %3267 = vmatprep.subr.bf16.mxu0 0
  %3268 = vmatpush1.bf16.msra.mxu0 %v3203
  %3269 = vmatprep.subr.bf16.mxu0 0
  %3270 = vmatpush1.bf16.msra.mxu0 %v3204
  %3271 = vmatprep.subr.bf16.mxu0 0
  %3272 = vmatpush1.bf16.msra.mxu0 %v3205
  %3273 = vmatprep.subr.bf16.mxu0 0
  %3274 = vmatpush1.bf16.msra.mxu0 %v3206
  %3275 = vmatprep.subr.bf16.mxu0 0
  %3276 = vmatpush1.bf16.msra.mxu0 %v3207
  %3277 = vmatprep.subr.bf16.mxu0 0
  %3278 = vmatpush1.bf16.msra.mxu0 %v3208
  %3279 = vmatprep.subr.bf16.mxu0 0
  %3280 = vmatpush1.bf16.msra.mxu0 %v3209
  %3281 = vmatprep.subr.bf16.mxu0 0
  %3282 = vmatpush1.bf16.msra.mxu0 %v3210
  %3283 = vmatprep.subr.bf16.mxu0 0
  %3284 = vmatpush1.bf16.msra.mxu0 %v3211
  %3285 = vmatprep.subr.bf16.mxu0 0
  %3286 = vmatpush1.bf16.msra.mxu0 %v3212
  %3287 = vmatprep.subr.bf16.mxu0 0
  %3288 = vmatpush1.bf16.msra.mxu0 %v3213
  %3289 = vmatprep.subr.bf16.mxu0 0
  %3290 = vmatpush1.bf16.msra.mxu0 %v3214
  %3291 = vmatprep.mubr.bf16.mxu0 %v3061
  %3292 = vmatmul.mubr.bf16.gmra.mrb[0].mxu0 %v3060
  %v3293 = vpop.f32.mrb[0].mxu0
  %v3294 = vadd.f32 %v3125, %v3293
  %v3295 = vpop.f32.mrb[0].mxu0
  %v3296 = vpop.f32.mrb[0].mxu0
  %v3297 = vadd.f32 %v3125, %v3296
  %v3298 = vpop.f32.mrb[0].mxu0
  %3299 = vmatprep.mubr.bf16.mxu0 %v3064
  %3300 = vmatmul.mubr.bf16.gmra.mrb[0].mxu0 %v3063
  %v3301 = vpop.f32.mrb[0].mxu0
  %v3302 = vadd.f32 %v3125, %v3301
  %v3303 = vpop.f32.mrb[0].mxu0
  %v3304 = vpop.f32.mrb[0].mxu0
  %v3305 = vadd.f32 %v3125, %v3304
  %v3306 = vpop.f32.mrb[0].mxu0
  %3307 = vmatprep.mubr.bf16.mxu0 %v3067
  %3308 = vmatmul.mubr.bf16.gmra.mrb[0].mxu0 %v3066
  %v3309 = vpop.f32.mrb[0].mxu0
  %v3310 = vadd.f32 %v3125, %v3309
  %v3311 = vpop.f32.mrb[0].mxu0
  %v3312 = vpop.f32.mrb[0].mxu0
  %v3313 = vadd.f32 %v3125, %v3312
  %v3314 = vpop.f32.mrb[0].mxu0
  %3315 = vmatprep.mubr.bf16.mxu0 %v3070
  %3316 = vmatmul.mubr.bf16.gmra.mrb[0].mxu0 %v3069
  %v3317 = vpop.f32.mrb[0].mxu0
  %v3318 = vadd.f32 %v3125, %v3317
  %v3319 = vpop.f32.mrb[0].mxu0
  %v3320 = vpop.f32.mrb[0].mxu0
  %v3321 = vadd.f32 %v3125, %v3320
  %v3322 = vpop.f32.mrb[0].mxu0
  %3323 = vmatprep.mubr.bf16.mxu0 %v3073
  %3324 = vmatmul.mubr.bf16.gmra.mrb[0].mxu0 %v3072
  %v3325 = vpop.f32.mrb[0].mxu0
  %v3326 = vadd.f32 %v3125, %v3325
  %v3327 = vpop.f32.mrb[0].mxu0
  %v3328 = vpop.f32.mrb[0].mxu0
  %v3329 = vadd.f32 %v3125, %v3328
  %v3330 = vpop.f32.mrb[0].mxu0
  %3331 = vmatprep.mubr.bf16.mxu0 %v3076
  %3332 = vmatmul.mubr.bf16.gmra.mrb[0].mxu0 %v3075
  %v3333 = vpop.f32.mrb[0].mxu0
  %v3334 = vadd.f32 %v3125, %v3333
  %v3335 = vpop.f32.mrb[0].mxu0
  %v3336 = vpop.f32.mrb[0].mxu0
  %v3337 = vadd.f32 %v3125, %v3336
  %v3338 = vpop.f32.mrb[0].mxu0
  %3339 = vmatprep.mubr.bf16.mxu0 %v3079
  %3340 = vmatmul.mubr.bf16.gmra.mrb[0].mxu0 %v3078
  %v3341 = vpop.f32.mrb[0].mxu0
  %v3342 = vadd.f32 %v3125, %v3341
  %v3343 = vpop.f32.mrb[0].mxu0
  %v3344 = vpop.f32.mrb[0].mxu0
  %v3345 = vadd.f32 %v3125, %v3344
  %v3346 = vpop.f32.mrb[0].mxu0
  %3347 = vmatprep.mubr.bf16.mxu0 %v3082
  %3348 = vmatmul.mubr.bf16.gmra.mrb[0].mxu0 %v3081
  %v3349 = vpop.f32.mrb[0].mxu0
  %v3350 = vadd.f32 %v3125, %v3349
  %v3351 = vpop.f32.mrb[0].mxu0
  %v3352 = vpop.f32.mrb[0].mxu0
  %v3353 = vadd.f32 %v3125, %v3352
  %v3354 = vpop.f32.mrb[0].mxu0
  %3355 = vdwg.mxu0
  %3356 = vmatprep.subr.bf16.mxu0 0
  %3357 = vmatpush1.bf16.msra.mxu0 %v3215
  %3358 = vmatprep.subr.bf16.mxu0 0
  %3359 = vmatpush1.bf16.msra.mxu0 %v3216
  %3360 = vmatprep.subr.bf16.mxu0 0
  %3361 = vmatpush1.bf16.msra.mxu0 0
  %3362 = vmatprep.subr.bf16.mxu0 0
  %3363 = vmatpush1.bf16.msra.mxu0 0
  %3364 = vmatprep.subr.bf16.mxu0 0
  %3365 = vmatpush1.bf16.msra.mxu0 0
  %3366 = vmatprep.subr.bf16.mxu0 0
  %3367 = vmatpush1.bf16.msra.mxu0 0
  %3368 = vmatprep.subr.bf16.mxu0 0
  %3369 = vmatpush1.bf16.msra.mxu0 0
  %3370 = vmatprep.subr.bf16.mxu0 0
  %3371 = vmatpush1.bf16.msra.mxu0 0
  %3372 = vmatprep.subr.bf16.mxu0 0
  %3373 = vmatpush1.bf16.msra.mxu0 0
  %3374 = vmatprep.subr.bf16.mxu0 0
  %3375 = vmatpush1.bf16.msra.mxu0 0
  %3376 = vmatprep.subr.bf16.mxu0 0
  %3377 = vmatpush1.bf16.msra.mxu0 0
  %3378 = vmatprep.subr.bf16.mxu0 0
  %3379 = vmatpush1.bf16.msra.mxu0 0
  %3380 = vmatprep.subr.bf16.mxu0 0
  %3381 = vmatpush1.bf16.msra.mxu0 0
  %3382 = vmatprep.subr.bf16.mxu0 0
  %3383 = vmatpush1.bf16.msra.mxu0 0
  %3384 = vmatprep.subr.bf16.mxu0 0
  %3385 = vmatpush1.bf16.msra.mxu0 0
  %3386 = vmatprep.subr.bf16.mxu0 0
  %3387 = vmatpush1.bf16.msra.mxu0 0
  %3388 = vmatprep.mubr.bf16.mxu0 0
  %3389 = vmatmul.mubr.bf16.gmra.mrb[0].mxu0 %v3236
  %v3390 = vpop.f32.mrb[0].mxu0
  %v3391 = vadd.f32 %v3294, %v3390
  %v3392 = vpop.f32.mrb[0].mxu0
  %v3393 = vpop.f32.mrb[0].mxu0
  %v3394 = vadd.f32 %v3297, %v3393
  %v3395 = vpop.f32.mrb[0].mxu0
  %3396 = vmatprep.mubr.bf16.mxu0 0
  %3397 = vmatmul.mubr.bf16.gmra.mrb[0].mxu0 %v3239
  %v3398 = vpop.f32.mrb[0].mxu0
  %v3399 = vadd.f32 %v3302, %v3398
  %v3400 = vpop.f32.mrb[0].mxu0
  %v3401 = vpop.f32.mrb[0].mxu0
  %v3402 = vadd.f32 %v3305, %v3401
  %v3403 = vpop.f32.mrb[0].mxu0
  %3404 = vmatprep.mubr.bf16.mxu0 0
  %3405 = vmatmul.mubr.bf16.gmra.mrb[0].mxu0 %v3242
  %v3406 = vpop.f32.mrb[0].mxu0
  %v3407 = vadd.f32 %v3310, %v3406
  %v3408 = vpop.f32.mrb[0].mxu0
  %v3409 = vpop.f32.mrb[0].mxu0
  %v3410 = vadd.f32 %v3313, %v3409
  %v3411 = vpop.f32.mrb[0].mxu0
  %3412 = vmatprep.mubr.bf16.mxu0 0
  %3413 = vmatmul.mubr.bf16.gmra.mrb[0].mxu0 %v3245
  %v3414 = vpop.f32.mrb[0].mxu0
  %v3415 = vadd.f32 %v3318, %v3414
  %v3416 = vpop.f32.mrb[0].mxu0
  %v3417 = vpop.f32.mrb[0].mxu0
  %v3418 = vadd.f32 %v3321, %v3417
  %v3419 = vpop.f32.mrb[0].mxu0
  %3420 = vmatprep.mubr.bf16.mxu0 0
  %3421 = vmatmul.mubr.bf16.gmra.mrb[0].mxu0 %v3248
  %v3422 = vpop.f32.mrb[0].mxu0
  %v3423 = vadd.f32 %v3326, %v3422
  %v3424 = vpop.f32.mrb[0].mxu0
  %v3425 = vpop.f32.mrb[0].mxu0
  %v3426 = vadd.f32 %v3329, %v3425
  %v3427 = vpop.f32.mrb[0].mxu0
  %3428 = vmatprep.mubr.bf16.mxu0 0
  %3429 = vmatmul.mubr.bf16.gmra.mrb[0].mxu0 %v3251
  %v3430 = vpop.f32.mrb[0].mxu0
  %v3431 = vadd.f32 %v3334, %v3430
  %v3432 = vpop.f32.mrb[0].mxu0
  %v3433 = vpop.f32.mrb[0].mxu0
  %v3434 = vadd.f32 %v3337, %v3433
  %v3435 = vpop.f32.mrb[0].mxu0
  %3436 = vmatprep.mubr.bf16.mxu0 0
  %3437 = vmatmul.mubr.bf16.gmra.mrb[0].mxu0 %v3254
  %v3438 = vpop.f32.mrb[0].mxu0
  %v3439 = vadd.f32 %v3342, %v3438
  %v3440 = vpop.f32.mrb[0].mxu0
  %v3441 = vpop.f32.mrb[0].mxu0
  %v3442 = vadd.f32 %v3345, %v3441
  %v3443 = vpop.f32.mrb[0].mxu0
  %3444 = vmatprep.mubr.bf16.mxu0 0
  %3445 = vmatmul.mubr.bf16.gmra.mrb[0].mxu0 %v3257
  %v3446 = vpop.f32.mrb[0].mxu0
  %v3447 = vadd.f32 %v3350, %v3446
  %v3448 = vpop.f32.mrb[0].mxu0
  %v3449 = vpop.f32.mrb[0].mxu0
  %v3450 = vadd.f32 %v3353, %v3449
  %v3451 = vpop.f32.mrb[0].mxu0
  %3452 = vdwg.mxu0
  %v3453 = vpack.c.bf16 %v3394, %v3391
  %v3454 = vpack.c.bf16 %v3402, %v3399
  %v3455 = vpack.c.bf16 %v3410, %v3407
  %v3456 = vpack.c.bf16 %v3418, %v3415
  %v3461 = vunpack.c.l.b16 %v3453
  %v3462 = vunpack.c.h.b16 %v3453
  %v3463 = vunpack.c.l.b16 %v3454
  %v3464 = vunpack.c.h.b16 %v3454
  %v3465 = vunpack.c.l.b16 %v3455
  %v3466 = vunpack.c.h.b16 %v3455
  %v3467 = vunpack.c.l.b16 %v3456
  %v3468 = vunpack.c.h.b16 %v3456
  %v3469 = vpack.c.b16 %v3461, %v3461
  %v3470 = vpack.c.b16 %v3462, %v3462
  %v3471 = vpack.c.b16 %v3463, %v3463
  %v3472 = vpack.c.b16 %v3464, %v3464
  %v3473 = vpack.c.b16 %v3465, %v3465
  %v3474 = vpack.c.b16 %v3466, %v3466
  %v3475 = vpack.c.b16 %v3467, %v3467
  %v3476 = vpack.c.b16 %v3468, %v3468
  %vm3485 = vcmask 257024
  %3486 = vst.msk [vmem:[%s7] sm:$0xf] %vm3485, %v3469
  %3487 = vst.msk [vmem:[%s7 + $0x4] sm:$0xf] %vm3485, %v3470
  %3488 = vst.msk [vmem:[%s7 + $0x8] sm:$0xf] %vm3485, %v3471
  %3489 = vst.msk [vmem:[%s7 + $0xc] sm:$0xf] %vm3485, %v3472
  %3490 = vst.msk [vmem:[%s7 + $0x10] sm:$0xf] %vm3485, %v3473
  %3491 = vst.msk [vmem:[%s7 + $0x14] sm:$0xf] %vm3485, %v3474
  %3492 = vst.msk [vmem:[%s7 + $0x18] sm:$0xf] %vm3485, %v3475
  %3493 = vst.msk [vmem:[%s7 + $0x1c] sm:$0xf] %vm3485, %v3476
  %v3494 = vpack.c.bf16 %v3426, %v3423
  %v3495 = vpack.c.bf16 %v3434, %v3431
  %v3496 = vpack.c.bf16 %v3442, %v3439
  %v3497 = vpack.c.bf16 %v3450, %v3447
  %v3502 = vunpack.c.l.b16 %v3494
  %v3503 = vunpack.c.h.b16 %v3494
  %v3504 = vunpack.c.l.b16 %v3495
  %v3505 = vunpack.c.h.b16 %v3495
  %v3506 = vunpack.c.l.b16 %v3496
  %v3507 = vunpack.c.h.b16 %v3496
  %v3508 = vunpack.c.l.b16 %v3497
  %v3509 = vunpack.c.h.b16 %v3497
  %v3510 = vpack.c.b16 %v3502, %v3502
  %v3511 = vpack.c.b16 %v3503, %v3503
  %v3512 = vpack.c.b16 %v3504, %v3504
  %v3513 = vpack.c.b16 %v3505, %v3505
  %v3514 = vpack.c.b16 %v3506, %v3506
  %v3515 = vpack.c.b16 %v3507, %v3507
  %v3516 = vpack.c.b16 %v3508, %v3508
  %v3517 = vpack.c.b16 %v3509, %v3509
  %s3526 = scalar_lea.vmem %s7, 32
  %3527 = vst.msk [vmem:[%s3526] sm:$0xf] %vm3485, %v3510
  %3528 = vst.msk [vmem:[%s3526 + $0x4] sm:$0xf] %vm3485, %v3511
  %3529 = vst.msk [vmem:[%s3526 + $0x8] sm:$0xf] %vm3485, %v3512
  %3530 = vst.msk [vmem:[%s3526 + $0xc] sm:$0xf] %vm3485, %v3513
  %3531 = vst.msk [vmem:[%s3526 + $0x10] sm:$0xf] %vm3485, %v3514
  %3532 = vst.msk [vmem:[%s3526 + $0x14] sm:$0xf] %vm3485, %v3515
  %3533 = vst.msk [vmem:[%s3526 + $0x18] sm:$0xf] %vm3485, %v3516
  %3534 = vst.msk [vmem:[%s3526 + $0x1c] sm:$0xf] %vm3485, %v3517
  // Predicated region
  $region30: #{_decoder_bf16.3} parent=0 // pred_check
    _
  $region31: #{_decoder_bf16.3} parent=0 // pred_check_branch
    %3536 = sbr.rel (0) target = $region33
  $region32: #{_decoder_bf16.3} parent=0 // pred_region
    _
  $region33: #{_decoder_bf16.3} parent=0 // pred_fallthru
    _
  // Predicated region
  $region34: #{_decoder_bf16.3} parent=0 // pred_check
    _
  $region35: #{_decoder_bf16.3} parent=0 // pred_check_branch
    %3538 = sbr.rel (0) target = $region37
  $region36: #{_decoder_bf16.3} parent=0 // pred_region
    _
  $region37: #{_decoder_bf16.3} parent=0 // pred_fallthru
    _

// kernel: _decoder_bf16.5
$region0: #{_decoder_bf16.5}
  #allocation0 [shape = 'u32[]', space=smem, size = 0x4, offset = 0x4, fixed_abs, tag = 'smem constant byte address 0x4 - core index']
  #allocation1 [shape = 'u32[144,128]{1,0:T(1,128)}', space=vmem, size = 0x12000, scoped, tag = 'internal scratch']
  %s0 = inlined_call_operand.vmem [shape: bf16[2,16,16,16], index: 0, kind: input, shape index: {}]
  %s1 = inlined_call_operand.vmem [shape: bf16[12,144], index: 1, kind: input, shape index: {}]
  %s2 = inlined_call_operand.vmem [shape: f32[12,1], index: 2, kind: input, shape index: {}]
  %s3 = inlined_call_operand.vmem [shape: f32[2,12,256], index: 3, kind: output, shape index: {}]
  %s4 = sld [smem:[#allocation0]]
  $region22: #{_decoder_bf16.5} parent=0
    _
  %s6 = ssub.s32 1, %s4
  %s7 = scalar_select 0, %s6, %s4
  // Predicated region
  $region2: #{_decoder_bf16.5} parent=0 // pred_check
    _
  $region3: #{_decoder_bf16.5} parent=0 // pred_check_branch
    %9 = sbr.rel (0) target = $region5
  $region4: #{_decoder_bf16.5} parent=0 // pred_region
    _
  $region5: #{_decoder_bf16.5} parent=0 // pred_fallthru
    _
  // Predicated region
  $region6: #{_decoder_bf16.5} parent=0 // pred_check
    _
  $region7: #{_decoder_bf16.5} parent=0 // pred_check_branch
    %11 = sbr.rel (0) target = $region9
  $region8: #{_decoder_bf16.5} parent=0 // pred_region
    _
  $region9: #{_decoder_bf16.5} parent=0 // pred_fallthru
    _
  // Predicated region
  $region10: #{_decoder_bf16.5} parent=0 // pred_check
    _
  $region11: #{_decoder_bf16.5} parent=0 // pred_check_branch
    %13 = sbr.rel (0) target = $region13
  $region12: #{_decoder_bf16.5} parent=0 // pred_region
    _
  $region13: #{_decoder_bf16.5} parent=0 // pred_fallthru
    _
  %v14 = vld [vmem:[%s0] sm:$0xf]
  %v15 = vld [vmem:[%s0 + $0x4] sm:$0xf]
  %v16 = vld [vmem:[%s0 + $0x8] sm:$0xf]
  %v17 = vld [vmem:[%s0 + $0xc] sm:$0xf]
  %v18 = vld [vmem:[%s0 + $0x10] sm:$0xf]
  %v19 = vld [vmem:[%s0 + $0x14] sm:$0xf]
  %v20 = vld [vmem:[%s0 + $0x18] sm:$0xf]
  %v21 = vld [vmem:[%s0 + $0x1c] sm:$0xf]
  %v22 = vld [vmem:[%s0 + $0x20] sm:$0xf]
  %v23 = vld [vmem:[%s0 + $0x24] sm:$0xf]
  %v24 = vld [vmem:[%s0 + $0x28] sm:$0xf]
  %v25 = vld [vmem:[%s0 + $0x2c] sm:$0xf]
  %v26 = vld [vmem:[%s0 + $0x30] sm:$0xf]
  %v27 = vld [vmem:[%s0 + $0x34] sm:$0xf]
  %v28 = vld [vmem:[%s0 + $0x38] sm:$0xf]
  %v29 = vld [vmem:[%s0 + $0x3c] sm:$0xf]
  %v30 = vld [vmem:[%s0 + $0x40] sm:$0xf]
  %v31 = vld [vmem:[%s0 + $0x44] sm:$0xf]
  %v32 = vld [vmem:[%s0 + $0x48] sm:$0xf]
  %v33 = vld [vmem:[%s0 + $0x4c] sm:$0xf]
  %v34 = vld [vmem:[%s0 + $0x50] sm:$0xf]
  %v35 = vld [vmem:[%s0 + $0x54] sm:$0xf]
  %v36 = vld [vmem:[%s0 + $0x58] sm:$0xf]
  %v37 = vld [vmem:[%s0 + $0x5c] sm:$0xf]
  %v38 = vld [vmem:[%s0 + $0x60] sm:$0xf]
  %v39 = vld [vmem:[%s0 + $0x64] sm:$0xf]
  %v40 = vld [vmem:[%s0 + $0x68] sm:$0xf]
  %v41 = vld [vmem:[%s0 + $0x6c] sm:$0xf]
  %v42 = vld [vmem:[%s0 + $0x70] sm:$0xf]
  %v43 = vld [vmem:[%s0 + $0x74] sm:$0xf]
  %v44 = vld [vmem:[%s0 + $0x78] sm:$0xf]
  %v45 = vld [vmem:[%s0 + $0x7c] sm:$0xf]
  %v46 = vunpack.c.l.bf16 %v14
  %v47 = vunpack.c.l.bf16 %v15
  %v48 = vunpack.c.l.bf16 %v16
  %v49 = vunpack.c.l.bf16 %v17
  %v50 = vunpack.c.l.bf16 %v18
  %v51 = vunpack.c.l.bf16 %v19
  %v52 = vunpack.c.l.bf16 %v20
  %v53 = vunpack.c.l.bf16 %v21
  %v54 = vunpack.c.l.bf16 %v22
  %v55 = vunpack.c.l.bf16 %v23
  %v56 = vunpack.c.l.bf16 %v24
  %v57 = vunpack.c.l.bf16 %v25
  %v58 = vunpack.c.l.bf16 %v26
  %v59 = vunpack.c.l.bf16 %v27
  %v60 = vunpack.c.l.bf16 %v28
  %v61 = vunpack.c.l.bf16 %v29
  %v62 = vunpack.c.l.bf16 %v30
  %v63 = vunpack.c.l.bf16 %v31
  %v64 = vunpack.c.l.bf16 %v32
  %v65 = vunpack.c.l.bf16 %v33
  %v66 = vunpack.c.l.bf16 %v34
  %v67 = vunpack.c.l.bf16 %v35
  %v68 = vunpack.c.l.bf16 %v36
  %v69 = vunpack.c.l.bf16 %v37
  %v70 = vunpack.c.l.bf16 %v38
  %v71 = vunpack.c.l.bf16 %v39
  %v72 = vunpack.c.l.bf16 %v40
  %v73 = vunpack.c.l.bf16 %v41
  %v74 = vunpack.c.l.bf16 %v42
  %v75 = vunpack.c.l.bf16 %v43
  %v76 = vunpack.c.l.bf16 %v44
  %v77 = vunpack.c.l.bf16 %v45
  %vm111 = vcmask 1040384
  %v112 = vrot.slane 0.0, 7
  %v113 = vsel %vm111, %v112, %v112
  %v114 = vrot.slane %v46, 7
  %v115 = vrot.slane %v47, 7
  %v116 = vsel %vm111, %v114, %v115
  %v117 = vrot.slane %v48, 7
  %v118 = vrot.slane %v49, 7
  %v119 = vsel %vm111, %v117, %v118
  %v120 = vrot.slane %v50, 7
  %v121 = vrot.slane %v51, 7
  %v122 = vsel %vm111, %v120, %v121
  %v123 = vrot.slane %v52, 7
  %v124 = vrot.slane %v53, 7
  %v125 = vsel %vm111, %v123, %v124
  %v126 = vrot.slane %v54, 7
  %v127 = vrot.slane %v55, 7
  %v128 = vsel %vm111, %v126, %v127
  %v129 = vrot.slane %v56, 7
  %v130 = vrot.slane %v57, 7
  %v131 = vsel %vm111, %v129, %v130
  %v132 = vrot.slane %v58, 7
  %v133 = vrot.slane %v59, 7
  %v134 = vsel %vm111, %v132, %v133
  %v135 = vrot.slane %v60, 7
  %v136 = vrot.slane %v61, 7
  %v137 = vsel %vm111, %v135, %v136
  %v138 = vrot.slane %v62, 7
  %v139 = vrot.slane %v63, 7
  %v140 = vsel %vm111, %v138, %v139
  %v141 = vrot.slane %v64, 7
  %v142 = vrot.slane %v65, 7
  %v143 = vsel %vm111, %v141, %v142
  %v144 = vrot.slane %v66, 7
  %v145 = vrot.slane %v67, 7
  %v146 = vsel %vm111, %v144, %v145
  %v147 = vrot.slane %v68, 7
  %v148 = vrot.slane %v69, 7
  %v149 = vsel %vm111, %v147, %v148
  %v150 = vrot.slane %v70, 7
  %v151 = vrot.slane %v71, 7
  %v152 = vsel %vm111, %v150, %v151
  %v153 = vrot.slane %v72, 7
  %v154 = vrot.slane %v73, 7
  %v155 = vsel %vm111, %v153, %v154
  %v156 = vrot.slane %v74, 7
  %v157 = vrot.slane %v75, 7
  %v158 = vsel %vm111, %v156, %v157
  %v159 = vrot.slane %v76, 7
  %v160 = vrot.slane %v77, 7
  %v161 = vsel %vm111, %v159, %v160
  %v212 = vsel %vm111, 0.0, %v112
  %v213 = vsel %vm111, 0.0, %v114
  %v214 = vsel %vm111, 0.0, %v117
  %v215 = vsel %vm111, 0.0, %v120
  %v216 = vsel %vm111, 0.0, %v123
  %v217 = vsel %vm111, 0.0, %v126
  %v218 = vsel %vm111, 0.0, %v129
  %v219 = vsel %vm111, 0.0, %v132
  %v220 = vsel %vm111, 0.0, %v135
  %v221 = vsel %vm111, 0.0, %v138
  %v222 = vsel %vm111, 0.0, %v141
  %v223 = vsel %vm111, 0.0, %v144
  %v224 = vsel %vm111, 0.0, %v147
  %v225 = vsel %vm111, 0.0, %v150
  %v226 = vsel %vm111, 0.0, %v153
  %v227 = vsel %vm111, 0.0, %v156
  %v228 = vsel %vm111, 0.0, %v159
  %v229 = vsel %vm111, %v112, 0.0
  %v230 = vsel %vm111, %v115, 0.0
  %v231 = vsel %vm111, %v118, 0.0
  %v232 = vsel %vm111, %v121, 0.0
  %v233 = vsel %vm111, %v124, 0.0
  %v234 = vsel %vm111, %v127, 0.0
  %v235 = vsel %vm111, %v130, 0.0
  %v236 = vsel %vm111, %v133, 0.0
  %v237 = vsel %vm111, %v136, 0.0
  %v238 = vsel %vm111, %v139, 0.0
  %v239 = vsel %vm111, %v142, 0.0
  %v240 = vsel %vm111, %v145, 0.0
  %v241 = vsel %vm111, %v148, 0.0
  %v242 = vsel %vm111, %v151, 0.0
  %v243 = vsel %vm111, %v154, 0.0
  %v244 = vsel %vm111, %v157, 0.0
  %v245 = vsel %vm111, %v160, 0.0
  %v246 = vmax.f32 %v212, 0.0
  %v247 = vmax.f32 %v113, 0.0
  %v248 = vmax.f32 %v229, 0.0
  %v249 = vmax.f32 %v213, 0.0
  %v250 = vmax.f32 %v116, 0.0
  %v251 = vmax.f32 %v230, 0.0
  %v252 = vmax.f32 %v214, 0.0
  %v253 = vmax.f32 %v119, 0.0
  %v254 = vmax.f32 %v231, 0.0
  %v255 = vmax.f32 %v215, 0.0
  %v256 = vmax.f32 %v122, 0.0
  %v257 = vmax.f32 %v232, 0.0
  %v258 = vmax.f32 %v216, 0.0
  %v259 = vmax.f32 %v125, 0.0
  %v260 = vmax.f32 %v233, 0.0
  %v261 = vmax.f32 %v217, 0.0
  %v262 = vmax.f32 %v128, 0.0
  %v263 = vmax.f32 %v234, 0.0
  %v264 = vmax.f32 %v218, 0.0
  %v265 = vmax.f32 %v131, 0.0
  %v266 = vmax.f32 %v235, 0.0
  %v267 = vmax.f32 %v219, 0.0
  %v268 = vmax.f32 %v134, 0.0
  %v269 = vmax.f32 %v236, 0.0
  %v270 = vmax.f32 %v220, 0.0
  %v271 = vmax.f32 %v137, 0.0
  %v272 = vmax.f32 %v237, 0.0
  %v273 = vmax.f32 %v221, 0.0
  %v274 = vmax.f32 %v140, 0.0
  %v275 = vmax.f32 %v238, 0.0
  %v276 = vmax.f32 %v222, 0.0
  %v277 = vmax.f32 %v143, 0.0
  %v278 = vmax.f32 %v239, 0.0
  %v279 = vmax.f32 %v223, 0.0
  %v280 = vmax.f32 %v146, 0.0
  %v281 = vmax.f32 %v240, 0.0
  %v282 = vmax.f32 %v224, 0.0
  %v283 = vmax.f32 %v149, 0.0
  %v284 = vmax.f32 %v241, 0.0
  %v285 = vmax.f32 %v225, 0.0
  %v286 = vmax.f32 %v152, 0.0
  %v287 = vmax.f32 %v242, 0.0
  %v288 = vmax.f32 %v226, 0.0
  %v289 = vmax.f32 %v155, 0.0
  %v290 = vmax.f32 %v243, 0.0
  %v291 = vmax.f32 %v227, 0.0
  %v292 = vmax.f32 %v158, 0.0
  %v293 = vmax.f32 %v244, 0.0
  %v294 = vmax.f32 %v228, 0.0
  %v295 = vmax.f32 %v161, 0.0
  %v296 = vmax.f32 %v245, 0.0
  %vm345 = vcmask 1046528
  %v346 = vrot.slane %v246, 1
  %v347 = vrot.slane %v247, 1
  %v348 = vsel %vm345, %v346, %v347
  %v349 = vrot.slane %v248, 1
  %v350 = vsel %vm345, %v347, %v349
  %v351 = vrot.slane %v249, 1
  %v352 = vrot.slane %v250, 1
  %v353 = vsel %vm345, %v351, %v352
  %v354 = vrot.slane %v251, 1
  %v355 = vsel %vm345, %v352, %v354
  %v356 = vrot.slane %v252, 1
  %v357 = vrot.slane %v253, 1
  %v358 = vsel %vm345, %v356, %v357
  %v359 = vrot.slane %v254, 1
  %v360 = vsel %vm345, %v357, %v359
  %v361 = vrot.slane %v255, 1
  %v362 = vrot.slane %v256, 1
  %v363 = vsel %vm345, %v361, %v362
  %v364 = vrot.slane %v257, 1
  %v365 = vsel %vm345, %v362, %v364
  %v366 = vrot.slane %v258, 1
  %v367 = vrot.slane %v259, 1
  %v368 = vsel %vm345, %v366, %v367
  %v369 = vrot.slane %v260, 1
  %v370 = vsel %vm345, %v367, %v369
  %v371 = vrot.slane %v261, 1
  %v372 = vrot.slane %v262, 1
  %v373 = vsel %vm345, %v371, %v372
  %v374 = vrot.slane %v263, 1
  %v375 = vsel %vm345, %v372, %v374
  %v376 = vrot.slane %v264, 1
  %v377 = vrot.slane %v265, 1
  %v378 = vsel %vm345, %v376, %v377
  %v379 = vrot.slane %v266, 1
  %v380 = vsel %vm345, %v377, %v379
  %v381 = vrot.slane %v267, 1
  %v382 = vrot.slane %v268, 1
  %v383 = vsel %vm345, %v381, %v382
  %v384 = vrot.slane %v269, 1
  %v385 = vsel %vm345, %v382, %v384
  %v386 = vrot.slane %v270, 1
  %v387 = vrot.slane %v271, 1
  %v388 = vsel %vm345, %v386, %v387
  %v389 = vrot.slane %v272, 1
  %v390 = vsel %vm345, %v387, %v389
  %v391 = vrot.slane %v273, 1
  %v392 = vrot.slane %v274, 1
  %v393 = vsel %vm345, %v391, %v392
  %v394 = vrot.slane %v275, 1
  %v395 = vsel %vm345, %v392, %v394
  %v396 = vrot.slane %v276, 1
  %v397 = vrot.slane %v277, 1
  %v398 = vsel %vm345, %v396, %v397
  %v399 = vrot.slane %v278, 1
  %v400 = vsel %vm345, %v397, %v399
  %v401 = vrot.slane %v279, 1
  %v402 = vrot.slane %v280, 1
  %v403 = vsel %vm345, %v401, %v402
  %v404 = vrot.slane %v281, 1
  %v405 = vsel %vm345, %v402, %v404
  %v406 = vrot.slane %v282, 1
  %v407 = vrot.slane %v283, 1
  %v408 = vsel %vm345, %v406, %v407
  %v409 = vrot.slane %v284, 1
  %v410 = vsel %vm345, %v407, %v409
  %v411 = vrot.slane %v285, 1
  %v412 = vrot.slane %v286, 1
  %v413 = vsel %vm345, %v411, %v412
  %v414 = vrot.slane %v287, 1
  %v415 = vsel %vm345, %v412, %v414
  %v416 = vrot.slane %v288, 1
  %v417 = vrot.slane %v289, 1
  %v418 = vsel %vm345, %v416, %v417
  %v419 = vrot.slane %v290, 1
  %v420 = vsel %vm345, %v417, %v419
  %v421 = vrot.slane %v291, 1
  %v422 = vrot.slane %v292, 1
  %v423 = vsel %vm345, %v421, %v422
  %v424 = vrot.slane %v293, 1
  %v425 = vsel %vm345, %v422, %v424
  %426 = vrot.lane.b32.xlu0 %v348, 16
  %v427 = vpop.permute.xlu0 %426
  %428 = vrot.lane.b32.xlu0 %v350, 16
  %v429 = vpop.permute.xlu0 %428
  %430 = vrot.lane.b32.xlu0 %v353, 16
  %v431 = vpop.permute.xlu0 %430
  %432 = vrot.lane.b32.xlu0 %v355, 16
  %v433 = vpop.permute.xlu0 %432
  %434 = vrot.lane.b32.xlu0 %v358, 16
  %v435 = vpop.permute.xlu0 %434
  %436 = vrot.lane.b32.xlu0 %v360, 16
  %v437 = vpop.permute.xlu0 %436
  %438 = vrot.lane.b32.xlu0 %v363, 16
  %v439 = vpop.permute.xlu0 %438
  %440 = vrot.lane.b32.xlu0 %v365, 16
  %v441 = vpop.permute.xlu0 %440
  %442 = vrot.lane.b32.xlu0 %v368, 16
  %v443 = vpop.permute.xlu0 %442
  %444 = vrot.lane.b32.xlu0 %v370, 16
  %v445 = vpop.permute.xlu0 %444
  %446 = vrot.lane.b32.xlu0 %v373, 16
  %v447 = vpop.permute.xlu0 %446
  %448 = vrot.lane.b32.xlu0 %v375, 16
  %v449 = vpop.permute.xlu0 %448
  %450 = vrot.lane.b32.xlu0 %v378, 16
  %v451 = vpop.permute.xlu0 %450
  %452 = vrot.lane.b32.xlu0 %v380, 16
  %v453 = vpop.permute.xlu0 %452
  %454 = vrot.lane.b32.xlu0 %v383, 16
  %v455 = vpop.permute.xlu0 %454
  %456 = vrot.lane.b32.xlu0 %v385, 16
  %v457 = vpop.permute.xlu0 %456
  %458 = vrot.lane.b32.xlu0 %v388, 16
  %v459 = vpop.permute.xlu0 %458
  %460 = vrot.lane.b32.xlu0 %v390, 16
  %v461 = vpop.permute.xlu0 %460
  %462 = vrot.lane.b32.xlu0 %v393, 16
  %v463 = vpop.permute.xlu0 %462
  %464 = vrot.lane.b32.xlu0 %v395, 16
  %v465 = vpop.permute.xlu0 %464
  %466 = vrot.lane.b32.xlu0 %v398, 16
  %v467 = vpop.permute.xlu0 %466
  %468 = vrot.lane.b32.xlu0 %v400, 16
  %v469 = vpop.permute.xlu0 %468
  %470 = vrot.lane.b32.xlu0 %v403, 16
  %v471 = vpop.permute.xlu0 %470
  %472 = vrot.lane.b32.xlu0 %v405, 16
  %v473 = vpop.permute.xlu0 %472
  %474 = vrot.lane.b32.xlu0 %v408, 16
  %v475 = vpop.permute.xlu0 %474
  %476 = vrot.lane.b32.xlu0 %v410, 16
  %v477 = vpop.permute.xlu0 %476
  %478 = vrot.lane.b32.xlu0 %v413, 16
  %v479 = vpop.permute.xlu0 %478
  %480 = vrot.lane.b32.xlu0 %v415, 16
  %v481 = vpop.permute.xlu0 %480
  %482 = vrot.lane.b32.xlu0 %v418, 16
  %v483 = vpop.permute.xlu0 %482
  %484 = vrot.lane.b32.xlu0 %v420, 16
  %v485 = vpop.permute.xlu0 %484
  %486 = vrot.lane.b32.xlu0 %v423, 16
  %v487 = vpop.permute.xlu0 %486
  %488 = vrot.lane.b32.xlu0 %v425, 16
  %v489 = vpop.permute.xlu0 %488
  %vm522 = vcmask 1045504
  %v523 = vrot.slane %v246, 2
  %v524 = vrot.slane %v247, 2
  %v525 = vsel %vm522, %v523, %v524
  %v526 = vrot.slane %v248, 2
  %v527 = vsel %vm522, %v524, %v526
  %v528 = vrot.slane %v249, 2
  %v529 = vrot.slane %v250, 2
  %v530 = vsel %vm522, %v528, %v529
  %v531 = vrot.slane %v251, 2
  %v532 = vsel %vm522, %v529, %v531
  %v533 = vrot.slane %v252, 2
  %v534 = vrot.slane %v253, 2
  %v535 = vsel %vm522, %v533, %v534
  %v536 = vrot.slane %v254, 2
  %v537 = vsel %vm522, %v534, %v536
  %v538 = vrot.slane %v255, 2
  %v539 = vrot.slane %v256, 2
  %v540 = vsel %vm522, %v538, %v539
  %v541 = vrot.slane %v257, 2
  %v542 = vsel %vm522, %v539, %v541
  %v543 = vrot.slane %v258, 2
  %v544 = vrot.slane %v259, 2
  %v545 = vsel %vm522, %v543, %v544
  %v546 = vrot.slane %v260, 2
  %v547 = vsel %vm522, %v544, %v546
  %v548 = vrot.slane %v261, 2
  %v549 = vrot.slane %v262, 2
  %v550 = vsel %vm522, %v548, %v549
  %v551 = vrot.slane %v263, 2
  %v552 = vsel %vm522, %v549, %v551
  %v553 = vrot.slane %v264, 2
  %v554 = vrot.slane %v265, 2
  %v555 = vsel %vm522, %v553, %v554
  %v556 = vrot.slane %v266, 2
  %v557 = vsel %vm522, %v554, %v556
  %v558 = vrot.slane %v267, 2
  %v559 = vrot.slane %v268, 2
  %v560 = vsel %vm522, %v558, %v559
  %v561 = vrot.slane %v269, 2
  %v562 = vsel %vm522, %v559, %v561
  %v563 = vrot.slane %v270, 2
  %v564 = vrot.slane %v271, 2
  %v565 = vsel %vm522, %v563, %v564
  %v566 = vrot.slane %v272, 2
  %v567 = vsel %vm522, %v564, %v566
  %v568 = vrot.slane %v273, 2
  %v569 = vrot.slane %v274, 2
  %v570 = vsel %vm522, %v568, %v569
  %v571 = vrot.slane %v275, 2
  %v572 = vsel %vm522, %v569, %v571
  %v573 = vrot.slane %v276, 2
  %v574 = vrot.slane %v277, 2
  %v575 = vsel %vm522, %v573, %v574
  %v576 = vrot.slane %v278, 2
  %v577 = vsel %vm522, %v574, %v576
  %v578 = vrot.slane %v279, 2
  %v579 = vrot.slane %v280, 2
  %v580 = vsel %vm522, %v578, %v579
  %v581 = vrot.slane %v281, 2
  %v582 = vsel %vm522, %v579, %v581
  %v583 = vrot.slane %v282, 2
  %v584 = vrot.slane %v283, 2
  %v585 = vsel %vm522, %v583, %v584
  %v586 = vrot.slane %v284, 2
  %v587 = vsel %vm522, %v584, %v586
  %v588 = vrot.slane %v285, 2
  %v589 = vrot.slane %v286, 2
  %v590 = vsel %vm522, %v588, %v589
  %v591 = vrot.slane %v287, 2
  %v592 = vsel %vm522, %v589, %v591
  %v593 = vrot.slane %v288, 2
  %v594 = vrot.slane %v289, 2
  %v595 = vsel %vm522, %v593, %v594
  %v596 = vrot.slane %v290, 2
  %v597 = vsel %vm522, %v594, %v596
  %v598 = vrot.slane %v291, 2
  %v599 = vrot.slane %v292, 2
  %v600 = vsel %vm522, %v598, %v599
  %v601 = vrot.slane %v293, 2
  %v602 = vsel %vm522, %v599, %v601
  %603 = vrot.lane.b32.xlu0 %v525, 32
  %v604 = vpop.permute.xlu0 %603
  %605 = vrot.lane.b32.xlu0 %v527, 32
  %v606 = vpop.permute.xlu0 %605
  %607 = vrot.lane.b32.xlu0 %v530, 32
  %v608 = vpop.permute.xlu0 %607
  %609 = vrot.lane.b32.xlu0 %v532, 32
  %v610 = vpop.permute.xlu0 %609
  %611 = vrot.lane.b32.xlu0 %v535, 32
  %v612 = vpop.permute.xlu0 %611
  %613 = vrot.lane.b32.xlu0 %v537, 32
  %v614 = vpop.permute.xlu0 %613
  %615 = vrot.lane.b32.xlu0 %v540, 32
  %v616 = vpop.permute.xlu0 %615
  %617 = vrot.lane.b32.xlu0 %v542, 32
  %v618 = vpop.permute.xlu0 %617
  %619 = vrot.lane.b32.xlu0 %v545, 32
  %v620 = vpop.permute.xlu0 %619
  %621 = vrot.lane.b32.xlu0 %v547, 32
  %v622 = vpop.permute.xlu0 %621
  %623 = vrot.lane.b32.xlu0 %v550, 32
  %v624 = vpop.permute.xlu0 %623
  %625 = vrot.lane.b32.xlu0 %v552, 32
  %v626 = vpop.permute.xlu0 %625
  %627 = vrot.lane.b32.xlu0 %v555, 32
  %v628 = vpop.permute.xlu0 %627
  %629 = vrot.lane.b32.xlu0 %v557, 32
  %v630 = vpop.permute.xlu0 %629
  %631 = vrot.lane.b32.xlu0 %v560, 32
  %v632 = vpop.permute.xlu0 %631
  %633 = vrot.lane.b32.xlu0 %v562, 32
  %v634 = vpop.permute.xlu0 %633
  %635 = vrot.lane.b32.xlu0 %v565, 32
  %v636 = vpop.permute.xlu0 %635
  %637 = vrot.lane.b32.xlu0 %v567, 32
  %v638 = vpop.permute.xlu0 %637
  %639 = vrot.lane.b32.xlu0 %v570, 32
  %v640 = vpop.permute.xlu0 %639
  %641 = vrot.lane.b32.xlu0 %v572, 32
  %v642 = vpop.permute.xlu0 %641
  %643 = vrot.lane.b32.xlu0 %v575, 32
  %v644 = vpop.permute.xlu0 %643
  %645 = vrot.lane.b32.xlu0 %v577, 32
  %v646 = vpop.permute.xlu0 %645
  %647 = vrot.lane.b32.xlu0 %v580, 32
  %v648 = vpop.permute.xlu0 %647
  %649 = vrot.lane.b32.xlu0 %v582, 32
  %v650 = vpop.permute.xlu0 %649
  %651 = vrot.lane.b32.xlu0 %v585, 32
  %v652 = vpop.permute.xlu0 %651
  %653 = vrot.lane.b32.xlu0 %v587, 32
  %v654 = vpop.permute.xlu0 %653
  %655 = vrot.lane.b32.xlu0 %v590, 32
  %v656 = vpop.permute.xlu0 %655
  %657 = vrot.lane.b32.xlu0 %v592, 32
  %v658 = vpop.permute.xlu0 %657
  %659 = vrot.lane.b32.xlu0 %v595, 32
  %v660 = vpop.permute.xlu0 %659
  %661 = vrot.lane.b32.xlu0 %v597, 32
  %v662 = vpop.permute.xlu0 %661
  %663 = vrot.lane.b32.xlu0 %v600, 32
  %v664 = vpop.permute.xlu0 %663
  %665 = vrot.lane.b32.xlu0 %v602, 32
  %v666 = vpop.permute.xlu0 %665
  %701 = vrot.lane.b32.xlu0 %v249, 48
  %v702 = vpop.permute.xlu0 %701
  %703 = vrot.lane.b32.xlu0 %v250, 48
  %v704 = vpop.permute.xlu0 %703
  %705 = vrot.lane.b32.xlu0 %v252, 48
  %v706 = vpop.permute.xlu0 %705
  %707 = vrot.lane.b32.xlu0 %v253, 48
  %v708 = vpop.permute.xlu0 %707
  %709 = vrot.lane.b32.xlu0 %v255, 48
  %v710 = vpop.permute.xlu0 %709
  %711 = vrot.lane.b32.xlu0 %v256, 48
  %v712 = vpop.permute.xlu0 %711
  %713 = vrot.lane.b32.xlu0 %v258, 48
  %v714 = vpop.permute.xlu0 %713
  %715 = vrot.lane.b32.xlu0 %v259, 48
  %v716 = vpop.permute.xlu0 %715
  %717 = vrot.lane.b32.xlu0 %v261, 48
  %v718 = vpop.permute.xlu0 %717
  %719 = vrot.lane.b32.xlu0 %v262, 48
  %v720 = vpop.permute.xlu0 %719
  %721 = vrot.lane.b32.xlu0 %v264, 48
  %v722 = vpop.permute.xlu0 %721
  %723 = vrot.lane.b32.xlu0 %v265, 48
  %v724 = vpop.permute.xlu0 %723
  %725 = vrot.lane.b32.xlu0 %v267, 48
  %v726 = vpop.permute.xlu0 %725
  %727 = vrot.lane.b32.xlu0 %v268, 48
  %v728 = vpop.permute.xlu0 %727
  %729 = vrot.lane.b32.xlu0 %v270, 48
  %v730 = vpop.permute.xlu0 %729
  %731 = vrot.lane.b32.xlu0 %v271, 48
  %v732 = vpop.permute.xlu0 %731
  %733 = vrot.lane.b32.xlu0 %v273, 48
  %v734 = vpop.permute.xlu0 %733
  %735 = vrot.lane.b32.xlu0 %v274, 48
  %v736 = vpop.permute.xlu0 %735
  %737 = vrot.lane.b32.xlu0 %v276, 48
  %v738 = vpop.permute.xlu0 %737
  %739 = vrot.lane.b32.xlu0 %v277, 48
  %v740 = vpop.permute.xlu0 %739
  %741 = vrot.lane.b32.xlu0 %v279, 48
  %v742 = vpop.permute.xlu0 %741
  %743 = vrot.lane.b32.xlu0 %v280, 48
  %v744 = vpop.permute.xlu0 %743
  %745 = vrot.lane.b32.xlu0 %v282, 48
  %v746 = vpop.permute.xlu0 %745
  %747 = vrot.lane.b32.xlu0 %v283, 48
  %v748 = vpop.permute.xlu0 %747
  %749 = vrot.lane.b32.xlu0 %v285, 48
  %v750 = vpop.permute.xlu0 %749
  %751 = vrot.lane.b32.xlu0 %v286, 48
  %v752 = vpop.permute.xlu0 %751
  %753 = vrot.lane.b32.xlu0 %v288, 48
  %v754 = vpop.permute.xlu0 %753
  %755 = vrot.lane.b32.xlu0 %v289, 48
  %v756 = vpop.permute.xlu0 %755
  %757 = vrot.lane.b32.xlu0 %v291, 48
  %v758 = vpop.permute.xlu0 %757
  %759 = vrot.lane.b32.xlu0 %v292, 48
  %v760 = vpop.permute.xlu0 %759
  %761 = vrot.lane.b32.xlu0 %v294, 48
  %v762 = vpop.permute.xlu0 %761
  %763 = vrot.lane.b32.xlu0 %v295, 48
  %v764 = vpop.permute.xlu0 %763
  %v798 = vrot.slane %v294, 1
  %v799 = vrot.slane %v295, 1
  %v800 = vsel %vm345, %v798, %v799
  %v801 = vrot.slane %v296, 1
  %v802 = vsel %vm345, %v799, %v801
  %803 = vrot.lane.b32.xlu0 %v353, 64
  %v804 = vpop.permute.xlu0 %803
  %805 = vrot.lane.b32.xlu0 %v355, 64
  %v806 = vpop.permute.xlu0 %805
  %807 = vrot.lane.b32.xlu0 %v358, 64
  %v808 = vpop.permute.xlu0 %807
  %809 = vrot.lane.b32.xlu0 %v360, 64
  %v810 = vpop.permute.xlu0 %809
  %811 = vrot.lane.b32.xlu0 %v363, 64
  %v812 = vpop.permute.xlu0 %811
  %813 = vrot.lane.b32.xlu0 %v365, 64
  %v814 = vpop.permute.xlu0 %813
  %815 = vrot.lane.b32.xlu0 %v368, 64
  %v816 = vpop.permute.xlu0 %815
  %817 = vrot.lane.b32.xlu0 %v370, 64
  %v818 = vpop.permute.xlu0 %817
  %819 = vrot.lane.b32.xlu0 %v373, 64
  %v820 = vpop.permute.xlu0 %819
  %821 = vrot.lane.b32.xlu0 %v375, 64
  %v822 = vpop.permute.xlu0 %821
  %823 = vrot.lane.b32.xlu0 %v378, 64
  %v824 = vpop.permute.xlu0 %823
  %825 = vrot.lane.b32.xlu0 %v380, 64
  %v826 = vpop.permute.xlu0 %825
  %827 = vrot.lane.b32.xlu0 %v383, 64
  %v828 = vpop.permute.xlu0 %827
  %829 = vrot.lane.b32.xlu0 %v385, 64
  %v830 = vpop.permute.xlu0 %829
  %831 = vrot.lane.b32.xlu0 %v388, 64
  %v832 = vpop.permute.xlu0 %831
  %833 = vrot.lane.b32.xlu0 %v390, 64
  %v834 = vpop.permute.xlu0 %833
  %835 = vrot.lane.b32.xlu0 %v393, 64
  %v836 = vpop.permute.xlu0 %835
  %837 = vrot.lane.b32.xlu0 %v395, 64
  %v838 = vpop.permute.xlu0 %837
  %839 = vrot.lane.b32.xlu0 %v398, 64
  %v840 = vpop.permute.xlu0 %839
  %841 = vrot.lane.b32.xlu0 %v400, 64
  %v842 = vpop.permute.xlu0 %841
  %843 = vrot.lane.b32.xlu0 %v403, 64
  %v844 = vpop.permute.xlu0 %843
  %845 = vrot.lane.b32.xlu0 %v405, 64
  %v846 = vpop.permute.xlu0 %845
  %847 = vrot.lane.b32.xlu0 %v408, 64
  %v848 = vpop.permute.xlu0 %847
  %849 = vrot.lane.b32.xlu0 %v410, 64
  %v850 = vpop.permute.xlu0 %849
  %851 = vrot.lane.b32.xlu0 %v413, 64
  %v852 = vpop.permute.xlu0 %851
  %853 = vrot.lane.b32.xlu0 %v415, 64
  %v854 = vpop.permute.xlu0 %853
  %855 = vrot.lane.b32.xlu0 %v418, 64
  %v856 = vpop.permute.xlu0 %855
  %857 = vrot.lane.b32.xlu0 %v420, 64
  %v858 = vpop.permute.xlu0 %857
  %859 = vrot.lane.b32.xlu0 %v423, 64
  %v860 = vpop.permute.xlu0 %859
  %861 = vrot.lane.b32.xlu0 %v425, 64
  %v862 = vpop.permute.xlu0 %861
  %863 = vrot.lane.b32.xlu0 %v800, 64
  %v864 = vpop.permute.xlu0 %863
  %865 = vrot.lane.b32.xlu0 %v802, 64
  %v866 = vpop.permute.xlu0 %865
  %v899 = vrot.slane %v294, 2
  %v900 = vrot.slane %v295, 2
  %v901 = vsel %vm522, %v899, %v900
  %v902 = vrot.slane %v296, 2
  %v903 = vsel %vm522, %v900, %v902
  %904 = vrot.lane.b32.xlu0 %v530, 80
  %v905 = vpop.permute.xlu0 %904
  %906 = vrot.lane.b32.xlu0 %v532, 80
  %v907 = vpop.permute.xlu0 %906
  %908 = vrot.lane.b32.xlu0 %v535, 80
  %v909 = vpop.permute.xlu0 %908
  %910 = vrot.lane.b32.xlu0 %v537, 80
  %v911 = vpop.permute.xlu0 %910
  %912 = vrot.lane.b32.xlu0 %v540, 80
  %v913 = vpop.permute.xlu0 %912
  %914 = vrot.lane.b32.xlu0 %v542, 80
  %v915 = vpop.permute.xlu0 %914
  %916 = vrot.lane.b32.xlu0 %v545, 80
  %v917 = vpop.permute.xlu0 %916
  %918 = vrot.lane.b32.xlu0 %v547, 80
  %v919 = vpop.permute.xlu0 %918
  %920 = vrot.lane.b32.xlu0 %v550, 80
  %v921 = vpop.permute.xlu0 %920
  %922 = vrot.lane.b32.xlu0 %v552, 80
  %v923 = vpop.permute.xlu0 %922
  %924 = vrot.lane.b32.xlu0 %v555, 80
  %v925 = vpop.permute.xlu0 %924
  %926 = vrot.lane.b32.xlu0 %v557, 80
  %v927 = vpop.permute.xlu0 %926
  %928 = vrot.lane.b32.xlu0 %v560, 80
  %v929 = vpop.permute.xlu0 %928
  %930 = vrot.lane.b32.xlu0 %v562, 80
  %v931 = vpop.permute.xlu0 %930
  %932 = vrot.lane.b32.xlu0 %v565, 80
  %v933 = vpop.permute.xlu0 %932
  %934 = vrot.lane.b32.xlu0 %v567, 80
  %v935 = vpop.permute.xlu0 %934
  %936 = vrot.lane.b32.xlu0 %v570, 80
  %v937 = vpop.permute.xlu0 %936
  %938 = vrot.lane.b32.xlu0 %v572, 80
  %v939 = vpop.permute.xlu0 %938
  %940 = vrot.lane.b32.xlu0 %v575, 80
  %v941 = vpop.permute.xlu0 %940
  %942 = vrot.lane.b32.xlu0 %v577, 80
  %v943 = vpop.permute.xlu0 %942
  %944 = vrot.lane.b32.xlu0 %v580, 80
  %v945 = vpop.permute.xlu0 %944
  %946 = vrot.lane.b32.xlu0 %v582, 80
  %v947 = vpop.permute.xlu0 %946
  %948 = vrot.lane.b32.xlu0 %v585, 80
  %v949 = vpop.permute.xlu0 %948
  %950 = vrot.lane.b32.xlu0 %v587, 80
  %v951 = vpop.permute.xlu0 %950
  %952 = vrot.lane.b32.xlu0 %v590, 80
  %v953 = vpop.permute.xlu0 %952
  %954 = vrot.lane.b32.xlu0 %v592, 80
  %v955 = vpop.permute.xlu0 %954
  %956 = vrot.lane.b32.xlu0 %v595, 80
  %v957 = vpop.permute.xlu0 %956
  %958 = vrot.lane.b32.xlu0 %v597, 80
  %v959 = vpop.permute.xlu0 %958
  %960 = vrot.lane.b32.xlu0 %v600, 80
  %v961 = vpop.permute.xlu0 %960
  %962 = vrot.lane.b32.xlu0 %v602, 80
  %v963 = vpop.permute.xlu0 %962
  %964 = vrot.lane.b32.xlu0 %v901, 80
  %v965 = vpop.permute.xlu0 %964
  %966 = vrot.lane.b32.xlu0 %v903, 80
  %v967 = vpop.permute.xlu0 %966
  %1000 = vrot.lane.b32.xlu0 %v252, 96
  %v1001 = vpop.permute.xlu0 %1000
  %1002 = vrot.lane.b32.xlu0 %v253, 96
  %v1003 = vpop.permute.xlu0 %1002
  %1004 = vrot.lane.b32.xlu0 %v255, 96
  %v1005 = vpop.permute.xlu0 %1004
  %1006 = vrot.lane.b32.xlu0 %v256, 96
  %v1007 = vpop.permute.xlu0 %1006
  %1008 = vrot.lane.b32.xlu0 %v258, 96
  %v1009 = vpop.permute.xlu0 %1008
  %1010 = vrot.lane.b32.xlu0 %v259, 96
  %v1011 = vpop.permute.xlu0 %1010
  %1012 = vrot.lane.b32.xlu0 %v261, 96
  %v1013 = vpop.permute.xlu0 %1012
  %1014 = vrot.lane.b32.xlu0 %v262, 96
  %v1015 = vpop.permute.xlu0 %1014
  %1016 = vrot.lane.b32.xlu0 %v264, 96
  %v1017 = vpop.permute.xlu0 %1016
  %1018 = vrot.lane.b32.xlu0 %v265, 96
  %v1019 = vpop.permute.xlu0 %1018
  %1020 = vrot.lane.b32.xlu0 %v267, 96
  %v1021 = vpop.permute.xlu0 %1020
  %1022 = vrot.lane.b32.xlu0 %v268, 96
  %v1023 = vpop.permute.xlu0 %1022
  %1024 = vrot.lane.b32.xlu0 %v270, 96
  %v1025 = vpop.permute.xlu0 %1024
  %1026 = vrot.lane.b32.xlu0 %v271, 96
  %v1027 = vpop.permute.xlu0 %1026
  %1028 = vrot.lane.b32.xlu0 %v273, 96
  %v1029 = vpop.permute.xlu0 %1028
  %1030 = vrot.lane.b32.xlu0 %v274, 96
  %v1031 = vpop.permute.xlu0 %1030
  %1032 = vrot.lane.b32.xlu0 %v276, 96
  %v1033 = vpop.permute.xlu0 %1032
  %1034 = vrot.lane.b32.xlu0 %v277, 96
  %v1035 = vpop.permute.xlu0 %1034
  %1036 = vrot.lane.b32.xlu0 %v279, 96
  %v1037 = vpop.permute.xlu0 %1036
  %1038 = vrot.lane.b32.xlu0 %v280, 96
  %v1039 = vpop.permute.xlu0 %1038
  %1040 = vrot.lane.b32.xlu0 %v282, 96
  %v1041 = vpop.permute.xlu0 %1040
  %1042 = vrot.lane.b32.xlu0 %v283, 96
  %v1043 = vpop.permute.xlu0 %1042
  %1044 = vrot.lane.b32.xlu0 %v285, 96
  %v1045 = vpop.permute.xlu0 %1044
  %1046 = vrot.lane.b32.xlu0 %v286, 96
  %v1047 = vpop.permute.xlu0 %1046
  %1048 = vrot.lane.b32.xlu0 %v288, 96
  %v1049 = vpop.permute.xlu0 %1048
  %1050 = vrot.lane.b32.xlu0 %v289, 96
  %v1051 = vpop.permute.xlu0 %1050
  %1052 = vrot.lane.b32.xlu0 %v291, 96
  %v1053 = vpop.permute.xlu0 %1052
  %1054 = vrot.lane.b32.xlu0 %v292, 96
  %v1055 = vpop.permute.xlu0 %1054
  %1056 = vrot.lane.b32.xlu0 %v294, 96
  %v1057 = vpop.permute.xlu0 %1056
  %1058 = vrot.lane.b32.xlu0 %v295, 96
  %v1059 = vpop.permute.xlu0 %1058
  %1060 = vrot.lane.b32.xlu0 %v246, 96
  %v1061 = vpop.permute.xlu0 %1060
  %1062 = vrot.lane.b32.xlu0 %v247, 96
  %v1063 = vpop.permute.xlu0 %1062
  %1096 = vrot.lane.b32.xlu0 %v358, 112
  %v1097 = vpop.permute.xlu0 %1096
  %1098 = vrot.lane.b32.xlu0 %v360, 112
  %v1099 = vpop.permute.xlu0 %1098
  %1100 = vrot.lane.b32.xlu0 %v363, 112
  %v1101 = vpop.permute.xlu0 %1100
  %1102 = vrot.lane.b32.xlu0 %v365, 112
  %v1103 = vpop.permute.xlu0 %1102
  %1104 = vrot.lane.b32.xlu0 %v368, 112
  %v1105 = vpop.permute.xlu0 %1104
  %1106 = vrot.lane.b32.xlu0 %v370, 112
  %v1107 = vpop.permute.xlu0 %1106
  %1108 = vrot.lane.b32.xlu0 %v373, 112
  %v1109 = vpop.permute.xlu0 %1108
  %1110 = vrot.lane.b32.xlu0 %v375, 112
  %v1111 = vpop.permute.xlu0 %1110
  %1112 = vrot.lane.b32.xlu0 %v378, 112
  %v1113 = vpop.permute.xlu0 %1112
  %1114 = vrot.lane.b32.xlu0 %v380, 112
  %v1115 = vpop.permute.xlu0 %1114
  %1116 = vrot.lane.b32.xlu0 %v383, 112
  %v1117 = vpop.permute.xlu0 %1116
  %1118 = vrot.lane.b32.xlu0 %v385, 112
  %v1119 = vpop.permute.xlu0 %1118
  %1120 = vrot.lane.b32.xlu0 %v388, 112
  %v1121 = vpop.permute.xlu0 %1120
  %1122 = vrot.lane.b32.xlu0 %v390, 112
  %v1123 = vpop.permute.xlu0 %1122
  %1124 = vrot.lane.b32.xlu0 %v393, 112
  %v1125 = vpop.permute.xlu0 %1124
  %1126 = vrot.lane.b32.xlu0 %v395, 112
  %v1127 = vpop.permute.xlu0 %1126
  %1128 = vrot.lane.b32.xlu0 %v398, 112
  %v1129 = vpop.permute.xlu0 %1128
  %1130 = vrot.lane.b32.xlu0 %v400, 112
  %v1131 = vpop.permute.xlu0 %1130
  %1132 = vrot.lane.b32.xlu0 %v403, 112
  %v1133 = vpop.permute.xlu0 %1132
  %1134 = vrot.lane.b32.xlu0 %v405, 112
  %v1135 = vpop.permute.xlu0 %1134
  %1136 = vrot.lane.b32.xlu0 %v408, 112
  %v1137 = vpop.permute.xlu0 %1136
  %1138 = vrot.lane.b32.xlu0 %v410, 112
  %v1139 = vpop.permute.xlu0 %1138
  %1140 = vrot.lane.b32.xlu0 %v413, 112
  %v1141 = vpop.permute.xlu0 %1140
  %1142 = vrot.lane.b32.xlu0 %v415, 112
  %v1143 = vpop.permute.xlu0 %1142
  %1144 = vrot.lane.b32.xlu0 %v418, 112
  %v1145 = vpop.permute.xlu0 %1144
  %1146 = vrot.lane.b32.xlu0 %v420, 112
  %v1147 = vpop.permute.xlu0 %1146
  %1148 = vrot.lane.b32.xlu0 %v423, 112
  %v1149 = vpop.permute.xlu0 %1148
  %1150 = vrot.lane.b32.xlu0 %v425, 112
  %v1151 = vpop.permute.xlu0 %1150
  %1152 = vrot.lane.b32.xlu0 %v800, 112
  %v1153 = vpop.permute.xlu0 %1152
  %1154 = vrot.lane.b32.xlu0 %v802, 112
  %v1155 = vpop.permute.xlu0 %1154
  %1156 = vrot.lane.b32.xlu0 %v348, 112
  %v1157 = vpop.permute.xlu0 %1156
  %1158 = vrot.lane.b32.xlu0 %v350, 112
  %v1159 = vpop.permute.xlu0 %1158
  %vm1224 = vcmask 130048
  %v1225 = vsel %vm1224, %v246, %v427
  %v1226 = vsel %vm1224, %v247, %v429
  %v1227 = vsel %vm1224, %v249, %v431
  %v1228 = vsel %vm1224, %v250, %v433
  %v1229 = vsel %vm1224, %v252, %v435
  %v1230 = vsel %vm1224, %v253, %v437
  %v1231 = vsel %vm1224, %v255, %v439
  %v1232 = vsel %vm1224, %v256, %v441
  %v1233 = vsel %vm1224, %v258, %v443
  %v1234 = vsel %vm1224, %v259, %v445
  %v1235 = vsel %vm1224, %v261, %v447
  %v1236 = vsel %vm1224, %v262, %v449
  %v1237 = vsel %vm1224, %v264, %v451
  %v1238 = vsel %vm1224, %v265, %v453
  %v1239 = vsel %vm1224, %v267, %v455
  %v1240 = vsel %vm1224, %v268, %v457
  %v1241 = vsel %vm1224, %v270, %v459
  %v1242 = vsel %vm1224, %v271, %v461
  %v1243 = vsel %vm1224, %v273, %v463
  %v1244 = vsel %vm1224, %v274, %v465
  %v1245 = vsel %vm1224, %v276, %v467
  %v1246 = vsel %vm1224, %v277, %v469
  %v1247 = vsel %vm1224, %v279, %v471
  %v1248 = vsel %vm1224, %v280, %v473
  %v1249 = vsel %vm1224, %v282, %v475
  %v1250 = vsel %vm1224, %v283, %v477
  %v1251 = vsel %vm1224, %v285, %v479
  %v1252 = vsel %vm1224, %v286, %v481
  %v1253 = vsel %vm1224, %v288, %v483
  %v1254 = vsel %vm1224, %v289, %v485
  %v1255 = vsel %vm1224, %v291, %v487
  %v1256 = vsel %vm1224, %v292, %v489
  %vm1257 = vcmask 261120
  %v1258 = vsel %vm1257, %v1225, %v604
  %v1259 = vsel %vm1257, %v1226, %v606
  %v1260 = vsel %vm1257, %v1227, %v608
  %v1261 = vsel %vm1257, %v1228, %v610
  %v1262 = vsel %vm1257, %v1229, %v612
  %v1263 = vsel %vm1257, %v1230, %v614
  %v1264 = vsel %vm1257, %v1231, %v616
  %v1265 = vsel %vm1257, %v1232, %v618
  %v1266 = vsel %vm1257, %v1233, %v620
  %v1267 = vsel %vm1257, %v1234, %v622
  %v1268 = vsel %vm1257, %v1235, %v624
  %v1269 = vsel %vm1257, %v1236, %v626
  %v1270 = vsel %vm1257, %v1237, %v628
  %v1271 = vsel %vm1257, %v1238, %v630
  %v1272 = vsel %vm1257, %v1239, %v632
  %v1273 = vsel %vm1257, %v1240, %v634
  %v1274 = vsel %vm1257, %v1241, %v636
  %v1275 = vsel %vm1257, %v1242, %v638
  %v1276 = vsel %vm1257, %v1243, %v640
  %v1277 = vsel %vm1257, %v1244, %v642
  %v1278 = vsel %vm1257, %v1245, %v644
  %v1279 = vsel %vm1257, %v1246, %v646
  %v1280 = vsel %vm1257, %v1247, %v648
  %v1281 = vsel %vm1257, %v1248, %v650
  %v1282 = vsel %vm1257, %v1249, %v652
  %v1283 = vsel %vm1257, %v1250, %v654
  %v1284 = vsel %vm1257, %v1251, %v656
  %v1285 = vsel %vm1257, %v1252, %v658
  %v1286 = vsel %vm1257, %v1253, %v660
  %v1287 = vsel %vm1257, %v1254, %v662
  %v1288 = vsel %vm1257, %v1255, %v664
  %v1289 = vsel %vm1257, %v1256, %v666
  %vm1290 = vcmask 392192
  %v1291 = vsel %vm1290, %v1258, %v702
  %v1292 = vsel %vm1290, %v1259, %v704
  %v1293 = vsel %vm1290, %v1260, %v706
  %v1294 = vsel %vm1290, %v1261, %v708
  %v1295 = vsel %vm1290, %v1262, %v710
  %v1296 = vsel %vm1290, %v1263, %v712
  %v1297 = vsel %vm1290, %v1264, %v714
  %v1298 = vsel %vm1290, %v1265, %v716
  %v1299 = vsel %vm1290, %v1266, %v718
  %v1300 = vsel %vm1290, %v1267, %v720
  %v1301 = vsel %vm1290, %v1268, %v722
  %v1302 = vsel %vm1290, %v1269, %v724
  %v1303 = vsel %vm1290, %v1270, %v726
  %v1304 = vsel %vm1290, %v1271, %v728
  %v1305 = vsel %vm1290, %v1272, %v730
  %v1306 = vsel %vm1290, %v1273, %v732
  %v1307 = vsel %vm1290, %v1274, %v734
  %v1308 = vsel %vm1290, %v1275, %v736
  %v1309 = vsel %vm1290, %v1276, %v738
  %v1310 = vsel %vm1290, %v1277, %v740
  %v1311 = vsel %vm1290, %v1278, %v742
  %v1312 = vsel %vm1290, %v1279, %v744
  %v1313 = vsel %vm1290, %v1280, %v746
  %v1314 = vsel %vm1290, %v1281, %v748
  %v1315 = vsel %vm1290, %v1282, %v750
  %v1316 = vsel %vm1290, %v1283, %v752
  %v1317 = vsel %vm1290, %v1284, %v754
  %v1318 = vsel %vm1290, %v1285, %v756
  %v1319 = vsel %vm1290, %v1286, %v758
  %v1320 = vsel %vm1290, %v1287, %v760
  %v1321 = vsel %vm1290, %v1288, %v762
  %v1322 = vsel %vm1290, %v1289, %v764
  %vm1323 = vcmask 523264
  %v1324 = vsel %vm1323, %v1291, %v804
  %v1325 = vsel %vm1323, %v1292, %v806
  %v1326 = vsel %vm1323, %v1293, %v808
  %v1327 = vsel %vm1323, %v1294, %v810
  %v1328 = vsel %vm1323, %v1295, %v812
  %v1329 = vsel %vm1323, %v1296, %v814
  %v1330 = vsel %vm1323, %v1297, %v816
  %v1331 = vsel %vm1323, %v1298, %v818
  %v1332 = vsel %vm1323, %v1299, %v820
  %v1333 = vsel %vm1323, %v1300, %v822
  %v1334 = vsel %vm1323, %v1301, %v824
  %v1335 = vsel %vm1323, %v1302, %v826
  %v1336 = vsel %vm1323, %v1303, %v828
  %v1337 = vsel %vm1323, %v1304, %v830
  %v1338 = vsel %vm1323, %v1305, %v832
  %v1339 = vsel %vm1323, %v1306, %v834
  %v1340 = vsel %vm1323, %v1307, %v836
  %v1341 = vsel %vm1323, %v1308, %v838
  %v1342 = vsel %vm1323, %v1309, %v840
  %v1343 = vsel %vm1323, %v1310, %v842
  %v1344 = vsel %vm1323, %v1311, %v844
  %v1345 = vsel %vm1323, %v1312, %v846
  %v1346 = vsel %vm1323, %v1313, %v848
  %v1347 = vsel %vm1323, %v1314, %v850
  %v1348 = vsel %vm1323, %v1315, %v852
  %v1349 = vsel %vm1323, %v1316, %v854
  %v1350 = vsel %vm1323, %v1317, %v856
  %v1351 = vsel %vm1323, %v1318, %v858
  %v1352 = vsel %vm1323, %v1319, %v860
  %v1353 = vsel %vm1323, %v1320, %v862
  %v1354 = vsel %vm1323, %v1321, %v864
  %v1355 = vsel %vm1323, %v1322, %v866
  %vm1356 = vcmask 654336
  %v1357 = vsel %vm1356, %v1324, %v905
  %v1358 = vsel %vm1356, %v1325, %v907
  %v1359 = vsel %vm1356, %v1326, %v909
  %v1360 = vsel %vm1356, %v1327, %v911
  %v1361 = vsel %vm1356, %v1328, %v913
  %v1362 = vsel %vm1356, %v1329, %v915
  %v1363 = vsel %vm1356, %v1330, %v917
  %v1364 = vsel %vm1356, %v1331, %v919
  %v1365 = vsel %vm1356, %v1332, %v921
  %v1366 = vsel %vm1356, %v1333, %v923
  %v1367 = vsel %vm1356, %v1334, %v925
  %v1368 = vsel %vm1356, %v1335, %v927
  %v1369 = vsel %vm1356, %v1336, %v929
  %v1370 = vsel %vm1356, %v1337, %v931
  %v1371 = vsel %vm1356, %v1338, %v933
  %v1372 = vsel %vm1356, %v1339, %v935
  %v1373 = vsel %vm1356, %v1340, %v937
  %v1374 = vsel %vm1356, %v1341, %v939
  %v1375 = vsel %vm1356, %v1342, %v941
  %v1376 = vsel %vm1356, %v1343, %v943
  %v1377 = vsel %vm1356, %v1344, %v945
  %v1378 = vsel %vm1356, %v1345, %v947
  %v1379 = vsel %vm1356, %v1346, %v949
  %v1380 = vsel %vm1356, %v1347, %v951
  %v1381 = vsel %vm1356, %v1348, %v953
  %v1382 = vsel %vm1356, %v1349, %v955
  %v1383 = vsel %vm1356, %v1350, %v957
  %v1384 = vsel %vm1356, %v1351, %v959
  %v1385 = vsel %vm1356, %v1352, %v961
  %v1386 = vsel %vm1356, %v1353, %v963
  %v1387 = vsel %vm1356, %v1354, %v965
  %v1388 = vsel %vm1356, %v1355, %v967
  %vm1389 = vcmask 785408
  %v1390 = vsel %vm1389, %v1357, %v1001
  %v1391 = vsel %vm1389, %v1358, %v1003
  %v1392 = vsel %vm1389, %v1359, %v1005
  %v1393 = vsel %vm1389, %v1360, %v1007
  %v1394 = vsel %vm1389, %v1361, %v1009
  %v1395 = vsel %vm1389, %v1362, %v1011
  %v1396 = vsel %vm1389, %v1363, %v1013
  %v1397 = vsel %vm1389, %v1364, %v1015
  %v1398 = vsel %vm1389, %v1365, %v1017
  %v1399 = vsel %vm1389, %v1366, %v1019
  %v1400 = vsel %vm1389, %v1367, %v1021
  %v1401 = vsel %vm1389, %v1368, %v1023
  %v1402 = vsel %vm1389, %v1369, %v1025
  %v1403 = vsel %vm1389, %v1370, %v1027
  %v1404 = vsel %vm1389, %v1371, %v1029
  %v1405 = vsel %vm1389, %v1372, %v1031
  %v1406 = vsel %vm1389, %v1373, %v1033
  %v1407 = vsel %vm1389, %v1374, %v1035
  %v1408 = vsel %vm1389, %v1375, %v1037
  %v1409 = vsel %vm1389, %v1376, %v1039
  %v1410 = vsel %vm1389, %v1377, %v1041
  %v1411 = vsel %vm1389, %v1378, %v1043
  %v1412 = vsel %vm1389, %v1379, %v1045
  %v1413 = vsel %vm1389, %v1380, %v1047
  %v1414 = vsel %vm1389, %v1381, %v1049
  %v1415 = vsel %vm1389, %v1382, %v1051
  %v1416 = vsel %vm1389, %v1383, %v1053
  %v1417 = vsel %vm1389, %v1384, %v1055
  %v1418 = vsel %vm1389, %v1385, %v1057
  %v1419 = vsel %vm1389, %v1386, %v1059
  %v1420 = vsel %vm1389, %v1387, %v1061
  %v1421 = vsel %vm1389, %v1388, %v1063
  %vm1422 = vcmask 916480
  %v1423 = vsel %vm1422, %v1390, %v1097
  %v1424 = vsel %vm1422, %v1391, %v1099
  %v1425 = vsel %vm1422, %v1392, %v1101
  %v1426 = vsel %vm1422, %v1393, %v1103
  %v1427 = vsel %vm1422, %v1394, %v1105
  %v1428 = vsel %vm1422, %v1395, %v1107
  %v1429 = vsel %vm1422, %v1396, %v1109
  %v1430 = vsel %vm1422, %v1397, %v1111
  %v1431 = vsel %vm1422, %v1398, %v1113
  %v1432 = vsel %vm1422, %v1399, %v1115
  %v1433 = vsel %vm1422, %v1400, %v1117
  %v1434 = vsel %vm1422, %v1401, %v1119
  %v1435 = vsel %vm1422, %v1402, %v1121
  %v1436 = vsel %vm1422, %v1403, %v1123
  %v1437 = vsel %vm1422, %v1404, %v1125
  %v1438 = vsel %vm1422, %v1405, %v1127
  %v1439 = vsel %vm1422, %v1406, %v1129
  %v1440 = vsel %vm1422, %v1407, %v1131
  %v1441 = vsel %vm1422, %v1408, %v1133
  %v1442 = vsel %vm1422, %v1409, %v1135
  %v1443 = vsel %vm1422, %v1410, %v1137
  %v1444 = vsel %vm1422, %v1411, %v1139
  %v1445 = vsel %vm1422, %v1412, %v1141
  %v1446 = vsel %vm1422, %v1413, %v1143
  %v1447 = vsel %vm1422, %v1414, %v1145
  %v1448 = vsel %vm1422, %v1415, %v1147
  %v1449 = vsel %vm1422, %v1416, %v1149
  %v1450 = vsel %vm1422, %v1417, %v1151
  %v1451 = vsel %vm1422, %v1418, %v1153
  %v1452 = vsel %vm1422, %v1419, %v1155
  %v1453 = vsel %vm1422, %v1420, %v1157
  %v1454 = vsel %vm1422, %v1421, %v1159
  %s1455 = scalar_lea.vmem %s0, 128
  %v1456 = vld [vmem:[%s1455] sm:$0xf]
  %v1457 = vld [vmem:[%s1455 + $0x4] sm:$0xf]
  %v1458 = vld [vmem:[%s1455 + $0x8] sm:$0xf]
  %v1459 = vld [vmem:[%s1455 + $0xc] sm:$0xf]
  %v1460 = vld [vmem:[%s1455 + $0x10] sm:$0xf]
  %v1461 = vld [vmem:[%s1455 + $0x14] sm:$0xf]
  %v1462 = vld [vmem:[%s1455 + $0x18] sm:$0xf]
  %v1463 = vld [vmem:[%s1455 + $0x1c] sm:$0xf]
  %v1464 = vld [vmem:[%s1455 + $0x20] sm:$0xf]
  %v1465 = vld [vmem:[%s1455 + $0x24] sm:$0xf]
  %v1466 = vld [vmem:[%s1455 + $0x28] sm:$0xf]
  %v1467 = vld [vmem:[%s1455 + $0x2c] sm:$0xf]
  %v1468 = vld [vmem:[%s1455 + $0x30] sm:$0xf]
  %v1469 = vld [vmem:[%s1455 + $0x34] sm:$0xf]
  %v1470 = vld [vmem:[%s1455 + $0x38] sm:$0xf]
  %v1471 = vld [vmem:[%s1455 + $0x3c] sm:$0xf]
  %v1472 = vld [vmem:[%s1455 + $0x40] sm:$0xf]
  %v1473 = vld [vmem:[%s1455 + $0x44] sm:$0xf]
  %v1474 = vld [vmem:[%s1455 + $0x48] sm:$0xf]
  %v1475 = vld [vmem:[%s1455 + $0x4c] sm:$0xf]
  %v1476 = vld [vmem:[%s1455 + $0x50] sm:$0xf]
  %v1477 = vld [vmem:[%s1455 + $0x54] sm:$0xf]
  %v1478 = vld [vmem:[%s1455 + $0x58] sm:$0xf]
  %v1479 = vld [vmem:[%s1455 + $0x5c] sm:$0xf]
  %v1480 = vld [vmem:[%s1455 + $0x60] sm:$0xf]
  %v1481 = vld [vmem:[%s1455 + $0x64] sm:$0xf]
  %v1482 = vld [vmem:[%s1455 + $0x68] sm:$0xf]
  %v1483 = vld [vmem:[%s1455 + $0x6c] sm:$0xf]
  %v1484 = vld [vmem:[%s1455 + $0x70] sm:$0xf]
  %v1485 = vld [vmem:[%s1455 + $0x74] sm:$0xf]
  %v1486 = vld [vmem:[%s1455 + $0x78] sm:$0xf]
  %v1487 = vld [vmem:[%s1455 + $0x7c] sm:$0xf]
  %v1488 = vunpack.c.l.bf16 %v1456
  %v1489 = vunpack.c.l.bf16 %v1457
  %v1490 = vunpack.c.l.bf16 %v1458
  %v1491 = vunpack.c.l.bf16 %v1459
  %v1492 = vunpack.c.l.bf16 %v1460
  %v1493 = vunpack.c.l.bf16 %v1461
  %v1494 = vunpack.c.l.bf16 %v1462
  %v1495 = vunpack.c.l.bf16 %v1463
  %v1496 = vunpack.c.l.bf16 %v1464
  %v1497 = vunpack.c.l.bf16 %v1465
  %v1498 = vunpack.c.l.bf16 %v1466
  %v1499 = vunpack.c.l.bf16 %v1467
  %v1500 = vunpack.c.l.bf16 %v1468
  %v1501 = vunpack.c.l.bf16 %v1469
  %v1502 = vunpack.c.l.bf16 %v1470
  %v1503 = vunpack.c.l.bf16 %v1471
  %v1504 = vunpack.c.l.bf16 %v1472
  %v1505 = vunpack.c.l.bf16 %v1473
  %v1506 = vunpack.c.l.bf16 %v1474
  %v1507 = vunpack.c.l.bf16 %v1475
  %v1508 = vunpack.c.l.bf16 %v1476
  %v1509 = vunpack.c.l.bf16 %v1477
  %v1510 = vunpack.c.l.bf16 %v1478
  %v1511 = vunpack.c.l.bf16 %v1479
  %v1512 = vunpack.c.l.bf16 %v1480
  %v1513 = vunpack.c.l.bf16 %v1481
  %v1514 = vunpack.c.l.bf16 %v1482
  %v1515 = vunpack.c.l.bf16 %v1483
  %v1516 = vunpack.c.l.bf16 %v1484
  %v1517 = vunpack.c.l.bf16 %v1485
  %v1518 = vunpack.c.l.bf16 %v1486
  %v1519 = vunpack.c.l.bf16 %v1487
  %v1552 = vrot.slane %v1488, 7
  %v1553 = vrot.slane %v1489, 7
  %v1554 = vsel %vm111, %v1552, %v1553
  %v1555 = vrot.slane %v1490, 7
  %v1556 = vrot.slane %v1491, 7
  %v1557 = vsel %vm111, %v1555, %v1556
  %v1558 = vrot.slane %v1492, 7
  %v1559 = vrot.slane %v1493, 7
  %v1560 = vsel %vm111, %v1558, %v1559
  %v1561 = vrot.slane %v1494, 7
  %v1562 = vrot.slane %v1495, 7
  %v1563 = vsel %vm111, %v1561, %v1562
  %v1564 = vrot.slane %v1496, 7
  %v1565 = vrot.slane %v1497, 7
  %v1566 = vsel %vm111, %v1564, %v1565
  %v1567 = vrot.slane %v1498, 7
  %v1568 = vrot.slane %v1499, 7
  %v1569 = vsel %vm111, %v1567, %v1568
  %v1570 = vrot.slane %v1500, 7
  %v1571 = vrot.slane %v1501, 7
  %v1572 = vsel %vm111, %v1570, %v1571
  %v1573 = vrot.slane %v1502, 7
  %v1574 = vrot.slane %v1503, 7
  %v1575 = vsel %vm111, %v1573, %v1574
  %v1576 = vrot.slane %v1504, 7
  %v1577 = vrot.slane %v1505, 7
  %v1578 = vsel %vm111, %v1576, %v1577
  %v1579 = vrot.slane %v1506, 7
  %v1580 = vrot.slane %v1507, 7
  %v1581 = vsel %vm111, %v1579, %v1580
  %v1582 = vrot.slane %v1508, 7
  %v1583 = vrot.slane %v1509, 7
  %v1584 = vsel %vm111, %v1582, %v1583
  %v1585 = vrot.slane %v1510, 7
  %v1586 = vrot.slane %v1511, 7
  %v1587 = vsel %vm111, %v1585, %v1586
  %v1588 = vrot.slane %v1512, 7
  %v1589 = vrot.slane %v1513, 7
  %v1590 = vsel %vm111, %v1588, %v1589
  %v1591 = vrot.slane %v1514, 7
  %v1592 = vrot.slane %v1515, 7
  %v1593 = vsel %vm111, %v1591, %v1592
  %v1594 = vrot.slane %v1516, 7
  %v1595 = vrot.slane %v1517, 7
  %v1596 = vsel %vm111, %v1594, %v1595
  %v1597 = vrot.slane %v1518, 7
  %v1598 = vrot.slane %v1519, 7
  %v1599 = vsel %vm111, %v1597, %v1598
  %v1648 = vsel %vm111, 0.0, %v1552
  %v1649 = vsel %vm111, 0.0, %v1555
  %v1650 = vsel %vm111, 0.0, %v1558
  %v1651 = vsel %vm111, 0.0, %v1561
  %v1652 = vsel %vm111, 0.0, %v1564
  %v1653 = vsel %vm111, 0.0, %v1567
  %v1654 = vsel %vm111, 0.0, %v1570
  %v1655 = vsel %vm111, 0.0, %v1573
  %v1656 = vsel %vm111, 0.0, %v1576
  %v1657 = vsel %vm111, 0.0, %v1579
  %v1658 = vsel %vm111, 0.0, %v1582
  %v1659 = vsel %vm111, 0.0, %v1585
  %v1660 = vsel %vm111, 0.0, %v1588
  %v1661 = vsel %vm111, 0.0, %v1591
  %v1662 = vsel %vm111, 0.0, %v1594
  %v1663 = vsel %vm111, 0.0, %v1597
  %v1664 = vsel %vm111, %v1553, 0.0
  %v1665 = vsel %vm111, %v1556, 0.0
  %v1666 = vsel %vm111, %v1559, 0.0
  %v1667 = vsel %vm111, %v1562, 0.0
  %v1668 = vsel %vm111, %v1565, 0.0
  %v1669 = vsel %vm111, %v1568, 0.0
  %v1670 = vsel %vm111, %v1571, 0.0
  %v1671 = vsel %vm111, %v1574, 0.0
  %v1672 = vsel %vm111, %v1577, 0.0
  %v1673 = vsel %vm111, %v1580, 0.0
  %v1674 = vsel %vm111, %v1583, 0.0
  %v1675 = vsel %vm111, %v1586, 0.0
  %v1676 = vsel %vm111, %v1589, 0.0
  %v1677 = vsel %vm111, %v1592, 0.0
  %v1678 = vsel %vm111, %v1595, 0.0
  %v1679 = vsel %vm111, %v1598, 0.0
  %v1680 = vmax.f32 %v1648, 0.0
  %v1681 = vmax.f32 %v1554, 0.0
  %v1682 = vmax.f32 %v1664, 0.0
  %v1683 = vmax.f32 %v1649, 0.0
  %v1684 = vmax.f32 %v1557, 0.0
  %v1685 = vmax.f32 %v1665, 0.0
  %v1686 = vmax.f32 %v1650, 0.0
  %v1687 = vmax.f32 %v1560, 0.0
  %v1688 = vmax.f32 %v1666, 0.0
  %v1689 = vmax.f32 %v1651, 0.0
  %v1690 = vmax.f32 %v1563, 0.0
  %v1691 = vmax.f32 %v1667, 0.0
  %v1692 = vmax.f32 %v1652, 0.0
  %v1693 = vmax.f32 %v1566, 0.0
  %v1694 = vmax.f32 %v1668, 0.0
  %v1695 = vmax.f32 %v1653, 0.0
  %v1696 = vmax.f32 %v1569, 0.0
  %v1697 = vmax.f32 %v1669, 0.0
  %v1698 = vmax.f32 %v1654, 0.0
  %v1699 = vmax.f32 %v1572, 0.0
  %v1700 = vmax.f32 %v1670, 0.0
  %v1701 = vmax.f32 %v1655, 0.0
  %v1702 = vmax.f32 %v1575, 0.0
  %v1703 = vmax.f32 %v1671, 0.0
  %v1704 = vmax.f32 %v1656, 0.0
  %v1705 = vmax.f32 %v1578, 0.0
  %v1706 = vmax.f32 %v1672, 0.0
  %v1707 = vmax.f32 %v1657, 0.0
  %v1708 = vmax.f32 %v1581, 0.0
  %v1709 = vmax.f32 %v1673, 0.0
  %v1710 = vmax.f32 %v1658, 0.0
  %v1711 = vmax.f32 %v1584, 0.0
  %v1712 = vmax.f32 %v1674, 0.0
  %v1713 = vmax.f32 %v1659, 0.0
  %v1714 = vmax.f32 %v1587, 0.0
  %v1715 = vmax.f32 %v1675, 0.0
  %v1716 = vmax.f32 %v1660, 0.0
  %v1717 = vmax.f32 %v1590, 0.0
  %v1718 = vmax.f32 %v1676, 0.0
  %v1719 = vmax.f32 %v1661, 0.0
  %v1720 = vmax.f32 %v1593, 0.0
  %v1721 = vmax.f32 %v1677, 0.0
  %v1722 = vmax.f32 %v1662, 0.0
  %v1723 = vmax.f32 %v1596, 0.0
  %v1724 = vmax.f32 %v1678, 0.0
  %v1725 = vmax.f32 %v1663, 0.0
  %v1726 = vmax.f32 %v1599, 0.0
  %v1727 = vmax.f32 %v1679, 0.0
  %v1773 = vrot.slane %v1680, 1
  %v1774 = vrot.slane %v1681, 1
  %v1775 = vsel %vm345, %v1773, %v1774
  %v1776 = vrot.slane %v1682, 1
  %v1777 = vsel %vm345, %v1774, %v1776
  %v1778 = vrot.slane %v1683, 1
  %v1779 = vrot.slane %v1684, 1
  %v1780 = vsel %vm345, %v1778, %v1779
  %v1781 = vrot.slane %v1685, 1
  %v1782 = vsel %vm345, %v1779, %v1781
  %v1783 = vrot.slane %v1686, 1
  %v1784 = vrot.slane %v1687, 1
  %v1785 = vsel %vm345, %v1783, %v1784
  %v1786 = vrot.slane %v1688, 1
  %v1787 = vsel %vm345, %v1784, %v1786
  %v1788 = vrot.slane %v1689, 1
  %v1789 = vrot.slane %v1690, 1
  %v1790 = vsel %vm345, %v1788, %v1789
  %v1791 = vrot.slane %v1691, 1
  %v1792 = vsel %vm345, %v1789, %v1791
  %v1793 = vrot.slane %v1692, 1
  %v1794 = vrot.slane %v1693, 1
  %v1795 = vsel %vm345, %v1793, %v1794
  %v1796 = vrot.slane %v1694, 1
  %v1797 = vsel %vm345, %v1794, %v1796
  %v1798 = vrot.slane %v1695, 1
  %v1799 = vrot.slane %v1696, 1
  %v1800 = vsel %vm345, %v1798, %v1799
  %v1801 = vrot.slane %v1697, 1
  %v1802 = vsel %vm345, %v1799, %v1801
  %v1803 = vrot.slane %v1698, 1
  %v1804 = vrot.slane %v1699, 1
  %v1805 = vsel %vm345, %v1803, %v1804
  %v1806 = vrot.slane %v1700, 1
  %v1807 = vsel %vm345, %v1804, %v1806
  %v1808 = vrot.slane %v1701, 1
  %v1809 = vrot.slane %v1702, 1
  %v1810 = vsel %vm345, %v1808, %v1809
  %v1811 = vrot.slane %v1703, 1
  %v1812 = vsel %vm345, %v1809, %v1811
  %v1813 = vrot.slane %v1704, 1
  %v1814 = vrot.slane %v1705, 1
  %v1815 = vsel %vm345, %v1813, %v1814
  %v1816 = vrot.slane %v1706, 1
  %v1817 = vsel %vm345, %v1814, %v1816
  %v1818 = vrot.slane %v1707, 1
  %v1819 = vrot.slane %v1708, 1
  %v1820 = vsel %vm345, %v1818, %v1819
  %v1821 = vrot.slane %v1709, 1
  %v1822 = vsel %vm345, %v1819, %v1821
  %v1823 = vrot.slane %v1710, 1
  %v1824 = vrot.slane %v1711, 1
  %v1825 = vsel %vm345, %v1823, %v1824
  %v1826 = vrot.slane %v1712, 1
  %v1827 = vsel %vm345, %v1824, %v1826
  %v1828 = vrot.slane %v1713, 1
  %v1829 = vrot.slane %v1714, 1
  %v1830 = vsel %vm345, %v1828, %v1829
  %v1831 = vrot.slane %v1715, 1
  %v1832 = vsel %vm345, %v1829, %v1831
  %v1833 = vrot.slane %v1716, 1
  %v1834 = vrot.slane %v1717, 1
  %v1835 = vsel %vm345, %v1833, %v1834
  %v1836 = vrot.slane %v1718, 1
  %v1837 = vsel %vm345, %v1834, %v1836
  %v1838 = vrot.slane %v1719, 1
  %v1839 = vrot.slane %v1720, 1
  %v1840 = vsel %vm345, %v1838, %v1839
  %v1841 = vrot.slane %v1721, 1
  %v1842 = vsel %vm345, %v1839, %v1841
  %v1843 = vrot.slane %v1722, 1
  %v1844 = vrot.slane %v1723, 1
  %v1845 = vsel %vm345, %v1843, %v1844
  %v1846 = vrot.slane %v1724, 1
  %v1847 = vsel %vm345, %v1844, %v1846
  %1848 = vrot.lane.b32.xlu0 %v1775, 16
  %v1849 = vpop.permute.xlu0 %1848
  %1850 = vrot.lane.b32.xlu0 %v1777, 16
  %v1851 = vpop.permute.xlu0 %1850
  %1852 = vrot.lane.b32.xlu0 %v1780, 16
  %v1853 = vpop.permute.xlu0 %1852
  %1854 = vrot.lane.b32.xlu0 %v1782, 16
  %v1855 = vpop.permute.xlu0 %1854
  %1856 = vrot.lane.b32.xlu0 %v1785, 16
  %v1857 = vpop.permute.xlu0 %1856
  %1858 = vrot.lane.b32.xlu0 %v1787, 16
  %v1859 = vpop.permute.xlu0 %1858
  %1860 = vrot.lane.b32.xlu0 %v1790, 16
  %v1861 = vpop.permute.xlu0 %1860
  %1862 = vrot.lane.b32.xlu0 %v1792, 16
  %v1863 = vpop.permute.xlu0 %1862
  %1864 = vrot.lane.b32.xlu0 %v1795, 16
  %v1865 = vpop.permute.xlu0 %1864
  %1866 = vrot.lane.b32.xlu0 %v1797, 16
  %v1867 = vpop.permute.xlu0 %1866
  %1868 = vrot.lane.b32.xlu0 %v1800, 16
  %v1869 = vpop.permute.xlu0 %1868
  %1870 = vrot.lane.b32.xlu0 %v1802, 16
  %v1871 = vpop.permute.xlu0 %1870
  %1872 = vrot.lane.b32.xlu0 %v1805, 16
  %v1873 = vpop.permute.xlu0 %1872
  %1874 = vrot.lane.b32.xlu0 %v1807, 16
  %v1875 = vpop.permute.xlu0 %1874
  %1876 = vrot.lane.b32.xlu0 %v1810, 16
  %v1877 = vpop.permute.xlu0 %1876
  %1878 = vrot.lane.b32.xlu0 %v1812, 16
  %v1879 = vpop.permute.xlu0 %1878
  %1880 = vrot.lane.b32.xlu0 %v1815, 16
  %v1881 = vpop.permute.xlu0 %1880
  %1882 = vrot.lane.b32.xlu0 %v1817, 16
  %v1883 = vpop.permute.xlu0 %1882
  %1884 = vrot.lane.b32.xlu0 %v1820, 16
  %v1885 = vpop.permute.xlu0 %1884
  %1886 = vrot.lane.b32.xlu0 %v1822, 16
  %v1887 = vpop.permute.xlu0 %1886
  %1888 = vrot.lane.b32.xlu0 %v1825, 16
  %v1889 = vpop.permute.xlu0 %1888
  %1890 = vrot.lane.b32.xlu0 %v1827, 16
  %v1891 = vpop.permute.xlu0 %1890
  %1892 = vrot.lane.b32.xlu0 %v1830, 16
  %v1893 = vpop.permute.xlu0 %1892
  %1894 = vrot.lane.b32.xlu0 %v1832, 16
  %v1895 = vpop.permute.xlu0 %1894
  %1896 = vrot.lane.b32.xlu0 %v1835, 16
  %v1897 = vpop.permute.xlu0 %1896
  %1898 = vrot.lane.b32.xlu0 %v1837, 16
  %v1899 = vpop.permute.xlu0 %1898
  %1900 = vrot.lane.b32.xlu0 %v1840, 16
  %v1901 = vpop.permute.xlu0 %1900
  %1902 = vrot.lane.b32.xlu0 %v1842, 16
  %v1903 = vpop.permute.xlu0 %1902
  %1904 = vrot.lane.b32.xlu0 %v1845, 16
  %v1905 = vpop.permute.xlu0 %1904
  %1906 = vrot.lane.b32.xlu0 %v1847, 16
  %v1907 = vpop.permute.xlu0 %1906
  %v1938 = vrot.slane %v1680, 2
  %v1939 = vrot.slane %v1681, 2
  %v1940 = vsel %vm522, %v1938, %v1939
  %v1941 = vrot.slane %v1682, 2
  %v1942 = vsel %vm522, %v1939, %v1941
  %v1943 = vrot.slane %v1683, 2
  %v1944 = vrot.slane %v1684, 2
  %v1945 = vsel %vm522, %v1943, %v1944
  %v1946 = vrot.slane %v1685, 2
  %v1947 = vsel %vm522, %v1944, %v1946
  %v1948 = vrot.slane %v1686, 2
  %v1949 = vrot.slane %v1687, 2
  %v1950 = vsel %vm522, %v1948, %v1949
  %v1951 = vrot.slane %v1688, 2
  %v1952 = vsel %vm522, %v1949, %v1951
  %v1953 = vrot.slane %v1689, 2
  %v1954 = vrot.slane %v1690, 2
  %v1955 = vsel %vm522, %v1953, %v1954
  %v1956 = vrot.slane %v1691, 2
  %v1957 = vsel %vm522, %v1954, %v1956
  %v1958 = vrot.slane %v1692, 2
  %v1959 = vrot.slane %v1693, 2
  %v1960 = vsel %vm522, %v1958, %v1959
  %v1961 = vrot.slane %v1694, 2
  %v1962 = vsel %vm522, %v1959, %v1961
  %v1963 = vrot.slane %v1695, 2
  %v1964 = vrot.slane %v1696, 2
  %v1965 = vsel %vm522, %v1963, %v1964
  %v1966 = vrot.slane %v1697, 2
  %v1967 = vsel %vm522, %v1964, %v1966
  %v1968 = vrot.slane %v1698, 2
  %v1969 = vrot.slane %v1699, 2
  %v1970 = vsel %vm522, %v1968, %v1969
  %v1971 = vrot.slane %v1700, 2
  %v1972 = vsel %vm522, %v1969, %v1971
  %v1973 = vrot.slane %v1701, 2
  %v1974 = vrot.slane %v1702, 2
  %v1975 = vsel %vm522, %v1973, %v1974
  %v1976 = vrot.slane %v1703, 2
  %v1977 = vsel %vm522, %v1974, %v1976
  %v1978 = vrot.slane %v1704, 2
  %v1979 = vrot.slane %v1705, 2
  %v1980 = vsel %vm522, %v1978, %v1979
  %v1981 = vrot.slane %v1706, 2
  %v1982 = vsel %vm522, %v1979, %v1981
  %v1983 = vrot.slane %v1707, 2
  %v1984 = vrot.slane %v1708, 2
  %v1985 = vsel %vm522, %v1983, %v1984
  %v1986 = vrot.slane %v1709, 2
  %v1987 = vsel %vm522, %v1984, %v1986
  %v1988 = vrot.slane %v1710, 2
  %v1989 = vrot.slane %v1711, 2
  %v1990 = vsel %vm522, %v1988, %v1989
  %v1991 = vrot.slane %v1712, 2
  %v1992 = vsel %vm522, %v1989, %v1991
  %v1993 = vrot.slane %v1713, 2
  %v1994 = vrot.slane %v1714, 2
  %v1995 = vsel %vm522, %v1993, %v1994
  %v1996 = vrot.slane %v1715, 2
  %v1997 = vsel %vm522, %v1994, %v1996
  %v1998 = vrot.slane %v1716, 2
  %v1999 = vrot.slane %v1717, 2
  %v2000 = vsel %vm522, %v1998, %v1999
  %v2001 = vrot.slane %v1718, 2
  %v2002 = vsel %vm522, %v1999, %v2001
  %v2003 = vrot.slane %v1719, 2
  %v2004 = vrot.slane %v1720, 2
  %v2005 = vsel %vm522, %v2003, %v2004
  %v2006 = vrot.slane %v1721, 2
  %v2007 = vsel %vm522, %v2004, %v2006
  %v2008 = vrot.slane %v1722, 2
  %v2009 = vrot.slane %v1723, 2
  %v2010 = vsel %vm522, %v2008, %v2009
  %v2011 = vrot.slane %v1724, 2
  %v2012 = vsel %vm522, %v2009, %v2011
  %2013 = vrot.lane.b32.xlu0 %v1940, 32
  %v2014 = vpop.permute.xlu0 %2013
  %2015 = vrot.lane.b32.xlu0 %v1942, 32
  %v2016 = vpop.permute.xlu0 %2015
  %2017 = vrot.lane.b32.xlu0 %v1945, 32
  %v2018 = vpop.permute.xlu0 %2017
  %2019 = vrot.lane.b32.xlu0 %v1947, 32
  %v2020 = vpop.permute.xlu0 %2019
  %2021 = vrot.lane.b32.xlu0 %v1950, 32
  %v2022 = vpop.permute.xlu0 %2021
  %2023 = vrot.lane.b32.xlu0 %v1952, 32
  %v2024 = vpop.permute.xlu0 %2023
  %2025 = vrot.lane.b32.xlu0 %v1955, 32
  %v2026 = vpop.permute.xlu0 %2025
  %2027 = vrot.lane.b32.xlu0 %v1957, 32
  %v2028 = vpop.permute.xlu0 %2027
  %2029 = vrot.lane.b32.xlu0 %v1960, 32
  %v2030 = vpop.permute.xlu0 %2029
  %2031 = vrot.lane.b32.xlu0 %v1962, 32
  %v2032 = vpop.permute.xlu0 %2031
  %2033 = vrot.lane.b32.xlu0 %v1965, 32
  %v2034 = vpop.permute.xlu0 %2033
  %2035 = vrot.lane.b32.xlu0 %v1967, 32
  %v2036 = vpop.permute.xlu0 %2035
  %2037 = vrot.lane.b32.xlu0 %v1970, 32
  %v2038 = vpop.permute.xlu0 %2037
  %2039 = vrot.lane.b32.xlu0 %v1972, 32
  %v2040 = vpop.permute.xlu0 %2039
  %2041 = vrot.lane.b32.xlu0 %v1975, 32
  %v2042 = vpop.permute.xlu0 %2041
  %2043 = vrot.lane.b32.xlu0 %v1977, 32
  %v2044 = vpop.permute.xlu0 %2043
  %2045 = vrot.lane.b32.xlu0 %v1980, 32
  %v2046 = vpop.permute.xlu0 %2045
  %2047 = vrot.lane.b32.xlu0 %v1982, 32
  %v2048 = vpop.permute.xlu0 %2047
  %2049 = vrot.lane.b32.xlu0 %v1985, 32
  %v2050 = vpop.permute.xlu0 %2049
  %2051 = vrot.lane.b32.xlu0 %v1987, 32
  %v2052 = vpop.permute.xlu0 %2051
  %2053 = vrot.lane.b32.xlu0 %v1990, 32
  %v2054 = vpop.permute.xlu0 %2053
  %2055 = vrot.lane.b32.xlu0 %v1992, 32
  %v2056 = vpop.permute.xlu0 %2055
  %2057 = vrot.lane.b32.xlu0 %v1995, 32
  %v2058 = vpop.permute.xlu0 %2057
  %2059 = vrot.lane.b32.xlu0 %v1997, 32
  %v2060 = vpop.permute.xlu0 %2059
  %2061 = vrot.lane.b32.xlu0 %v2000, 32
  %v2062 = vpop.permute.xlu0 %2061
  %2063 = vrot.lane.b32.xlu0 %v2002, 32
  %v2064 = vpop.permute.xlu0 %2063
  %2065 = vrot.lane.b32.xlu0 %v2005, 32
  %v2066 = vpop.permute.xlu0 %2065
  %2067 = vrot.lane.b32.xlu0 %v2007, 32
  %v2068 = vpop.permute.xlu0 %2067
  %2069 = vrot.lane.b32.xlu0 %v2010, 32
  %v2070 = vpop.permute.xlu0 %2069
  %2071 = vrot.lane.b32.xlu0 %v2012, 32
  %v2072 = vpop.permute.xlu0 %2071
  %2105 = vrot.lane.b32.xlu0 %v1680, 48
  %v2106 = vpop.permute.xlu0 %2105
  %2107 = vrot.lane.b32.xlu0 %v1681, 48
  %v2108 = vpop.permute.xlu0 %2107
  %2109 = vrot.lane.b32.xlu0 %v1683, 48
  %v2110 = vpop.permute.xlu0 %2109
  %2111 = vrot.lane.b32.xlu0 %v1684, 48
  %v2112 = vpop.permute.xlu0 %2111
  %2113 = vrot.lane.b32.xlu0 %v1686, 48
  %v2114 = vpop.permute.xlu0 %2113
  %2115 = vrot.lane.b32.xlu0 %v1687, 48
  %v2116 = vpop.permute.xlu0 %2115
  %2117 = vrot.lane.b32.xlu0 %v1689, 48
  %v2118 = vpop.permute.xlu0 %2117
  %2119 = vrot.lane.b32.xlu0 %v1690, 48
  %v2120 = vpop.permute.xlu0 %2119
  %2121 = vrot.lane.b32.xlu0 %v1692, 48
  %v2122 = vpop.permute.xlu0 %2121
  %2123 = vrot.lane.b32.xlu0 %v1693, 48
  %v2124 = vpop.permute.xlu0 %2123
  %2125 = vrot.lane.b32.xlu0 %v1695, 48
  %v2126 = vpop.permute.xlu0 %2125
  %2127 = vrot.lane.b32.xlu0 %v1696, 48
  %v2128 = vpop.permute.xlu0 %2127
  %2129 = vrot.lane.b32.xlu0 %v1698, 48
  %v2130 = vpop.permute.xlu0 %2129
  %2131 = vrot.lane.b32.xlu0 %v1699, 48
  %v2132 = vpop.permute.xlu0 %2131
  %2133 = vrot.lane.b32.xlu0 %v1701, 48
  %v2134 = vpop.permute.xlu0 %2133
  %2135 = vrot.lane.b32.xlu0 %v1702, 48
  %v2136 = vpop.permute.xlu0 %2135
  %2137 = vrot.lane.b32.xlu0 %v1704, 48
  %v2138 = vpop.permute.xlu0 %2137
  %2139 = vrot.lane.b32.xlu0 %v1705, 48
  %v2140 = vpop.permute.xlu0 %2139
  %2141 = vrot.lane.b32.xlu0 %v1707, 48
  %v2142 = vpop.permute.xlu0 %2141
  %2143 = vrot.lane.b32.xlu0 %v1708, 48
  %v2144 = vpop.permute.xlu0 %2143
  %2145 = vrot.lane.b32.xlu0 %v1710, 48
  %v2146 = vpop.permute.xlu0 %2145
  %2147 = vrot.lane.b32.xlu0 %v1711, 48
  %v2148 = vpop.permute.xlu0 %2147
  %2149 = vrot.lane.b32.xlu0 %v1713, 48
  %v2150 = vpop.permute.xlu0 %2149
  %2151 = vrot.lane.b32.xlu0 %v1714, 48
  %v2152 = vpop.permute.xlu0 %2151
  %2153 = vrot.lane.b32.xlu0 %v1716, 48
  %v2154 = vpop.permute.xlu0 %2153
  %2155 = vrot.lane.b32.xlu0 %v1717, 48
  %v2156 = vpop.permute.xlu0 %2155
  %2157 = vrot.lane.b32.xlu0 %v1719, 48
  %v2158 = vpop.permute.xlu0 %2157
  %2159 = vrot.lane.b32.xlu0 %v1720, 48
  %v2160 = vpop.permute.xlu0 %2159
  %2161 = vrot.lane.b32.xlu0 %v1722, 48
  %v2162 = vpop.permute.xlu0 %2161
  %2163 = vrot.lane.b32.xlu0 %v1723, 48
  %v2164 = vpop.permute.xlu0 %2163
  %2165 = vrot.lane.b32.xlu0 %v1725, 48
  %v2166 = vpop.permute.xlu0 %2165
  %2167 = vrot.lane.b32.xlu0 %v1726, 48
  %v2168 = vpop.permute.xlu0 %2167
  %v2202 = vrot.slane %v1725, 1
  %v2203 = vrot.slane %v1726, 1
  %v2204 = vsel %vm345, %v2202, %v2203
  %v2205 = vrot.slane %v1727, 1
  %v2206 = vsel %vm345, %v2203, %v2205
  %2207 = vrot.lane.b32.xlu0 %v1775, 64
  %v2208 = vpop.permute.xlu0 %2207
  %2209 = vrot.lane.b32.xlu0 %v1777, 64
  %v2210 = vpop.permute.xlu0 %2209
  %2211 = vrot.lane.b32.xlu0 %v1780, 64
  %v2212 = vpop.permute.xlu0 %2211
  %2213 = vrot.lane.b32.xlu0 %v1782, 64
  %v2214 = vpop.permute.xlu0 %2213
  %2215 = vrot.lane.b32.xlu0 %v1785, 64
  %v2216 = vpop.permute.xlu0 %2215
  %2217 = vrot.lane.b32.xlu0 %v1787, 64
  %v2218 = vpop.permute.xlu0 %2217
  %2219 = vrot.lane.b32.xlu0 %v1790, 64
  %v2220 = vpop.permute.xlu0 %2219
  %2221 = vrot.lane.b32.xlu0 %v1792, 64
  %v2222 = vpop.permute.xlu0 %2221
  %2223 = vrot.lane.b32.xlu0 %v1795, 64
  %v2224 = vpop.permute.xlu0 %2223
  %2225 = vrot.lane.b32.xlu0 %v1797, 64
  %v2226 = vpop.permute.xlu0 %2225
  %2227 = vrot.lane.b32.xlu0 %v1800, 64
  %v2228 = vpop.permute.xlu0 %2227
  %2229 = vrot.lane.b32.xlu0 %v1802, 64
  %v2230 = vpop.permute.xlu0 %2229
  %2231 = vrot.lane.b32.xlu0 %v1805, 64
  %v2232 = vpop.permute.xlu0 %2231
  %2233 = vrot.lane.b32.xlu0 %v1807, 64
  %v2234 = vpop.permute.xlu0 %2233
  %2235 = vrot.lane.b32.xlu0 %v1810, 64
  %v2236 = vpop.permute.xlu0 %2235
  %2237 = vrot.lane.b32.xlu0 %v1812, 64
  %v2238 = vpop.permute.xlu0 %2237
  %2239 = vrot.lane.b32.xlu0 %v1815, 64
  %v2240 = vpop.permute.xlu0 %2239
  %2241 = vrot.lane.b32.xlu0 %v1817, 64
  %v2242 = vpop.permute.xlu0 %2241
  %2243 = vrot.lane.b32.xlu0 %v1820, 64
  %v2244 = vpop.permute.xlu0 %2243
  %2245 = vrot.lane.b32.xlu0 %v1822, 64
  %v2246 = vpop.permute.xlu0 %2245
  %2247 = vrot.lane.b32.xlu0 %v1825, 64
  %v2248 = vpop.permute.xlu0 %2247
  %2249 = vrot.lane.b32.xlu0 %v1827, 64
  %v2250 = vpop.permute.xlu0 %2249
  %2251 = vrot.lane.b32.xlu0 %v1830, 64
  %v2252 = vpop.permute.xlu0 %2251
  %2253 = vrot.lane.b32.xlu0 %v1832, 64
  %v2254 = vpop.permute.xlu0 %2253
  %2255 = vrot.lane.b32.xlu0 %v1835, 64
  %v2256 = vpop.permute.xlu0 %2255
  %2257 = vrot.lane.b32.xlu0 %v1837, 64
  %v2258 = vpop.permute.xlu0 %2257
  %2259 = vrot.lane.b32.xlu0 %v1840, 64
  %v2260 = vpop.permute.xlu0 %2259
  %2261 = vrot.lane.b32.xlu0 %v1842, 64
  %v2262 = vpop.permute.xlu0 %2261
  %2263 = vrot.lane.b32.xlu0 %v1845, 64
  %v2264 = vpop.permute.xlu0 %2263
  %2265 = vrot.lane.b32.xlu0 %v1847, 64
  %v2266 = vpop.permute.xlu0 %2265
  %2267 = vrot.lane.b32.xlu0 %v2204, 64
  %v2268 = vpop.permute.xlu0 %2267
  %2269 = vrot.lane.b32.xlu0 %v2206, 64
  %v2270 = vpop.permute.xlu0 %2269
  %v2303 = vrot.slane %v1725, 2
  %v2304 = vrot.slane %v1726, 2
  %v2305 = vsel %vm522, %v2303, %v2304
  %v2306 = vrot.slane %v1727, 2
  %v2307 = vsel %vm522, %v2304, %v2306
  %2308 = vrot.lane.b32.xlu0 %v1940, 80
  %v2309 = vpop.permute.xlu0 %2308
  %2310 = vrot.lane.b32.xlu0 %v1942, 80
  %v2311 = vpop.permute.xlu0 %2310
  %2312 = vrot.lane.b32.xlu0 %v1945, 80
  %v2313 = vpop.permute.xlu0 %2312
  %2314 = vrot.lane.b32.xlu0 %v1947, 80
  %v2315 = vpop.permute.xlu0 %2314
  %2316 = vrot.lane.b32.xlu0 %v1950, 80
  %v2317 = vpop.permute.xlu0 %2316
  %2318 = vrot.lane.b32.xlu0 %v1952, 80
  %v2319 = vpop.permute.xlu0 %2318
  %2320 = vrot.lane.b32.xlu0 %v1955, 80
  %v2321 = vpop.permute.xlu0 %2320
  %2322 = vrot.lane.b32.xlu0 %v1957, 80
  %v2323 = vpop.permute.xlu0 %2322
  %2324 = vrot.lane.b32.xlu0 %v1960, 80
  %v2325 = vpop.permute.xlu0 %2324
  %2326 = vrot.lane.b32.xlu0 %v1962, 80
  %v2327 = vpop.permute.xlu0 %2326
  %2328 = vrot.lane.b32.xlu0 %v1965, 80
  %v2329 = vpop.permute.xlu0 %2328
  %2330 = vrot.lane.b32.xlu0 %v1967, 80
  %v2331 = vpop.permute.xlu0 %2330
  %2332 = vrot.lane.b32.xlu0 %v1970, 80
  %v2333 = vpop.permute.xlu0 %2332
  %2334 = vrot.lane.b32.xlu0 %v1972, 80
  %v2335 = vpop.permute.xlu0 %2334
  %2336 = vrot.lane.b32.xlu0 %v1975, 80
  %v2337 = vpop.permute.xlu0 %2336
  %2338 = vrot.lane.b32.xlu0 %v1977, 80
  %v2339 = vpop.permute.xlu0 %2338
  %2340 = vrot.lane.b32.xlu0 %v1980, 80
  %v2341 = vpop.permute.xlu0 %2340
  %2342 = vrot.lane.b32.xlu0 %v1982, 80
  %v2343 = vpop.permute.xlu0 %2342
  %2344 = vrot.lane.b32.xlu0 %v1985, 80
  %v2345 = vpop.permute.xlu0 %2344
  %2346 = vrot.lane.b32.xlu0 %v1987, 80
  %v2347 = vpop.permute.xlu0 %2346
  %2348 = vrot.lane.b32.xlu0 %v1990, 80
  %v2349 = vpop.permute.xlu0 %2348
  %2350 = vrot.lane.b32.xlu0 %v1992, 80
  %v2351 = vpop.permute.xlu0 %2350
  %2352 = vrot.lane.b32.xlu0 %v1995, 80
  %v2353 = vpop.permute.xlu0 %2352
  %2354 = vrot.lane.b32.xlu0 %v1997, 80
  %v2355 = vpop.permute.xlu0 %2354
  %2356 = vrot.lane.b32.xlu0 %v2000, 80
  %v2357 = vpop.permute.xlu0 %2356
  %2358 = vrot.lane.b32.xlu0 %v2002, 80
  %v2359 = vpop.permute.xlu0 %2358
  %2360 = vrot.lane.b32.xlu0 %v2005, 80
  %v2361 = vpop.permute.xlu0 %2360
  %2362 = vrot.lane.b32.xlu0 %v2007, 80
  %v2363 = vpop.permute.xlu0 %2362
  %2364 = vrot.lane.b32.xlu0 %v2010, 80
  %v2365 = vpop.permute.xlu0 %2364
  %2366 = vrot.lane.b32.xlu0 %v2012, 80
  %v2367 = vpop.permute.xlu0 %2366
  %2368 = vrot.lane.b32.xlu0 %v2305, 80
  %v2369 = vpop.permute.xlu0 %2368
  %2370 = vrot.lane.b32.xlu0 %v2307, 80
  %v2371 = vpop.permute.xlu0 %2370
  %2404 = vrot.lane.b32.xlu0 %v1683, 96
  %v2405 = vpop.permute.xlu0 %2404
  %2406 = vrot.lane.b32.xlu0 %v1684, 96
  %v2407 = vpop.permute.xlu0 %2406
  %2408 = vrot.lane.b32.xlu0 %v1686, 96
  %v2409 = vpop.permute.xlu0 %2408
  %2410 = vrot.lane.b32.xlu0 %v1687, 96
  %v2411 = vpop.permute.xlu0 %2410
  %2412 = vrot.lane.b32.xlu0 %v1689, 96
  %v2413 = vpop.permute.xlu0 %2412
  %2414 = vrot.lane.b32.xlu0 %v1690, 96
  %v2415 = vpop.permute.xlu0 %2414
  %2416 = vrot.lane.b32.xlu0 %v1692, 96
  %v2417 = vpop.permute.xlu0 %2416
  %2418 = vrot.lane.b32.xlu0 %v1693, 96
  %v2419 = vpop.permute.xlu0 %2418
  %2420 = vrot.lane.b32.xlu0 %v1695, 96
  %v2421 = vpop.permute.xlu0 %2420
  %2422 = vrot.lane.b32.xlu0 %v1696, 96
  %v2423 = vpop.permute.xlu0 %2422
  %2424 = vrot.lane.b32.xlu0 %v1698, 96
  %v2425 = vpop.permute.xlu0 %2424
  %2426 = vrot.lane.b32.xlu0 %v1699, 96
  %v2427 = vpop.permute.xlu0 %2426
  %2428 = vrot.lane.b32.xlu0 %v1701, 96
  %v2429 = vpop.permute.xlu0 %2428
  %2430 = vrot.lane.b32.xlu0 %v1702, 96
  %v2431 = vpop.permute.xlu0 %2430
  %2432 = vrot.lane.b32.xlu0 %v1704, 96
  %v2433 = vpop.permute.xlu0 %2432
  %2434 = vrot.lane.b32.xlu0 %v1705, 96
  %v2435 = vpop.permute.xlu0 %2434
  %2436 = vrot.lane.b32.xlu0 %v1707, 96
  %v2437 = vpop.permute.xlu0 %2436
  %2438 = vrot.lane.b32.xlu0 %v1708, 96
  %v2439 = vpop.permute.xlu0 %2438
  %2440 = vrot.lane.b32.xlu0 %v1710, 96
  %v2441 = vpop.permute.xlu0 %2440
  %2442 = vrot.lane.b32.xlu0 %v1711, 96
  %v2443 = vpop.permute.xlu0 %2442
  %2444 = vrot.lane.b32.xlu0 %v1713, 96
  %v2445 = vpop.permute.xlu0 %2444
  %2446 = vrot.lane.b32.xlu0 %v1714, 96
  %v2447 = vpop.permute.xlu0 %2446
  %2448 = vrot.lane.b32.xlu0 %v1716, 96
  %v2449 = vpop.permute.xlu0 %2448
  %2450 = vrot.lane.b32.xlu0 %v1717, 96
  %v2451 = vpop.permute.xlu0 %2450
  %2452 = vrot.lane.b32.xlu0 %v1719, 96
  %v2453 = vpop.permute.xlu0 %2452
  %2454 = vrot.lane.b32.xlu0 %v1720, 96
  %v2455 = vpop.permute.xlu0 %2454
  %2456 = vrot.lane.b32.xlu0 %v1722, 96
  %v2457 = vpop.permute.xlu0 %2456
  %2458 = vrot.lane.b32.xlu0 %v1723, 96
  %v2459 = vpop.permute.xlu0 %2458
  %2460 = vrot.lane.b32.xlu0 %v1725, 96
  %v2461 = vpop.permute.xlu0 %2460
  %2462 = vrot.lane.b32.xlu0 %v1726, 96
  %v2463 = vpop.permute.xlu0 %2462
  %2494 = vrot.lane.b32.xlu0 %v1780, 112
  %v2495 = vpop.permute.xlu0 %2494
  %2496 = vrot.lane.b32.xlu0 %v1782, 112
  %v2497 = vpop.permute.xlu0 %2496
  %2498 = vrot.lane.b32.xlu0 %v1785, 112
  %v2499 = vpop.permute.xlu0 %2498
  %2500 = vrot.lane.b32.xlu0 %v1787, 112
  %v2501 = vpop.permute.xlu0 %2500
  %2502 = vrot.lane.b32.xlu0 %v1790, 112
  %v2503 = vpop.permute.xlu0 %2502
  %2504 = vrot.lane.b32.xlu0 %v1792, 112
  %v2505 = vpop.permute.xlu0 %2504
  %2506 = vrot.lane.b32.xlu0 %v1795, 112
  %v2507 = vpop.permute.xlu0 %2506
  %2508 = vrot.lane.b32.xlu0 %v1797, 112
  %v2509 = vpop.permute.xlu0 %2508
  %2510 = vrot.lane.b32.xlu0 %v1800, 112
  %v2511 = vpop.permute.xlu0 %2510
  %2512 = vrot.lane.b32.xlu0 %v1802, 112
  %v2513 = vpop.permute.xlu0 %2512
  %2514 = vrot.lane.b32.xlu0 %v1805, 112
  %v2515 = vpop.permute.xlu0 %2514
  %2516 = vrot.lane.b32.xlu0 %v1807, 112
  %v2517 = vpop.permute.xlu0 %2516
  %2518 = vrot.lane.b32.xlu0 %v1810, 112
  %v2519 = vpop.permute.xlu0 %2518
  %2520 = vrot.lane.b32.xlu0 %v1812, 112
  %v2521 = vpop.permute.xlu0 %2520
  %2522 = vrot.lane.b32.xlu0 %v1815, 112
  %v2523 = vpop.permute.xlu0 %2522
  %2524 = vrot.lane.b32.xlu0 %v1817, 112
  %v2525 = vpop.permute.xlu0 %2524
  %2526 = vrot.lane.b32.xlu0 %v1820, 112
  %v2527 = vpop.permute.xlu0 %2526
  %2528 = vrot.lane.b32.xlu0 %v1822, 112
  %v2529 = vpop.permute.xlu0 %2528
  %2530 = vrot.lane.b32.xlu0 %v1825, 112
  %v2531 = vpop.permute.xlu0 %2530
  %2532 = vrot.lane.b32.xlu0 %v1827, 112
  %v2533 = vpop.permute.xlu0 %2532
  %2534 = vrot.lane.b32.xlu0 %v1830, 112
  %v2535 = vpop.permute.xlu0 %2534
  %2536 = vrot.lane.b32.xlu0 %v1832, 112
  %v2537 = vpop.permute.xlu0 %2536
  %2538 = vrot.lane.b32.xlu0 %v1835, 112
  %v2539 = vpop.permute.xlu0 %2538
  %2540 = vrot.lane.b32.xlu0 %v1837, 112
  %v2541 = vpop.permute.xlu0 %2540
  %2542 = vrot.lane.b32.xlu0 %v1840, 112
  %v2543 = vpop.permute.xlu0 %2542
  %2544 = vrot.lane.b32.xlu0 %v1842, 112
  %v2545 = vpop.permute.xlu0 %2544
  %2546 = vrot.lane.b32.xlu0 %v1845, 112
  %v2547 = vpop.permute.xlu0 %2546
  %2548 = vrot.lane.b32.xlu0 %v1847, 112
  %v2549 = vpop.permute.xlu0 %2548
  %2550 = vrot.lane.b32.xlu0 %v2204, 112
  %v2551 = vpop.permute.xlu0 %2550
  %2552 = vrot.lane.b32.xlu0 %v2206, 112
  %v2553 = vpop.permute.xlu0 %2552
  %v2614 = vsel %vm1224, %v1680, %v1849
  %v2615 = vsel %vm1224, %v1681, %v1851
  %v2616 = vsel %vm1224, %v1683, %v1853
  %v2617 = vsel %vm1224, %v1684, %v1855
  %v2618 = vsel %vm1224, %v1686, %v1857
  %v2619 = vsel %vm1224, %v1687, %v1859
  %v2620 = vsel %vm1224, %v1689, %v1861
  %v2621 = vsel %vm1224, %v1690, %v1863
  %v2622 = vsel %vm1224, %v1692, %v1865
  %v2623 = vsel %vm1224, %v1693, %v1867
  %v2624 = vsel %vm1224, %v1695, %v1869
  %v2625 = vsel %vm1224, %v1696, %v1871
  %v2626 = vsel %vm1224, %v1698, %v1873
  %v2627 = vsel %vm1224, %v1699, %v1875
  %v2628 = vsel %vm1224, %v1701, %v1877
  %v2629 = vsel %vm1224, %v1702, %v1879
  %v2630 = vsel %vm1224, %v1704, %v1881
  %v2631 = vsel %vm1224, %v1705, %v1883
  %v2632 = vsel %vm1224, %v1707, %v1885
  %v2633 = vsel %vm1224, %v1708, %v1887
  %v2634 = vsel %vm1224, %v1710, %v1889
  %v2635 = vsel %vm1224, %v1711, %v1891
  %v2636 = vsel %vm1224, %v1713, %v1893
  %v2637 = vsel %vm1224, %v1714, %v1895
  %v2638 = vsel %vm1224, %v1716, %v1897
  %v2639 = vsel %vm1224, %v1717, %v1899
  %v2640 = vsel %vm1224, %v1719, %v1901
  %v2641 = vsel %vm1224, %v1720, %v1903
  %v2642 = vsel %vm1224, %v1722, %v1905
  %v2643 = vsel %vm1224, %v1723, %v1907
  %v2644 = vsel %vm1257, %v2614, %v2014
  %v2645 = vsel %vm1257, %v2615, %v2016
  %v2646 = vsel %vm1257, %v2616, %v2018
  %v2647 = vsel %vm1257, %v2617, %v2020
  %v2648 = vsel %vm1257, %v2618, %v2022
  %v2649 = vsel %vm1257, %v2619, %v2024
  %v2650 = vsel %vm1257, %v2620, %v2026
  %v2651 = vsel %vm1257, %v2621, %v2028
  %v2652 = vsel %vm1257, %v2622, %v2030
  %v2653 = vsel %vm1257, %v2623, %v2032
  %v2654 = vsel %vm1257, %v2624, %v2034
  %v2655 = vsel %vm1257, %v2625, %v2036
  %v2656 = vsel %vm1257, %v2626, %v2038
  %v2657 = vsel %vm1257, %v2627, %v2040
  %v2658 = vsel %vm1257, %v2628, %v2042
  %v2659 = vsel %vm1257, %v2629, %v2044
  %v2660 = vsel %vm1257, %v2630, %v2046
  %v2661 = vsel %vm1257, %v2631, %v2048
  %v2662 = vsel %vm1257, %v2632, %v2050
  %v2663 = vsel %vm1257, %v2633, %v2052
  %v2664 = vsel %vm1257, %v2634, %v2054
  %v2665 = vsel %vm1257, %v2635, %v2056
  %v2666 = vsel %vm1257, %v2636, %v2058
  %v2667 = vsel %vm1257, %v2637, %v2060
  %v2668 = vsel %vm1257, %v2638, %v2062
  %v2669 = vsel %vm1257, %v2639, %v2064
  %v2670 = vsel %vm1257, %v2640, %v2066
  %v2671 = vsel %vm1257, %v2641, %v2068
  %v2672 = vsel %vm1257, %v2642, %v2070
  %v2673 = vsel %vm1257, %v2643, %v2072
  %v2674 = vsel %vm1290, %v1258, %v2106
  %v2675 = vsel %vm1290, %v1259, %v2108
  %v2676 = vsel %vm1290, %v2644, %v2110
  %v2677 = vsel %vm1290, %v2645, %v2112
  %v2678 = vsel %vm1290, %v2646, %v2114
  %v2679 = vsel %vm1290, %v2647, %v2116
  %v2680 = vsel %vm1290, %v2648, %v2118
  %v2681 = vsel %vm1290, %v2649, %v2120
  %v2682 = vsel %vm1290, %v2650, %v2122
  %v2683 = vsel %vm1290, %v2651, %v2124
  %v2684 = vsel %vm1290, %v2652, %v2126
  %v2685 = vsel %vm1290, %v2653, %v2128
  %v2686 = vsel %vm1290, %v2654, %v2130
  %v2687 = vsel %vm1290, %v2655, %v2132
  %v2688 = vsel %vm1290, %v2656, %v2134
  %v2689 = vsel %vm1290, %v2657, %v2136
  %v2690 = vsel %vm1290, %v2658, %v2138
  %v2691 = vsel %vm1290, %v2659, %v2140
  %v2692 = vsel %vm1290, %v2660, %v2142
  %v2693 = vsel %vm1290, %v2661, %v2144
  %v2694 = vsel %vm1290, %v2662, %v2146
  %v2695 = vsel %vm1290, %v2663, %v2148
  %v2696 = vsel %vm1290, %v2664, %v2150
  %v2697 = vsel %vm1290, %v2665, %v2152
  %v2698 = vsel %vm1290, %v2666, %v2154
  %v2699 = vsel %vm1290, %v2667, %v2156
  %v2700 = vsel %vm1290, %v2668, %v2158
  %v2701 = vsel %vm1290, %v2669, %v2160
  %v2702 = vsel %vm1290, %v2670, %v2162
  %v2703 = vsel %vm1290, %v2671, %v2164
  %v2704 = vsel %vm1290, %v2672, %v2166
  %v2705 = vsel %vm1290, %v2673, %v2168
  %v2706 = vsel %vm1323, %v2674, %v2208
  %v2707 = vsel %vm1323, %v2675, %v2210
  %v2708 = vsel %vm1323, %v2676, %v2212
  %v2709 = vsel %vm1323, %v2677, %v2214
  %v2710 = vsel %vm1323, %v2678, %v2216
  %v2711 = vsel %vm1323, %v2679, %v2218
  %v2712 = vsel %vm1323, %v2680, %v2220
  %v2713 = vsel %vm1323, %v2681, %v2222
  %v2714 = vsel %vm1323, %v2682, %v2224
  %v2715 = vsel %vm1323, %v2683, %v2226
  %v2716 = vsel %vm1323, %v2684, %v2228
  %v2717 = vsel %vm1323, %v2685, %v2230
  %v2718 = vsel %vm1323, %v2686, %v2232
  %v2719 = vsel %vm1323, %v2687, %v2234
  %v2720 = vsel %vm1323, %v2688, %v2236
  %v2721 = vsel %vm1323, %v2689, %v2238
  %v2722 = vsel %vm1323, %v2690, %v2240
  %v2723 = vsel %vm1323, %v2691, %v2242
  %v2724 = vsel %vm1323, %v2692, %v2244
  %v2725 = vsel %vm1323, %v2693, %v2246
  %v2726 = vsel %vm1323, %v2694, %v2248
  %v2727 = vsel %vm1323, %v2695, %v2250
  %v2728 = vsel %vm1323, %v2696, %v2252
  %v2729 = vsel %vm1323, %v2697, %v2254
  %v2730 = vsel %vm1323, %v2698, %v2256
  %v2731 = vsel %vm1323, %v2699, %v2258
  %v2732 = vsel %vm1323, %v2700, %v2260
  %v2733 = vsel %vm1323, %v2701, %v2262
  %v2734 = vsel %vm1323, %v2702, %v2264
  %v2735 = vsel %vm1323, %v2703, %v2266
  %v2736 = vsel %vm1323, %v2704, %v2268
  %v2737 = vsel %vm1323, %v2705, %v2270
  %v2738 = vsel %vm1356, %v2706, %v2309
  %v2739 = vsel %vm1356, %v2707, %v2311
  %v2740 = vsel %vm1356, %v2708, %v2313
  %v2741 = vsel %vm1356, %v2709, %v2315
  %v2742 = vsel %vm1356, %v2710, %v2317
  %v2743 = vsel %vm1356, %v2711, %v2319
  %v2744 = vsel %vm1356, %v2712, %v2321
  %v2745 = vsel %vm1356, %v2713, %v2323
  %v2746 = vsel %vm1356, %v2714, %v2325
  %v2747 = vsel %vm1356, %v2715, %v2327
  %v2748 = vsel %vm1356, %v2716, %v2329
  %v2749 = vsel %vm1356, %v2717, %v2331
  %v2750 = vsel %vm1356, %v2718, %v2333
  %v2751 = vsel %vm1356, %v2719, %v2335
  %v2752 = vsel %vm1356, %v2720, %v2337
  %v2753 = vsel %vm1356, %v2721, %v2339
  %v2754 = vsel %vm1356, %v2722, %v2341
  %v2755 = vsel %vm1356, %v2723, %v2343
  %v2756 = vsel %vm1356, %v2724, %v2345
  %v2757 = vsel %vm1356, %v2725, %v2347
  %v2758 = vsel %vm1356, %v2726, %v2349
  %v2759 = vsel %vm1356, %v2727, %v2351
  %v2760 = vsel %vm1356, %v2728, %v2353
  %v2761 = vsel %vm1356, %v2729, %v2355
  %v2762 = vsel %vm1356, %v2730, %v2357
  %v2763 = vsel %vm1356, %v2731, %v2359
  %v2764 = vsel %vm1356, %v2732, %v2361
  %v2765 = vsel %vm1356, %v2733, %v2363
  %v2766 = vsel %vm1356, %v2734, %v2365
  %v2767 = vsel %vm1356, %v2735, %v2367
  %v2768 = vsel %vm1356, %v2736, %v2369
  %v2769 = vsel %vm1356, %v2737, %v2371
  %v2770 = vsel %vm1389, %v2738, %v2405
  %v2771 = vsel %vm1389, %v2739, %v2407
  %v2772 = vsel %vm1389, %v2740, %v2409
  %v2773 = vsel %vm1389, %v2741, %v2411
  %v2774 = vsel %vm1389, %v2742, %v2413
  %v2775 = vsel %vm1389, %v2743, %v2415
  %v2776 = vsel %vm1389, %v2744, %v2417
  %v2777 = vsel %vm1389, %v2745, %v2419
  %v2778 = vsel %vm1389, %v2746, %v2421
  %v2779 = vsel %vm1389, %v2747, %v2423
  %v2780 = vsel %vm1389, %v2748, %v2425
  %v2781 = vsel %vm1389, %v2749, %v2427
  %v2782 = vsel %vm1389, %v2750, %v2429
  %v2783 = vsel %vm1389, %v2751, %v2431
  %v2784 = vsel %vm1389, %v2752, %v2433
  %v2785 = vsel %vm1389, %v2753, %v2435
  %v2786 = vsel %vm1389, %v2754, %v2437
  %v2787 = vsel %vm1389, %v2755, %v2439
  %v2788 = vsel %vm1389, %v2756, %v2441
  %v2789 = vsel %vm1389, %v2757, %v2443
  %v2790 = vsel %vm1389, %v2758, %v2445
  %v2791 = vsel %vm1389, %v2759, %v2447
  %v2792 = vsel %vm1389, %v2760, %v2449
  %v2793 = vsel %vm1389, %v2761, %v2451
  %v2794 = vsel %vm1389, %v2762, %v2453
  %v2795 = vsel %vm1389, %v2763, %v2455
  %v2796 = vsel %vm1389, %v2764, %v2457
  %v2797 = vsel %vm1389, %v2765, %v2459
  %v2798 = vsel %vm1389, %v2766, %v2461
  %v2799 = vsel %vm1389, %v2767, %v2463
  %v2800 = vsel %vm1389, %v2768, %v1061
  %v2801 = vsel %vm1389, %v2769, %v1063
  %v2802 = vsel %vm1422, %v2770, %v2495
  %v2803 = vsel %vm1422, %v2771, %v2497
  %v2804 = vsel %vm1422, %v2772, %v2499
  %v2805 = vsel %vm1422, %v2773, %v2501
  %v2806 = vsel %vm1422, %v2774, %v2503
  %v2807 = vsel %vm1422, %v2775, %v2505
  %v2808 = vsel %vm1422, %v2776, %v2507
  %v2809 = vsel %vm1422, %v2777, %v2509
  %v2810 = vsel %vm1422, %v2778, %v2511
  %v2811 = vsel %vm1422, %v2779, %v2513
  %v2812 = vsel %vm1422, %v2780, %v2515
  %v2813 = vsel %vm1422, %v2781, %v2517
  %v2814 = vsel %vm1422, %v2782, %v2519
  %v2815 = vsel %vm1422, %v2783, %v2521
  %v2816 = vsel %vm1422, %v2784, %v2523
  %v2817 = vsel %vm1422, %v2785, %v2525
  %v2818 = vsel %vm1422, %v2786, %v2527
  %v2819 = vsel %vm1422, %v2787, %v2529
  %v2820 = vsel %vm1422, %v2788, %v2531
  %v2821 = vsel %vm1422, %v2789, %v2533
  %v2822 = vsel %vm1422, %v2790, %v2535
  %v2823 = vsel %vm1422, %v2791, %v2537
  %v2824 = vsel %vm1422, %v2792, %v2539
  %v2825 = vsel %vm1422, %v2793, %v2541
  %v2826 = vsel %vm1422, %v2794, %v2543
  %v2827 = vsel %vm1422, %v2795, %v2545
  %v2828 = vsel %vm1422, %v2796, %v2547
  %v2829 = vsel %vm1422, %v2797, %v2549
  %v2830 = vsel %vm1422, %v2798, %v2551
  %v2831 = vsel %vm1422, %v2799, %v2553
  %v2832 = vsel %vm1422, %v2800, %v1157
  %v2833 = vsel %vm1422, %v2801, %v1159
  %v2834 = vpack.c.bf16 %v1424, %v1423
  %v2835 = vpack.c.bf16 %v537, %v535
  %v2836 = vpack.c.bf16 %v1426, %v1425
  %v2837 = vpack.c.bf16 %v542, %v540
  %v2838 = vpack.c.bf16 %v1428, %v1427
  %v2839 = vpack.c.bf16 %v547, %v545
  %v2840 = vpack.c.bf16 %v1430, %v1429
  %v2841 = vpack.c.bf16 %v552, %v550
  %v2842 = vpack.c.bf16 %v1432, %v1431
  %v2843 = vpack.c.bf16 %v557, %v555
  %v2844 = vpack.c.bf16 %v1434, %v1433
  %v2845 = vpack.c.bf16 %v562, %v560
  %v2846 = vpack.c.bf16 %v1436, %v1435
  %v2847 = vpack.c.bf16 %v567, %v565
  %v2848 = vpack.c.bf16 %v1438, %v1437
  %v2849 = vpack.c.bf16 %v572, %v570
  %v2850 = vpack.c.bf16 %v1440, %v1439
  %v2851 = vpack.c.bf16 %v577, %v575
  %v2852 = vpack.c.bf16 %v1442, %v1441
  %v2853 = vpack.c.bf16 %v582, %v580
  %v2854 = vpack.c.bf16 %v1444, %v1443
  %v2855 = vpack.c.bf16 %v587, %v585
  %v2856 = vpack.c.bf16 %v1446, %v1445
  %v2857 = vpack.c.bf16 %v592, %v590
  %v2858 = vpack.c.bf16 %v1448, %v1447
  %v2859 = vpack.c.bf16 %v597, %v595
  %v2860 = vpack.c.bf16 %v1450, %v1449
  %v2861 = vpack.c.bf16 %v602, %v600
  %v2862 = vpack.c.bf16 %v1452, %v1451
  %v2863 = vpack.c.bf16 %v903, %v901
  %v2864 = vpack.c.bf16 %v1454, %v1453
  %v2865 = vpack.c.bf16 %v527, %v525
  %v2866 = vpack.c.bf16 %v2803, %v2802
  %v2867 = vpack.c.bf16 %v1947, %v1945
  %v2868 = vpack.c.bf16 %v2805, %v2804
  %v2869 = vpack.c.bf16 %v1952, %v1950
  %v2870 = vpack.c.bf16 %v2807, %v2806
  %v2871 = vpack.c.bf16 %v1957, %v1955
  %v2872 = vpack.c.bf16 %v2809, %v2808
  %v2873 = vpack.c.bf16 %v1962, %v1960
  %v2874 = vpack.c.bf16 %v2811, %v2810
  %v2875 = vpack.c.bf16 %v1967, %v1965
  %v2876 = vpack.c.bf16 %v2813, %v2812
  %v2877 = vpack.c.bf16 %v1972, %v1970
  %v2878 = vpack.c.bf16 %v2815, %v2814
  %v2879 = vpack.c.bf16 %v1977, %v1975
  %v2880 = vpack.c.bf16 %v2817, %v2816
  %v2881 = vpack.c.bf16 %v1982, %v1980
  %v2882 = vpack.c.bf16 %v2819, %v2818
  %v2883 = vpack.c.bf16 %v1987, %v1985
  %v2884 = vpack.c.bf16 %v2821, %v2820
  %v2885 = vpack.c.bf16 %v1992, %v1990
  %v2886 = vpack.c.bf16 %v2823, %v2822
  %v2887 = vpack.c.bf16 %v1997, %v1995
  %v2888 = vpack.c.bf16 %v2825, %v2824
  %v2889 = vpack.c.bf16 %v2002, %v2000
  %v2890 = vpack.c.bf16 %v2827, %v2826
  %v2891 = vpack.c.bf16 %v2007, %v2005
  %v2892 = vpack.c.bf16 %v2829, %v2828
  %v2893 = vpack.c.bf16 %v2012, %v2010
  %v2894 = vpack.c.bf16 %v2831, %v2830
  %v2895 = vpack.c.bf16 %v2307, %v2305
  %v2896 = vpack.c.bf16 %v2833, %v2832
  %v2897 = vld [vmem:[%s2] sm:$0xff]
  %v2898 = vld [vmem:[%s2 + $0x8] sm:$0xf]
  %v2899 = vld [vmem:[%s1] sm:$0xff]
  %v2900 = vld [vmem:[%s1 + $0x8] sm:$0x33]
  %2902 = vset.pattern.permute.xlu0 0
  %2903 = vperm.xlu0 %2902, %v2897
  %v2904 = vpop.permute.xlu0 %2903
  %2907 = vset.pattern.permute.xlu0 0
  %2908 = vperm.xlu0 %2907, %v2898
  %v2909 = vpop.permute.xlu0 %2908
  %v2913 = vunpack.c.l.b16 %v2899
  %v2914 = vunpack.c.h.b16 %v2899
  %v2915 = vunpack.c.l.b16 %v2900
  %v2916 = vunpack.c.h.b16 %v2900
  %v2917 = vpack.c.b16 %v2915, %v2913
  %v2918 = vpack.c.b16 %v2916, %v2914
  %v2921 = vsel %vm1224, %v2918, 0
  %v2924 = vsel %vm1224, %v2835, 0
  %v2927 = vsel %vm1224, %v2837, 0
  %v2930 = vsel %vm1224, %v2839, 0
  %v2933 = vsel %vm1224, %v2841, 0
  %v2936 = vsel %vm1224, %v2843, 0
  %v2939 = vsel %vm1224, %v2845, 0
  %v2942 = vsel %vm1224, %v2847, 0
  %v2945 = vsel %vm1224, %v2849, 0
  %v2948 = vsel %vm1224, %v2851, 0
  %v2951 = vsel %vm1224, %v2853, 0
  %v2954 = vsel %vm1224, %v2855, 0
  %v2957 = vsel %vm1224, %v2857, 0
  %v2960 = vsel %vm1224, %v2859, 0
  %v2963 = vsel %vm1224, %v2861, 0
  %v2966 = vsel %vm1224, %v2863, 0
  %v2969 = vsel %vm1224, %v2865, 0
  %v2972 = vsel %vm1224, %v2867, 0
  %v2975 = vsel %vm1224, %v2869, 0
  %v2978 = vsel %vm1224, %v2871, 0
  %v2981 = vsel %vm1224, %v2873, 0
  %v2984 = vsel %vm1224, %v2875, 0
  %v2987 = vsel %vm1224, %v2877, 0
  %v2990 = vsel %vm1224, %v2879, 0
  %v2993 = vsel %vm1224, %v2881, 0
  %v2996 = vsel %vm1224, %v2883, 0
  %v2999 = vsel %vm1224, %v2885, 0
  %v3002 = vsel %vm1224, %v2887, 0
  %v3005 = vsel %vm1224, %v2889, 0
  %v3008 = vsel %vm1224, %v2891, 0
  %v3011 = vsel %vm1224, %v2893, 0
  %v3014 = vsel %vm1224, %v2895, 0
  %3016 = vmatprep.subr.bf16.mxu0 %v2924
  %3017 = vmatpush1.bf16.xpose.msra.mxu0 %v2834
  %3018 = vmatprep.subr.bf16.mxu0 %v2927
  %3019 = vmatpush1.bf16.xpose.msra.mxu0 %v2836
  %3020 = vmatprep.subr.bf16.mxu0 %v2930
  %3021 = vmatpush1.bf16.xpose.msra.mxu0 %v2838
  %3022 = vmatprep.subr.bf16.mxu0 %v2933
  %3023 = vmatpush1.bf16.xpose.msra.mxu0 %v2840
  %3024 = vmatprep.subr.bf16.mxu0 %v2936
  %3025 = vmatpush1.bf16.xpose.msra.mxu0 %v2842
  %3026 = vmatprep.subr.bf16.mxu0 %v2939
  %3027 = vmatpush1.bf16.xpose.msra.mxu0 %v2844
  %3028 = vmatprep.subr.bf16.mxu0 %v2942
  %3029 = vmatpush1.bf16.xpose.msra.mxu0 %v2846
  %3030 = vmatprep.subr.bf16.mxu0 %v2945
  %3031 = vmatpush1.bf16.xpose.msra.mxu0 %v2848
  %3032 = vmatprep.subr.bf16.mxu0 %v2948
  %3033 = vmatpush1.bf16.xpose.msra.mxu0 %v2850
  %3034 = vmatprep.subr.bf16.mxu0 %v2951
  %3035 = vmatpush1.bf16.xpose.msra.mxu0 %v2852
  %3036 = vmatprep.subr.bf16.mxu0 %v2954
  %3037 = vmatpush1.bf16.xpose.msra.mxu0 %v2854
  %3038 = vmatprep.subr.bf16.mxu0 %v2957
  %3039 = vmatpush1.bf16.xpose.msra.mxu0 %v2856
  %3040 = vmatprep.subr.bf16.mxu0 %v2960
  %3041 = vmatpush1.bf16.xpose.msra.mxu0 %v2858
  %3042 = vmatprep.subr.bf16.mxu0 %v2963
  %3043 = vmatpush1.bf16.xpose.msra.mxu0 %v2860
  %3044 = vmatprep.subr.bf16.mxu0 %v2966
  %3045 = vmatpush1.bf16.xpose.msra.mxu0 %v2862
  %3046 = vmatprep.subr.bf16.mxu0 %v2969
  %3047 = vmatpush1.bf16.xpose.msra.mxu0 %v2864
  %3048 = vmatprep.mubr.bf16.mxu0 %v2921
  %3049 = vmatmul.mubr.bf16.gmra.mrb[0].mxu0 %v2917
  %v3050 = vpop.f32.mrb[0].mxu0
  %v3051 = vadd.f32 %v2904, %v3050
  %v3052 = vpop.f32.mrb[0].mxu0
  %v3053 = vadd.f32 %v2904, %v3052
  %v3054 = vpop.f32.mrb[0].mxu0
  %v3055 = vadd.f32 %v2909, %v3054
  %v3056 = vpop.f32.mrb[0].mxu0
  %v3057 = vadd.f32 %v2909, %v3056
  %3058 = vdwg.mxu0
  %3059 = vmatprep.subr.bf16.mxu0 %v2972
  %3060 = vmatpush1.bf16.xpose.msra.mxu0 %v2866
  %3061 = vmatprep.subr.bf16.mxu0 %v2975
  %3062 = vmatpush1.bf16.xpose.msra.mxu0 %v2868
  %3063 = vmatprep.subr.bf16.mxu0 %v2978
  %3064 = vmatpush1.bf16.xpose.msra.mxu0 %v2870
  %3065 = vmatprep.subr.bf16.mxu0 %v2981
  %3066 = vmatpush1.bf16.xpose.msra.mxu0 %v2872
  %3067 = vmatprep.subr.bf16.mxu0 %v2984
  %3068 = vmatpush1.bf16.xpose.msra.mxu0 %v2874
  %3069 = vmatprep.subr.bf16.mxu0 %v2987
  %3070 = vmatpush1.bf16.xpose.msra.mxu0 %v2876
  %3071 = vmatprep.subr.bf16.mxu0 %v2990
  %3072 = vmatpush1.bf16.xpose.msra.mxu0 %v2878
  %3073 = vmatprep.subr.bf16.mxu0 %v2993
  %3074 = vmatpush1.bf16.xpose.msra.mxu0 %v2880
  %3075 = vmatprep.subr.bf16.mxu0 %v2996
  %3076 = vmatpush1.bf16.xpose.msra.mxu0 %v2882
  %3077 = vmatprep.subr.bf16.mxu0 %v2999
  %3078 = vmatpush1.bf16.xpose.msra.mxu0 %v2884
  %3079 = vmatprep.subr.bf16.mxu0 %v3002
  %3080 = vmatpush1.bf16.xpose.msra.mxu0 %v2886
  %3081 = vmatprep.subr.bf16.mxu0 %v3005
  %3082 = vmatpush1.bf16.xpose.msra.mxu0 %v2888
  %3083 = vmatprep.subr.bf16.mxu0 %v3008
  %3084 = vmatpush1.bf16.xpose.msra.mxu0 %v2890
  %3085 = vmatprep.subr.bf16.mxu0 %v3011
  %3086 = vmatpush1.bf16.xpose.msra.mxu0 %v2892
  %3087 = vmatprep.subr.bf16.mxu0 %v3014
  %3088 = vmatpush1.bf16.xpose.msra.mxu0 %v2894
  %3089 = vmatprep.subr.bf16.mxu0 %v2969
  %3090 = vmatpush1.bf16.xpose.msra.mxu0 %v2896
  %3091 = vmatprep.mubr.bf16.mxu0 %v2921
  %3092 = vmatmul.mubr.bf16.gmra.mrb[0].mxu0 %v2917
  %v3093 = vpop.f32.mrb[0].mxu0
  %v3094 = vadd.f32 %v2904, %v3093
  %v3095 = vpop.f32.mrb[0].mxu0
  %v3096 = vadd.f32 %v2904, %v3095
  %v3097 = vpop.f32.mrb[0].mxu0
  %v3098 = vadd.f32 %v2909, %v3097
  %v3099 = vpop.f32.mrb[0].mxu0
  %v3100 = vadd.f32 %v2909, %v3099
  %3101 = vdwg.mxu0
  %3102 = vst [vmem:[%s3] sm:$0xff] %v3051
  %3103 = vst [vmem:[%s3 + $0x8] sm:$0xff] %v3053
  %3104 = vst [vmem:[%s3 + $0x10] sm:$0xf] %v3055
  %3105 = vst [vmem:[%s3 + $0x18] sm:$0xf] %v3057
  %s3106 = scalar_lea.vmem %s3, 32
  %3107 = vst [vmem:[%s3106] sm:$0xff] %v3094
  %3108 = vst [vmem:[%s3106 + $0x8] sm:$0xff] %v3096
  %3109 = vst [vmem:[%s3106 + $0x10] sm:$0xf] %v3098
  %3110 = vst [vmem:[%s3106 + $0x18] sm:$0xf] %v3100
  // Predicated region
  $region14: #{_decoder_bf16.5} parent=0 // pred_check
    _
  $region15: #{_decoder_bf16.5} parent=0 // pred_check_branch
    %3112 = sbr.rel (0) target = $region17
  $region16: #{_decoder_bf16.5} parent=0 // pred_region
    _
  $region17: #{_decoder_bf16.5} parent=0 // pred_fallthru
    _
  // Predicated region
  $region18: #{_decoder_bf16.5} parent=0 // pred_check
    _
  $region19: #{_decoder_bf16.5} parent=0 // pred_check_branch
    %3114 = sbr.rel (0) target = $region21
  $region20: #{_decoder_bf16.5} parent=0 // pred_region
    _
  $region21: #{_decoder_bf16.5} parent=0 // pred_fallthru
    _

</llo_original>
